<compile_context>
chip_gen: v7x
topology: tpu7x:2x2x1
jax: 0.10.0
libtpu: 0.0.40
codegen_flags: <defaults>
</compile_context>

<pallas_src>
import functools
import math

import jax
import jax.numpy as jnp
from jax.experimental import pallas as pl
from jax.experimental.pallas import tpu as pltpu


def _round_up(x, m):
    return (x + m - 1) // m * m


# Logical layer sizes and their lane-padded (multiple-of-128) counterparts.
LAYER_SIZES = [(9605, 4800), (4800, 2400), (2400, 128), (128, 3)]
D_IN_P = _round_up(9605, 128)   # 9728
D1_P = _round_up(4800, 128)     # 4864
D2_P = _round_up(2400, 128)     # 2432
D3_P = 128
D_OUT = 3
D_OUT_P = 128
PADDED_SIZES = [(D_IN_P, D1_P), (D1_P, D2_P), (D2_P, D3_P), (D3_P, D_OUT_P)]

VMEM_LIMIT_BYTES = 48 * 1024 * 1024


# ---------------------------------------------------------------------------
# Fused (matmul + bias + optional ReLU) kernel.
# Grid = (M/tm, N/tn, K/tk); K is the innermost reduction axis ("arbitrary").
# Partial sums accumulate directly in the resident f32 output block.
# ---------------------------------------------------------------------------
def _linear_kernel(x_ref, w_ref, b_ref, o_ref, *, apply_relu):
    k = pl.program_id(2)

    @pl.when(k == 0)
    def _():
        o_ref[...] = jnp.zeros_like(o_ref)

    o_ref[...] += jnp.dot(
        x_ref[...], w_ref[...].astype(jnp.float32),
        preferred_element_type=jnp.float32,
    )

    @pl.when(k == pl.num_programs(2) - 1)
    def _():
        out = o_ref[...] + b_ref[...]  # (tm,tn) + (1,tn) broadcast
        if apply_relu:
            out = jnp.maximum(out, 0.0)
        o_ref[...] = out


def linear_pallas(xp, wp, bp, *, apply_relu, tk, tn):
    """y = relu?(xp @ wp + bp) on already-padded operands.

    xp:(Mp,Kp) f32, wp:(Kp,Np), bp:(1,Np) f32 -> (Mp,Np) f32 (still padded).
    """
    Mp, Kp = xp.shape
    Kw, Np = wp.shape
    assert Kw == Kp and Kp % tk == 0 and Np % tn == 0 and Mp % 8 == 0

    tm = Mp  # small batch: one block covers it
    grid = (Mp // tm, Np // tn, Kp // tk)

    flops = 2 * Mp * Kp * Np
    bytes_accessed = (
        Mp * Kp * 4 + Kp * Np * wp.dtype.itemsize + Np * 4 + Mp * Np * 4
    )

    return pl.pallas_call(
        functools.partial(_linear_kernel, apply_relu=apply_relu),
        out_shape=jax.ShapeDtypeStruct((Mp, Np), jnp.float32),
        grid_spec=pltpu.PrefetchScalarGridSpec(
            num_scalar_prefetch=0,
            grid=grid,
            in_specs=[
                pl.BlockSpec((tm, tk), lambda i, j, k: (i, k)),
                pl.BlockSpec((tk, tn), lambda i, j, k: (k, j)),
                pl.BlockSpec((1, tn), lambda i, j, k: (0, j)),
            ],
            out_specs=pl.BlockSpec((tm, tn), lambda i, j, k: (i, j)),
        ),
        compiler_params=pltpu.CompilerParams(
            dimension_semantics=("parallel", "parallel", "arbitrary"),
            vmem_limit_bytes=VMEM_LIMIT_BYTES,
        ),
        cost_estimate=pl.CostEstimate(
            flops=flops, transcendentals=0, bytes_accessed=bytes_accessed
        ),
    )(xp, wp, bp)


# ---------------------------------------------------------------------------
# Fused tail: fc3 (2400->128) + ReLU + fc4 (128->3) + masked log_softmax,
# all weights (~1.3 MiB) in one VMEM block, grid=(1,).
# ---------------------------------------------------------------------------
def _tail_kernel(x_ref, w3_ref, b3_ref, w4_ref, b4_ref, o_ref, *, n_valid):
    h = (
        jnp.dot(x_ref[...], w3_ref[...].astype(jnp.float32),
                preferred_element_type=jnp.float32)
        + b3_ref[...]
    )
    h = jnp.maximum(h, 0.0)
    logits = (
        jnp.dot(h, w4_ref[...].astype(jnp.float32),
                preferred_element_type=jnp.float32)
        + b4_ref[...]
    )
    col = jax.lax.broadcasted_iota(jnp.int32, logits.shape, 1)
    valid = col < n_valid
    masked = jnp.where(valid, logits, jnp.full_like(logits, -jnp.inf))
    m = jnp.max(masked, axis=1, keepdims=True)
    e = jnp.where(valid, jnp.exp(masked - m), jnp.zeros_like(logits))
    lse = jnp.log(jnp.sum(e, axis=1, keepdims=True)) + m
    o_ref[...] = (logits - lse).astype(o_ref.dtype)


def tail_pallas(xp, w3p, b3p, w4p, b4p):
    Mp, Kp = xp.shape
    assert Kp == D2_P and Mp % 8 == 0
    return pl.pallas_call(
        functools.partial(_tail_kernel, n_valid=D_OUT),
        out_shape=jax.ShapeDtypeStruct((Mp, D_OUT_P), jnp.float32),
        grid_spec=pltpu.PrefetchScalarGridSpec(
            num_scalar_prefetch=0,
            grid=(1,),
            in_specs=[
                pl.BlockSpec((Mp, Kp), lambda i: (0, 0)),
                pl.BlockSpec((Kp, D3_P), lambda i: (0, 0)),
                pl.BlockSpec((1, D3_P), lambda i: (0, 0)),
                pl.BlockSpec((D3_P, D_OUT_P), lambda i: (0, 0)),
                pl.BlockSpec((1, D_OUT_P), lambda i: (0, 0)),
            ],
            out_specs=pl.BlockSpec((Mp, D_OUT_P), lambda i: (0, 0)),
        ),
        compiler_params=pltpu.CompilerParams(
            dimension_semantics=("arbitrary",),
            vmem_limit_bytes=VMEM_LIMIT_BYTES,
        ),
    )(xp, w3p, b3p, w4p, b4p)


# ---------------------------------------------------------------------------
# Parameter init (deterministic, mimics nn.Linear default U(-1/sqrt(fan_in),+))
# and one-time padding of the weights.
# ---------------------------------------------------------------------------
def init_params(key):
    params = []
    for fan_in, fan_out in LAYER_SIZES:
        key, kw, kb = jax.random.split(key, 3)
        bound = 1.0 / math.sqrt(fan_in)
        w = jax.random.uniform(
            kw, (fan_in, fan_out), jnp.float32, minval=-bound, maxval=bound
        )
        b = jax.random.uniform(
            kb, (fan_out,), jnp.float32, minval=-bound, maxval=bound
        )
        params.append((w, b))
    return params


def prepare_params(params, weights_dtype=jnp.float32):
    """Pad (and optionally cast) all weights/biases ONCE, outside the forward."""
    prepped = []
    for (w, b), (kp, np_) in zip(params, PADDED_SIZES):
        fi, fo = w.shape
        wp = jnp.pad(w.astype(weights_dtype), ((0, kp - fi), (0, np_ - fo)))
        bp = jnp.pad(b.astype(jnp.float32), (0, np_ - fo)).reshape(1, np_)
        prepped.append((wp, bp))
    return prepped


def mlp_forward(x, prepped):
    (w1, b1), (w2, b2), (w3, b3), (w4, b4) = prepped
    M, K = x.shape
    Mp = _round_up(M, 8)
    xp = jnp.pad(x.astype(jnp.float32), ((0, Mp - M), (0, D_IN_P - K)))

    # fc1 + relu: (Mp,9728)@(9728,4864); 19 K-steps, 2-way parallel N split.
    h = linear_pallas(xp, w1, b1, apply_relu=True, tk=512, tn=D1_P // 2)
    # fc2 + relu: (Mp,4864)@(4864,2432); full-K block, 19 parallel N-steps.
    h = linear_pallas(h, w2, b2, apply_relu=True, tk=D1_P, tn=128)
    # fc3 + relu + fc4 + log_softmax fused, single block.
    out = tail_pallas(h, w3, b3, w4, b4)
    return out[:M, :D_OUT]


def reference_forward(x, params):
    h = x
    for idx, (w, b) in enumerate(params):
        h = jnp.dot(h, w, precision=jax.lax.Precision.HIGHEST) + b
        if idx < len(params) - 1:
            h = jnp.maximum(h, 0.0)
    return jax.nn.log_softmax(h, axis=1)


if __name__ == "__main__":
    key = jax.random.PRNGKey(0)
    key, kx = jax.random.split(key)

    batch = 4
    x = jax.random.normal(kx, (batch, 9605), dtype=jnp.float32)

    params = init_params(key)
    prepped = prepare_params(params)   # pad once, reused by every forward

    fwd = jax.jit(mlp_forward)
    out = jax.block_until_ready(fwd(x, prepped))

    assert out.shape == (batch, 3)
    assert out.dtype == jnp.float32
    # log_softmax rows should exp-sum to ~1
    assert bool(jnp.all(jnp.abs(jnp.sum(jnp.exp(out), axis=1) - 1.0) < 1e-4))

    # sanity vs pure-JAX reference (generous tol for matmul precision modes)
    ref = reference_forward(x, params)
    assert bool(jnp.allclose(out, ref, atol=5e-2, rtol=5e-2)), float(
        jnp.max(jnp.abs(out - ref))
    )

    print("KERNEL_OK")
</pallas_src>

<mosaic_0001>
module attributes {stable_mosaic.version = 11 : i64} {
  func.func @_linear_kernel(%arg0: i32, %arg1: i32, %arg2: i32, %arg3: memref<8x4864xf32, #tpu.memory_space<vmem>>, %arg4: memref<4864x128xf32, #tpu.memory_space<vmem>>, %arg5: memref<1x128xf32, #tpu.memory_space<vmem>>, %arg6: memref<8x128xf32, #tpu.memory_space<vmem>>) attributes {dimension_semantics = [#tpu.dimension_semantics<parallel>, #tpu.dimension_semantics<parallel>, #tpu.dimension_semantics<arbitrary>], iteration_bounds = array<i64: 1, 19, 1>, scalar_prefetch = 0 : i64, scratch_operands = 0 : i64, tpu.core_type = #tpu.core_type<tc>, window_params = [{transform_indices = @transform_0, window_bounds = array<i64: 8, 4864>}, {transform_indices = @transform_1, window_bounds = array<i64: 4864, 128>}, {transform_indices = @transform_2, window_bounds = array<i64: 1, 128>}, {transform_indices = @transform_3, window_bounds = array<i64: 8, 128>}]} {
    %c0_i32 = arith.constant 0 : i32
    %0 = arith.cmpi eq, %arg2, %c0_i32 : i32
    %1 = arith.extui %0 : i1 to i32
    %c0_i32_0 = arith.constant 0 : i32
    %2 = arith.cmpi ne, %1, %c0_i32_0 : i32
    scf.if %2 {
      %cst_10 = arith.constant 0.000000e+00 : f32
      %12 = vector.broadcast %cst_10 : f32 to vector<8x128xf32>
      %c0_11 = arith.constant 0 : index
      %c0_12 = arith.constant 0 : index
      %13 = vector.load %arg6[%c0_11, %c0_12] : memref<8x128xf32, #tpu.memory_space<vmem>>, vector<8x128xf32>
      tpu.vector_store %arg6[%c0_11, %c0_12], %12 {strides = array<i32>} : memref<8x128xf32, #tpu.memory_space<vmem>>, vector<8x128xf32>,
    } else {
    }
    %c0 = arith.constant 0 : index
    %c0_1 = arith.constant 0 : index
    %3 = vector.load %arg6[%c0, %c0_1] : memref<8x128xf32, #tpu.memory_space<vmem>>, vector<8x128xf32>
    %c0_2 = arith.constant 0 : index
    %c0_3 = arith.constant 0 : index
    %4 = vector.load %arg3[%c0_2, %c0_3] : memref<8x4864xf32, #tpu.memory_space<vmem>>, vector<8x4864xf32>
    %c0_4 = arith.constant 0 : index
    %c0_5 = arith.constant 0 : index
    %5 = vector.load %arg4[%c0_4, %c0_5] : memref<4864x128xf32, #tpu.memory_space<vmem>>, vector<4864x128xf32>
    %cst = arith.constant dense<0.000000e+00> : vector<8x128xf32>
    %6 = tpu.matmul %4, %5, %cst {dimension_numbers = #tpu.dot_dimension_numbers<[1], [0], [0], [1], [0, 0, 1, 1], [], []>} : vector<8x4864xf32>, vector<4864x128xf32>, vector<8x128xf32> -> vector<8x128xf32>
    %7 = arith.addf %3, %6 : vector<8x128xf32>
    %c0_6 = arith.constant 0 : index
    %c0_7 = arith.constant 0 : index
    %8 = vector.load %arg6[%c0_6, %c0_7] : memref<8x128xf32, #tpu.memory_space<vmem>>, vector<8x128xf32>
    tpu.vector_store %arg6[%c0_6, %c0_7], %7 {strides = array<i32>} : memref<8x128xf32, #tpu.memory_space<vmem>>, vector<8x128xf32>,
    %c0_i32_8 = arith.constant 0 : i32
    %9 = arith.cmpi eq, %arg2, %c0_i32_8 : i32
    %10 = arith.extui %9 : i1 to i32
    %c0_i32_9 = arith.constant 0 : i32
    %11 = arith.cmpi ne, %10, %c0_i32_9 : i32
    scf.if %11 {
      %c0_10 = arith.constant 0 : index
      %c0_11 = arith.constant 0 : index
      %12 = vector.load %arg6[%c0_10, %c0_11] : memref<8x128xf32, #tpu.memory_space<vmem>>, vector<8x128xf32>
      %c0_12 = arith.constant 0 : index
      %c0_13 = arith.constant 0 : index
      %13 = vector.load %arg5[%c0_12, %c0_13] : memref<1x128xf32, #tpu.memory_space<vmem>>, vector<1x128xf32>
      %14 = vector.broadcast %13 : vector<1x128xf32> to vector<8x128xf32>
      %15 = arith.addf %12, %14 : vector<8x128xf32>
      %cst_14 = arith.constant 0.000000e+00 : f32
      %16 = vector.broadcast %cst_14 : f32 to vector<8x128xf32>
      %17 = arith.maximumf %15, %16 : vector<8x128xf32>
      %c0_15 = arith.constant 0 : index
      %c0_16 = arith.constant 0 : index
      %18 = vector.load %arg6[%c0_15, %c0_16] : memref<8x128xf32, #tpu.memory_space<vmem>>, vector<8x128xf32>
      tpu.vector_store %arg6[%c0_15, %c0_16], %17 {strides = array<i32>} : memref<8x128xf32, #tpu.memory_space<vmem>>, vector<8x128xf32>,
    } else {
    }
    return
  }
  func.func @transform_0(%arg0: i32, %arg1: i32, %arg2: i32) -> (i32, i32) {
    %c0_i32 = arith.constant 0 : i32
    return %arg0, %arg2 : i32, i32
  }
  func.func @transform_1(%arg0: i32, %arg1: i32, %arg2: i32) -> (i32, i32) {
    %c0_i32 = arith.constant 0 : i32
    return %arg2, %arg1 : i32, i32
  }
  func.func @transform_2(%arg0: i32, %arg1: i32, %arg2: i32) -> (i32, i32) {
    %c0_i32 = arith.constant 0 : i32
    %c0_i32_0 = arith.constant 0 : i32
    return %c0_i32, %arg1 : i32, i32
  }
  func.func @transform_3(%arg0: i32, %arg1: i32, %arg2: i32) -> (i32, i32) {
    %c0_i32 = arith.constant 0 : i32
    return %arg0, %arg1 : i32, i32
  }
}

module attributes {stable_mosaic.version = 11 : i64} {
  func.func @_tail_kernel(%arg0: i32, %arg1: memref<8x2432xf32, #tpu.memory_space<vmem>>, %arg2: memref<2432x128xf32, #tpu.memory_space<vmem>>, %arg3: memref<1x128xf32, #tpu.memory_space<vmem>>, %arg4: memref<128x128xf32, #tpu.memory_space<vmem>>, %arg5: memref<1x128xf32, #tpu.memory_space<vmem>>, %arg6: memref<8x128xf32, #tpu.memory_space<vmem>>) attributes {dimension_semantics = [#tpu.dimension_semantics<arbitrary>], iteration_bounds = array<i64: 1>, scalar_prefetch = 0 : i64, scratch_operands = 0 : i64, tpu.core_type = #tpu.core_type<tc>, window_params = [{pipeline_mode = #tpu.pipeline_mode<synchronous>, transform_indices = @transform_0, window_bounds = array<i64: 8, 2432>}, {pipeline_mode = #tpu.pipeline_mode<synchronous>, transform_indices = @transform_1, window_bounds = array<i64: 2432, 128>}, {pipeline_mode = #tpu.pipeline_mode<synchronous>, transform_indices = @transform_2, window_bounds = array<i64: 1, 128>}, {pipeline_mode = #tpu.pipeline_mode<synchronous>, transform_indices = @transform_3, window_bounds = array<i64: 128, 128>}, {pipeline_mode = #tpu.pipeline_mode<synchronous>, transform_indices = @transform_4, window_bounds = array<i64: 1, 128>}, {pipeline_mode = #tpu.pipeline_mode<synchronous>, transform_indices = @transform_5, window_bounds = array<i64: 8, 128>}]} {
    %c0 = arith.constant 0 : index
    %c0_0 = arith.constant 0 : index
    %0 = vector.load %arg1[%c0, %c0_0] : memref<8x2432xf32, #tpu.memory_space<vmem>>, vector<8x2432xf32>
    %c0_1 = arith.constant 0 : index
    %c0_2 = arith.constant 0 : index
    %1 = vector.load %arg2[%c0_1, %c0_2] : memref<2432x128xf32, #tpu.memory_space<vmem>>, vector<2432x128xf32>
    %cst = arith.constant dense<0.000000e+00> : vector<8x128xf32>
    %2 = tpu.matmul %0, %1, %cst {dimension_numbers = #tpu.dot_dimension_numbers<[1], [0], [0], [1], [0, 0, 1, 1], [], []>} : vector<8x2432xf32>, vector<2432x128xf32>, vector<8x128xf32> -> vector<8x128xf32>
    %c0_3 = arith.constant 0 : index
    %c0_4 = arith.constant 0 : index
    %3 = vector.load %arg3[%c0_3, %c0_4] : memref<1x128xf32, #tpu.memory_space<vmem>>, vector<1x128xf32>
    %4 = vector.broadcast %3 : vector<1x128xf32> to vector<8x128xf32>
    %5 = arith.addf %2, %4 : vector<8x128xf32>
    %cst_5 = arith.constant 0.000000e+00 : f32
    %6 = vector.broadcast %cst_5 : f32 to vector<8x128xf32>
    %7 = arith.maximumf %5, %6 : vector<8x128xf32>
    %c0_6 = arith.constant 0 : index
    %c0_7 = arith.constant 0 : index
    %8 = vector.load %arg4[%c0_6, %c0_7] : memref<128x128xf32, #tpu.memory_space<vmem>>, vector<128x128xf32>
    %cst_8 = arith.constant dense<0.000000e+00> : vector<8x128xf32>
    %9 = tpu.matmul %7, %8, %cst_8 {dimension_numbers = #tpu.dot_dimension_numbers<[1], [0], [0], [1], [0, 0, 1, 1], [], []>} : vector<8x128xf32>, vector<128x128xf32>, vector<8x128xf32> -> vector<8x128xf32>
    %c0_9 = arith.constant 0 : index
    %c0_10 = arith.constant 0 : index
    %10 = vector.load %arg5[%c0_9, %c0_10] : memref<1x128xf32, #tpu.memory_space<vmem>>, vector<1x128xf32>
    %11 = vector.broadcast %10 : vector<1x128xf32> to vector<8x128xf32>
    %12 = arith.addf %9, %11 : vector<8x128xf32>
    %13 = tpu.iota {dimensions = array<i32: 1>} : vector<8x128xi32>
    %c3_i32 = arith.constant 3 : i32
    %14 = vector.broadcast %c3_i32 : i32 to vector<8x128xi32>
    %15 = arith.cmpi slt, %13, %14 : vector<8x128xi32>
    %cst_11 = arith.constant 0xFF800000 : f32
    %16 = vector.broadcast %cst_11 : f32 to vector<8x128xf32>
    %17 = arith.select %15, %12, %16 : vector<8x128xi1>, vector<8x128xf32>
    %cst_12 = arith.constant dense<0xFF800000> : vector<8xf32>
    %18 = vector.multi_reduction <maximumf>, %17, %cst_12 [1] : vector<8x128xf32> to vector<8xf32>
    %19 = vector.shape_cast %18 : vector<8xf32> to vector<8x1xf32>
    %20 = vector.broadcast %19 : vector<8x1xf32> to vector<8x128xf32>
    %21 = arith.subf %17, %20 : vector<8x128xf32>
    %22 = math.exp %21 : vector<8x128xf32>
    %cst_13 = arith.constant 0.000000e+00 : f32
    %23 = vector.broadcast %cst_13 : f32 to vector<8x128xf32>
    %24 = arith.select %15, %22, %23 : vector<8x128xi1>, vector<8x128xf32>
    %cst_14 = arith.constant dense<0.000000e+00> : vector<8xf32>
    %25 = vector.multi_reduction <add>, %24, %cst_14 [1] : vector<8x128xf32> to vector<8xf32>
    %26 = vector.shape_cast %25 : vector<8xf32> to vector<8x1xf32>
    %27 = math.log %26 : vector<8x1xf32>
    %28 = arith.addf %27, %19 : vector<8x1xf32>
    %29 = vector.broadcast %28 : vector<8x1xf32> to vector<8x128xf32>
    %30 = arith.subf %12, %29 : vector<8x128xf32>
    %c0_15 = arith.constant 0 : index
    %c0_16 = arith.constant 0 : index
    %31 = vector.load %arg6[%c0_15, %c0_16] : memref<8x128xf32, #tpu.memory_space<vmem>>, vector<8x128xf32>
    tpu.vector_store %arg6[%c0_15, %c0_16], %30 {strides = array<i32>} : memref<8x128xf32, #tpu.memory_space<vmem>>, vector<8x128xf32>,
    return
  }
  func.func @transform_0(%arg0: i32) -> (i32, i32) {
    %c0_i32 = arith.constant 0 : i32
    %c0_i32_0 = arith.constant 0 : i32
    %c0_i32_1 = arith.constant 0 : i32
    return %c0_i32, %c0_i32_0 : i32, i32
  }
  func.func @transform_1(%arg0: i32) -> (i32, i32) {
    %c0_i32 = arith.constant 0 : i32
    %c0_i32_0 = arith.constant 0 : i32
    %c0_i32_1 = arith.constant 0 : i32
    return %c0_i32, %c0_i32_0 : i32, i32
  }
  func.func @transform_2(%arg0: i32) -> (i32, i32) {
    %c0_i32 = arith.constant 0 : i32
    %c0_i32_0 = arith.constant 0 : i32
    %c0_i32_1 = arith.constant 0 : i32
    return %c0_i32, %c0_i32_0 : i32, i32
  }
  func.func @transform_3(%arg0: i32) -> (i32, i32) {
    %c0_i32 = arith.constant 0 : i32
    %c0_i32_0 = arith.constant 0 : i32
    %c0_i32_1 = arith.constant 0 : i32
    return %c0_i32, %c0_i32_0 : i32, i32
  }
  func.func @transform_4(%arg0: i32) -> (i32, i32) {
    %c0_i32 = arith.constant 0 : i32
    %c0_i32_0 = arith.constant 0 : i32
    %c0_i32_1 = arith.constant 0 : i32
    return %c0_i32, %c0_i32_0 : i32, i32
  }
  func.func @transform_5(%arg0: i32) -> (i32, i32) {
    %c0_i32 = arith.constant 0 : i32
    %c0_i32_0 = arith.constant 0 : i32
    %c0_i32_1 = arith.constant 0 : i32
    return %c0_i32, %c0_i32_0 : i32, i32
  }
}

module attributes {stable_mosaic.version = 11 : i64} {
  func.func @_linear_kernel(%arg0: i32, %arg1: i32, %arg2: i32, %arg3: memref<8x512xf32, #tpu.memory_space<vmem>>, %arg4: memref<512x2432xf32, #tpu.memory_space<vmem>>, %arg5: memref<1x2432xf32, #tpu.memory_space<vmem>>, %arg6: memref<8x2432xf32, #tpu.memory_space<vmem>>) attributes {dimension_semantics = [#tpu.dimension_semantics<parallel>, #tpu.dimension_semantics<parallel>, #tpu.dimension_semantics<arbitrary>], iteration_bounds = array<i64: 1, 2, 19>, scalar_prefetch = 0 : i64, scratch_operands = 0 : i64, tpu.core_type = #tpu.core_type<tc>, window_params = [{transform_indices = @transform_0, window_bounds = array<i64: 8, 512>}, {transform_indices = @transform_1, window_bounds = array<i64: 512, 2432>}, {transform_indices = @transform_2, window_bounds = array<i64: 1, 2432>}, {transform_indices = @transform_3, window_bounds = array<i64: 8, 2432>}]} {
    %c0_i32 = arith.constant 0 : i32
    %0 = arith.cmpi eq, %arg2, %c0_i32 : i32
    %1 = arith.extui %0 : i1 to i32
    %c0_i32_0 = arith.constant 0 : i32
    %2 = arith.cmpi ne, %1, %c0_i32_0 : i32
    scf.if %2 {
      %cst_9 = arith.constant 0.000000e+00 : f32
      %12 = vector.broadcast %cst_9 : f32 to vector<8x2432xf32>
      %c0_10 = arith.constant 0 : index
      %c0_11 = arith.constant 0 : index
      %13 = vector.load %arg6[%c0_10, %c0_11] : memref<8x2432xf32, #tpu.memory_space<vmem>>, vector<8x2432xf32>
      tpu.vector_store %arg6[%c0_10, %c0_11], %12 {strides = array<i32>} : memref<8x2432xf32, #tpu.memory_space<vmem>>, vector<8x2432xf32>,
    } else {
    }
    %c0 = arith.constant 0 : index
    %c0_1 = arith.constant 0 : index
    %3 = vector.load %arg6[%c0, %c0_1] : memref<8x2432xf32, #tpu.memory_space<vmem>>, vector<8x2432xf32>
    %c0_2 = arith.constant 0 : index
    %c0_3 = arith.constant 0 : index
    %4 = vector.load %arg3[%c0_2, %c0_3] : memref<8x512xf32, #tpu.memory_space<vmem>>, vector<8x512xf32>
    %c0_4 = arith.constant 0 : index
    %c0_5 = arith.constant 0 : index
    %5 = vector.load %arg4[%c0_4, %c0_5] : memref<512x2432xf32, #tpu.memory_space<vmem>>, vector<512x2432xf32>
    %cst = arith.constant dense<0.000000e+00> : vector<8x2432xf32>
    %6 = tpu.matmul %4, %5, %cst {dimension_numbers = #tpu.dot_dimension_numbers<[1], [0], [0], [1], [0, 0, 1, 1], [], []>} : vector<8x512xf32>, vector<512x2432xf32>, vector<8x2432xf32> -> vector<8x2432xf32>
    %7 = arith.addf %3, %6 : vector<8x2432xf32>
    %c0_6 = arith.constant 0 : index
    %c0_7 = arith.constant 0 : index
    %8 = vector.load %arg6[%c0_6, %c0_7] : memref<8x2432xf32, #tpu.memory_space<vmem>>, vector<8x2432xf32>
    tpu.vector_store %arg6[%c0_6, %c0_7], %7 {strides = array<i32>} : memref<8x2432xf32, #tpu.memory_space<vmem>>, vector<8x2432xf32>,
    %c18_i32 = arith.constant 18 : i32
    %9 = arith.cmpi eq, %arg2, %c18_i32 : i32
    %10 = arith.extui %9 : i1 to i32
    %c0_i32_8 = arith.constant 0 : i32
    %11 = arith.cmpi ne, %10, %c0_i32_8 : i32
    scf.if %11 {
      %c0_9 = arith.constant 0 : index
      %c0_10 = arith.constant 0 : index
      %12 = vector.load %arg6[%c0_9, %c0_10] : memref<8x2432xf32, #tpu.memory_space<vmem>>, vector<8x2432xf32>
      %c0_11 = arith.constant 0 : index
      %c0_12 = arith.constant 0 : index
      %13 = vector.load %arg5[%c0_11, %c0_12] : memref<1x2432xf32, #tpu.memory_space<vmem>>, vector<1x2432xf32>
      %14 = vector.broadcast %13 : vector<1x2432xf32> to vector<8x2432xf32>
      %15 = arith.addf %12, %14 : vector<8x2432xf32>
      %cst_13 = arith.constant 0.000000e+00 : f32
      %16 = vector.broadcast %cst_13 : f32 to vector<8x2432xf32>
      %17 = arith.maximumf %15, %16 : vector<8x2432xf32>
      %c0_14 = arith.constant 0 : index
      %c0_15 = arith.constant 0 : index
      %18 = vector.load %arg6[%c0_14, %c0_15] : memref<8x2432xf32, #tpu.memory_space<vmem>>, vector<8x2432xf32>
      tpu.vector_store %arg6[%c0_14, %c0_15], %17 {strides = array<i32>} : memref<8x2432xf32, #tpu.memory_space<vmem>>, vector<8x2432xf32>,
    } else {
    }
    return
  }
  func.func @transform_0(%arg0: i32, %arg1: i32, %arg2: i32) -> (i32, i32) {
    %c0_i32 = arith.constant 0 : i32
    return %arg0, %arg2 : i32, i32
  }
  func.func @transform_1(%arg0: i32, %arg1: i32, %arg2: i32) -> (i32, i32) {
    %c0_i32 = arith.constant 0 : i32
    return %arg2, %arg1 : i32, i32
  }
  func.func @transform_2(%arg0: i32, %arg1: i32, %arg2: i32) -> (i32, i32) {
    %c0_i32 = arith.constant 0 : i32
    %c0_i32_0 = arith.constant 0 : i32
    return %c0_i32, %arg1 : i32, i32
  }
  func.func @transform_3(%arg0: i32, %arg1: i32, %arg2: i32) -> (i32, i32) {
    %c0_i32 = arith.constant 0 : i32
    return %arg0, %arg1 : i32, i32
  }
}

</mosaic_0001>

<llo_original>
// kernel: mlp_forward.5
$region0: #{mlp_forward.5}
  #allocation0 [shape = 'u32[]', space=smem, size = 0x4, offset = 0x4, fixed_abs, tag = 'smem constant byte address 0x4 - core index']
  #allocation1 [shape = 'u32[144,128]{1,0:T(1,128)}', space=vmem, size = 0x12000, scoped, tag = 'internal scratch']
  %s0 = inlined_call_operand.vmem [shape: f32[8,2432], index: 0, kind: input, shape index: {}]
  %s1 = inlined_call_operand.vmem [shape: f32[2432,128], index: 1, kind: input, shape index: {}]
  %s2 = inlined_call_operand.vmem [shape: f32[1,128], index: 2, kind: input, shape index: {}]
  %s3 = inlined_call_operand.vmem [shape: f32[128,128], index: 3, kind: input, shape index: {}]
  %s4 = inlined_call_operand.vmem [shape: f32[1,128], index: 4, kind: input, shape index: {}]
  %s5 = inlined_call_operand.vmem [shape: f32[8,128], index: 5, kind: output, shape index: {}]
  %s6 = sld [smem:[#allocation0]]
  $region30: #{mlp_forward.5} parent=0
    _
  %s8 = ssub.s32 1, %s6
  %s9 = scalar_select 0, %s8, %s6
  // Predicated region
  $region2: #{mlp_forward.5} parent=0 // pred_check
    _
  $region3: #{mlp_forward.5} parent=0 // pred_check_branch
    %11 = sbr.rel (0) target = $region5
  $region4: #{mlp_forward.5} parent=0 // pred_region
    _
  $region5: #{mlp_forward.5} parent=0 // pred_fallthru
    _
  // Predicated region
  $region6: #{mlp_forward.5} parent=0 // pred_check
    _
  $region7: #{mlp_forward.5} parent=0 // pred_check_branch
    %13 = sbr.rel (0) target = $region9
  $region8: #{mlp_forward.5} parent=0 // pred_region
    _
  $region9: #{mlp_forward.5} parent=0 // pred_fallthru
    _
  // Predicated region
  $region10: #{mlp_forward.5} parent=0 // pred_check
    _
  $region11: #{mlp_forward.5} parent=0 // pred_check_branch
    %15 = sbr.rel (0) target = $region13
  $region12: #{mlp_forward.5} parent=0 // pred_region
    _
  $region13: #{mlp_forward.5} parent=0 // pred_fallthru
    _
  // Predicated region
  $region14: #{mlp_forward.5} parent=0 // pred_check
    _
  $region15: #{mlp_forward.5} parent=0 // pred_check_branch
    %17 = sbr.rel (0) target = $region17
  $region16: #{mlp_forward.5} parent=0 // pred_region
    _
  $region17: #{mlp_forward.5} parent=0 // pred_fallthru
    _
  // Predicated region
  $region18: #{mlp_forward.5} parent=0 // pred_check
    _
  $region19: #{mlp_forward.5} parent=0 // pred_check_branch
    %19 = sbr.rel (0) target = $region21
  $region20: #{mlp_forward.5} parent=0 // pred_region
    _
  $region21: #{mlp_forward.5} parent=0 // pred_fallthru
    _
  %v20 = vld [vmem:[%s0] sm:$0xff]
  %v21 = vld [vmem:[%s0 + $0x8] sm:$0xff]
  %v22 = vld [vmem:[%s0 + $0x10] sm:$0xff]
  %v23 = vld [vmem:[%s0 + $0x18] sm:$0xff]
  %v24 = vld [vmem:[%s0 + $0x20] sm:$0xff]
  %v25 = vld [vmem:[%s0 + $0x28] sm:$0xff]
  %v26 = vld [vmem:[%s0 + $0x30] sm:$0xff]
  %v27 = vld [vmem:[%s0 + $0x38] sm:$0xff]
  %v28 = vld [vmem:[%s0 + $0x40] sm:$0xff]
  %v29 = vld [vmem:[%s0 + $0x48] sm:$0xff]
  %v30 = vld [vmem:[%s0 + $0x50] sm:$0xff]
  %v31 = vld [vmem:[%s0 + $0x58] sm:$0xff]
  %v32 = vld [vmem:[%s0 + $0x60] sm:$0xff]
  %v33 = vld [vmem:[%s0 + $0x68] sm:$0xff]
  %v34 = vld [vmem:[%s0 + $0x70] sm:$0xff]
  %v35 = vld [vmem:[%s0 + $0x78] sm:$0xff]
  %v36 = vld [vmem:[%s0 + $0x80] sm:$0xff]
  %v37 = vld [vmem:[%s0 + $0x88] sm:$0xff]
  %v38 = vld [vmem:[%s0 + $0x90] sm:$0xff]
  %v39 = vld [vmem:[%s1] sm:$0xff]
  %v40 = vld [vmem:[%s1 + $0x8] sm:$0xff]
  %v41 = vld [vmem:[%s1 + $0x10] sm:$0xff]
  %v42 = vld [vmem:[%s1 + $0x18] sm:$0xff]
  %v43 = vld [vmem:[%s1 + $0x20] sm:$0xff]
  %v44 = vld [vmem:[%s1 + $0x28] sm:$0xff]
  %v45 = vld [vmem:[%s1 + $0x30] sm:$0xff]
  %v46 = vld [vmem:[%s1 + $0x38] sm:$0xff]
  %v47 = vld [vmem:[%s1 + $0x40] sm:$0xff]
  %v48 = vld [vmem:[%s1 + $0x48] sm:$0xff]
  %v49 = vld [vmem:[%s1 + $0x50] sm:$0xff]
  %v50 = vld [vmem:[%s1 + $0x58] sm:$0xff]
  %v51 = vld [vmem:[%s1 + $0x60] sm:$0xff]
  %v52 = vld [vmem:[%s1 + $0x68] sm:$0xff]
  %v53 = vld [vmem:[%s1 + $0x70] sm:$0xff]
  %v54 = vld [vmem:[%s1 + $0x78] sm:$0xff]
  %v55 = vld [vmem:[%s1 + $0x80] sm:$0xff]
  %v56 = vld [vmem:[%s1 + $0x88] sm:$0xff]
  %v57 = vld [vmem:[%s1 + $0x90] sm:$0xff]
  %v58 = vld [vmem:[%s1 + $0x98] sm:$0xff]
  %v59 = vld [vmem:[%s1 + $0xa0] sm:$0xff]
  %v60 = vld [vmem:[%s1 + $0xa8] sm:$0xff]
  %v61 = vld [vmem:[%s1 + $0xb0] sm:$0xff]
  %v62 = vld [vmem:[%s1 + $0xb8] sm:$0xff]
  %v63 = vld [vmem:[%s1 + $0xc0] sm:$0xff]
  %v64 = vld [vmem:[%s1 + $0xc8] sm:$0xff]
  %v65 = vld [vmem:[%s1 + $0xd0] sm:$0xff]
  %v66 = vld [vmem:[%s1 + $0xd8] sm:$0xff]
  %v67 = vld [vmem:[%s1 + $0xe0] sm:$0xff]
  %v68 = vld [vmem:[%s1 + $0xe8] sm:$0xff]
  %v69 = vld [vmem:[%s1 + $0xf0] sm:$0xff]
  %v70 = vld [vmem:[%s1 + $0xf8] sm:$0xff]
  %v71 = vld [vmem:[%s1 + $0x100] sm:$0xff]
  %v72 = vld [vmem:[%s1 + $0x108] sm:$0xff]
  %v73 = vld [vmem:[%s1 + $0x110] sm:$0xff]
  %v74 = vld [vmem:[%s1 + $0x118] sm:$0xff]
  %v75 = vld [vmem:[%s1 + $0x120] sm:$0xff]
  %v76 = vld [vmem:[%s1 + $0x128] sm:$0xff]
  %v77 = vld [vmem:[%s1 + $0x130] sm:$0xff]
  %v78 = vld [vmem:[%s1 + $0x138] sm:$0xff]
  %v79 = vld [vmem:[%s1 + $0x140] sm:$0xff]
  %v80 = vld [vmem:[%s1 + $0x148] sm:$0xff]
  %v81 = vld [vmem:[%s1 + $0x150] sm:$0xff]
  %v82 = vld [vmem:[%s1 + $0x158] sm:$0xff]
  %v83 = vld [vmem:[%s1 + $0x160] sm:$0xff]
  %v84 = vld [vmem:[%s1 + $0x168] sm:$0xff]
  %v85 = vld [vmem:[%s1 + $0x170] sm:$0xff]
  %v86 = vld [vmem:[%s1 + $0x178] sm:$0xff]
  %v87 = vld [vmem:[%s1 + $0x180] sm:$0xff]
  %v88 = vld [vmem:[%s1 + $0x188] sm:$0xff]
  %v89 = vld [vmem:[%s1 + $0x190] sm:$0xff]
  %v90 = vld [vmem:[%s1 + $0x198] sm:$0xff]
  %v91 = vld [vmem:[%s1 + $0x1a0] sm:$0xff]
  %v92 = vld [vmem:[%s1 + $0x1a8] sm:$0xff]
  %v93 = vld [vmem:[%s1 + $0x1b0] sm:$0xff]
  %v94 = vld [vmem:[%s1 + $0x1b8] sm:$0xff]
  %v95 = vld [vmem:[%s1 + $0x1c0] sm:$0xff]
  %v96 = vld [vmem:[%s1 + $0x1c8] sm:$0xff]
  %v97 = vld [vmem:[%s1 + $0x1d0] sm:$0xff]
  %v98 = vld [vmem:[%s1 + $0x1d8] sm:$0xff]
  %v99 = vld [vmem:[%s1 + $0x1e0] sm:$0xff]
  %v100 = vld [vmem:[%s1 + $0x1e8] sm:$0xff]
  %v101 = vld [vmem:[%s1 + $0x1f0] sm:$0xff]
  %v102 = vld [vmem:[%s1 + $0x1f8] sm:$0xff]
  %v103 = vld [vmem:[%s1 + $0x200] sm:$0xff]
  %v104 = vld [vmem:[%s1 + $0x208] sm:$0xff]
  %v105 = vld [vmem:[%s1 + $0x210] sm:$0xff]
  %v106 = vld [vmem:[%s1 + $0x218] sm:$0xff]
  %v107 = vld [vmem:[%s1 + $0x220] sm:$0xff]
  %v108 = vld [vmem:[%s1 + $0x228] sm:$0xff]
  %v109 = vld [vmem:[%s1 + $0x230] sm:$0xff]
  %v110 = vld [vmem:[%s1 + $0x238] sm:$0xff]
  %v111 = vld [vmem:[%s1 + $0x240] sm:$0xff]
  %v112 = vld [vmem:[%s1 + $0x248] sm:$0xff]
  %v113 = vld [vmem:[%s1 + $0x250] sm:$0xff]
  %v114 = vld [vmem:[%s1 + $0x258] sm:$0xff]
  %v115 = vld [vmem:[%s1 + $0x260] sm:$0xff]
  %v116 = vld [vmem:[%s1 + $0x268] sm:$0xff]
  %v117 = vld [vmem:[%s1 + $0x270] sm:$0xff]
  %v118 = vld [vmem:[%s1 + $0x278] sm:$0xff]
  %v119 = vld [vmem:[%s1 + $0x280] sm:$0xff]
  %v120 = vld [vmem:[%s1 + $0x288] sm:$0xff]
  %v121 = vld [vmem:[%s1 + $0x290] sm:$0xff]
  %v122 = vld [vmem:[%s1 + $0x298] sm:$0xff]
  %v123 = vld [vmem:[%s1 + $0x2a0] sm:$0xff]
  %v124 = vld [vmem:[%s1 + $0x2a8] sm:$0xff]
  %v125 = vld [vmem:[%s1 + $0x2b0] sm:$0xff]
  %v126 = vld [vmem:[%s1 + $0x2b8] sm:$0xff]
  %v127 = vld [vmem:[%s1 + $0x2c0] sm:$0xff]
  %v128 = vld [vmem:[%s1 + $0x2c8] sm:$0xff]
  %v129 = vld [vmem:[%s1 + $0x2d0] sm:$0xff]
  %v130 = vld [vmem:[%s1 + $0x2d8] sm:$0xff]
  %v131 = vld [vmem:[%s1 + $0x2e0] sm:$0xff]
  %v132 = vld [vmem:[%s1 + $0x2e8] sm:$0xff]
  %v133 = vld [vmem:[%s1 + $0x2f0] sm:$0xff]
  %v134 = vld [vmem:[%s1 + $0x2f8] sm:$0xff]
  %v135 = vld [vmem:[%s1 + $0x300] sm:$0xff]
  %v136 = vld [vmem:[%s1 + $0x308] sm:$0xff]
  %v137 = vld [vmem:[%s1 + $0x310] sm:$0xff]
  %v138 = vld [vmem:[%s1 + $0x318] sm:$0xff]
  %v139 = vld [vmem:[%s1 + $0x320] sm:$0xff]
  %v140 = vld [vmem:[%s1 + $0x328] sm:$0xff]
  %v141 = vld [vmem:[%s1 + $0x330] sm:$0xff]
  %v142 = vld [vmem:[%s1 + $0x338] sm:$0xff]
  %v143 = vld [vmem:[%s1 + $0x340] sm:$0xff]
  %v144 = vld [vmem:[%s1 + $0x348] sm:$0xff]
  %v145 = vld [vmem:[%s1 + $0x350] sm:$0xff]
  %v146 = vld [vmem:[%s1 + $0x358] sm:$0xff]
  %v147 = vld [vmem:[%s1 + $0x360] sm:$0xff]
  %v148 = vld [vmem:[%s1 + $0x368] sm:$0xff]
  %v149 = vld [vmem:[%s1 + $0x370] sm:$0xff]
  %v150 = vld [vmem:[%s1 + $0x378] sm:$0xff]
  %v151 = vld [vmem:[%s1 + $0x380] sm:$0xff]
  %v152 = vld [vmem:[%s1 + $0x388] sm:$0xff]
  %v153 = vld [vmem:[%s1 + $0x390] sm:$0xff]
  %v154 = vld [vmem:[%s1 + $0x398] sm:$0xff]
  %v155 = vld [vmem:[%s1 + $0x3a0] sm:$0xff]
  %v156 = vld [vmem:[%s1 + $0x3a8] sm:$0xff]
  %v157 = vld [vmem:[%s1 + $0x3b0] sm:$0xff]
  %v158 = vld [vmem:[%s1 + $0x3b8] sm:$0xff]
  %v159 = vld [vmem:[%s1 + $0x3c0] sm:$0xff]
  %v160 = vld [vmem:[%s1 + $0x3c8] sm:$0xff]
  %v161 = vld [vmem:[%s1 + $0x3d0] sm:$0xff]
  %v162 = vld [vmem:[%s1 + $0x3d8] sm:$0xff]
  %v163 = vld [vmem:[%s1 + $0x3e0] sm:$0xff]
  %v164 = vld [vmem:[%s1 + $0x3e8] sm:$0xff]
  %v165 = vld [vmem:[%s1 + $0x3f0] sm:$0xff]
  %v166 = vld [vmem:[%s1 + $0x3f8] sm:$0xff]
  %v167 = vld [vmem:[%s1 + $0x400] sm:$0xff]
  %v168 = vld [vmem:[%s1 + $0x408] sm:$0xff]
  %v169 = vld [vmem:[%s1 + $0x410] sm:$0xff]
  %v170 = vld [vmem:[%s1 + $0x418] sm:$0xff]
  %v171 = vld [vmem:[%s1 + $0x420] sm:$0xff]
  %v172 = vld [vmem:[%s1 + $0x428] sm:$0xff]
  %v173 = vld [vmem:[%s1 + $0x430] sm:$0xff]
  %v174 = vld [vmem:[%s1 + $0x438] sm:$0xff]
  %v175 = vld [vmem:[%s1 + $0x440] sm:$0xff]
  %v176 = vld [vmem:[%s1 + $0x448] sm:$0xff]
  %v177 = vld [vmem:[%s1 + $0x450] sm:$0xff]
  %v178 = vld [vmem:[%s1 + $0x458] sm:$0xff]
  %v179 = vld [vmem:[%s1 + $0x460] sm:$0xff]
  %v180 = vld [vmem:[%s1 + $0x468] sm:$0xff]
  %v181 = vld [vmem:[%s1 + $0x470] sm:$0xff]
  %v182 = vld [vmem:[%s1 + $0x478] sm:$0xff]
  %v183 = vld [vmem:[%s1 + $0x480] sm:$0xff]
  %v184 = vld [vmem:[%s1 + $0x488] sm:$0xff]
  %v185 = vld [vmem:[%s1 + $0x490] sm:$0xff]
  %v186 = vld [vmem:[%s1 + $0x498] sm:$0xff]
  %v187 = vld [vmem:[%s1 + $0x4a0] sm:$0xff]
  %v188 = vld [vmem:[%s1 + $0x4a8] sm:$0xff]
  %v189 = vld [vmem:[%s1 + $0x4b0] sm:$0xff]
  %v190 = vld [vmem:[%s1 + $0x4b8] sm:$0xff]
  %v191 = vld [vmem:[%s1 + $0x4c0] sm:$0xff]
  %v192 = vld [vmem:[%s1 + $0x4c8] sm:$0xff]
  %v193 = vld [vmem:[%s1 + $0x4d0] sm:$0xff]
  %v194 = vld [vmem:[%s1 + $0x4d8] sm:$0xff]
  %v195 = vld [vmem:[%s1 + $0x4e0] sm:$0xff]
  %v196 = vld [vmem:[%s1 + $0x4e8] sm:$0xff]
  %v197 = vld [vmem:[%s1 + $0x4f0] sm:$0xff]
  %v198 = vld [vmem:[%s1 + $0x4f8] sm:$0xff]
  %v199 = vld [vmem:[%s1 + $0x500] sm:$0xff]
  %v200 = vld [vmem:[%s1 + $0x508] sm:$0xff]
  %v201 = vld [vmem:[%s1 + $0x510] sm:$0xff]
  %v202 = vld [vmem:[%s1 + $0x518] sm:$0xff]
  %v203 = vld [vmem:[%s1 + $0x520] sm:$0xff]
  %v204 = vld [vmem:[%s1 + $0x528] sm:$0xff]
  %v205 = vld [vmem:[%s1 + $0x530] sm:$0xff]
  %v206 = vld [vmem:[%s1 + $0x538] sm:$0xff]
  %v207 = vld [vmem:[%s1 + $0x540] sm:$0xff]
  %v208 = vld [vmem:[%s1 + $0x548] sm:$0xff]
  %v209 = vld [vmem:[%s1 + $0x550] sm:$0xff]
  %v210 = vld [vmem:[%s1 + $0x558] sm:$0xff]
  %v211 = vld [vmem:[%s1 + $0x560] sm:$0xff]
  %v212 = vld [vmem:[%s1 + $0x568] sm:$0xff]
  %v213 = vld [vmem:[%s1 + $0x570] sm:$0xff]
  %v214 = vld [vmem:[%s1 + $0x578] sm:$0xff]
  %v215 = vld [vmem:[%s1 + $0x580] sm:$0xff]
  %v216 = vld [vmem:[%s1 + $0x588] sm:$0xff]
  %v217 = vld [vmem:[%s1 + $0x590] sm:$0xff]
  %v218 = vld [vmem:[%s1 + $0x598] sm:$0xff]
  %v219 = vld [vmem:[%s1 + $0x5a0] sm:$0xff]
  %v220 = vld [vmem:[%s1 + $0x5a8] sm:$0xff]
  %v221 = vld [vmem:[%s1 + $0x5b0] sm:$0xff]
  %v222 = vld [vmem:[%s1 + $0x5b8] sm:$0xff]
  %v223 = vld [vmem:[%s1 + $0x5c0] sm:$0xff]
  %v224 = vld [vmem:[%s1 + $0x5c8] sm:$0xff]
  %v225 = vld [vmem:[%s1 + $0x5d0] sm:$0xff]
  %v226 = vld [vmem:[%s1 + $0x5d8] sm:$0xff]
  %v227 = vld [vmem:[%s1 + $0x5e0] sm:$0xff]
  %v228 = vld [vmem:[%s1 + $0x5e8] sm:$0xff]
  %v229 = vld [vmem:[%s1 + $0x5f0] sm:$0xff]
  %v230 = vld [vmem:[%s1 + $0x5f8] sm:$0xff]
  %v231 = vld [vmem:[%s1 + $0x600] sm:$0xff]
  %v232 = vld [vmem:[%s1 + $0x608] sm:$0xff]
  %v233 = vld [vmem:[%s1 + $0x610] sm:$0xff]
  %v234 = vld [vmem:[%s1 + $0x618] sm:$0xff]
  %v235 = vld [vmem:[%s1 + $0x620] sm:$0xff]
  %v236 = vld [vmem:[%s1 + $0x628] sm:$0xff]
  %v237 = vld [vmem:[%s1 + $0x630] sm:$0xff]
  %v238 = vld [vmem:[%s1 + $0x638] sm:$0xff]
  %v239 = vld [vmem:[%s1 + $0x640] sm:$0xff]
  %v240 = vld [vmem:[%s1 + $0x648] sm:$0xff]
  %v241 = vld [vmem:[%s1 + $0x650] sm:$0xff]
  %v242 = vld [vmem:[%s1 + $0x658] sm:$0xff]
  %v243 = vld [vmem:[%s1 + $0x660] sm:$0xff]
  %v244 = vld [vmem:[%s1 + $0x668] sm:$0xff]
  %v245 = vld [vmem:[%s1 + $0x670] sm:$0xff]
  %v246 = vld [vmem:[%s1 + $0x678] sm:$0xff]
  %v247 = vld [vmem:[%s1 + $0x680] sm:$0xff]
  %v248 = vld [vmem:[%s1 + $0x688] sm:$0xff]
  %v249 = vld [vmem:[%s1 + $0x690] sm:$0xff]
  %v250 = vld [vmem:[%s1 + $0x698] sm:$0xff]
  %v251 = vld [vmem:[%s1 + $0x6a0] sm:$0xff]
  %v252 = vld [vmem:[%s1 + $0x6a8] sm:$0xff]
  %v253 = vld [vmem:[%s1 + $0x6b0] sm:$0xff]
  %v254 = vld [vmem:[%s1 + $0x6b8] sm:$0xff]
  %v255 = vld [vmem:[%s1 + $0x6c0] sm:$0xff]
  %v256 = vld [vmem:[%s1 + $0x6c8] sm:$0xff]
  %v257 = vld [vmem:[%s1 + $0x6d0] sm:$0xff]
  %v258 = vld [vmem:[%s1 + $0x6d8] sm:$0xff]
  %v259 = vld [vmem:[%s1 + $0x6e0] sm:$0xff]
  %v260 = vld [vmem:[%s1 + $0x6e8] sm:$0xff]
  %v261 = vld [vmem:[%s1 + $0x6f0] sm:$0xff]
  %v262 = vld [vmem:[%s1 + $0x6f8] sm:$0xff]
  %v263 = vld [vmem:[%s1 + $0x700] sm:$0xff]
  %v264 = vld [vmem:[%s1 + $0x708] sm:$0xff]
  %v265 = vld [vmem:[%s1 + $0x710] sm:$0xff]
  %v266 = vld [vmem:[%s1 + $0x718] sm:$0xff]
  %v267 = vld [vmem:[%s1 + $0x720] sm:$0xff]
  %v268 = vld [vmem:[%s1 + $0x728] sm:$0xff]
  %v269 = vld [vmem:[%s1 + $0x730] sm:$0xff]
  %v270 = vld [vmem:[%s1 + $0x738] sm:$0xff]
  %v271 = vld [vmem:[%s1 + $0x740] sm:$0xff]
  %v272 = vld [vmem:[%s1 + $0x748] sm:$0xff]
  %v273 = vld [vmem:[%s1 + $0x750] sm:$0xff]
  %v274 = vld [vmem:[%s1 + $0x758] sm:$0xff]
  %v275 = vld [vmem:[%s1 + $0x760] sm:$0xff]
  %v276 = vld [vmem:[%s1 + $0x768] sm:$0xff]
  %v277 = vld [vmem:[%s1 + $0x770] sm:$0xff]
  %v278 = vld [vmem:[%s1 + $0x778] sm:$0xff]
  %v279 = vld [vmem:[%s1 + $0x780] sm:$0xff]
  %v280 = vld [vmem:[%s1 + $0x788] sm:$0xff]
  %v281 = vld [vmem:[%s1 + $0x790] sm:$0xff]
  %v282 = vld [vmem:[%s1 + $0x798] sm:$0xff]
  %v283 = vld [vmem:[%s1 + $0x7a0] sm:$0xff]
  %v284 = vld [vmem:[%s1 + $0x7a8] sm:$0xff]
  %v285 = vld [vmem:[%s1 + $0x7b0] sm:$0xff]
  %v286 = vld [vmem:[%s1 + $0x7b8] sm:$0xff]
  %v287 = vld [vmem:[%s1 + $0x7c0] sm:$0xff]
  %v288 = vld [vmem:[%s1 + $0x7c8] sm:$0xff]
  %v289 = vld [vmem:[%s1 + $0x7d0] sm:$0xff]
  %v290 = vld [vmem:[%s1 + $0x7d8] sm:$0xff]
  %v291 = vld [vmem:[%s1 + $0x7e0] sm:$0xff]
  %v292 = vld [vmem:[%s1 + $0x7e8] sm:$0xff]
  %v293 = vld [vmem:[%s1 + $0x7f0] sm:$0xff]
  %v294 = vld [vmem:[%s1 + $0x7f8] sm:$0xff]
  %v295 = vld [vmem:[%s1 + $0x800] sm:$0xff]
  %v296 = vld [vmem:[%s1 + $0x808] sm:$0xff]
  %v297 = vld [vmem:[%s1 + $0x810] sm:$0xff]
  %v298 = vld [vmem:[%s1 + $0x818] sm:$0xff]
  %v299 = vld [vmem:[%s1 + $0x820] sm:$0xff]
  %v300 = vld [vmem:[%s1 + $0x828] sm:$0xff]
  %v301 = vld [vmem:[%s1 + $0x830] sm:$0xff]
  %v302 = vld [vmem:[%s1 + $0x838] sm:$0xff]
  %v303 = vld [vmem:[%s1 + $0x840] sm:$0xff]
  %v304 = vld [vmem:[%s1 + $0x848] sm:$0xff]
  %v305 = vld [vmem:[%s1 + $0x850] sm:$0xff]
  %v306 = vld [vmem:[%s1 + $0x858] sm:$0xff]
  %v307 = vld [vmem:[%s1 + $0x860] sm:$0xff]
  %v308 = vld [vmem:[%s1 + $0x868] sm:$0xff]
  %v309 = vld [vmem:[%s1 + $0x870] sm:$0xff]
  %v310 = vld [vmem:[%s1 + $0x878] sm:$0xff]
  %v311 = vld [vmem:[%s1 + $0x880] sm:$0xff]
  %v312 = vld [vmem:[%s1 + $0x888] sm:$0xff]
  %v313 = vld [vmem:[%s1 + $0x890] sm:$0xff]
  %v314 = vld [vmem:[%s1 + $0x898] sm:$0xff]
  %v315 = vld [vmem:[%s1 + $0x8a0] sm:$0xff]
  %v316 = vld [vmem:[%s1 + $0x8a8] sm:$0xff]
  %v317 = vld [vmem:[%s1 + $0x8b0] sm:$0xff]
  %v318 = vld [vmem:[%s1 + $0x8b8] sm:$0xff]
  %v319 = vld [vmem:[%s1 + $0x8c0] sm:$0xff]
  %v320 = vld [vmem:[%s1 + $0x8c8] sm:$0xff]
  %v321 = vld [vmem:[%s1 + $0x8d0] sm:$0xff]
  %v322 = vld [vmem:[%s1 + $0x8d8] sm:$0xff]
  %v323 = vld [vmem:[%s1 + $0x8e0] sm:$0xff]
  %v324 = vld [vmem:[%s1 + $0x8e8] sm:$0xff]
  %v325 = vld [vmem:[%s1 + $0x8f0] sm:$0xff]
  %v326 = vld [vmem:[%s1 + $0x8f8] sm:$0xff]
  %v327 = vld [vmem:[%s1 + $0x900] sm:$0xff]
  %v328 = vld [vmem:[%s1 + $0x908] sm:$0xff]
  %v329 = vld [vmem:[%s1 + $0x910] sm:$0xff]
  %v330 = vld [vmem:[%s1 + $0x918] sm:$0xff]
  %v331 = vld [vmem:[%s1 + $0x920] sm:$0xff]
  %v332 = vld [vmem:[%s1 + $0x928] sm:$0xff]
  %v333 = vld [vmem:[%s1 + $0x930] sm:$0xff]
  %v334 = vld [vmem:[%s1 + $0x938] sm:$0xff]
  %v335 = vld [vmem:[%s1 + $0x940] sm:$0xff]
  %v336 = vld [vmem:[%s1 + $0x948] sm:$0xff]
  %v337 = vld [vmem:[%s1 + $0x950] sm:$0xff]
  %v338 = vld [vmem:[%s1 + $0x958] sm:$0xff]
  %v339 = vld [vmem:[%s1 + $0x960] sm:$0xff]
  %v340 = vld [vmem:[%s1 + $0x968] sm:$0xff]
  %v341 = vld [vmem:[%s1 + $0x970] sm:$0xff]
  %v342 = vld [vmem:[%s1 + $0x978] sm:$0xff]
  %v343 = vld [vmem:[%s2] sm:$0x1]
  %v345 = vlaneseq
  %v346 = vshrl.u32 %v345, 7
  %v347 = vsub.s32 0, %v346
  %v348 = vrot.slane %v343, %v347
  %350 = vmatprep.subr.mxu0 0.0
  %351 = vmatpush1.msra.mxu0 %v39
  %352 = vmatprep.subr.mxu0 0.0
  %353 = vmatpush1.msra.mxu0 %v40
  %354 = vmatprep.subr.mxu0 0.0
  %355 = vmatpush1.msra.mxu0 %v41
  %356 = vmatprep.subr.mxu0 0.0
  %357 = vmatpush1.msra.mxu0 %v42
  %358 = vmatprep.subr.mxu0 0.0
  %359 = vmatpush1.msra.mxu0 %v43
  %360 = vmatprep.subr.mxu0 0.0
  %361 = vmatpush1.msra.mxu0 %v44
  %362 = vmatprep.subr.mxu0 0.0
  %363 = vmatpush1.msra.mxu0 %v45
  %364 = vmatprep.subr.mxu0 0.0
  %365 = vmatpush1.msra.mxu0 %v46
  %366 = vmatprep.subr.mxu0 0.0
  %367 = vmatpush1.msra.mxu0 %v47
  %368 = vmatprep.subr.mxu0 0.0
  %369 = vmatpush1.msra.mxu0 %v48
  %370 = vmatprep.subr.mxu0 0.0
  %371 = vmatpush1.msra.mxu0 %v49
  %372 = vmatprep.subr.mxu0 0.0
  %373 = vmatpush1.msra.mxu0 %v50
  %374 = vmatprep.subr.mxu0 0.0
  %375 = vmatpush1.msra.mxu0 %v51
  %376 = vmatprep.subr.mxu0 0.0
  %377 = vmatpush1.msra.mxu0 %v52
  %378 = vmatprep.subr.mxu0 0.0
  %379 = vmatpush1.msra.mxu0 %v53
  %380 = vmatprep.subr.mxu0 0.0
  %381 = vmatpush1.msra.mxu0 %v54
  %382 = vmatprep.subr.mxu0 0.0
  %383 = vmatpush1.msra.mxu0 %v55
  %384 = vmatprep.subr.mxu0 0.0
  %385 = vmatpush1.msra.mxu0 %v56
  %386 = vmatprep.subr.mxu0 0.0
  %387 = vmatpush1.msra.mxu0 %v57
  %388 = vmatprep.subr.mxu0 0.0
  %389 = vmatpush1.msra.mxu0 %v58
  %390 = vmatprep.subr.mxu0 0.0
  %391 = vmatpush1.msra.mxu0 %v59
  %392 = vmatprep.subr.mxu0 0.0
  %393 = vmatpush1.msra.mxu0 %v60
  %394 = vmatprep.subr.mxu0 0.0
  %395 = vmatpush1.msra.mxu0 %v61
  %396 = vmatprep.subr.mxu0 0.0
  %397 = vmatpush1.msra.mxu0 %v62
  %398 = vmatprep.subr.mxu0 0.0
  %399 = vmatpush1.msra.mxu0 %v63
  %400 = vmatprep.subr.mxu0 0.0
  %401 = vmatpush1.msra.mxu0 %v64
  %402 = vmatprep.subr.mxu0 0.0
  %403 = vmatpush1.msra.mxu0 %v65
  %404 = vmatprep.subr.mxu0 0.0
  %405 = vmatpush1.msra.mxu0 %v66
  %406 = vmatprep.subr.mxu0 0.0
  %407 = vmatpush1.msra.mxu0 %v67
  %408 = vmatprep.subr.mxu0 0.0
  %409 = vmatpush1.msra.mxu0 %v68
  %410 = vmatprep.subr.mxu0 0.0
  %411 = vmatpush1.msra.mxu0 %v69
  %412 = vmatprep.subr.mxu0 0.0
  %413 = vmatpush1.msra.mxu0 %v70
  %414 = vmatprep.mubr.f32.mxu0 %v21
  %415 = vmatmul.mubr.f32.gmra.mrb[0].mxu0 %v20
  %v416 = vpop.f32.mrb[0].mxu0
  %v417 = vadd.f32 %v348, %v416
  %v418 = vpop.f32.mrb[0].mxu0
  %419 = vdwg.mxu0
  %420 = vmatprep.subr.mxu0 0.0
  %421 = vmatpush1.msra.mxu0 %v71
  %422 = vmatprep.subr.mxu0 0.0
  %423 = vmatpush1.msra.mxu0 %v72
  %424 = vmatprep.subr.mxu0 0.0
  %425 = vmatpush1.msra.mxu0 %v73
  %426 = vmatprep.subr.mxu0 0.0
  %427 = vmatpush1.msra.mxu0 %v74
  %428 = vmatprep.subr.mxu0 0.0
  %429 = vmatpush1.msra.mxu0 %v75
  %430 = vmatprep.subr.mxu0 0.0
  %431 = vmatpush1.msra.mxu0 %v76
  %432 = vmatprep.subr.mxu0 0.0
  %433 = vmatpush1.msra.mxu0 %v77
  %434 = vmatprep.subr.mxu0 0.0
  %435 = vmatpush1.msra.mxu0 %v78
  %436 = vmatprep.subr.mxu0 0.0
  %437 = vmatpush1.msra.mxu0 %v79
  %438 = vmatprep.subr.mxu0 0.0
  %439 = vmatpush1.msra.mxu0 %v80
  %440 = vmatprep.subr.mxu0 0.0
  %441 = vmatpush1.msra.mxu0 %v81
  %442 = vmatprep.subr.mxu0 0.0
  %443 = vmatpush1.msra.mxu0 %v82
  %444 = vmatprep.subr.mxu0 0.0
  %445 = vmatpush1.msra.mxu0 %v83
  %446 = vmatprep.subr.mxu0 0.0
  %447 = vmatpush1.msra.mxu0 %v84
  %448 = vmatprep.subr.mxu0 0.0
  %449 = vmatpush1.msra.mxu0 %v85
  %450 = vmatprep.subr.mxu0 0.0
  %451 = vmatpush1.msra.mxu0 %v86
  %452 = vmatprep.subr.mxu0 0.0
  %453 = vmatpush1.msra.mxu0 %v87
  %454 = vmatprep.subr.mxu0 0.0
  %455 = vmatpush1.msra.mxu0 %v88
  %456 = vmatprep.subr.mxu0 0.0
  %457 = vmatpush1.msra.mxu0 %v89
  %458 = vmatprep.subr.mxu0 0.0
  %459 = vmatpush1.msra.mxu0 %v90
  %460 = vmatprep.subr.mxu0 0.0
  %461 = vmatpush1.msra.mxu0 %v91
  %462 = vmatprep.subr.mxu0 0.0
  %463 = vmatpush1.msra.mxu0 %v92
  %464 = vmatprep.subr.mxu0 0.0
  %465 = vmatpush1.msra.mxu0 %v93
  %466 = vmatprep.subr.mxu0 0.0
  %467 = vmatpush1.msra.mxu0 %v94
  %468 = vmatprep.subr.mxu0 0.0
  %469 = vmatpush1.msra.mxu0 %v95
  %470 = vmatprep.subr.mxu0 0.0
  %471 = vmatpush1.msra.mxu0 %v96
  %472 = vmatprep.subr.mxu0 0.0
  %473 = vmatpush1.msra.mxu0 %v97
  %474 = vmatprep.subr.mxu0 0.0
  %475 = vmatpush1.msra.mxu0 %v98
  %476 = vmatprep.subr.mxu0 0.0
  %477 = vmatpush1.msra.mxu0 %v99
  %478 = vmatprep.subr.mxu0 0.0
  %479 = vmatpush1.msra.mxu0 %v100
  %480 = vmatprep.subr.mxu0 0.0
  %481 = vmatpush1.msra.mxu0 %v101
  %482 = vmatprep.subr.mxu0 0.0
  %483 = vmatpush1.msra.mxu0 %v102
  %484 = vmatprep.mubr.f32.mxu0 %v23
  %485 = vmatmul.mubr.f32.gmra.mrb[0].mxu0 %v22
  %v486 = vpop.f32.mrb[0].mxu0
  %v487 = vadd.f32 %v417, %v486
  %v488 = vpop.f32.mrb[0].mxu0
  %489 = vdwg.mxu0
  %490 = vmatprep.subr.mxu0 0.0
  %491 = vmatpush1.msra.mxu0 %v103
  %492 = vmatprep.subr.mxu0 0.0
  %493 = vmatpush1.msra.mxu0 %v104
  %494 = vmatprep.subr.mxu0 0.0
  %495 = vmatpush1.msra.mxu0 %v105
  %496 = vmatprep.subr.mxu0 0.0
  %497 = vmatpush1.msra.mxu0 %v106
  %498 = vmatprep.subr.mxu0 0.0
  %499 = vmatpush1.msra.mxu0 %v107
  %500 = vmatprep.subr.mxu0 0.0
  %501 = vmatpush1.msra.mxu0 %v108
  %502 = vmatprep.subr.mxu0 0.0
  %503 = vmatpush1.msra.mxu0 %v109
  %504 = vmatprep.subr.mxu0 0.0
  %505 = vmatpush1.msra.mxu0 %v110
  %506 = vmatprep.subr.mxu0 0.0
  %507 = vmatpush1.msra.mxu0 %v111
  %508 = vmatprep.subr.mxu0 0.0
  %509 = vmatpush1.msra.mxu0 %v112
  %510 = vmatprep.subr.mxu0 0.0
  %511 = vmatpush1.msra.mxu0 %v113
  %512 = vmatprep.subr.mxu0 0.0
  %513 = vmatpush1.msra.mxu0 %v114
  %514 = vmatprep.subr.mxu0 0.0
  %515 = vmatpush1.msra.mxu0 %v115
  %516 = vmatprep.subr.mxu0 0.0
  %517 = vmatpush1.msra.mxu0 %v116
  %518 = vmatprep.subr.mxu0 0.0
  %519 = vmatpush1.msra.mxu0 %v117
  %520 = vmatprep.subr.mxu0 0.0
  %521 = vmatpush1.msra.mxu0 %v118
  %522 = vmatprep.subr.mxu0 0.0
  %523 = vmatpush1.msra.mxu0 %v119
  %524 = vmatprep.subr.mxu0 0.0
  %525 = vmatpush1.msra.mxu0 %v120
  %526 = vmatprep.subr.mxu0 0.0
  %527 = vmatpush1.msra.mxu0 %v121
  %528 = vmatprep.subr.mxu0 0.0
  %529 = vmatpush1.msra.mxu0 %v122
  %530 = vmatprep.subr.mxu0 0.0
  %531 = vmatpush1.msra.mxu0 %v123
  %532 = vmatprep.subr.mxu0 0.0
  %533 = vmatpush1.msra.mxu0 %v124
  %534 = vmatprep.subr.mxu0 0.0
  %535 = vmatpush1.msra.mxu0 %v125
  %536 = vmatprep.subr.mxu0 0.0
  %537 = vmatpush1.msra.mxu0 %v126
  %538 = vmatprep.subr.mxu0 0.0
  %539 = vmatpush1.msra.mxu0 %v127
  %540 = vmatprep.subr.mxu0 0.0
  %541 = vmatpush1.msra.mxu0 %v128
  %542 = vmatprep.subr.mxu0 0.0
  %543 = vmatpush1.msra.mxu0 %v129
  %544 = vmatprep.subr.mxu0 0.0
  %545 = vmatpush1.msra.mxu0 %v130
  %546 = vmatprep.subr.mxu0 0.0
  %547 = vmatpush1.msra.mxu0 %v131
  %548 = vmatprep.subr.mxu0 0.0
  %549 = vmatpush1.msra.mxu0 %v132
  %550 = vmatprep.subr.mxu0 0.0
  %551 = vmatpush1.msra.mxu0 %v133
  %552 = vmatprep.subr.mxu0 0.0
  %553 = vmatpush1.msra.mxu0 %v134
  %554 = vmatprep.mubr.f32.mxu0 %v25
  %555 = vmatmul.mubr.f32.gmra.mrb[0].mxu0 %v24
  %v556 = vpop.f32.mrb[0].mxu0
  %v557 = vadd.f32 %v487, %v556
  %v558 = vpop.f32.mrb[0].mxu0
  %559 = vdwg.mxu0
  %560 = vmatprep.subr.mxu0 0.0
  %561 = vmatpush1.msra.mxu0 %v135
  %562 = vmatprep.subr.mxu0 0.0
  %563 = vmatpush1.msra.mxu0 %v136
  %564 = vmatprep.subr.mxu0 0.0
  %565 = vmatpush1.msra.mxu0 %v137
  %566 = vmatprep.subr.mxu0 0.0
  %567 = vmatpush1.msra.mxu0 %v138
  %568 = vmatprep.subr.mxu0 0.0
  %569 = vmatpush1.msra.mxu0 %v139
  %570 = vmatprep.subr.mxu0 0.0
  %571 = vmatpush1.msra.mxu0 %v140
  %572 = vmatprep.subr.mxu0 0.0
  %573 = vmatpush1.msra.mxu0 %v141
  %574 = vmatprep.subr.mxu0 0.0
  %575 = vmatpush1.msra.mxu0 %v142
  %576 = vmatprep.subr.mxu0 0.0
  %577 = vmatpush1.msra.mxu0 %v143
  %578 = vmatprep.subr.mxu0 0.0
  %579 = vmatpush1.msra.mxu0 %v144
  %580 = vmatprep.subr.mxu0 0.0
  %581 = vmatpush1.msra.mxu0 %v145
  %582 = vmatprep.subr.mxu0 0.0
  %583 = vmatpush1.msra.mxu0 %v146
  %584 = vmatprep.subr.mxu0 0.0
  %585 = vmatpush1.msra.mxu0 %v147
  %586 = vmatprep.subr.mxu0 0.0
  %587 = vmatpush1.msra.mxu0 %v148
  %588 = vmatprep.subr.mxu0 0.0
  %589 = vmatpush1.msra.mxu0 %v149
  %590 = vmatprep.subr.mxu0 0.0
  %591 = vmatpush1.msra.mxu0 %v150
  %592 = vmatprep.subr.mxu0 0.0
  %593 = vmatpush1.msra.mxu0 %v151
  %594 = vmatprep.subr.mxu0 0.0
  %595 = vmatpush1.msra.mxu0 %v152
  %596 = vmatprep.subr.mxu0 0.0
  %597 = vmatpush1.msra.mxu0 %v153
  %598 = vmatprep.subr.mxu0 0.0
  %599 = vmatpush1.msra.mxu0 %v154
  %600 = vmatprep.subr.mxu0 0.0
  %601 = vmatpush1.msra.mxu0 %v155
  %602 = vmatprep.subr.mxu0 0.0
  %603 = vmatpush1.msra.mxu0 %v156
  %604 = vmatprep.subr.mxu0 0.0
  %605 = vmatpush1.msra.mxu0 %v157
  %606 = vmatprep.subr.mxu0 0.0
  %607 = vmatpush1.msra.mxu0 %v158
  %608 = vmatprep.subr.mxu0 0.0
  %609 = vmatpush1.msra.mxu0 %v159
  %610 = vmatprep.subr.mxu0 0.0
  %611 = vmatpush1.msra.mxu0 %v160
  %612 = vmatprep.subr.mxu0 0.0
  %613 = vmatpush1.msra.mxu0 %v161
  %614 = vmatprep.subr.mxu0 0.0
  %615 = vmatpush1.msra.mxu0 %v162
  %616 = vmatprep.subr.mxu0 0.0
  %617 = vmatpush1.msra.mxu0 %v163
  %618 = vmatprep.subr.mxu0 0.0
  %619 = vmatpush1.msra.mxu0 %v164
  %620 = vmatprep.subr.mxu0 0.0
  %621 = vmatpush1.msra.mxu0 %v165
  %622 = vmatprep.subr.mxu0 0.0
  %623 = vmatpush1.msra.mxu0 %v166
  %624 = vmatprep.mubr.f32.mxu0 %v27
  %625 = vmatmul.mubr.f32.gmra.mrb[0].mxu0 %v26
  %v626 = vpop.f32.mrb[0].mxu0
  %v627 = vadd.f32 %v557, %v626
  %v628 = vpop.f32.mrb[0].mxu0
  %629 = vdwg.mxu0
  %630 = vmatprep.subr.mxu0 0.0
  %631 = vmatpush1.msra.mxu0 %v167
  %632 = vmatprep.subr.mxu0 0.0
  %633 = vmatpush1.msra.mxu0 %v168
  %634 = vmatprep.subr.mxu0 0.0
  %635 = vmatpush1.msra.mxu0 %v169
  %636 = vmatprep.subr.mxu0 0.0
  %637 = vmatpush1.msra.mxu0 %v170
  %638 = vmatprep.subr.mxu0 0.0
  %639 = vmatpush1.msra.mxu0 %v171
  %640 = vmatprep.subr.mxu0 0.0
  %641 = vmatpush1.msra.mxu0 %v172
  %642 = vmatprep.subr.mxu0 0.0
  %643 = vmatpush1.msra.mxu0 %v173
  %644 = vmatprep.subr.mxu0 0.0
  %645 = vmatpush1.msra.mxu0 %v174
  %646 = vmatprep.subr.mxu0 0.0
  %647 = vmatpush1.msra.mxu0 %v175
  %648 = vmatprep.subr.mxu0 0.0
  %649 = vmatpush1.msra.mxu0 %v176
  %650 = vmatprep.subr.mxu0 0.0
  %651 = vmatpush1.msra.mxu0 %v177
  %652 = vmatprep.subr.mxu0 0.0
  %653 = vmatpush1.msra.mxu0 %v178
  %654 = vmatprep.subr.mxu0 0.0
  %655 = vmatpush1.msra.mxu0 %v179
  %656 = vmatprep.subr.mxu0 0.0
  %657 = vmatpush1.msra.mxu0 %v180
  %658 = vmatprep.subr.mxu0 0.0
  %659 = vmatpush1.msra.mxu0 %v181
  %660 = vmatprep.subr.mxu0 0.0
  %661 = vmatpush1.msra.mxu0 %v182
  %662 = vmatprep.subr.mxu0 0.0
  %663 = vmatpush1.msra.mxu0 %v183
  %664 = vmatprep.subr.mxu0 0.0
  %665 = vmatpush1.msra.mxu0 %v184
  %666 = vmatprep.subr.mxu0 0.0
  %667 = vmatpush1.msra.mxu0 %v185
  %668 = vmatprep.subr.mxu0 0.0
  %669 = vmatpush1.msra.mxu0 %v186
  %670 = vmatprep.subr.mxu0 0.0
  %671 = vmatpush1.msra.mxu0 %v187
  %672 = vmatprep.subr.mxu0 0.0
  %673 = vmatpush1.msra.mxu0 %v188
  %674 = vmatprep.subr.mxu0 0.0
  %675 = vmatpush1.msra.mxu0 %v189
  %676 = vmatprep.subr.mxu0 0.0
  %677 = vmatpush1.msra.mxu0 %v190
  %678 = vmatprep.subr.mxu0 0.0
  %679 = vmatpush1.msra.mxu0 %v191
  %680 = vmatprep.subr.mxu0 0.0
  %681 = vmatpush1.msra.mxu0 %v192
  %682 = vmatprep.subr.mxu0 0.0
  %683 = vmatpush1.msra.mxu0 %v193
  %684 = vmatprep.subr.mxu0 0.0
  %685 = vmatpush1.msra.mxu0 %v194
  %686 = vmatprep.subr.mxu0 0.0
  %687 = vmatpush1.msra.mxu0 %v195
  %688 = vmatprep.subr.mxu0 0.0
  %689 = vmatpush1.msra.mxu0 %v196
  %690 = vmatprep.subr.mxu0 0.0
  %691 = vmatpush1.msra.mxu0 %v197
  %692 = vmatprep.subr.mxu0 0.0
  %693 = vmatpush1.msra.mxu0 %v198
  %694 = vmatprep.mubr.f32.mxu0 %v29
  %695 = vmatmul.mubr.f32.gmra.mrb[0].mxu0 %v28
  %v696 = vpop.f32.mrb[0].mxu0
  %v697 = vadd.f32 %v627, %v696
  %v698 = vpop.f32.mrb[0].mxu0
  %699 = vdwg.mxu0
  %700 = vmatprep.subr.mxu0 0.0
  %701 = vmatpush1.msra.mxu0 %v199
  %702 = vmatprep.subr.mxu0 0.0
  %703 = vmatpush1.msra.mxu0 %v200
  %704 = vmatprep.subr.mxu0 0.0
  %705 = vmatpush1.msra.mxu0 %v201
  %706 = vmatprep.subr.mxu0 0.0
  %707 = vmatpush1.msra.mxu0 %v202
  %708 = vmatprep.subr.mxu0 0.0
  %709 = vmatpush1.msra.mxu0 %v203
  %710 = vmatprep.subr.mxu0 0.0
  %711 = vmatpush1.msra.mxu0 %v204
  %712 = vmatprep.subr.mxu0 0.0
  %713 = vmatpush1.msra.mxu0 %v205
  %714 = vmatprep.subr.mxu0 0.0
  %715 = vmatpush1.msra.mxu0 %v206
  %716 = vmatprep.subr.mxu0 0.0
  %717 = vmatpush1.msra.mxu0 %v207
  %718 = vmatprep.subr.mxu0 0.0
  %719 = vmatpush1.msra.mxu0 %v208
  %720 = vmatprep.subr.mxu0 0.0
  %721 = vmatpush1.msra.mxu0 %v209
  %722 = vmatprep.subr.mxu0 0.0
  %723 = vmatpush1.msra.mxu0 %v210
  %724 = vmatprep.subr.mxu0 0.0
  %725 = vmatpush1.msra.mxu0 %v211
  %726 = vmatprep.subr.mxu0 0.0
  %727 = vmatpush1.msra.mxu0 %v212
  %728 = vmatprep.subr.mxu0 0.0
  %729 = vmatpush1.msra.mxu0 %v213
  %730 = vmatprep.subr.mxu0 0.0
  %731 = vmatpush1.msra.mxu0 %v214
  %732 = vmatprep.subr.mxu0 0.0
  %733 = vmatpush1.msra.mxu0 %v215
  %734 = vmatprep.subr.mxu0 0.0
  %735 = vmatpush1.msra.mxu0 %v216
  %736 = vmatprep.subr.mxu0 0.0
  %737 = vmatpush1.msra.mxu0 %v217
  %738 = vmatprep.subr.mxu0 0.0
  %739 = vmatpush1.msra.mxu0 %v218
  %740 = vmatprep.subr.mxu0 0.0
  %741 = vmatpush1.msra.mxu0 %v219
  %742 = vmatprep.subr.mxu0 0.0
  %743 = vmatpush1.msra.mxu0 %v220
  %744 = vmatprep.subr.mxu0 0.0
  %745 = vmatpush1.msra.mxu0 %v221
  %746 = vmatprep.subr.mxu0 0.0
  %747 = vmatpush1.msra.mxu0 %v222
  %748 = vmatprep.subr.mxu0 0.0
  %749 = vmatpush1.msra.mxu0 %v223
  %750 = vmatprep.subr.mxu0 0.0
  %751 = vmatpush1.msra.mxu0 %v224
  %752 = vmatprep.subr.mxu0 0.0
  %753 = vmatpush1.msra.mxu0 %v225
  %754 = vmatprep.subr.mxu0 0.0
  %755 = vmatpush1.msra.mxu0 %v226
  %756 = vmatprep.subr.mxu0 0.0
  %757 = vmatpush1.msra.mxu0 %v227
  %758 = vmatprep.subr.mxu0 0.0
  %759 = vmatpush1.msra.mxu0 %v228
  %760 = vmatprep.subr.mxu0 0.0
  %761 = vmatpush1.msra.mxu0 %v229
  %762 = vmatprep.subr.mxu0 0.0
  %763 = vmatpush1.msra.mxu0 %v230
  %764 = vmatprep.mubr.f32.mxu0 %v31
  %765 = vmatmul.mubr.f32.gmra.mrb[0].mxu0 %v30
  %v766 = vpop.f32.mrb[0].mxu0
  %v767 = vadd.f32 %v697, %v766
  %v768 = vpop.f32.mrb[0].mxu0
  %769 = vdwg.mxu0
  %770 = vmatprep.subr.mxu0 0.0
  %771 = vmatpush1.msra.mxu0 %v231
  %772 = vmatprep.subr.mxu0 0.0
  %773 = vmatpush1.msra.mxu0 %v232
  %774 = vmatprep.subr.mxu0 0.0
  %775 = vmatpush1.msra.mxu0 %v233
  %776 = vmatprep.subr.mxu0 0.0
  %777 = vmatpush1.msra.mxu0 %v234
  %778 = vmatprep.subr.mxu0 0.0
  %779 = vmatpush1.msra.mxu0 %v235
  %780 = vmatprep.subr.mxu0 0.0
  %781 = vmatpush1.msra.mxu0 %v236
  %782 = vmatprep.subr.mxu0 0.0
  %783 = vmatpush1.msra.mxu0 %v237
  %784 = vmatprep.subr.mxu0 0.0
  %785 = vmatpush1.msra.mxu0 %v238
  %786 = vmatprep.subr.mxu0 0.0
  %787 = vmatpush1.msra.mxu0 %v239
  %788 = vmatprep.subr.mxu0 0.0
  %789 = vmatpush1.msra.mxu0 %v240
  %790 = vmatprep.subr.mxu0 0.0
  %791 = vmatpush1.msra.mxu0 %v241
  %792 = vmatprep.subr.mxu0 0.0
  %793 = vmatpush1.msra.mxu0 %v242
  %794 = vmatprep.subr.mxu0 0.0
  %795 = vmatpush1.msra.mxu0 %v243
  %796 = vmatprep.subr.mxu0 0.0
  %797 = vmatpush1.msra.mxu0 %v244
  %798 = vmatprep.subr.mxu0 0.0
  %799 = vmatpush1.msra.mxu0 %v245
  %800 = vmatprep.subr.mxu0 0.0
  %801 = vmatpush1.msra.mxu0 %v246
  %802 = vmatprep.subr.mxu0 0.0
  %803 = vmatpush1.msra.mxu0 %v247
  %804 = vmatprep.subr.mxu0 0.0
  %805 = vmatpush1.msra.mxu0 %v248
  %806 = vmatprep.subr.mxu0 0.0
  %807 = vmatpush1.msra.mxu0 %v249
  %808 = vmatprep.subr.mxu0 0.0
  %809 = vmatpush1.msra.mxu0 %v250
  %810 = vmatprep.subr.mxu0 0.0
  %811 = vmatpush1.msra.mxu0 %v251
  %812 = vmatprep.subr.mxu0 0.0
  %813 = vmatpush1.msra.mxu0 %v252
  %814 = vmatprep.subr.mxu0 0.0
  %815 = vmatpush1.msra.mxu0 %v253
  %816 = vmatprep.subr.mxu0 0.0
  %817 = vmatpush1.msra.mxu0 %v254
  %818 = vmatprep.subr.mxu0 0.0
  %819 = vmatpush1.msra.mxu0 %v255
  %820 = vmatprep.subr.mxu0 0.0
  %821 = vmatpush1.msra.mxu0 %v256
  %822 = vmatprep.subr.mxu0 0.0
  %823 = vmatpush1.msra.mxu0 %v257
  %824 = vmatprep.subr.mxu0 0.0
  %825 = vmatpush1.msra.mxu0 %v258
  %826 = vmatprep.subr.mxu0 0.0
  %827 = vmatpush1.msra.mxu0 %v259
  %828 = vmatprep.subr.mxu0 0.0
  %829 = vmatpush1.msra.mxu0 %v260
  %830 = vmatprep.subr.mxu0 0.0
  %831 = vmatpush1.msra.mxu0 %v261
  %832 = vmatprep.subr.mxu0 0.0
  %833 = vmatpush1.msra.mxu0 %v262
  %834 = vmatprep.mubr.f32.mxu0 %v33
  %835 = vmatmul.mubr.f32.gmra.mrb[0].mxu0 %v32
  %v836 = vpop.f32.mrb[0].mxu0
  %v837 = vadd.f32 %v767, %v836
  %v838 = vpop.f32.mrb[0].mxu0
  %839 = vdwg.mxu0
  %840 = vmatprep.subr.mxu0 0.0
  %841 = vmatpush1.msra.mxu0 %v263
  %842 = vmatprep.subr.mxu0 0.0
  %843 = vmatpush1.msra.mxu0 %v264
  %844 = vmatprep.subr.mxu0 0.0
  %845 = vmatpush1.msra.mxu0 %v265
  %846 = vmatprep.subr.mxu0 0.0
  %847 = vmatpush1.msra.mxu0 %v266
  %848 = vmatprep.subr.mxu0 0.0
  %849 = vmatpush1.msra.mxu0 %v267
  %850 = vmatprep.subr.mxu0 0.0
  %851 = vmatpush1.msra.mxu0 %v268
  %852 = vmatprep.subr.mxu0 0.0
  %853 = vmatpush1.msra.mxu0 %v269
  %854 = vmatprep.subr.mxu0 0.0
  %855 = vmatpush1.msra.mxu0 %v270
  %856 = vmatprep.subr.mxu0 0.0
  %857 = vmatpush1.msra.mxu0 %v271
  %858 = vmatprep.subr.mxu0 0.0
  %859 = vmatpush1.msra.mxu0 %v272
  %860 = vmatprep.subr.mxu0 0.0
  %861 = vmatpush1.msra.mxu0 %v273
  %862 = vmatprep.subr.mxu0 0.0
  %863 = vmatpush1.msra.mxu0 %v274
  %864 = vmatprep.subr.mxu0 0.0
  %865 = vmatpush1.msra.mxu0 %v275
  %866 = vmatprep.subr.mxu0 0.0
  %867 = vmatpush1.msra.mxu0 %v276
  %868 = vmatprep.subr.mxu0 0.0
  %869 = vmatpush1.msra.mxu0 %v277
  %870 = vmatprep.subr.mxu0 0.0
  %871 = vmatpush1.msra.mxu0 %v278
  %872 = vmatprep.subr.mxu0 0.0
  %873 = vmatpush1.msra.mxu0 %v279
  %874 = vmatprep.subr.mxu0 0.0
  %875 = vmatpush1.msra.mxu0 %v280
  %876 = vmatprep.subr.mxu0 0.0
  %877 = vmatpush1.msra.mxu0 %v281
  %878 = vmatprep.subr.mxu0 0.0
  %879 = vmatpush1.msra.mxu0 %v282
  %880 = vmatprep.subr.mxu0 0.0
  %881 = vmatpush1.msra.mxu0 %v283
  %882 = vmatprep.subr.mxu0 0.0
  %883 = vmatpush1.msra.mxu0 %v284
  %884 = vmatprep.subr.mxu0 0.0
  %885 = vmatpush1.msra.mxu0 %v285
  %886 = vmatprep.subr.mxu0 0.0
  %887 = vmatpush1.msra.mxu0 %v286
  %888 = vmatprep.subr.mxu0 0.0
  %889 = vmatpush1.msra.mxu0 %v287
  %890 = vmatprep.subr.mxu0 0.0
  %891 = vmatpush1.msra.mxu0 %v288
  %892 = vmatprep.subr.mxu0 0.0
  %893 = vmatpush1.msra.mxu0 %v289
  %894 = vmatprep.subr.mxu0 0.0
  %895 = vmatpush1.msra.mxu0 %v290
  %896 = vmatprep.subr.mxu0 0.0
  %897 = vmatpush1.msra.mxu0 %v291
  %898 = vmatprep.subr.mxu0 0.0
  %899 = vmatpush1.msra.mxu0 %v292
  %900 = vmatprep.subr.mxu0 0.0
  %901 = vmatpush1.msra.mxu0 %v293
  %902 = vmatprep.subr.mxu0 0.0
  %903 = vmatpush1.msra.mxu0 %v294
  %904 = vmatprep.mubr.f32.mxu0 %v35
  %905 = vmatmul.mubr.f32.gmra.mrb[0].mxu0 %v34
  %v906 = vpop.f32.mrb[0].mxu0
  %v907 = vadd.f32 %v837, %v906
  %v908 = vpop.f32.mrb[0].mxu0
  %909 = vdwg.mxu0
  %910 = vmatprep.subr.mxu0 0.0
  %911 = vmatpush1.msra.mxu0 %v295
  %912 = vmatprep.subr.mxu0 0.0
  %913 = vmatpush1.msra.mxu0 %v296
  %914 = vmatprep.subr.mxu0 0.0
  %915 = vmatpush1.msra.mxu0 %v297
  %916 = vmatprep.subr.mxu0 0.0
  %917 = vmatpush1.msra.mxu0 %v298
  %918 = vmatprep.subr.mxu0 0.0
  %919 = vmatpush1.msra.mxu0 %v299
  %920 = vmatprep.subr.mxu0 0.0
  %921 = vmatpush1.msra.mxu0 %v300
  %922 = vmatprep.subr.mxu0 0.0
  %923 = vmatpush1.msra.mxu0 %v301
  %924 = vmatprep.subr.mxu0 0.0
  %925 = vmatpush1.msra.mxu0 %v302
  %926 = vmatprep.subr.mxu0 0.0
  %927 = vmatpush1.msra.mxu0 %v303
  %928 = vmatprep.subr.mxu0 0.0
  %929 = vmatpush1.msra.mxu0 %v304
  %930 = vmatprep.subr.mxu0 0.0
  %931 = vmatpush1.msra.mxu0 %v305
  %932 = vmatprep.subr.mxu0 0.0
  %933 = vmatpush1.msra.mxu0 %v306
  %934 = vmatprep.subr.mxu0 0.0
  %935 = vmatpush1.msra.mxu0 %v307
  %936 = vmatprep.subr.mxu0 0.0
  %937 = vmatpush1.msra.mxu0 %v308
  %938 = vmatprep.subr.mxu0 0.0
  %939 = vmatpush1.msra.mxu0 %v309
  %940 = vmatprep.subr.mxu0 0.0
  %941 = vmatpush1.msra.mxu0 %v310
  %942 = vmatprep.subr.mxu0 0.0
  %943 = vmatpush1.msra.mxu0 %v311
  %944 = vmatprep.subr.mxu0 0.0
  %945 = vmatpush1.msra.mxu0 %v312
  %946 = vmatprep.subr.mxu0 0.0
  %947 = vmatpush1.msra.mxu0 %v313
  %948 = vmatprep.subr.mxu0 0.0
  %949 = vmatpush1.msra.mxu0 %v314
  %950 = vmatprep.subr.mxu0 0.0
  %951 = vmatpush1.msra.mxu0 %v315
  %952 = vmatprep.subr.mxu0 0.0
  %953 = vmatpush1.msra.mxu0 %v316
  %954 = vmatprep.subr.mxu0 0.0
  %955 = vmatpush1.msra.mxu0 %v317
  %956 = vmatprep.subr.mxu0 0.0
  %957 = vmatpush1.msra.mxu0 %v318
  %958 = vmatprep.subr.mxu0 0.0
  %959 = vmatpush1.msra.mxu0 %v319
  %960 = vmatprep.subr.mxu0 0.0
  %961 = vmatpush1.msra.mxu0 %v320
  %962 = vmatprep.subr.mxu0 0.0
  %963 = vmatpush1.msra.mxu0 %v321
  %964 = vmatprep.subr.mxu0 0.0
  %965 = vmatpush1.msra.mxu0 %v322
  %966 = vmatprep.subr.mxu0 0.0
  %967 = vmatpush1.msra.mxu0 %v323
  %968 = vmatprep.subr.mxu0 0.0
  %969 = vmatpush1.msra.mxu0 %v324
  %970 = vmatprep.subr.mxu0 0.0
  %971 = vmatpush1.msra.mxu0 %v325
  %972 = vmatprep.subr.mxu0 0.0
  %973 = vmatpush1.msra.mxu0 %v326
  %974 = vmatprep.mubr.f32.mxu0 %v37
  %975 = vmatmul.mubr.f32.gmra.mrb[0].mxu0 %v36
  %v976 = vpop.f32.mrb[0].mxu0
  %v977 = vadd.f32 %v907, %v976
  %v978 = vpop.f32.mrb[0].mxu0
  %979 = vdwg.mxu0
  %980 = vmatprep.subr.mxu0 0.0
  %981 = vmatpush1.msra.mxu0 %v327
  %982 = vmatprep.subr.mxu0 0.0
  %983 = vmatpush1.msra.mxu0 %v328
  %984 = vmatprep.subr.mxu0 0.0
  %985 = vmatpush1.msra.mxu0 %v329
  %986 = vmatprep.subr.mxu0 0.0
  %987 = vmatpush1.msra.mxu0 %v330
  %988 = vmatprep.subr.mxu0 0.0
  %989 = vmatpush1.msra.mxu0 %v331
  %990 = vmatprep.subr.mxu0 0.0
  %991 = vmatpush1.msra.mxu0 %v332
  %992 = vmatprep.subr.mxu0 0.0
  %993 = vmatpush1.msra.mxu0 %v333
  %994 = vmatprep.subr.mxu0 0.0
  %995 = vmatpush1.msra.mxu0 %v334
  %996 = vmatprep.subr.mxu0 0.0
  %997 = vmatpush1.msra.mxu0 %v335
  %998 = vmatprep.subr.mxu0 0.0
  %999 = vmatpush1.msra.mxu0 %v336
  %1000 = vmatprep.subr.mxu0 0.0
  %1001 = vmatpush1.msra.mxu0 %v337
  %1002 = vmatprep.subr.mxu0 0.0
  %1003 = vmatpush1.msra.mxu0 %v338
  %1004 = vmatprep.subr.mxu0 0.0
  %1005 = vmatpush1.msra.mxu0 %v339
  %1006 = vmatprep.subr.mxu0 0.0
  %1007 = vmatpush1.msra.mxu0 %v340
  %1008 = vmatprep.subr.mxu0 0.0
  %1009 = vmatpush1.msra.mxu0 %v341
  %1010 = vmatprep.subr.mxu0 0.0
  %1011 = vmatpush1.msra.mxu0 %v342
  %1012 = vmatprep.subr.mxu0 0.0
  %1013 = vmatpush1.msra.mxu0 0.0
  %1014 = vmatprep.subr.mxu0 0.0
  %1015 = vmatpush1.msra.mxu0 0.0
  %1016 = vmatprep.subr.mxu0 0.0
  %1017 = vmatpush1.msra.mxu0 0.0
  %1018 = vmatprep.subr.mxu0 0.0
  %1019 = vmatpush1.msra.mxu0 0.0
  %1020 = vmatprep.subr.mxu0 0.0
  %1021 = vmatpush1.msra.mxu0 0.0
  %1022 = vmatprep.subr.mxu0 0.0
  %1023 = vmatpush1.msra.mxu0 0.0
  %1024 = vmatprep.subr.mxu0 0.0
  %1025 = vmatpush1.msra.mxu0 0.0
  %1026 = vmatprep.subr.mxu0 0.0
  %1027 = vmatpush1.msra.mxu0 0.0
  %1028 = vmatprep.subr.mxu0 0.0
  %1029 = vmatpush1.msra.mxu0 0.0
  %1030 = vmatprep.subr.mxu0 0.0
  %1031 = vmatpush1.msra.mxu0 0.0
  %1032 = vmatprep.subr.mxu0 0.0
  %1033 = vmatpush1.msra.mxu0 0.0
  %1034 = vmatprep.subr.mxu0 0.0
  %1035 = vmatpush1.msra.mxu0 0.0
  %1036 = vmatprep.subr.mxu0 0.0
  %1037 = vmatpush1.msra.mxu0 0.0
  %1038 = vmatprep.subr.mxu0 0.0
  %1039 = vmatpush1.msra.mxu0 0.0
  %1040 = vmatprep.subr.mxu0 0.0
  %1041 = vmatpush1.msra.mxu0 0.0
  %1042 = vmatprep.subr.mxu0 0.0
  %1043 = vmatpush1.msra.mxu0 0.0
  %1044 = vmatprep.mubr.f32.mxu0 0.0
  %1045 = vmatmul.mubr.f32.gmra.mrb[0].mxu0 %v38
  %v1046 = vpop.f32.mrb[0].mxu0
  %v1047 = vadd.f32 %v977, %v1046
  %v1048 = vpop.f32.mrb[0].mxu0
  %1049 = vdwg.mxu0
  %v1050 = vmax.f32 %v1047, 0.0
  %v1051 = vld [vmem:[%s3] sm:$0xff]
  %v1052 = vld [vmem:[%s3 + $0x8] sm:$0xff]
  %v1053 = vld [vmem:[%s3 + $0x10] sm:$0xff]
  %v1054 = vld [vmem:[%s3 + $0x18] sm:$0xff]
  %v1055 = vld [vmem:[%s3 + $0x20] sm:$0xff]
  %v1056 = vld [vmem:[%s3 + $0x28] sm:$0xff]
  %v1057 = vld [vmem:[%s3 + $0x30] sm:$0xff]
  %v1058 = vld [vmem:[%s3 + $0x38] sm:$0xff]
  %v1059 = vld [vmem:[%s3 + $0x40] sm:$0xff]
  %v1060 = vld [vmem:[%s3 + $0x48] sm:$0xff]
  %v1061 = vld [vmem:[%s3 + $0x50] sm:$0xff]
  %v1062 = vld [vmem:[%s3 + $0x58] sm:$0xff]
  %v1063 = vld [vmem:[%s3 + $0x60] sm:$0xff]
  %v1064 = vld [vmem:[%s3 + $0x68] sm:$0xff]
  %v1065 = vld [vmem:[%s3 + $0x70] sm:$0xff]
  %v1066 = vld [vmem:[%s3 + $0x78] sm:$0xff]
  %v1067 = vld [vmem:[%s4] sm:$0x1]
  %v1069 = vlaneseq
  %v1070 = vshrl.u32 %v1069, 7
  %v1071 = vsub.s32 0, %v1070
  %v1072 = vrot.slane %v1067, %v1071
  %1074 = vmatprep.subr.mxu0 0.0
  %1075 = vmatpush1.msra.mxu0 %v1051
  %1076 = vmatprep.subr.mxu0 0.0
  %1077 = vmatpush1.msra.mxu0 %v1052
  %1078 = vmatprep.subr.mxu0 0.0
  %1079 = vmatpush1.msra.mxu0 %v1053
  %1080 = vmatprep.subr.mxu0 0.0
  %1081 = vmatpush1.msra.mxu0 %v1054
  %1082 = vmatprep.subr.mxu0 0.0
  %1083 = vmatpush1.msra.mxu0 %v1055
  %1084 = vmatprep.subr.mxu0 0.0
  %1085 = vmatpush1.msra.mxu0 %v1056
  %1086 = vmatprep.subr.mxu0 0.0
  %1087 = vmatpush1.msra.mxu0 %v1057
  %1088 = vmatprep.subr.mxu0 0.0
  %1089 = vmatpush1.msra.mxu0 %v1058
  %1090 = vmatprep.subr.mxu0 0.0
  %1091 = vmatpush1.msra.mxu0 %v1059
  %1092 = vmatprep.subr.mxu0 0.0
  %1093 = vmatpush1.msra.mxu0 %v1060
  %1094 = vmatprep.subr.mxu0 0.0
  %1095 = vmatpush1.msra.mxu0 %v1061
  %1096 = vmatprep.subr.mxu0 0.0
  %1097 = vmatpush1.msra.mxu0 %v1062
  %1098 = vmatprep.subr.mxu0 0.0
  %1099 = vmatpush1.msra.mxu0 %v1063
  %1100 = vmatprep.subr.mxu0 0.0
  %1101 = vmatpush1.msra.mxu0 %v1064
  %1102 = vmatprep.subr.mxu0 0.0
  %1103 = vmatpush1.msra.mxu0 %v1065
  %1104 = vmatprep.subr.mxu0 0.0
  %1105 = vmatpush1.msra.mxu0 %v1066
  %1106 = vmatprep.subr.mxu0 0.0
  %1107 = vmatpush1.msra.mxu0 0.0
  %1108 = vmatprep.subr.mxu0 0.0
  %1109 = vmatpush1.msra.mxu0 0.0
  %1110 = vmatprep.subr.mxu0 0.0
  %1111 = vmatpush1.msra.mxu0 0.0
  %1112 = vmatprep.subr.mxu0 0.0
  %1113 = vmatpush1.msra.mxu0 0.0
  %1114 = vmatprep.subr.mxu0 0.0
  %1115 = vmatpush1.msra.mxu0 0.0
  %1116 = vmatprep.subr.mxu0 0.0
  %1117 = vmatpush1.msra.mxu0 0.0
  %1118 = vmatprep.subr.mxu0 0.0
  %1119 = vmatpush1.msra.mxu0 0.0
  %1120 = vmatprep.subr.mxu0 0.0
  %1121 = vmatpush1.msra.mxu0 0.0
  %1122 = vmatprep.subr.mxu0 0.0
  %1123 = vmatpush1.msra.mxu0 0.0
  %1124 = vmatprep.subr.mxu0 0.0
  %1125 = vmatpush1.msra.mxu0 0.0
  %1126 = vmatprep.subr.mxu0 0.0
  %1127 = vmatpush1.msra.mxu0 0.0
  %1128 = vmatprep.subr.mxu0 0.0
  %1129 = vmatpush1.msra.mxu0 0.0
  %1130 = vmatprep.subr.mxu0 0.0
  %1131 = vmatpush1.msra.mxu0 0.0
  %1132 = vmatprep.subr.mxu0 0.0
  %1133 = vmatpush1.msra.mxu0 0.0
  %1134 = vmatprep.subr.mxu0 0.0
  %1135 = vmatpush1.msra.mxu0 0.0
  %1136 = vmatprep.subr.mxu0 0.0
  %1137 = vmatpush1.msra.mxu0 0.0
  %1138 = vmatprep.mubr.f32.mxu0 0.0
  %1139 = vmatmul.mubr.f32.gmra.mrb[0].mxu0 %v1050
  %v1140 = vpop.f32.mrb[0].mxu0
  %v1141 = vadd.f32 %v1072, %v1140
  %v1142 = vpop.f32.mrb[0].mxu0
  %1143 = vdwg.mxu0
  %v1144 = vlaneseq
  %v1145 = vand.u32 %v1144, 127
  %vm1146 = vcmp.lt.s32.totalorder %v1145, 3
  %v1147 = vsel %vm1146, %v1141, -inf
  %1148 = vmax.xlane.f32.xlu0 %v1147
  %v1149 = vpop.xlane.xlu0 %1148
  %v1150 = vsub.f32 %v1147, %v1149
  %v1151 = vmul.f32 %v1150, 1.442695
  %v1152 = vpow.pop %v1151
  %v1153 = vsel %vm1146, %v1152, 0.0
  %1154 = vadd.xlane.f32.xlu0 %v1153
  %v1155 = vpop.xlane.xlu0 %1154
  %v1156 = vlog2.pop %v1155
  %v1157 = vmul.f32 %v1156, 0.6931472
  %v1158 = vadd.f32 %v1157, %v1149
  %v1159 = vsub.f32 %v1141, %v1158
  %1160 = vst [vmem:[%s5] sm:$0xff] %v1159
  // Predicated region
  $region22: #{mlp_forward.5} parent=0 // pred_check
    _
  $region23: #{mlp_forward.5} parent=0 // pred_check_branch
    %1162 = sbr.rel (0) target = $region25
  $region24: #{mlp_forward.5} parent=0 // pred_region
    _
  $region25: #{mlp_forward.5} parent=0 // pred_fallthru
    _
  // Predicated region
  $region26: #{mlp_forward.5} parent=0 // pred_check
    _
  $region27: #{mlp_forward.5} parent=0 // pred_check_branch
    %1164 = sbr.rel (0) target = $region29
  $region28: #{mlp_forward.5} parent=0 // pred_region
    _
  $region29: #{mlp_forward.5} parent=0 // pred_fallthru
    _

// kernel: mlp_forward.4
$region0: #{mlp_forward.4}
  #allocation0 [shape = 'u32[]', space=smem, size = 0x4, offset = 0x4, fixed_abs, tag = 'smem constant byte address 0x4 - core index']
  #allocation1 [shape = 'u32[144,128]{1,0:T(1,128)}', space=vmem, size = 0x12000, scoped, tag = 'internal scratch']
  %s0 = inlined_call_operand.vmem [shape: f32[8,4864], index: 0, kind: input, shape index: {}]
  %s1 = inlined_call_operand.hbm [shape: f32[4864,2432], index: 1, kind: input, shape index: {}]
  %s2 = inlined_call_operand.vmem [shape: f32[1,2432], index: 2, kind: input, shape index: {}]
  %s3 = inlined_call_operand.vmem [shape: f32[8,2432], index: 3, kind: output, shape index: {}]
  %s4 = sld [smem:[#allocation0]]
  $region57: #{mlp_forward.4} parent=0
    _
  %s6 = ssub.s32 1, %s4
  %s7 = scalar_select 0, %s6, %s4
  $region1: #{mlp_forward.4} parent=0
    #allocation2 [shape = 'u8[4980736]{0}', space=vmem, size = 0x4c0000, scoped, tag = 'input window, operand 1']
    #allocation3 [shape = 's32[2]{0}', space=sflag, size = 0x8, scoped, tag = 'scoped memory for mlp_forward.4']
    %8 = vsyncpa [#allocation3], 0
    %s9 = scalar_lea.sflag [#allocation3], 1
    %10 = vsyncpa %s9, 0
    loop: start=0, step=1, limit=21
    $region2: #{mlp_forward.4} parent=1 // loop_pre_header
      _
    $region3: #{mlp_forward.4} parent=1 // loop_header
      %s12 = sphi 0, %s16
      %p13 = scmp.ge.s32.totalorder %s12, 21
      %s19 = sphi 0, %s38
      %s20 = sphi 0, %s34
      %s21 = sphi 0, %s30
      %s22 = sphi 0, %s19
      %s23 = sphi 0, %s20
      %s24 = sphi 0, %s21
      %s25 = sphi 0, %s22
      %s26 = sphi 0, %s23
      %s27 = sphi 0, %s24
      %s43 = sphi 0, %s45
      %s46 = sphi 0, %s43
      %s47 = sphi 0, %s46
      %s63 = sphi 0, %s47
      %s71 = sphi 0, %s73
      %s74 = sphi 0, %s71
      %s75 = sphi 0, %s74
      %s91 = sphi 0, %s75
      %s97 = sphi 0, %s99
      %s100 = sphi 0, %s97
      %s101 = sphi 0, %s100
      %s117 = sphi 0, %s101
      %s125 = sphi 0, %s127
      %s128 = sphi 0, %s125
      %s129 = sphi 0, %s128
      %s145 = sphi 0, %s129
    $region4: #{mlp_forward.4} parent=1 // loop_header_branch
      %15 = sbr.rel (%p13) target = $region8
    $region5: #{mlp_forward.4} parent=1 // loop_body
      %s17 = ssub.s32 %s12, 1
      %s18 = ssub.s32 %s12, 2
      %s28 = sadd.s32 1, %s21
      %p29 = scmp.ge.s32.totalorder %s28, 1
      %s30 = scalar_select %p29, 0, %s28
      %s31 = sadd.s32 1, %s20
      %s32 = scalar_select %p29, %s31, %s20
      %p33 = scmp.ge.s32.totalorder %s32, 19
      %s34 = scalar_select %p33, 0, %s32
      %s35 = sadd.s32 1, %s19
      %s36 = scalar_select %p33, %s35, %s19
      %p37 = scmp.ge.s32.totalorder %s36, 1
      %s38 = scalar_select %p37, 0, %s36
      %s39 = ssub.s32 %s19, %s38
      %s40 = ssub.s32 %s21, %s30
      %s41 = sor.u32 %s39, %s40
      %p42 = scmp.eq.s32.totalorder %s41, 0
      %s44 = sadd.s32 %s43, 1
      %s45 = scalar_select %p42, %s43, %s44
      %p48 = pneg %p42
      %p49 = scmp.eq.s32.totalorder %s12, 18
      %p50 = por %p48, %p49
      %p51 = scmp.ne.s32.totalorder %s43, %s46
      %p52 = scmp.eq.s32.totalorder %s12, 0
      %p53 = por %p51, %p52
      %p54 = scmp.ne.s32.totalorder %s43, %s46
      %p55 = scmp.eq.s32.totalorder %s17, 18
      %p56 = por %p54, %p55
      %p57 = scmp.ne.s32.totalorder %s46, %s47
      %p58 = scmp.eq.s32.totalorder %s17, 0
      %p59 = por %p57, %p58
      %p60 = scmp.ne.s32.totalorder %s46, %s47
      %p61 = scmp.eq.s32.totalorder %s18, 18
      %p62 = por %p60, %p61
      %p64 = scmp.ne.s32.totalorder %s47, %s63
      %p65 = scmp.eq.s32.totalorder %s18, 0
      %p66 = por %p64, %p65
      %s67 = ssub.s32 %s21, %s30
      %s68 = ssub.s32 %s20, %s34
      %s69 = sor.u32 %s67, %s68
      %p70 = scmp.eq.s32.totalorder %s69, 0
      %s72 = sadd.s32 %s71, 1
      %s73 = scalar_select %p70, %s71, %s72
      %p76 = pneg %p70
      %p77 = scmp.eq.s32.totalorder %s12, 18
      %p78 = por %p76, %p77
      %p79 = scmp.ne.s32.totalorder %s71, %s74
      %p80 = scmp.eq.s32.totalorder %s12, 0
      %p81 = por %p79, %p80
      %p82 = scmp.ne.s32.totalorder %s71, %s74
      %p83 = scmp.eq.s32.totalorder %s17, 18
      %p84 = por %p82, %p83
      %p85 = scmp.ne.s32.totalorder %s74, %s75
      %p86 = scmp.eq.s32.totalorder %s17, 0
      %p87 = por %p85, %p86
      %p88 = scmp.ne.s32.totalorder %s74, %s75
      %p89 = scmp.eq.s32.totalorder %s18, 18
      %p90 = por %p88, %p89
      %p92 = scmp.ne.s32.totalorder %s75, %s91
      %p93 = scmp.eq.s32.totalorder %s18, 0
      %p94 = por %p92, %p93
      %s95 = ssub.s32 %s20, %s34
      %p96 = scmp.eq.s32.totalorder %s95, 0
      %s98 = sadd.s32 %s97, 1
      %s99 = scalar_select %p96, %s97, %s98
      %p102 = pneg %p96
      %p103 = scmp.eq.s32.totalorder %s12, 18
      %p104 = por %p102, %p103
      %p105 = scmp.ne.s32.totalorder %s97, %s100
      %p106 = scmp.eq.s32.totalorder %s12, 0
      %p107 = por %p105, %p106
      %p108 = scmp.ne.s32.totalorder %s97, %s100
      %p109 = scmp.eq.s32.totalorder %s17, 18
      %p110 = por %p108, %p109
      %p111 = scmp.ne.s32.totalorder %s100, %s101
      %p112 = scmp.eq.s32.totalorder %s17, 0
      %p113 = por %p111, %p112
      %p114 = scmp.ne.s32.totalorder %s100, %s101
      %p115 = scmp.eq.s32.totalorder %s18, 18
      %p116 = por %p114, %p115
      %p118 = scmp.ne.s32.totalorder %s101, %s117
      %p119 = scmp.eq.s32.totalorder %s18, 0
      %p120 = por %p118, %p119
      %s121 = ssub.s32 %s19, %s38
      %s122 = ssub.s32 %s20, %s34
      %s123 = sor.u32 %s121, %s122
      %p124 = scmp.eq.s32.totalorder %s123, 0
      %s126 = sadd.s32 %s125, 1
      %s127 = scalar_select %p124, %s125, %s126
      %p130 = pneg %p124
      %p131 = scmp.eq.s32.totalorder %s12, 18
      %p132 = por %p130, %p131
      %p133 = scmp.ne.s32.totalorder %s125, %s128
      %p134 = scmp.eq.s32.totalorder %s12, 0
      %p135 = por %p133, %p134
      %p136 = scmp.ne.s32.totalorder %s125, %s128
      %p137 = scmp.eq.s32.totalorder %s17, 18
      %p138 = por %p136, %p137
      %p139 = scmp.ne.s32.totalorder %s128, %s129
      %p140 = scmp.eq.s32.totalorder %s17, 0
      %p141 = por %p139, %p140
      %p142 = scmp.ne.s32.totalorder %s128, %s129
      %p143 = scmp.eq.s32.totalorder %s18, 18
      %p144 = por %p142, %p143
      %p146 = scmp.ne.s32.totalorder %s129, %s145
      %p147 = scmp.eq.s32.totalorder %s18, 0
      %p148 = por %p146, %p147
      %p149 = scmp.le.s32.totalorder 1, %s12
      %p150 = scmp.lt.s32.totalorder %s12, 20
      %p151 = pnand %p149, %p150
      %p152 = pneg %p151
      // Predicated region
      $region9: #{mlp_forward.4} parent=5 // pred_check
        _
      $region10: #{mlp_forward.4} parent=5 // pred_check_branch
        %154 = sbr.rel (%p151) target = $region12
      $region11: #{mlp_forward.4} parent=5 // pred_region
        %s155 = ssub.s32 %s12, 1
        // Predicated region
        $region13: #{mlp_forward.4} parent=11 // pred_check
          %p156 = pneg %p59
        $region14: #{mlp_forward.4} parent=11 // pred_check_branch
          %158 = sbr.rel (%p156) target = $region16
        $region15: #{mlp_forward.4} parent=11 // pred_region
          %s159 = smul.u32 38, %s24
          %p160 = scmp.lt.s32.totalorder %s22, 0
          %s161 = scalar_select %p160, %s22, 0
          %p162 = scmp.lt.s32.totalorder %s159, 37
          %s163 = scalar_select %p162, %s159, 37
          %s164 = smul.addr %s161, 38
          %s165 = sadd.s32 %s163, %s164
          %s166 = smul.addr %s165, 8
          %s167 = scalar_lea.vmem %s0, %s166
          %s168 = smul.u32 38, %s24
        $region16: #{mlp_forward.4} parent=11 // pred_fallthru
          _
      $region12: #{mlp_forward.4} parent=5 // pred_fallthru
        _
      %p169 = scmp.lt.s32.totalorder %s12, 19
      // Predicated region
      $region17: #{mlp_forward.4} parent=5 // pred_check
        %p170 = pneg %p169
      $region18: #{mlp_forward.4} parent=5 // pred_check_branch
        %172 = sbr.rel (%p170) target = $region20
      $region19: #{mlp_forward.4} parent=5 // pred_region
        // Predicated region
        $region21: #{mlp_forward.4} parent=19 // pred_check
          %p173 = pneg %p81
        $region22: #{mlp_forward.4} parent=19 // pred_check_branch
          %175 = sbr.rel (%p173) target = $region24
        $region23: #{mlp_forward.4} parent=19 // pred_region
          %s176 = sand.u32 %s71, 1
          %s177 = scalar_lea.sflag [#allocation3], %s176
          %s178 = sand.u32 %s71, 1
          %s179 = smul.addr %s178, 4864
          %s180 = scalar_lea.vmem [#allocation2], %s179
          %s181 = smul.u32 608, %s21
          %s183 = ssub.s32 77824, 77824
          %184 = vsyncadd %s177, %s183
          %s185 = smul.addr %s181, 19
          %s186 = sadd.s32 %s20, %s185
          %s187 = smul.addr %s186, 128
          %s188 = scalar_lea.hbm %s1, %s187
          %s189 = sshll.u32 %s180, 4
          %s190 = int_to_ptr.vmem [resolvable:$true] %s189
          %195 = dma.hbm_to_vmem [thread:$0]  %s188, 77824, %s190, %s177, 2432, 128, 8
        $region24: #{mlp_forward.4} parent=19 // pred_fallthru
          _
        // Predicated region
        $region25: #{mlp_forward.4} parent=19 // pred_check
          %p196 = pneg %p107
        $region26: #{mlp_forward.4} parent=19 // pred_check_branch
          %198 = sbr.rel (%p196) target = $region28
        $region27: #{mlp_forward.4} parent=19 // pred_region
          %p199 = scmp.lt.s32.totalorder %s20, 18
          %s200 = scalar_select %p199, %s20, 18
          %s201 = scalar_lea.vmem %s2, %s200
        $region28: #{mlp_forward.4} parent=19 // pred_fallthru
          _
      $region20: #{mlp_forward.4} parent=5 // pred_fallthru
        _
      %p202 = scmp.le.s32.totalorder 1, %s12
      %p203 = scmp.lt.s32.totalorder %s12, 20
      %p204 = pnand %p202, %p203
      %p205 = pneg %p204
      // Predicated region
      $region29: #{mlp_forward.4} parent=5 // pred_check
        _
      $region30: #{mlp_forward.4} parent=5 // pred_check_branch
        %207 = sbr.rel (%p204) target = $region32
      $region31: #{mlp_forward.4} parent=5 // pred_region
        %s208 = ssub.s32 %s12, 1
        %s209 = sand.u32 %s74, 1
        %s210 = scalar_lea.sflag [#allocation3], %s209
        %s211 = sand.u32 %s74, 1
        %s212 = smul.addr %s211, 4864
        %s213 = scalar_lea.vmem [#allocation2], %s212
        // Predicated region
        $region33: #{mlp_forward.4} parent=31 // pred_check
          %p214 = pneg %p87
        $region34: #{mlp_forward.4} parent=31 // pred_check_branch
          %216 = sbr.rel (%p214) target = $region36
        $region35: #{mlp_forward.4} parent=31 // pred_region
          %217 = dma.done %s210, 77824
        $region36: #{mlp_forward.4} parent=31 // pred_fallthru
          _
        %s218 = smul.u32 38, %s24
        %p219 = scmp.lt.s32.totalorder %s22, 0
        %s220 = scalar_select %p219, %s22, 0
        %p221 = scmp.lt.s32.totalorder %s218, 37
        %s222 = scalar_select %p221, %s218, 37
        %s223 = smul.addr %s220, 38
        %s224 = sadd.s32 %s222, %s223
        %s225 = smul.addr %s224, 8
        %s226 = scalar_lea.vmem %s0, %s225
        %p227 = pneg %p59
        %p228 = pneg %p56
        %s229 = sand.u32 %s74, 1
        %s230 = scalar_lea.sflag [#allocation3], %s229
        %s231 = sand.u32 %s74, 1
        %s232 = smul.addr %s231, 4864
        %s233 = scalar_lea.vmem [#allocation2], %s232
        %p234 = pneg %p87
        %p235 = pneg %p84
        %p236 = scmp.lt.s32.totalorder %s23, 18
        %s237 = scalar_select %p236, %s23, 18
        %s238 = scalar_lea.vmem %s2, %s237
        %p239 = pneg %p113
        %p240 = pneg %p110
        %p241 = pneg %p141
        %p242 = pneg %p138
        %p243 = scmp.lt.s32.totalorder %s22, 0
        %s244 = scalar_select %p243, %s22, 0
        %p245 = scmp.lt.s32.totalorder %s23, 18
        %s246 = scalar_select %p245, %s23, 18
        %s247 = smul.addr %s244, 19
        %s248 = sadd.s32 %s246, %s247
        %s249 = smul.addr %s248, 8
        %s250 = scalar_lea.vmem %s3, %s249
        %s251 = smul.u32 38, %s24
        %p252 = scmp.lt.s32.totalorder %s22, 0
        %s253 = scalar_select %p252, %s22, 0
        %p254 = scmp.lt.s32.totalorder %s251, 37
        %s255 = scalar_select %p254, %s251, 37
        %s256 = smul.addr %s253, 38
        %s257 = sadd.s32 %s255, %s256
        %s258 = smul.addr %s257, 8
        %s259 = scalar_lea.vmem %s0, %s258
        %s260 = smul.u32 38, %s24
        %s261 = smul.u32 608, %s24
        %p262 = scmp.lt.s32.totalorder %s23, 18
        %s263 = scalar_select %p262, %s23, 18
        %s264 = scalar_lea.vmem %s2, %s263
        %p265 = scmp.lt.s32.totalorder %s22, 0
        %s266 = scalar_select %p265, %s22, 0
        %p267 = scmp.lt.s32.totalorder %s23, 18
        %s268 = scalar_select %p267, %s23, 18
        %s269 = smul.addr %s266, 19
        %s270 = sadd.s32 %s268, %s269
        %s271 = smul.addr %s270, 8
        %s272 = scalar_lea.vmem %s3, %s271
        %p273 = scmp.eq.s32.totalorder %s24, 0
        // Predicated region
        $region37: #{mlp_forward.4} parent=31 // pred_check
          %p274 = pneg %p273
        $region38: #{mlp_forward.4} parent=31 // pred_check_branch
          %276 = sbr.rel (%p274) target = $region40
        $region39: #{mlp_forward.4} parent=31 // pred_region
          %277 = vst [vmem:[%s272] sm:$0xff] 0.0
        $region40: #{mlp_forward.4} parent=31 // pred_fallthru
          _
        %v278 = vld [vmem:[%s272] sm:$0xff]
        %v279 = vld [vmem:[%s259] sm:$0xff]
        %v280 = vld [vmem:[%s259 + $0x8] sm:$0xff]
        %v281 = vld [vmem:[%s259 + $0x10] sm:$0xff]
        %v282 = vld [vmem:[%s259 + $0x18] sm:$0xff]
        %v283 = vld [vmem:[%s259 + $0x20] sm:$0xff]
        %v284 = vld [vmem:[%s259 + $0x28] sm:$0xff]
        %v285 = vld [vmem:[%s259 + $0x30] sm:$0xff]
        %v286 = vld [vmem:[%s259 + $0x38] sm:$0xff]
        %v287 = vld [vmem:[%s259 + $0x40] sm:$0xff]
        %v288 = vld [vmem:[%s259 + $0x48] sm:$0xff]
        %v289 = vld [vmem:[%s259 + $0x50] sm:$0xff]
        %v290 = vld [vmem:[%s259 + $0x58] sm:$0xff]
        %v291 = vld [vmem:[%s259 + $0x60] sm:$0xff]
        %v292 = vld [vmem:[%s259 + $0x68] sm:$0xff]
        %v293 = vld [vmem:[%s259 + $0x70] sm:$0xff]
        %v294 = vld [vmem:[%s259 + $0x78] sm:$0xff]
        %v295 = vld [vmem:[%s259 + $0x80] sm:$0xff]
        %v296 = vld [vmem:[%s259 + $0x88] sm:$0xff]
        %v297 = vld [vmem:[%s259 + $0x90] sm:$0xff]
        %v298 = vld [vmem:[%s259 + $0x98] sm:$0xff]
        %v299 = vld [vmem:[%s259 + $0xa0] sm:$0xff]
        %v300 = vld [vmem:[%s259 + $0xa8] sm:$0xff]
        %v301 = vld [vmem:[%s259 + $0xb0] sm:$0xff]
        %v302 = vld [vmem:[%s259 + $0xb8] sm:$0xff]
        %v303 = vld [vmem:[%s259 + $0xc0] sm:$0xff]
        %v304 = vld [vmem:[%s259 + $0xc8] sm:$0xff]
        %v305 = vld [vmem:[%s259 + $0xd0] sm:$0xff]
        %v306 = vld [vmem:[%s259 + $0xd8] sm:$0xff]
        %v307 = vld [vmem:[%s259 + $0xe0] sm:$0xff]
        %v308 = vld [vmem:[%s259 + $0xe8] sm:$0xff]
        %v309 = vld [vmem:[%s259 + $0xf0] sm:$0xff]
        %v310 = vld [vmem:[%s259 + $0xf8] sm:$0xff]
        %v311 = vld [vmem:[%s259 + $0x100] sm:$0xff]
        %v312 = vld [vmem:[%s259 + $0x108] sm:$0xff]
        %v313 = vld [vmem:[%s259 + $0x110] sm:$0xff]
        %v314 = vld [vmem:[%s259 + $0x118] sm:$0xff]
        %v315 = vld [vmem:[%s259 + $0x120] sm:$0xff]
        %v316 = vld [vmem:[%s259 + $0x128] sm:$0xff]
        %v317 = vld [vmem:[%s213] sm:$0xff]
        %v318 = vld [vmem:[%s213 + $0x8] sm:$0xff]
        %v319 = vld [vmem:[%s213 + $0x10] sm:$0xff]
        %v320 = vld [vmem:[%s213 + $0x18] sm:$0xff]
        %v321 = vld [vmem:[%s213 + $0x20] sm:$0xff]
        %v322 = vld [vmem:[%s213 + $0x28] sm:$0xff]
        %v323 = vld [vmem:[%s213 + $0x30] sm:$0xff]
        %v324 = vld [vmem:[%s213 + $0x38] sm:$0xff]
        %v325 = vld [vmem:[%s213 + $0x40] sm:$0xff]
        %v326 = vld [vmem:[%s213 + $0x48] sm:$0xff]
        %v327 = vld [vmem:[%s213 + $0x50] sm:$0xff]
        %v328 = vld [vmem:[%s213 + $0x58] sm:$0xff]
        %v329 = vld [vmem:[%s213 + $0x60] sm:$0xff]
        %v330 = vld [vmem:[%s213 + $0x68] sm:$0xff]
        %v331 = vld [vmem:[%s213 + $0x70] sm:$0xff]
        %v332 = vld [vmem:[%s213 + $0x78] sm:$0xff]
        %v333 = vld [vmem:[%s213 + $0x80] sm:$0xff]
        %v334 = vld [vmem:[%s213 + $0x88] sm:$0xff]
        %v335 = vld [vmem:[%s213 + $0x90] sm:$0xff]
        %v336 = vld [vmem:[%s213 + $0x98] sm:$0xff]
        %v337 = vld [vmem:[%s213 + $0xa0] sm:$0xff]
        %v338 = vld [vmem:[%s213 + $0xa8] sm:$0xff]
        %v339 = vld [vmem:[%s213 + $0xb0] sm:$0xff]
        %v340 = vld [vmem:[%s213 + $0xb8] sm:$0xff]
        %v341 = vld [vmem:[%s213 + $0xc0] sm:$0xff]
        %v342 = vld [vmem:[%s213 + $0xc8] sm:$0xff]
        %v343 = vld [vmem:[%s213 + $0xd0] sm:$0xff]
        %v344 = vld [vmem:[%s213 + $0xd8] sm:$0xff]
        %v345 = vld [vmem:[%s213 + $0xe0] sm:$0xff]
        %v346 = vld [vmem:[%s213 + $0xe8] sm:$0xff]
        %v347 = vld [vmem:[%s213 + $0xf0] sm:$0xff]
        %v348 = vld [vmem:[%s213 + $0xf8] sm:$0xff]
        %v349 = vld [vmem:[%s213 + $0x100] sm:$0xff]
        %v350 = vld [vmem:[%s213 + $0x108] sm:$0xff]
        %v351 = vld [vmem:[%s213 + $0x110] sm:$0xff]
        %v352 = vld [vmem:[%s213 + $0x118] sm:$0xff]
        %v353 = vld [vmem:[%s213 + $0x120] sm:$0xff]
        %v354 = vld [vmem:[%s213 + $0x128] sm:$0xff]
        %v355 = vld [vmem:[%s213 + $0x130] sm:$0xff]
        %v356 = vld [vmem:[%s213 + $0x138] sm:$0xff]
        %v357 = vld [vmem:[%s213 + $0x140] sm:$0xff]
        %v358 = vld [vmem:[%s213 + $0x148] sm:$0xff]
        %v359 = vld [vmem:[%s213 + $0x150] sm:$0xff]
        %v360 = vld [vmem:[%s213 + $0x158] sm:$0xff]
        %v361 = vld [vmem:[%s213 + $0x160] sm:$0xff]
        %v362 = vld [vmem:[%s213 + $0x168] sm:$0xff]
        %v363 = vld [vmem:[%s213 + $0x170] sm:$0xff]
        %v364 = vld [vmem:[%s213 + $0x178] sm:$0xff]
        %v365 = vld [vmem:[%s213 + $0x180] sm:$0xff]
        %v366 = vld [vmem:[%s213 + $0x188] sm:$0xff]
        %v367 = vld [vmem:[%s213 + $0x190] sm:$0xff]
        %v368 = vld [vmem:[%s213 + $0x198] sm:$0xff]
        %v369 = vld [vmem:[%s213 + $0x1a0] sm:$0xff]
        %v370 = vld [vmem:[%s213 + $0x1a8] sm:$0xff]
        %v371 = vld [vmem:[%s213 + $0x1b0] sm:$0xff]
        %v372 = vld [vmem:[%s213 + $0x1b8] sm:$0xff]
        %v373 = vld [vmem:[%s213 + $0x1c0] sm:$0xff]
        %v374 = vld [vmem:[%s213 + $0x1c8] sm:$0xff]
        %v375 = vld [vmem:[%s213 + $0x1d0] sm:$0xff]
        %v376 = vld [vmem:[%s213 + $0x1d8] sm:$0xff]
        %v377 = vld [vmem:[%s213 + $0x1e0] sm:$0xff]
        %v378 = vld [vmem:[%s213 + $0x1e8] sm:$0xff]
        %v379 = vld [vmem:[%s213 + $0x1f0] sm:$0xff]
        %v380 = vld [vmem:[%s213 + $0x1f8] sm:$0xff]
        %v381 = vld [vmem:[%s213 + $0x200] sm:$0xff]
        %v382 = vld [vmem:[%s213 + $0x208] sm:$0xff]
        %v383 = vld [vmem:[%s213 + $0x210] sm:$0xff]
        %v384 = vld [vmem:[%s213 + $0x218] sm:$0xff]
        %v385 = vld [vmem:[%s213 + $0x220] sm:$0xff]
        %v386 = vld [vmem:[%s213 + $0x228] sm:$0xff]
        %v387 = vld [vmem:[%s213 + $0x230] sm:$0xff]
        %v388 = vld [vmem:[%s213 + $0x238] sm:$0xff]
        %v389 = vld [vmem:[%s213 + $0x240] sm:$0xff]
        %v390 = vld [vmem:[%s213 + $0x248] sm:$0xff]
        %v391 = vld [vmem:[%s213 + $0x250] sm:$0xff]
        %v392 = vld [vmem:[%s213 + $0x258] sm:$0xff]
        %v393 = vld [vmem:[%s213 + $0x260] sm:$0xff]
        %v394 = vld [vmem:[%s213 + $0x268] sm:$0xff]
        %v395 = vld [vmem:[%s213 + $0x270] sm:$0xff]
        %v396 = vld [vmem:[%s213 + $0x278] sm:$0xff]
        %v397 = vld [vmem:[%s213 + $0x280] sm:$0xff]
        %v398 = vld [vmem:[%s213 + $0x288] sm:$0xff]
        %v399 = vld [vmem:[%s213 + $0x290] sm:$0xff]
        %v400 = vld [vmem:[%s213 + $0x298] sm:$0xff]
        %v401 = vld [vmem:[%s213 + $0x2a0] sm:$0xff]
        %v402 = vld [vmem:[%s213 + $0x2a8] sm:$0xff]
        %v403 = vld [vmem:[%s213 + $0x2b0] sm:$0xff]
        %v404 = vld [vmem:[%s213 + $0x2b8] sm:$0xff]
        %v405 = vld [vmem:[%s213 + $0x2c0] sm:$0xff]
        %v406 = vld [vmem:[%s213 + $0x2c8] sm:$0xff]
        %v407 = vld [vmem:[%s213 + $0x2d0] sm:$0xff]
        %v408 = vld [vmem:[%s213 + $0x2d8] sm:$0xff]
        %v409 = vld [vmem:[%s213 + $0x2e0] sm:$0xff]
        %v410 = vld [vmem:[%s213 + $0x2e8] sm:$0xff]
        %v411 = vld [vmem:[%s213 + $0x2f0] sm:$0xff]
        %v412 = vld [vmem:[%s213 + $0x2f8] sm:$0xff]
        %v413 = vld [vmem:[%s213 + $0x300] sm:$0xff]
        %v414 = vld [vmem:[%s213 + $0x308] sm:$0xff]
        %v415 = vld [vmem:[%s213 + $0x310] sm:$0xff]
        %v416 = vld [vmem:[%s213 + $0x318] sm:$0xff]
        %v417 = vld [vmem:[%s213 + $0x320] sm:$0xff]
        %v418 = vld [vmem:[%s213 + $0x328] sm:$0xff]
        %v419 = vld [vmem:[%s213 + $0x330] sm:$0xff]
        %v420 = vld [vmem:[%s213 + $0x338] sm:$0xff]
        %v421 = vld [vmem:[%s213 + $0x340] sm:$0xff]
        %v422 = vld [vmem:[%s213 + $0x348] sm:$0xff]
        %v423 = vld [vmem:[%s213 + $0x350] sm:$0xff]
        %v424 = vld [vmem:[%s213 + $0x358] sm:$0xff]
        %v425 = vld [vmem:[%s213 + $0x360] sm:$0xff]
        %v426 = vld [vmem:[%s213 + $0x368] sm:$0xff]
        %v427 = vld [vmem:[%s213 + $0x370] sm:$0xff]
        %v428 = vld [vmem:[%s213 + $0x378] sm:$0xff]
        %v429 = vld [vmem:[%s213 + $0x380] sm:$0xff]
        %v430 = vld [vmem:[%s213 + $0x388] sm:$0xff]
        %v431 = vld [vmem:[%s213 + $0x390] sm:$0xff]
        %v432 = vld [vmem:[%s213 + $0x398] sm:$0xff]
        %v433 = vld [vmem:[%s213 + $0x3a0] sm:$0xff]
        %v434 = vld [vmem:[%s213 + $0x3a8] sm:$0xff]
        %v435 = vld [vmem:[%s213 + $0x3b0] sm:$0xff]
        %v436 = vld [vmem:[%s213 + $0x3b8] sm:$0xff]
        %v437 = vld [vmem:[%s213 + $0x3c0] sm:$0xff]
        %v438 = vld [vmem:[%s213 + $0x3c8] sm:$0xff]
        %v439 = vld [vmem:[%s213 + $0x3d0] sm:$0xff]
        %v440 = vld [vmem:[%s213 + $0x3d8] sm:$0xff]
        %v441 = vld [vmem:[%s213 + $0x3e0] sm:$0xff]
        %v442 = vld [vmem:[%s213 + $0x3e8] sm:$0xff]
        %v443 = vld [vmem:[%s213 + $0x3f0] sm:$0xff]
        %v444 = vld [vmem:[%s213 + $0x3f8] sm:$0xff]
        %v445 = vld [vmem:[%s213 + $0x400] sm:$0xff]
        %v446 = vld [vmem:[%s213 + $0x408] sm:$0xff]
        %v447 = vld [vmem:[%s213 + $0x410] sm:$0xff]
        %v448 = vld [vmem:[%s213 + $0x418] sm:$0xff]
        %v449 = vld [vmem:[%s213 + $0x420] sm:$0xff]
        %v450 = vld [vmem:[%s213 + $0x428] sm:$0xff]
        %v451 = vld [vmem:[%s213 + $0x430] sm:$0xff]
        %v452 = vld [vmem:[%s213 + $0x438] sm:$0xff]
        %v453 = vld [vmem:[%s213 + $0x440] sm:$0xff]
        %v454 = vld [vmem:[%s213 + $0x448] sm:$0xff]
        %v455 = vld [vmem:[%s213 + $0x450] sm:$0xff]
        %v456 = vld [vmem:[%s213 + $0x458] sm:$0xff]
        %v457 = vld [vmem:[%s213 + $0x460] sm:$0xff]
        %v458 = vld [vmem:[%s213 + $0x468] sm:$0xff]
        %v459 = vld [vmem:[%s213 + $0x470] sm:$0xff]
        %v460 = vld [vmem:[%s213 + $0x478] sm:$0xff]
        %v461 = vld [vmem:[%s213 + $0x480] sm:$0xff]
        %v462 = vld [vmem:[%s213 + $0x488] sm:$0xff]
        %v463 = vld [vmem:[%s213 + $0x490] sm:$0xff]
        %v464 = vld [vmem:[%s213 + $0x498] sm:$0xff]
        %v465 = vld [vmem:[%s213 + $0x4a0] sm:$0xff]
        %v466 = vld [vmem:[%s213 + $0x4a8] sm:$0xff]
        %v467 = vld [vmem:[%s213 + $0x4b0] sm:$0xff]
        %v468 = vld [vmem:[%s213 + $0x4b8] sm:$0xff]
        %v469 = vld [vmem:[%s213 + $0x4c0] sm:$0xff]
        %v470 = vld [vmem:[%s213 + $0x4c8] sm:$0xff]
        %v471 = vld [vmem:[%s213 + $0x4d0] sm:$0xff]
        %v472 = vld [vmem:[%s213 + $0x4d8] sm:$0xff]
        %v473 = vld [vmem:[%s213 + $0x4e0] sm:$0xff]
        %v474 = vld [vmem:[%s213 + $0x4e8] sm:$0xff]
        %v475 = vld [vmem:[%s213 + $0x4f0] sm:$0xff]
        %v476 = vld [vmem:[%s213 + $0x4f8] sm:$0xff]
        %v477 = vld [vmem:[%s213 + $0x500] sm:$0xff]
        %v478 = vld [vmem:[%s213 + $0x508] sm:$0xff]
        %v479 = vld [vmem:[%s213 + $0x510] sm:$0xff]
        %v480 = vld [vmem:[%s213 + $0x518] sm:$0xff]
        %v481 = vld [vmem:[%s213 + $0x520] sm:$0xff]
        %v482 = vld [vmem:[%s213 + $0x528] sm:$0xff]
        %v483 = vld [vmem:[%s213 + $0x530] sm:$0xff]
        %v484 = vld [vmem:[%s213 + $0x538] sm:$0xff]
        %v485 = vld [vmem:[%s213 + $0x540] sm:$0xff]
        %v486 = vld [vmem:[%s213 + $0x548] sm:$0xff]
        %v487 = vld [vmem:[%s213 + $0x550] sm:$0xff]
        %v488 = vld [vmem:[%s213 + $0x558] sm:$0xff]
        %v489 = vld [vmem:[%s213 + $0x560] sm:$0xff]
        %v490 = vld [vmem:[%s213 + $0x568] sm:$0xff]
        %v491 = vld [vmem:[%s213 + $0x570] sm:$0xff]
        %v492 = vld [vmem:[%s213 + $0x578] sm:$0xff]
        %v493 = vld [vmem:[%s213 + $0x580] sm:$0xff]
        %v494 = vld [vmem:[%s213 + $0x588] sm:$0xff]
        %v495 = vld [vmem:[%s213 + $0x590] sm:$0xff]
        %v496 = vld [vmem:[%s213 + $0x598] sm:$0xff]
        %v497 = vld [vmem:[%s213 + $0x5a0] sm:$0xff]
        %v498 = vld [vmem:[%s213 + $0x5a8] sm:$0xff]
        %v499 = vld [vmem:[%s213 + $0x5b0] sm:$0xff]
        %v500 = vld [vmem:[%s213 + $0x5b8] sm:$0xff]
        %v501 = vld [vmem:[%s213 + $0x5c0] sm:$0xff]
        %v502 = vld [vmem:[%s213 + $0x5c8] sm:$0xff]
        %v503 = vld [vmem:[%s213 + $0x5d0] sm:$0xff]
        %v504 = vld [vmem:[%s213 + $0x5d8] sm:$0xff]
        %v505 = vld [vmem:[%s213 + $0x5e0] sm:$0xff]
        %v506 = vld [vmem:[%s213 + $0x5e8] sm:$0xff]
        %v507 = vld [vmem:[%s213 + $0x5f0] sm:$0xff]
        %v508 = vld [vmem:[%s213 + $0x5f8] sm:$0xff]
        %v509 = vld [vmem:[%s213 + $0x600] sm:$0xff]
        %v510 = vld [vmem:[%s213 + $0x608] sm:$0xff]
        %v511 = vld [vmem:[%s213 + $0x610] sm:$0xff]
        %v512 = vld [vmem:[%s213 + $0x618] sm:$0xff]
        %v513 = vld [vmem:[%s213 + $0x620] sm:$0xff]
        %v514 = vld [vmem:[%s213 + $0x628] sm:$0xff]
        %v515 = vld [vmem:[%s213 + $0x630] sm:$0xff]
        %v516 = vld [vmem:[%s213 + $0x638] sm:$0xff]
        %v517 = vld [vmem:[%s213 + $0x640] sm:$0xff]
        %v518 = vld [vmem:[%s213 + $0x648] sm:$0xff]
        %v519 = vld [vmem:[%s213 + $0x650] sm:$0xff]
        %v520 = vld [vmem:[%s213 + $0x658] sm:$0xff]
        %v521 = vld [vmem:[%s213 + $0x660] sm:$0xff]
        %v522 = vld [vmem:[%s213 + $0x668] sm:$0xff]
        %v523 = vld [vmem:[%s213 + $0x670] sm:$0xff]
        %v524 = vld [vmem:[%s213 + $0x678] sm:$0xff]
        %v525 = vld [vmem:[%s213 + $0x680] sm:$0xff]
        %v526 = vld [vmem:[%s213 + $0x688] sm:$0xff]
        %v527 = vld [vmem:[%s213 + $0x690] sm:$0xff]
        %v528 = vld [vmem:[%s213 + $0x698] sm:$0xff]
        %v529 = vld [vmem:[%s213 + $0x6a0] sm:$0xff]
        %v530 = vld [vmem:[%s213 + $0x6a8] sm:$0xff]
        %v531 = vld [vmem:[%s213 + $0x6b0] sm:$0xff]
        %v532 = vld [vmem:[%s213 + $0x6b8] sm:$0xff]
        %v533 = vld [vmem:[%s213 + $0x6c0] sm:$0xff]
        %v534 = vld [vmem:[%s213 + $0x6c8] sm:$0xff]
        %v535 = vld [vmem:[%s213 + $0x6d0] sm:$0xff]
        %v536 = vld [vmem:[%s213 + $0x6d8] sm:$0xff]
        %v537 = vld [vmem:[%s213 + $0x6e0] sm:$0xff]
        %v538 = vld [vmem:[%s213 + $0x6e8] sm:$0xff]
        %v539 = vld [vmem:[%s213 + $0x6f0] sm:$0xff]
        %v540 = vld [vmem:[%s213 + $0x6f8] sm:$0xff]
        %v541 = vld [vmem:[%s213 + $0x700] sm:$0xff]
        %v542 = vld [vmem:[%s213 + $0x708] sm:$0xff]
        %v543 = vld [vmem:[%s213 + $0x710] sm:$0xff]
        %v544 = vld [vmem:[%s213 + $0x718] sm:$0xff]
        %v545 = vld [vmem:[%s213 + $0x720] sm:$0xff]
        %v546 = vld [vmem:[%s213 + $0x728] sm:$0xff]
        %v547 = vld [vmem:[%s213 + $0x730] sm:$0xff]
        %v548 = vld [vmem:[%s213 + $0x738] sm:$0xff]
        %v549 = vld [vmem:[%s213 + $0x740] sm:$0xff]
        %v550 = vld [vmem:[%s213 + $0x748] sm:$0xff]
        %v551 = vld [vmem:[%s213 + $0x750] sm:$0xff]
        %v552 = vld [vmem:[%s213 + $0x758] sm:$0xff]
        %v553 = vld [vmem:[%s213 + $0x760] sm:$0xff]
        %v554 = vld [vmem:[%s213 + $0x768] sm:$0xff]
        %v555 = vld [vmem:[%s213 + $0x770] sm:$0xff]
        %v556 = vld [vmem:[%s213 + $0x778] sm:$0xff]
        %v557 = vld [vmem:[%s213 + $0x780] sm:$0xff]
        %v558 = vld [vmem:[%s213 + $0x788] sm:$0xff]
        %v559 = vld [vmem:[%s213 + $0x790] sm:$0xff]
        %v560 = vld [vmem:[%s213 + $0x798] sm:$0xff]
        %v561 = vld [vmem:[%s213 + $0x7a0] sm:$0xff]
        %v562 = vld [vmem:[%s213 + $0x7a8] sm:$0xff]
        %v563 = vld [vmem:[%s213 + $0x7b0] sm:$0xff]
        %v564 = vld [vmem:[%s213 + $0x7b8] sm:$0xff]
        %v565 = vld [vmem:[%s213 + $0x7c0] sm:$0xff]
        %v566 = vld [vmem:[%s213 + $0x7c8] sm:$0xff]
        %v567 = vld [vmem:[%s213 + $0x7d0] sm:$0xff]
        %v568 = vld [vmem:[%s213 + $0x7d8] sm:$0xff]
        %v569 = vld [vmem:[%s213 + $0x7e0] sm:$0xff]
        %v570 = vld [vmem:[%s213 + $0x7e8] sm:$0xff]
        %v571 = vld [vmem:[%s213 + $0x7f0] sm:$0xff]
        %v572 = vld [vmem:[%s213 + $0x7f8] sm:$0xff]
        %v573 = vld [vmem:[%s213 + $0x800] sm:$0xff]
        %v574 = vld [vmem:[%s213 + $0x808] sm:$0xff]
        %v575 = vld [vmem:[%s213 + $0x810] sm:$0xff]
        %v576 = vld [vmem:[%s213 + $0x818] sm:$0xff]
        %v577 = vld [vmem:[%s213 + $0x820] sm:$0xff]
        %v578 = vld [vmem:[%s213 + $0x828] sm:$0xff]
        %v579 = vld [vmem:[%s213 + $0x830] sm:$0xff]
        %v580 = vld [vmem:[%s213 + $0x838] sm:$0xff]
        %v581 = vld [vmem:[%s213 + $0x840] sm:$0xff]
        %v582 = vld [vmem:[%s213 + $0x848] sm:$0xff]
        %v583 = vld [vmem:[%s213 + $0x850] sm:$0xff]
        %v584 = vld [vmem:[%s213 + $0x858] sm:$0xff]
        %v585 = vld [vmem:[%s213 + $0x860] sm:$0xff]
        %v586 = vld [vmem:[%s213 + $0x868] sm:$0xff]
        %v587 = vld [vmem:[%s213 + $0x870] sm:$0xff]
        %v588 = vld [vmem:[%s213 + $0x878] sm:$0xff]
        %v589 = vld [vmem:[%s213 + $0x880] sm:$0xff]
        %v590 = vld [vmem:[%s213 + $0x888] sm:$0xff]
        %v591 = vld [vmem:[%s213 + $0x890] sm:$0xff]
        %v592 = vld [vmem:[%s213 + $0x898] sm:$0xff]
        %v593 = vld [vmem:[%s213 + $0x8a0] sm:$0xff]
        %v594 = vld [vmem:[%s213 + $0x8a8] sm:$0xff]
        %v595 = vld [vmem:[%s213 + $0x8b0] sm:$0xff]
        %v596 = vld [vmem:[%s213 + $0x8b8] sm:$0xff]
        %v597 = vld [vmem:[%s213 + $0x8c0] sm:$0xff]
        %v598 = vld [vmem:[%s213 + $0x8c8] sm:$0xff]
        %v599 = vld [vmem:[%s213 + $0x8d0] sm:$0xff]
        %v600 = vld [vmem:[%s213 + $0x8d8] sm:$0xff]
        %v601 = vld [vmem:[%s213 + $0x8e0] sm:$0xff]
        %v602 = vld [vmem:[%s213 + $0x8e8] sm:$0xff]
        %v603 = vld [vmem:[%s213 + $0x8f0] sm:$0xff]
        %v604 = vld [vmem:[%s213 + $0x8f8] sm:$0xff]
        %v605 = vld [vmem:[%s213 + $0x900] sm:$0xff]
        %v606 = vld [vmem:[%s213 + $0x908] sm:$0xff]
        %v607 = vld [vmem:[%s213 + $0x910] sm:$0xff]
        %v608 = vld [vmem:[%s213 + $0x918] sm:$0xff]
        %v609 = vld [vmem:[%s213 + $0x920] sm:$0xff]
        %v610 = vld [vmem:[%s213 + $0x928] sm:$0xff]
        %v611 = vld [vmem:[%s213 + $0x930] sm:$0xff]
        %v612 = vld [vmem:[%s213 + $0x938] sm:$0xff]
        %v613 = vld [vmem:[%s213 + $0x940] sm:$0xff]
        %v614 = vld [vmem:[%s213 + $0x948] sm:$0xff]
        %v615 = vld [vmem:[%s213 + $0x950] sm:$0xff]
        %v616 = vld [vmem:[%s213 + $0x958] sm:$0xff]
        %v617 = vld [vmem:[%s213 + $0x960] sm:$0xff]
        %v618 = vld [vmem:[%s213 + $0x968] sm:$0xff]
        %v619 = vld [vmem:[%s213 + $0x970] sm:$0xff]
        %v620 = vld [vmem:[%s213 + $0x978] sm:$0xff]
        %v621 = vld [vmem:[%s213 + $0x980] sm:$0xff]
        %v622 = vld [vmem:[%s213 + $0x988] sm:$0xff]
        %v623 = vld [vmem:[%s213 + $0x990] sm:$0xff]
        %v624 = vld [vmem:[%s213 + $0x998] sm:$0xff]
        %v625 = vld [vmem:[%s213 + $0x9a0] sm:$0xff]
        %v626 = vld [vmem:[%s213 + $0x9a8] sm:$0xff]
        %v627 = vld [vmem:[%s213 + $0x9b0] sm:$0xff]
        %v628 = vld [vmem:[%s213 + $0x9b8] sm:$0xff]
        %v629 = vld [vmem:[%s213 + $0x9c0] sm:$0xff]
        %v630 = vld [vmem:[%s213 + $0x9c8] sm:$0xff]
        %v631 = vld [vmem:[%s213 + $0x9d0] sm:$0xff]
        %v632 = vld [vmem:[%s213 + $0x9d8] sm:$0xff]
        %v633 = vld [vmem:[%s213 + $0x9e0] sm:$0xff]
        %v634 = vld [vmem:[%s213 + $0x9e8] sm:$0xff]
        %v635 = vld [vmem:[%s213 + $0x9f0] sm:$0xff]
        %v636 = vld [vmem:[%s213 + $0x9f8] sm:$0xff]
        %v637 = vld [vmem:[%s213 + $0xa00] sm:$0xff]
        %v638 = vld [vmem:[%s213 + $0xa08] sm:$0xff]
        %v639 = vld [vmem:[%s213 + $0xa10] sm:$0xff]
        %v640 = vld [vmem:[%s213 + $0xa18] sm:$0xff]
        %v641 = vld [vmem:[%s213 + $0xa20] sm:$0xff]
        %v642 = vld [vmem:[%s213 + $0xa28] sm:$0xff]
        %v643 = vld [vmem:[%s213 + $0xa30] sm:$0xff]
        %v644 = vld [vmem:[%s213 + $0xa38] sm:$0xff]
        %v645 = vld [vmem:[%s213 + $0xa40] sm:$0xff]
        %v646 = vld [vmem:[%s213 + $0xa48] sm:$0xff]
        %v647 = vld [vmem:[%s213 + $0xa50] sm:$0xff]
        %v648 = vld [vmem:[%s213 + $0xa58] sm:$0xff]
        %v649 = vld [vmem:[%s213 + $0xa60] sm:$0xff]
        %v650 = vld [vmem:[%s213 + $0xa68] sm:$0xff]
        %v651 = vld [vmem:[%s213 + $0xa70] sm:$0xff]
        %v652 = vld [vmem:[%s213 + $0xa78] sm:$0xff]
        %v653 = vld [vmem:[%s213 + $0xa80] sm:$0xff]
        %v654 = vld [vmem:[%s213 + $0xa88] sm:$0xff]
        %v655 = vld [vmem:[%s213 + $0xa90] sm:$0xff]
        %v656 = vld [vmem:[%s213 + $0xa98] sm:$0xff]
        %v657 = vld [vmem:[%s213 + $0xaa0] sm:$0xff]
        %v658 = vld [vmem:[%s213 + $0xaa8] sm:$0xff]
        %v659 = vld [vmem:[%s213 + $0xab0] sm:$0xff]
        %v660 = vld [vmem:[%s213 + $0xab8] sm:$0xff]
        %v661 = vld [vmem:[%s213 + $0xac0] sm:$0xff]
        %v662 = vld [vmem:[%s213 + $0xac8] sm:$0xff]
        %v663 = vld [vmem:[%s213 + $0xad0] sm:$0xff]
        %v664 = vld [vmem:[%s213 + $0xad8] sm:$0xff]
        %v665 = vld [vmem:[%s213 + $0xae0] sm:$0xff]
        %v666 = vld [vmem:[%s213 + $0xae8] sm:$0xff]
        %v667 = vld [vmem:[%s213 + $0xaf0] sm:$0xff]
        %v668 = vld [vmem:[%s213 + $0xaf8] sm:$0xff]
        %v669 = vld [vmem:[%s213 + $0xb00] sm:$0xff]
        %v670 = vld [vmem:[%s213 + $0xb08] sm:$0xff]
        %v671 = vld [vmem:[%s213 + $0xb10] sm:$0xff]
        %v672 = vld [vmem:[%s213 + $0xb18] sm:$0xff]
        %v673 = vld [vmem:[%s213 + $0xb20] sm:$0xff]
        %v674 = vld [vmem:[%s213 + $0xb28] sm:$0xff]
        %v675 = vld [vmem:[%s213 + $0xb30] sm:$0xff]
        %v676 = vld [vmem:[%s213 + $0xb38] sm:$0xff]
        %v677 = vld [vmem:[%s213 + $0xb40] sm:$0xff]
        %v678 = vld [vmem:[%s213 + $0xb48] sm:$0xff]
        %v679 = vld [vmem:[%s213 + $0xb50] sm:$0xff]
        %v680 = vld [vmem:[%s213 + $0xb58] sm:$0xff]
        %v681 = vld [vmem:[%s213 + $0xb60] sm:$0xff]
        %v682 = vld [vmem:[%s213 + $0xb68] sm:$0xff]
        %v683 = vld [vmem:[%s213 + $0xb70] sm:$0xff]
        %v684 = vld [vmem:[%s213 + $0xb78] sm:$0xff]
        %v685 = vld [vmem:[%s213 + $0xb80] sm:$0xff]
        %v686 = vld [vmem:[%s213 + $0xb88] sm:$0xff]
        %v687 = vld [vmem:[%s213 + $0xb90] sm:$0xff]
        %v688 = vld [vmem:[%s213 + $0xb98] sm:$0xff]
        %v689 = vld [vmem:[%s213 + $0xba0] sm:$0xff]
        %v690 = vld [vmem:[%s213 + $0xba8] sm:$0xff]
        %v691 = vld [vmem:[%s213 + $0xbb0] sm:$0xff]
        %v692 = vld [vmem:[%s213 + $0xbb8] sm:$0xff]
        %v693 = vld [vmem:[%s213 + $0xbc0] sm:$0xff]
        %v694 = vld [vmem:[%s213 + $0xbc8] sm:$0xff]
        %v695 = vld [vmem:[%s213 + $0xbd0] sm:$0xff]
        %v696 = vld [vmem:[%s213 + $0xbd8] sm:$0xff]
        %v697 = vld [vmem:[%s213 + $0xbe0] sm:$0xff]
        %v698 = vld [vmem:[%s213 + $0xbe8] sm:$0xff]
        %v699 = vld [vmem:[%s213 + $0xbf0] sm:$0xff]
        %v700 = vld [vmem:[%s213 + $0xbf8] sm:$0xff]
        %v701 = vld [vmem:[%s213 + $0xc00] sm:$0xff]
        %v702 = vld [vmem:[%s213 + $0xc08] sm:$0xff]
        %v703 = vld [vmem:[%s213 + $0xc10] sm:$0xff]
        %v704 = vld [vmem:[%s213 + $0xc18] sm:$0xff]
        %v705 = vld [vmem:[%s213 + $0xc20] sm:$0xff]
        %v706 = vld [vmem:[%s213 + $0xc28] sm:$0xff]
        %v707 = vld [vmem:[%s213 + $0xc30] sm:$0xff]
        %v708 = vld [vmem:[%s213 + $0xc38] sm:$0xff]
        %v709 = vld [vmem:[%s213 + $0xc40] sm:$0xff]
        %v710 = vld [vmem:[%s213 + $0xc48] sm:$0xff]
        %v711 = vld [vmem:[%s213 + $0xc50] sm:$0xff]
        %v712 = vld [vmem:[%s213 + $0xc58] sm:$0xff]
        %v713 = vld [vmem:[%s213 + $0xc60] sm:$0xff]
        %v714 = vld [vmem:[%s213 + $0xc68] sm:$0xff]
        %v715 = vld [vmem:[%s213 + $0xc70] sm:$0xff]
        %v716 = vld [vmem:[%s213 + $0xc78] sm:$0xff]
        %v717 = vld [vmem:[%s213 + $0xc80] sm:$0xff]
        %v718 = vld [vmem:[%s213 + $0xc88] sm:$0xff]
        %v719 = vld [vmem:[%s213 + $0xc90] sm:$0xff]
        %v720 = vld [vmem:[%s213 + $0xc98] sm:$0xff]
        %v721 = vld [vmem:[%s213 + $0xca0] sm:$0xff]
        %v722 = vld [vmem:[%s213 + $0xca8] sm:$0xff]
        %v723 = vld [vmem:[%s213 + $0xcb0] sm:$0xff]
        %v724 = vld [vmem:[%s213 + $0xcb8] sm:$0xff]
        %v725 = vld [vmem:[%s213 + $0xcc0] sm:$0xff]
        %v726 = vld [vmem:[%s213 + $0xcc8] sm:$0xff]
        %v727 = vld [vmem:[%s213 + $0xcd0] sm:$0xff]
        %v728 = vld [vmem:[%s213 + $0xcd8] sm:$0xff]
        %v729 = vld [vmem:[%s213 + $0xce0] sm:$0xff]
        %v730 = vld [vmem:[%s213 + $0xce8] sm:$0xff]
        %v731 = vld [vmem:[%s213 + $0xcf0] sm:$0xff]
        %v732 = vld [vmem:[%s213 + $0xcf8] sm:$0xff]
        %v733 = vld [vmem:[%s213 + $0xd00] sm:$0xff]
        %v734 = vld [vmem:[%s213 + $0xd08] sm:$0xff]
        %v735 = vld [vmem:[%s213 + $0xd10] sm:$0xff]
        %v736 = vld [vmem:[%s213 + $0xd18] sm:$0xff]
        %v737 = vld [vmem:[%s213 + $0xd20] sm:$0xff]
        %v738 = vld [vmem:[%s213 + $0xd28] sm:$0xff]
        %v739 = vld [vmem:[%s213 + $0xd30] sm:$0xff]
        %v740 = vld [vmem:[%s213 + $0xd38] sm:$0xff]
        %v741 = vld [vmem:[%s213 + $0xd40] sm:$0xff]
        %v742 = vld [vmem:[%s213 + $0xd48] sm:$0xff]
        %v743 = vld [vmem:[%s213 + $0xd50] sm:$0xff]
        %v744 = vld [vmem:[%s213 + $0xd58] sm:$0xff]
        %v745 = vld [vmem:[%s213 + $0xd60] sm:$0xff]
        %v746 = vld [vmem:[%s213 + $0xd68] sm:$0xff]
        %v747 = vld [vmem:[%s213 + $0xd70] sm:$0xff]
        %v748 = vld [vmem:[%s213 + $0xd78] sm:$0xff]
        %v749 = vld [vmem:[%s213 + $0xd80] sm:$0xff]
        %v750 = vld [vmem:[%s213 + $0xd88] sm:$0xff]
        %v751 = vld [vmem:[%s213 + $0xd90] sm:$0xff]
        %v752 = vld [vmem:[%s213 + $0xd98] sm:$0xff]
        %v753 = vld [vmem:[%s213 + $0xda0] sm:$0xff]
        %v754 = vld [vmem:[%s213 + $0xda8] sm:$0xff]
        %v755 = vld [vmem:[%s213 + $0xdb0] sm:$0xff]
        %v756 = vld [vmem:[%s213 + $0xdb8] sm:$0xff]
        %v757 = vld [vmem:[%s213 + $0xdc0] sm:$0xff]
        %v758 = vld [vmem:[%s213 + $0xdc8] sm:$0xff]
        %v759 = vld [vmem:[%s213 + $0xdd0] sm:$0xff]
        %v760 = vld [vmem:[%s213 + $0xdd8] sm:$0xff]
        %v761 = vld [vmem:[%s213 + $0xde0] sm:$0xff]
        %v762 = vld [vmem:[%s213 + $0xde8] sm:$0xff]
        %v763 = vld [vmem:[%s213 + $0xdf0] sm:$0xff]
        %v764 = vld [vmem:[%s213 + $0xdf8] sm:$0xff]
        %v765 = vld [vmem:[%s213 + $0xe00] sm:$0xff]
        %v766 = vld [vmem:[%s213 + $0xe08] sm:$0xff]
        %v767 = vld [vmem:[%s213 + $0xe10] sm:$0xff]
        %v768 = vld [vmem:[%s213 + $0xe18] sm:$0xff]
        %v769 = vld [vmem:[%s213 + $0xe20] sm:$0xff]
        %v770 = vld [vmem:[%s213 + $0xe28] sm:$0xff]
        %v771 = vld [vmem:[%s213 + $0xe30] sm:$0xff]
        %v772 = vld [vmem:[%s213 + $0xe38] sm:$0xff]
        %v773 = vld [vmem:[%s213 + $0xe40] sm:$0xff]
        %v774 = vld [vmem:[%s213 + $0xe48] sm:$0xff]
        %v775 = vld [vmem:[%s213 + $0xe50] sm:$0xff]
        %v776 = vld [vmem:[%s213 + $0xe58] sm:$0xff]
        %v777 = vld [vmem:[%s213 + $0xe60] sm:$0xff]
        %v778 = vld [vmem:[%s213 + $0xe68] sm:$0xff]
        %v779 = vld [vmem:[%s213 + $0xe70] sm:$0xff]
        %v780 = vld [vmem:[%s213 + $0xe78] sm:$0xff]
        %v781 = vld [vmem:[%s213 + $0xe80] sm:$0xff]
        %v782 = vld [vmem:[%s213 + $0xe88] sm:$0xff]
        %v783 = vld [vmem:[%s213 + $0xe90] sm:$0xff]
        %v784 = vld [vmem:[%s213 + $0xe98] sm:$0xff]
        %v785 = vld [vmem:[%s213 + $0xea0] sm:$0xff]
        %v786 = vld [vmem:[%s213 + $0xea8] sm:$0xff]
        %v787 = vld [vmem:[%s213 + $0xeb0] sm:$0xff]
        %v788 = vld [vmem:[%s213 + $0xeb8] sm:$0xff]
        %v789 = vld [vmem:[%s213 + $0xec0] sm:$0xff]
        %v790 = vld [vmem:[%s213 + $0xec8] sm:$0xff]
        %v791 = vld [vmem:[%s213 + $0xed0] sm:$0xff]
        %v792 = vld [vmem:[%s213 + $0xed8] sm:$0xff]
        %v793 = vld [vmem:[%s213 + $0xee0] sm:$0xff]
        %v794 = vld [vmem:[%s213 + $0xee8] sm:$0xff]
        %v795 = vld [vmem:[%s213 + $0xef0] sm:$0xff]
        %v796 = vld [vmem:[%s213 + $0xef8] sm:$0xff]
        %v797 = vld [vmem:[%s213 + $0xf00] sm:$0xff]
        %v798 = vld [vmem:[%s213 + $0xf08] sm:$0xff]
        %v799 = vld [vmem:[%s213 + $0xf10] sm:$0xff]
        %v800 = vld [vmem:[%s213 + $0xf18] sm:$0xff]
        %v801 = vld [vmem:[%s213 + $0xf20] sm:$0xff]
        %v802 = vld [vmem:[%s213 + $0xf28] sm:$0xff]
        %v803 = vld [vmem:[%s213 + $0xf30] sm:$0xff]
        %v804 = vld [vmem:[%s213 + $0xf38] sm:$0xff]
        %v805 = vld [vmem:[%s213 + $0xf40] sm:$0xff]
        %v806 = vld [vmem:[%s213 + $0xf48] sm:$0xff]
        %v807 = vld [vmem:[%s213 + $0xf50] sm:$0xff]
        %v808 = vld [vmem:[%s213 + $0xf58] sm:$0xff]
        %v809 = vld [vmem:[%s213 + $0xf60] sm:$0xff]
        %v810 = vld [vmem:[%s213 + $0xf68] sm:$0xff]
        %v811 = vld [vmem:[%s213 + $0xf70] sm:$0xff]
        %v812 = vld [vmem:[%s213 + $0xf78] sm:$0xff]
        %v813 = vld [vmem:[%s213 + $0xf80] sm:$0xff]
        %v814 = vld [vmem:[%s213 + $0xf88] sm:$0xff]
        %v815 = vld [vmem:[%s213 + $0xf90] sm:$0xff]
        %v816 = vld [vmem:[%s213 + $0xf98] sm:$0xff]
        %v817 = vld [vmem:[%s213 + $0xfa0] sm:$0xff]
        %v818 = vld [vmem:[%s213 + $0xfa8] sm:$0xff]
        %v819 = vld [vmem:[%s213 + $0xfb0] sm:$0xff]
        %v820 = vld [vmem:[%s213 + $0xfb8] sm:$0xff]
        %v821 = vld [vmem:[%s213 + $0xfc0] sm:$0xff]
        %v822 = vld [vmem:[%s213 + $0xfc8] sm:$0xff]
        %v823 = vld [vmem:[%s213 + $0xfd0] sm:$0xff]
        %v824 = vld [vmem:[%s213 + $0xfd8] sm:$0xff]
        %v825 = vld [vmem:[%s213 + $0xfe0] sm:$0xff]
        %v826 = vld [vmem:[%s213 + $0xfe8] sm:$0xff]
        %v827 = vld [vmem:[%s213 + $0xff0] sm:$0xff]
        %v828 = vld [vmem:[%s213 + $0xff8] sm:$0xff]
        %v829 = vld [vmem:[%s213 + $0x1000] sm:$0xff]
        %v830 = vld [vmem:[%s213 + $0x1008] sm:$0xff]
        %v831 = vld [vmem:[%s213 + $0x1010] sm:$0xff]
        %v832 = vld [vmem:[%s213 + $0x1018] sm:$0xff]
        %v833 = vld [vmem:[%s213 + $0x1020] sm:$0xff]
        %v834 = vld [vmem:[%s213 + $0x1028] sm:$0xff]
        %v835 = vld [vmem:[%s213 + $0x1030] sm:$0xff]
        %v836 = vld [vmem:[%s213 + $0x1038] sm:$0xff]
        %v837 = vld [vmem:[%s213 + $0x1040] sm:$0xff]
        %v838 = vld [vmem:[%s213 + $0x1048] sm:$0xff]
        %v839 = vld [vmem:[%s213 + $0x1050] sm:$0xff]
        %v840 = vld [vmem:[%s213 + $0x1058] sm:$0xff]
        %v841 = vld [vmem:[%s213 + $0x1060] sm:$0xff]
        %v842 = vld [vmem:[%s213 + $0x1068] sm:$0xff]
        %v843 = vld [vmem:[%s213 + $0x1070] sm:$0xff]
        %v844 = vld [vmem:[%s213 + $0x1078] sm:$0xff]
        %v845 = vld [vmem:[%s213 + $0x1080] sm:$0xff]
        %v846 = vld [vmem:[%s213 + $0x1088] sm:$0xff]
        %v847 = vld [vmem:[%s213 + $0x1090] sm:$0xff]
        %v848 = vld [vmem:[%s213 + $0x1098] sm:$0xff]
        %v849 = vld [vmem:[%s213 + $0x10a0] sm:$0xff]
        %v850 = vld [vmem:[%s213 + $0x10a8] sm:$0xff]
        %v851 = vld [vmem:[%s213 + $0x10b0] sm:$0xff]
        %v852 = vld [vmem:[%s213 + $0x10b8] sm:$0xff]
        %v853 = vld [vmem:[%s213 + $0x10c0] sm:$0xff]
        %v854 = vld [vmem:[%s213 + $0x10c8] sm:$0xff]
        %v855 = vld [vmem:[%s213 + $0x10d0] sm:$0xff]
        %v856 = vld [vmem:[%s213 + $0x10d8] sm:$0xff]
        %v857 = vld [vmem:[%s213 + $0x10e0] sm:$0xff]
        %v858 = vld [vmem:[%s213 + $0x10e8] sm:$0xff]
        %v859 = vld [vmem:[%s213 + $0x10f0] sm:$0xff]
        %v860 = vld [vmem:[%s213 + $0x10f8] sm:$0xff]
        %v861 = vld [vmem:[%s213 + $0x1100] sm:$0xff]
        %v862 = vld [vmem:[%s213 + $0x1108] sm:$0xff]
        %v863 = vld [vmem:[%s213 + $0x1110] sm:$0xff]
        %v864 = vld [vmem:[%s213 + $0x1118] sm:$0xff]
        %v865 = vld [vmem:[%s213 + $0x1120] sm:$0xff]
        %v866 = vld [vmem:[%s213 + $0x1128] sm:$0xff]
        %v867 = vld [vmem:[%s213 + $0x1130] sm:$0xff]
        %v868 = vld [vmem:[%s213 + $0x1138] sm:$0xff]
        %v869 = vld [vmem:[%s213 + $0x1140] sm:$0xff]
        %v870 = vld [vmem:[%s213 + $0x1148] sm:$0xff]
        %v871 = vld [vmem:[%s213 + $0x1150] sm:$0xff]
        %v872 = vld [vmem:[%s213 + $0x1158] sm:$0xff]
        %v873 = vld [vmem:[%s213 + $0x1160] sm:$0xff]
        %v874 = vld [vmem:[%s213 + $0x1168] sm:$0xff]
        %v875 = vld [vmem:[%s213 + $0x1170] sm:$0xff]
        %v876 = vld [vmem:[%s213 + $0x1178] sm:$0xff]
        %v877 = vld [vmem:[%s213 + $0x1180] sm:$0xff]
        %v878 = vld [vmem:[%s213 + $0x1188] sm:$0xff]
        %v879 = vld [vmem:[%s213 + $0x1190] sm:$0xff]
        %v880 = vld [vmem:[%s213 + $0x1198] sm:$0xff]
        %v881 = vld [vmem:[%s213 + $0x11a0] sm:$0xff]
        %v882 = vld [vmem:[%s213 + $0x11a8] sm:$0xff]
        %v883 = vld [vmem:[%s213 + $0x11b0] sm:$0xff]
        %v884 = vld [vmem:[%s213 + $0x11b8] sm:$0xff]
        %v885 = vld [vmem:[%s213 + $0x11c0] sm:$0xff]
        %v886 = vld [vmem:[%s213 + $0x11c8] sm:$0xff]
        %v887 = vld [vmem:[%s213 + $0x11d0] sm:$0xff]
        %v888 = vld [vmem:[%s213 + $0x11d8] sm:$0xff]
        %v889 = vld [vmem:[%s213 + $0x11e0] sm:$0xff]
        %v890 = vld [vmem:[%s213 + $0x11e8] sm:$0xff]
        %v891 = vld [vmem:[%s213 + $0x11f0] sm:$0xff]
        %v892 = vld [vmem:[%s213 + $0x11f8] sm:$0xff]
        %v893 = vld [vmem:[%s213 + $0x1200] sm:$0xff]
        %v894 = vld [vmem:[%s213 + $0x1208] sm:$0xff]
        %v895 = vld [vmem:[%s213 + $0x1210] sm:$0xff]
        %v896 = vld [vmem:[%s213 + $0x1218] sm:$0xff]
        %v897 = vld [vmem:[%s213 + $0x1220] sm:$0xff]
        %v898 = vld [vmem:[%s213 + $0x1228] sm:$0xff]
        %v899 = vld [vmem:[%s213 + $0x1230] sm:$0xff]
        %v900 = vld [vmem:[%s213 + $0x1238] sm:$0xff]
        %v901 = vld [vmem:[%s213 + $0x1240] sm:$0xff]
        %v902 = vld [vmem:[%s213 + $0x1248] sm:$0xff]
        %v903 = vld [vmem:[%s213 + $0x1250] sm:$0xff]
        %v904 = vld [vmem:[%s213 + $0x1258] sm:$0xff]
        %v905 = vld [vmem:[%s213 + $0x1260] sm:$0xff]
        %v906 = vld [vmem:[%s213 + $0x1268] sm:$0xff]
        %v907 = vld [vmem:[%s213 + $0x1270] sm:$0xff]
        %v908 = vld [vmem:[%s213 + $0x1278] sm:$0xff]
        %v909 = vld [vmem:[%s213 + $0x1280] sm:$0xff]
        %v910 = vld [vmem:[%s213 + $0x1288] sm:$0xff]
        %v911 = vld [vmem:[%s213 + $0x1290] sm:$0xff]
        %v912 = vld [vmem:[%s213 + $0x1298] sm:$0xff]
        %v913 = vld [vmem:[%s213 + $0x12a0] sm:$0xff]
        %v914 = vld [vmem:[%s213 + $0x12a8] sm:$0xff]
        %v915 = vld [vmem:[%s213 + $0x12b0] sm:$0xff]
        %v916 = vld [vmem:[%s213 + $0x12b8] sm:$0xff]
        %v917 = vld [vmem:[%s213 + $0x12c0] sm:$0xff]
        %v918 = vld [vmem:[%s213 + $0x12c8] sm:$0xff]
        %v919 = vld [vmem:[%s213 + $0x12d0] sm:$0xff]
        %v920 = vld [vmem:[%s213 + $0x12d8] sm:$0xff]
        %v921 = vld [vmem:[%s213 + $0x12e0] sm:$0xff]
        %v922 = vld [vmem:[%s213 + $0x12e8] sm:$0xff]
        %v923 = vld [vmem:[%s213 + $0x12f0] sm:$0xff]
        %v924 = vld [vmem:[%s213 + $0x12f8] sm:$0xff]
        %925 = vmatprep.subr.mxu0 0.0
        %926 = vmatpush1.msra.mxu0 %v317
        %927 = vmatprep.subr.mxu0 0.0
        %928 = vmatpush1.msra.mxu0 %v318
        %929 = vmatprep.subr.mxu0 0.0
        %930 = vmatpush1.msra.mxu0 %v319
        %931 = vmatprep.subr.mxu0 0.0
        %932 = vmatpush1.msra.mxu0 %v320
        %933 = vmatprep.subr.mxu0 0.0
        %934 = vmatpush1.msra.mxu0 %v321
        %935 = vmatprep.subr.mxu0 0.0
        %936 = vmatpush1.msra.mxu0 %v322
        %937 = vmatprep.subr.mxu0 0.0
        %938 = vmatpush1.msra.mxu0 %v323
        %939 = vmatprep.subr.mxu0 0.0
        %940 = vmatpush1.msra.mxu0 %v324
        %941 = vmatprep.subr.mxu0 0.0
        %942 = vmatpush1.msra.mxu0 %v325
        %943 = vmatprep.subr.mxu0 0.0
        %944 = vmatpush1.msra.mxu0 %v326
        %945 = vmatprep.subr.mxu0 0.0
        %946 = vmatpush1.msra.mxu0 %v327
        %947 = vmatprep.subr.mxu0 0.0
        %948 = vmatpush1.msra.mxu0 %v328
        %949 = vmatprep.subr.mxu0 0.0
        %950 = vmatpush1.msra.mxu0 %v329
        %951 = vmatprep.subr.mxu0 0.0
        %952 = vmatpush1.msra.mxu0 %v330
        %953 = vmatprep.subr.mxu0 0.0
        %954 = vmatpush1.msra.mxu0 %v331
        %955 = vmatprep.subr.mxu0 0.0
        %956 = vmatpush1.msra.mxu0 %v332
        %957 = vmatprep.subr.mxu0 0.0
        %958 = vmatpush1.msra.mxu0 %v333
        %959 = vmatprep.subr.mxu0 0.0
        %960 = vmatpush1.msra.mxu0 %v334
        %961 = vmatprep.subr.mxu0 0.0
        %962 = vmatpush1.msra.mxu0 %v335
        %963 = vmatprep.subr.mxu0 0.0
        %964 = vmatpush1.msra.mxu0 %v336
        %965 = vmatprep.subr.mxu0 0.0
        %966 = vmatpush1.msra.mxu0 %v337
        %967 = vmatprep.subr.mxu0 0.0
        %968 = vmatpush1.msra.mxu0 %v338
        %969 = vmatprep.subr.mxu0 0.0
        %970 = vmatpush1.msra.mxu0 %v339
        %971 = vmatprep.subr.mxu0 0.0
        %972 = vmatpush1.msra.mxu0 %v340
        %973 = vmatprep.subr.mxu0 0.0
        %974 = vmatpush1.msra.mxu0 %v341
        %975 = vmatprep.subr.mxu0 0.0
        %976 = vmatpush1.msra.mxu0 %v342
        %977 = vmatprep.subr.mxu0 0.0
        %978 = vmatpush1.msra.mxu0 %v343
        %979 = vmatprep.subr.mxu0 0.0
        %980 = vmatpush1.msra.mxu0 %v344
        %981 = vmatprep.subr.mxu0 0.0
        %982 = vmatpush1.msra.mxu0 %v345
        %983 = vmatprep.subr.mxu0 0.0
        %984 = vmatpush1.msra.mxu0 %v346
        %985 = vmatprep.subr.mxu0 0.0
        %986 = vmatpush1.msra.mxu0 %v347
        %987 = vmatprep.subr.mxu0 0.0
        %988 = vmatpush1.msra.mxu0 %v348
        %989 = vmatprep.mubr.f32.mxu0 %v280
        %990 = vmatmul.mubr.f32.gmra.mrb[0].mxu0 %v279
        %v991 = vpop.f32.mrb[0].mxu0
        %v992 = vadd.f32 0.0, %v991
        %v993 = vpop.f32.mrb[0].mxu0
        %994 = vdwg.mxu0
        %995 = vmatprep.subr.mxu0 0.0
        %996 = vmatpush1.msra.mxu0 %v349
        %997 = vmatprep.subr.mxu0 0.0
        %998 = vmatpush1.msra.mxu0 %v350
        %999 = vmatprep.subr.mxu0 0.0
        %1000 = vmatpush1.msra.mxu0 %v351
        %1001 = vmatprep.subr.mxu0 0.0
        %1002 = vmatpush1.msra.mxu0 %v352
        %1003 = vmatprep.subr.mxu0 0.0
        %1004 = vmatpush1.msra.mxu0 %v353
        %1005 = vmatprep.subr.mxu0 0.0
        %1006 = vmatpush1.msra.mxu0 %v354
        %1007 = vmatprep.subr.mxu0 0.0
        %1008 = vmatpush1.msra.mxu0 %v355
        %1009 = vmatprep.subr.mxu0 0.0
        %1010 = vmatpush1.msra.mxu0 %v356
        %1011 = vmatprep.subr.mxu0 0.0
        %1012 = vmatpush1.msra.mxu0 %v357
        %1013 = vmatprep.subr.mxu0 0.0
        %1014 = vmatpush1.msra.mxu0 %v358
        %1015 = vmatprep.subr.mxu0 0.0
        %1016 = vmatpush1.msra.mxu0 %v359
        %1017 = vmatprep.subr.mxu0 0.0
        %1018 = vmatpush1.msra.mxu0 %v360
        %1019 = vmatprep.subr.mxu0 0.0
        %1020 = vmatpush1.msra.mxu0 %v361
        %1021 = vmatprep.subr.mxu0 0.0
        %1022 = vmatpush1.msra.mxu0 %v362
        %1023 = vmatprep.subr.mxu0 0.0
        %1024 = vmatpush1.msra.mxu0 %v363
        %1025 = vmatprep.subr.mxu0 0.0
        %1026 = vmatpush1.msra.mxu0 %v364
        %1027 = vmatprep.subr.mxu0 0.0
        %1028 = vmatpush1.msra.mxu0 %v365
        %1029 = vmatprep.subr.mxu0 0.0
        %1030 = vmatpush1.msra.mxu0 %v366
        %1031 = vmatprep.subr.mxu0 0.0
        %1032 = vmatpush1.msra.mxu0 %v367
        %1033 = vmatprep.subr.mxu0 0.0
        %1034 = vmatpush1.msra.mxu0 %v368
        %1035 = vmatprep.subr.mxu0 0.0
        %1036 = vmatpush1.msra.mxu0 %v369
        %1037 = vmatprep.subr.mxu0 0.0
        %1038 = vmatpush1.msra.mxu0 %v370
        %1039 = vmatprep.subr.mxu0 0.0
        %1040 = vmatpush1.msra.mxu0 %v371
        %1041 = vmatprep.subr.mxu0 0.0
        %1042 = vmatpush1.msra.mxu0 %v372
        %1043 = vmatprep.subr.mxu0 0.0
        %1044 = vmatpush1.msra.mxu0 %v373
        %1045 = vmatprep.subr.mxu0 0.0
        %1046 = vmatpush1.msra.mxu0 %v374
        %1047 = vmatprep.subr.mxu0 0.0
        %1048 = vmatpush1.msra.mxu0 %v375
        %1049 = vmatprep.subr.mxu0 0.0
        %1050 = vmatpush1.msra.mxu0 %v376
        %1051 = vmatprep.subr.mxu0 0.0
        %1052 = vmatpush1.msra.mxu0 %v377
        %1053 = vmatprep.subr.mxu0 0.0
        %1054 = vmatpush1.msra.mxu0 %v378
        %1055 = vmatprep.subr.mxu0 0.0
        %1056 = vmatpush1.msra.mxu0 %v379
        %1057 = vmatprep.subr.mxu0 0.0
        %1058 = vmatpush1.msra.mxu0 %v380
        %1059 = vmatprep.mubr.f32.mxu0 %v282
        %1060 = vmatmul.mubr.f32.gmra.mrb[0].mxu0 %v281
        %v1061 = vpop.f32.mrb[0].mxu0
        %v1062 = vadd.f32 %v992, %v1061
        %v1063 = vpop.f32.mrb[0].mxu0
        %1064 = vdwg.mxu0
        %1065 = vmatprep.subr.mxu0 0.0
        %1066 = vmatpush1.msra.mxu0 %v381
        %1067 = vmatprep.subr.mxu0 0.0
        %1068 = vmatpush1.msra.mxu0 %v382
        %1069 = vmatprep.subr.mxu0 0.0
        %1070 = vmatpush1.msra.mxu0 %v383
        %1071 = vmatprep.subr.mxu0 0.0
        %1072 = vmatpush1.msra.mxu0 %v384
        %1073 = vmatprep.subr.mxu0 0.0
        %1074 = vmatpush1.msra.mxu0 %v385
        %1075 = vmatprep.subr.mxu0 0.0
        %1076 = vmatpush1.msra.mxu0 %v386
        %1077 = vmatprep.subr.mxu0 0.0
        %1078 = vmatpush1.msra.mxu0 %v387
        %1079 = vmatprep.subr.mxu0 0.0
        %1080 = vmatpush1.msra.mxu0 %v388
        %1081 = vmatprep.subr.mxu0 0.0
        %1082 = vmatpush1.msra.mxu0 %v389
        %1083 = vmatprep.subr.mxu0 0.0
        %1084 = vmatpush1.msra.mxu0 %v390
        %1085 = vmatprep.subr.mxu0 0.0
        %1086 = vmatpush1.msra.mxu0 %v391
        %1087 = vmatprep.subr.mxu0 0.0
        %1088 = vmatpush1.msra.mxu0 %v392
        %1089 = vmatprep.subr.mxu0 0.0
        %1090 = vmatpush1.msra.mxu0 %v393
        %1091 = vmatprep.subr.mxu0 0.0
        %1092 = vmatpush1.msra.mxu0 %v394
        %1093 = vmatprep.subr.mxu0 0.0
        %1094 = vmatpush1.msra.mxu0 %v395
        %1095 = vmatprep.subr.mxu0 0.0
        %1096 = vmatpush1.msra.mxu0 %v396
        %1097 = vmatprep.subr.mxu0 0.0
        %1098 = vmatpush1.msra.mxu0 %v397
        %1099 = vmatprep.subr.mxu0 0.0
        %1100 = vmatpush1.msra.mxu0 %v398
        %1101 = vmatprep.subr.mxu0 0.0
        %1102 = vmatpush1.msra.mxu0 %v399
        %1103 = vmatprep.subr.mxu0 0.0
        %1104 = vmatpush1.msra.mxu0 %v400
        %1105 = vmatprep.subr.mxu0 0.0
        %1106 = vmatpush1.msra.mxu0 %v401
        %1107 = vmatprep.subr.mxu0 0.0
        %1108 = vmatpush1.msra.mxu0 %v402
        %1109 = vmatprep.subr.mxu0 0.0
        %1110 = vmatpush1.msra.mxu0 %v403
        %1111 = vmatprep.subr.mxu0 0.0
        %1112 = vmatpush1.msra.mxu0 %v404
        %1113 = vmatprep.subr.mxu0 0.0
        %1114 = vmatpush1.msra.mxu0 %v405
        %1115 = vmatprep.subr.mxu0 0.0
        %1116 = vmatpush1.msra.mxu0 %v406
        %1117 = vmatprep.subr.mxu0 0.0
        %1118 = vmatpush1.msra.mxu0 %v407
        %1119 = vmatprep.subr.mxu0 0.0
        %1120 = vmatpush1.msra.mxu0 %v408
        %1121 = vmatprep.subr.mxu0 0.0
        %1122 = vmatpush1.msra.mxu0 %v409
        %1123 = vmatprep.subr.mxu0 0.0
        %1124 = vmatpush1.msra.mxu0 %v410
        %1125 = vmatprep.subr.mxu0 0.0
        %1126 = vmatpush1.msra.mxu0 %v411
        %1127 = vmatprep.subr.mxu0 0.0
        %1128 = vmatpush1.msra.mxu0 %v412
        %1129 = vmatprep.mubr.f32.mxu0 %v284
        %1130 = vmatmul.mubr.f32.gmra.mrb[0].mxu0 %v283
        %v1131 = vpop.f32.mrb[0].mxu0
        %v1132 = vadd.f32 %v1062, %v1131
        %v1133 = vpop.f32.mrb[0].mxu0
        %1134 = vdwg.mxu0
        %1135 = vmatprep.subr.mxu0 0.0
        %1136 = vmatpush1.msra.mxu0 %v413
        %1137 = vmatprep.subr.mxu0 0.0
        %1138 = vmatpush1.msra.mxu0 %v414
        %1139 = vmatprep.subr.mxu0 0.0
        %1140 = vmatpush1.msra.mxu0 %v415
        %1141 = vmatprep.subr.mxu0 0.0
        %1142 = vmatpush1.msra.mxu0 %v416
        %1143 = vmatprep.subr.mxu0 0.0
        %1144 = vmatpush1.msra.mxu0 %v417
        %1145 = vmatprep.subr.mxu0 0.0
        %1146 = vmatpush1.msra.mxu0 %v418
        %1147 = vmatprep.subr.mxu0 0.0
        %1148 = vmatpush1.msra.mxu0 %v419
        %1149 = vmatprep.subr.mxu0 0.0
        %1150 = vmatpush1.msra.mxu0 %v420
        %1151 = vmatprep.subr.mxu0 0.0
        %1152 = vmatpush1.msra.mxu0 %v421
        %1153 = vmatprep.subr.mxu0 0.0
        %1154 = vmatpush1.msra.mxu0 %v422
        %1155 = vmatprep.subr.mxu0 0.0
        %1156 = vmatpush1.msra.mxu0 %v423
        %1157 = vmatprep.subr.mxu0 0.0
        %1158 = vmatpush1.msra.mxu0 %v424
        %1159 = vmatprep.subr.mxu0 0.0
        %1160 = vmatpush1.msra.mxu0 %v425
        %1161 = vmatprep.subr.mxu0 0.0
        %1162 = vmatpush1.msra.mxu0 %v426
        %1163 = vmatprep.subr.mxu0 0.0
        %1164 = vmatpush1.msra.mxu0 %v427
        %1165 = vmatprep.subr.mxu0 0.0
        %1166 = vmatpush1.msra.mxu0 %v428
        %1167 = vmatprep.subr.mxu0 0.0
        %1168 = vmatpush1.msra.mxu0 %v429
        %1169 = vmatprep.subr.mxu0 0.0
        %1170 = vmatpush1.msra.mxu0 %v430
        %1171 = vmatprep.subr.mxu0 0.0
        %1172 = vmatpush1.msra.mxu0 %v431
        %1173 = vmatprep.subr.mxu0 0.0
        %1174 = vmatpush1.msra.mxu0 %v432
        %1175 = vmatprep.subr.mxu0 0.0
        %1176 = vmatpush1.msra.mxu0 %v433
        %1177 = vmatprep.subr.mxu0 0.0
        %1178 = vmatpush1.msra.mxu0 %v434
        %1179 = vmatprep.subr.mxu0 0.0
        %1180 = vmatpush1.msra.mxu0 %v435
        %1181 = vmatprep.subr.mxu0 0.0
        %1182 = vmatpush1.msra.mxu0 %v436
        %1183 = vmatprep.subr.mxu0 0.0
        %1184 = vmatpush1.msra.mxu0 %v437
        %1185 = vmatprep.subr.mxu0 0.0
        %1186 = vmatpush1.msra.mxu0 %v438
        %1187 = vmatprep.subr.mxu0 0.0
        %1188 = vmatpush1.msra.mxu0 %v439
        %1189 = vmatprep.subr.mxu0 0.0
        %1190 = vmatpush1.msra.mxu0 %v440
        %1191 = vmatprep.subr.mxu0 0.0
        %1192 = vmatpush1.msra.mxu0 %v441
        %1193 = vmatprep.subr.mxu0 0.0
        %1194 = vmatpush1.msra.mxu0 %v442
        %1195 = vmatprep.subr.mxu0 0.0
        %1196 = vmatpush1.msra.mxu0 %v443
        %1197 = vmatprep.subr.mxu0 0.0
        %1198 = vmatpush1.msra.mxu0 %v444
        %1199 = vmatprep.mubr.f32.mxu0 %v286
        %1200 = vmatmul.mubr.f32.gmra.mrb[0].mxu0 %v285
        %v1201 = vpop.f32.mrb[0].mxu0
        %v1202 = vadd.f32 %v1132, %v1201
        %v1203 = vpop.f32.mrb[0].mxu0
        %1204 = vdwg.mxu0
        %1205 = vmatprep.subr.mxu0 0.0
        %1206 = vmatpush1.msra.mxu0 %v445
        %1207 = vmatprep.subr.mxu0 0.0
        %1208 = vmatpush1.msra.mxu0 %v446
        %1209 = vmatprep.subr.mxu0 0.0
        %1210 = vmatpush1.msra.mxu0 %v447
        %1211 = vmatprep.subr.mxu0 0.0
        %1212 = vmatpush1.msra.mxu0 %v448
        %1213 = vmatprep.subr.mxu0 0.0
        %1214 = vmatpush1.msra.mxu0 %v449
        %1215 = vmatprep.subr.mxu0 0.0
        %1216 = vmatpush1.msra.mxu0 %v450
        %1217 = vmatprep.subr.mxu0 0.0
        %1218 = vmatpush1.msra.mxu0 %v451
        %1219 = vmatprep.subr.mxu0 0.0
        %1220 = vmatpush1.msra.mxu0 %v452
        %1221 = vmatprep.subr.mxu0 0.0
        %1222 = vmatpush1.msra.mxu0 %v453
        %1223 = vmatprep.subr.mxu0 0.0
        %1224 = vmatpush1.msra.mxu0 %v454
        %1225 = vmatprep.subr.mxu0 0.0
        %1226 = vmatpush1.msra.mxu0 %v455
        %1227 = vmatprep.subr.mxu0 0.0
        %1228 = vmatpush1.msra.mxu0 %v456
        %1229 = vmatprep.subr.mxu0 0.0
        %1230 = vmatpush1.msra.mxu0 %v457
        %1231 = vmatprep.subr.mxu0 0.0
        %1232 = vmatpush1.msra.mxu0 %v458
        %1233 = vmatprep.subr.mxu0 0.0
        %1234 = vmatpush1.msra.mxu0 %v459
        %1235 = vmatprep.subr.mxu0 0.0
        %1236 = vmatpush1.msra.mxu0 %v460
        %1237 = vmatprep.subr.mxu0 0.0
        %1238 = vmatpush1.msra.mxu0 %v461
        %1239 = vmatprep.subr.mxu0 0.0
        %1240 = vmatpush1.msra.mxu0 %v462
        %1241 = vmatprep.subr.mxu0 0.0
        %1242 = vmatpush1.msra.mxu0 %v463
        %1243 = vmatprep.subr.mxu0 0.0
        %1244 = vmatpush1.msra.mxu0 %v464
        %1245 = vmatprep.subr.mxu0 0.0
        %1246 = vmatpush1.msra.mxu0 %v465
        %1247 = vmatprep.subr.mxu0 0.0
        %1248 = vmatpush1.msra.mxu0 %v466
        %1249 = vmatprep.subr.mxu0 0.0
        %1250 = vmatpush1.msra.mxu0 %v467
        %1251 = vmatprep.subr.mxu0 0.0
        %1252 = vmatpush1.msra.mxu0 %v468
        %1253 = vmatprep.subr.mxu0 0.0
        %1254 = vmatpush1.msra.mxu0 %v469
        %1255 = vmatprep.subr.mxu0 0.0
        %1256 = vmatpush1.msra.mxu0 %v470
        %1257 = vmatprep.subr.mxu0 0.0
        %1258 = vmatpush1.msra.mxu0 %v471
        %1259 = vmatprep.subr.mxu0 0.0
        %1260 = vmatpush1.msra.mxu0 %v472
        %1261 = vmatprep.subr.mxu0 0.0
        %1262 = vmatpush1.msra.mxu0 %v473
        %1263 = vmatprep.subr.mxu0 0.0
        %1264 = vmatpush1.msra.mxu0 %v474
        %1265 = vmatprep.subr.mxu0 0.0
        %1266 = vmatpush1.msra.mxu0 %v475
        %1267 = vmatprep.subr.mxu0 0.0
        %1268 = vmatpush1.msra.mxu0 %v476
        %1269 = vmatprep.mubr.f32.mxu0 %v288
        %1270 = vmatmul.mubr.f32.gmra.mrb[0].mxu0 %v287
        %v1271 = vpop.f32.mrb[0].mxu0
        %v1272 = vadd.f32 %v1202, %v1271
        %v1273 = vpop.f32.mrb[0].mxu0
        %1274 = vdwg.mxu0
        %1275 = vmatprep.subr.mxu0 0.0
        %1276 = vmatpush1.msra.mxu0 %v477
        %1277 = vmatprep.subr.mxu0 0.0
        %1278 = vmatpush1.msra.mxu0 %v478
        %1279 = vmatprep.subr.mxu0 0.0
        %1280 = vmatpush1.msra.mxu0 %v479
        %1281 = vmatprep.subr.mxu0 0.0
        %1282 = vmatpush1.msra.mxu0 %v480
        %1283 = vmatprep.subr.mxu0 0.0
        %1284 = vmatpush1.msra.mxu0 %v481
        %1285 = vmatprep.subr.mxu0 0.0
        %1286 = vmatpush1.msra.mxu0 %v482
        %1287 = vmatprep.subr.mxu0 0.0
        %1288 = vmatpush1.msra.mxu0 %v483
        %1289 = vmatprep.subr.mxu0 0.0
        %1290 = vmatpush1.msra.mxu0 %v484
        %1291 = vmatprep.subr.mxu0 0.0
        %1292 = vmatpush1.msra.mxu0 %v485
        %1293 = vmatprep.subr.mxu0 0.0
        %1294 = vmatpush1.msra.mxu0 %v486
        %1295 = vmatprep.subr.mxu0 0.0
        %1296 = vmatpush1.msra.mxu0 %v487
        %1297 = vmatprep.subr.mxu0 0.0
        %1298 = vmatpush1.msra.mxu0 %v488
        %1299 = vmatprep.subr.mxu0 0.0
        %1300 = vmatpush1.msra.mxu0 %v489
        %1301 = vmatprep.subr.mxu0 0.0
        %1302 = vmatpush1.msra.mxu0 %v490
        %1303 = vmatprep.subr.mxu0 0.0
        %1304 = vmatpush1.msra.mxu0 %v491
        %1305 = vmatprep.subr.mxu0 0.0
        %1306 = vmatpush1.msra.mxu0 %v492
        %1307 = vmatprep.subr.mxu0 0.0
        %1308 = vmatpush1.msra.mxu0 %v493
        %1309 = vmatprep.subr.mxu0 0.0
        %1310 = vmatpush1.msra.mxu0 %v494
        %1311 = vmatprep.subr.mxu0 0.0
        %1312 = vmatpush1.msra.mxu0 %v495
        %1313 = vmatprep.subr.mxu0 0.0
        %1314 = vmatpush1.msra.mxu0 %v496
        %1315 = vmatprep.subr.mxu0 0.0
        %1316 = vmatpush1.msra.mxu0 %v497
        %1317 = vmatprep.subr.mxu0 0.0
        %1318 = vmatpush1.msra.mxu0 %v498
        %1319 = vmatprep.subr.mxu0 0.0
        %1320 = vmatpush1.msra.mxu0 %v499
        %1321 = vmatprep.subr.mxu0 0.0
        %1322 = vmatpush1.msra.mxu0 %v500
        %1323 = vmatprep.subr.mxu0 0.0
        %1324 = vmatpush1.msra.mxu0 %v501
        %1325 = vmatprep.subr.mxu0 0.0
        %1326 = vmatpush1.msra.mxu0 %v502
        %1327 = vmatprep.subr.mxu0 0.0
        %1328 = vmatpush1.msra.mxu0 %v503
        %1329 = vmatprep.subr.mxu0 0.0
        %1330 = vmatpush1.msra.mxu0 %v504
        %1331 = vmatprep.subr.mxu0 0.0
        %1332 = vmatpush1.msra.mxu0 %v505
        %1333 = vmatprep.subr.mxu0 0.0
        %1334 = vmatpush1.msra.mxu0 %v506
        %1335 = vmatprep.subr.mxu0 0.0
        %1336 = vmatpush1.msra.mxu0 %v507
        %1337 = vmatprep.subr.mxu0 0.0
        %1338 = vmatpush1.msra.mxu0 %v508
        %1339 = vmatprep.mubr.f32.mxu0 %v290
        %1340 = vmatmul.mubr.f32.gmra.mrb[0].mxu0 %v289
        %v1341 = vpop.f32.mrb[0].mxu0
        %v1342 = vadd.f32 %v1272, %v1341
        %v1343 = vpop.f32.mrb[0].mxu0
        %1344 = vdwg.mxu0
        %1345 = vmatprep.subr.mxu0 0.0
        %1346 = vmatpush1.msra.mxu0 %v509
        %1347 = vmatprep.subr.mxu0 0.0
        %1348 = vmatpush1.msra.mxu0 %v510
        %1349 = vmatprep.subr.mxu0 0.0
        %1350 = vmatpush1.msra.mxu0 %v511
        %1351 = vmatprep.subr.mxu0 0.0
        %1352 = vmatpush1.msra.mxu0 %v512
        %1353 = vmatprep.subr.mxu0 0.0
        %1354 = vmatpush1.msra.mxu0 %v513
        %1355 = vmatprep.subr.mxu0 0.0
        %1356 = vmatpush1.msra.mxu0 %v514
        %1357 = vmatprep.subr.mxu0 0.0
        %1358 = vmatpush1.msra.mxu0 %v515
        %1359 = vmatprep.subr.mxu0 0.0
        %1360 = vmatpush1.msra.mxu0 %v516
        %1361 = vmatprep.subr.mxu0 0.0
        %1362 = vmatpush1.msra.mxu0 %v517
        %1363 = vmatprep.subr.mxu0 0.0
        %1364 = vmatpush1.msra.mxu0 %v518
        %1365 = vmatprep.subr.mxu0 0.0
        %1366 = vmatpush1.msra.mxu0 %v519
        %1367 = vmatprep.subr.mxu0 0.0
        %1368 = vmatpush1.msra.mxu0 %v520
        %1369 = vmatprep.subr.mxu0 0.0
        %1370 = vmatpush1.msra.mxu0 %v521
        %1371 = vmatprep.subr.mxu0 0.0
        %1372 = vmatpush1.msra.mxu0 %v522
        %1373 = vmatprep.subr.mxu0 0.0
        %1374 = vmatpush1.msra.mxu0 %v523
        %1375 = vmatprep.subr.mxu0 0.0
        %1376 = vmatpush1.msra.mxu0 %v524
        %1377 = vmatprep.subr.mxu0 0.0
        %1378 = vmatpush1.msra.mxu0 %v525
        %1379 = vmatprep.subr.mxu0 0.0
        %1380 = vmatpush1.msra.mxu0 %v526
        %1381 = vmatprep.subr.mxu0 0.0
        %1382 = vmatpush1.msra.mxu0 %v527
        %1383 = vmatprep.subr.mxu0 0.0
        %1384 = vmatpush1.msra.mxu0 %v528
        %1385 = vmatprep.subr.mxu0 0.0
        %1386 = vmatpush1.msra.mxu0 %v529
        %1387 = vmatprep.subr.mxu0 0.0
        %1388 = vmatpush1.msra.mxu0 %v530
        %1389 = vmatprep.subr.mxu0 0.0
        %1390 = vmatpush1.msra.mxu0 %v531
        %1391 = vmatprep.subr.mxu0 0.0
        %1392 = vmatpush1.msra.mxu0 %v532
        %1393 = vmatprep.subr.mxu0 0.0
        %1394 = vmatpush1.msra.mxu0 %v533
        %1395 = vmatprep.subr.mxu0 0.0
        %1396 = vmatpush1.msra.mxu0 %v534
        %1397 = vmatprep.subr.mxu0 0.0
        %1398 = vmatpush1.msra.mxu0 %v535
        %1399 = vmatprep.subr.mxu0 0.0
        %1400 = vmatpush1.msra.mxu0 %v536
        %1401 = vmatprep.subr.mxu0 0.0
        %1402 = vmatpush1.msra.mxu0 %v537
        %1403 = vmatprep.subr.mxu0 0.0
        %1404 = vmatpush1.msra.mxu0 %v538
        %1405 = vmatprep.subr.mxu0 0.0
        %1406 = vmatpush1.msra.mxu0 %v539
        %1407 = vmatprep.subr.mxu0 0.0
        %1408 = vmatpush1.msra.mxu0 %v540
        %1409 = vmatprep.mubr.f32.mxu0 %v292
        %1410 = vmatmul.mubr.f32.gmra.mrb[0].mxu0 %v291
        %v1411 = vpop.f32.mrb[0].mxu0
        %v1412 = vadd.f32 %v1342, %v1411
        %v1413 = vpop.f32.mrb[0].mxu0
        %1414 = vdwg.mxu0
        %1415 = vmatprep.subr.mxu0 0.0
        %1416 = vmatpush1.msra.mxu0 %v541
        %1417 = vmatprep.subr.mxu0 0.0
        %1418 = vmatpush1.msra.mxu0 %v542
        %1419 = vmatprep.subr.mxu0 0.0
        %1420 = vmatpush1.msra.mxu0 %v543
        %1421 = vmatprep.subr.mxu0 0.0
        %1422 = vmatpush1.msra.mxu0 %v544
        %1423 = vmatprep.subr.mxu0 0.0
        %1424 = vmatpush1.msra.mxu0 %v545
        %1425 = vmatprep.subr.mxu0 0.0
        %1426 = vmatpush1.msra.mxu0 %v546
        %1427 = vmatprep.subr.mxu0 0.0
        %1428 = vmatpush1.msra.mxu0 %v547
        %1429 = vmatprep.subr.mxu0 0.0
        %1430 = vmatpush1.msra.mxu0 %v548
        %1431 = vmatprep.subr.mxu0 0.0
        %1432 = vmatpush1.msra.mxu0 %v549
        %1433 = vmatprep.subr.mxu0 0.0
        %1434 = vmatpush1.msra.mxu0 %v550
        %1435 = vmatprep.subr.mxu0 0.0
        %1436 = vmatpush1.msra.mxu0 %v551
        %1437 = vmatprep.subr.mxu0 0.0
        %1438 = vmatpush1.msra.mxu0 %v552
        %1439 = vmatprep.subr.mxu0 0.0
        %1440 = vmatpush1.msra.mxu0 %v553
        %1441 = vmatprep.subr.mxu0 0.0
        %1442 = vmatpush1.msra.mxu0 %v554
        %1443 = vmatprep.subr.mxu0 0.0
        %1444 = vmatpush1.msra.mxu0 %v555
        %1445 = vmatprep.subr.mxu0 0.0
        %1446 = vmatpush1.msra.mxu0 %v556
        %1447 = vmatprep.subr.mxu0 0.0
        %1448 = vmatpush1.msra.mxu0 %v557
        %1449 = vmatprep.subr.mxu0 0.0
        %1450 = vmatpush1.msra.mxu0 %v558
        %1451 = vmatprep.subr.mxu0 0.0
        %1452 = vmatpush1.msra.mxu0 %v559
        %1453 = vmatprep.subr.mxu0 0.0
        %1454 = vmatpush1.msra.mxu0 %v560
        %1455 = vmatprep.subr.mxu0 0.0
        %1456 = vmatpush1.msra.mxu0 %v561
        %1457 = vmatprep.subr.mxu0 0.0
        %1458 = vmatpush1.msra.mxu0 %v562
        %1459 = vmatprep.subr.mxu0 0.0
        %1460 = vmatpush1.msra.mxu0 %v563
        %1461 = vmatprep.subr.mxu0 0.0
        %1462 = vmatpush1.msra.mxu0 %v564
        %1463 = vmatprep.subr.mxu0 0.0
        %1464 = vmatpush1.msra.mxu0 %v565
        %1465 = vmatprep.subr.mxu0 0.0
        %1466 = vmatpush1.msra.mxu0 %v566
        %1467 = vmatprep.subr.mxu0 0.0
        %1468 = vmatpush1.msra.mxu0 %v567
        %1469 = vmatprep.subr.mxu0 0.0
        %1470 = vmatpush1.msra.mxu0 %v568
        %1471 = vmatprep.subr.mxu0 0.0
        %1472 = vmatpush1.msra.mxu0 %v569
        %1473 = vmatprep.subr.mxu0 0.0
        %1474 = vmatpush1.msra.mxu0 %v570
        %1475 = vmatprep.subr.mxu0 0.0
        %1476 = vmatpush1.msra.mxu0 %v571
        %1477 = vmatprep.subr.mxu0 0.0
        %1478 = vmatpush1.msra.mxu0 %v572
        %1479 = vmatprep.mubr.f32.mxu0 %v294
        %1480 = vmatmul.mubr.f32.gmra.mrb[0].mxu0 %v293
        %v1481 = vpop.f32.mrb[0].mxu0
        %v1482 = vadd.f32 %v1412, %v1481
        %v1483 = vpop.f32.mrb[0].mxu0
        %1484 = vdwg.mxu0
        %1485 = vmatprep.subr.mxu0 0.0
        %1486 = vmatpush1.msra.mxu0 %v573
        %1487 = vmatprep.subr.mxu0 0.0
        %1488 = vmatpush1.msra.mxu0 %v574
        %1489 = vmatprep.subr.mxu0 0.0
        %1490 = vmatpush1.msra.mxu0 %v575
        %1491 = vmatprep.subr.mxu0 0.0
        %1492 = vmatpush1.msra.mxu0 %v576
        %1493 = vmatprep.subr.mxu0 0.0
        %1494 = vmatpush1.msra.mxu0 %v577
        %1495 = vmatprep.subr.mxu0 0.0
        %1496 = vmatpush1.msra.mxu0 %v578
        %1497 = vmatprep.subr.mxu0 0.0
        %1498 = vmatpush1.msra.mxu0 %v579
        %1499 = vmatprep.subr.mxu0 0.0
        %1500 = vmatpush1.msra.mxu0 %v580
        %1501 = vmatprep.subr.mxu0 0.0
        %1502 = vmatpush1.msra.mxu0 %v581
        %1503 = vmatprep.subr.mxu0 0.0
        %1504 = vmatpush1.msra.mxu0 %v582
        %1505 = vmatprep.subr.mxu0 0.0
        %1506 = vmatpush1.msra.mxu0 %v583
        %1507 = vmatprep.subr.mxu0 0.0
        %1508 = vmatpush1.msra.mxu0 %v584
        %1509 = vmatprep.subr.mxu0 0.0
        %1510 = vmatpush1.msra.mxu0 %v585
        %1511 = vmatprep.subr.mxu0 0.0
        %1512 = vmatpush1.msra.mxu0 %v586
        %1513 = vmatprep.subr.mxu0 0.0
        %1514 = vmatpush1.msra.mxu0 %v587
        %1515 = vmatprep.subr.mxu0 0.0
        %1516 = vmatpush1.msra.mxu0 %v588
        %1517 = vmatprep.subr.mxu0 0.0
        %1518 = vmatpush1.msra.mxu0 %v589
        %1519 = vmatprep.subr.mxu0 0.0
        %1520 = vmatpush1.msra.mxu0 %v590
        %1521 = vmatprep.subr.mxu0 0.0
        %1522 = vmatpush1.msra.mxu0 %v591
        %1523 = vmatprep.subr.mxu0 0.0
        %1524 = vmatpush1.msra.mxu0 %v592
        %1525 = vmatprep.subr.mxu0 0.0
        %1526 = vmatpush1.msra.mxu0 %v593
        %1527 = vmatprep.subr.mxu0 0.0
        %1528 = vmatpush1.msra.mxu0 %v594
        %1529 = vmatprep.subr.mxu0 0.0
        %1530 = vmatpush1.msra.mxu0 %v595
        %1531 = vmatprep.subr.mxu0 0.0
        %1532 = vmatpush1.msra.mxu0 %v596
        %1533 = vmatprep.subr.mxu0 0.0
        %1534 = vmatpush1.msra.mxu0 %v597
        %1535 = vmatprep.subr.mxu0 0.0
        %1536 = vmatpush1.msra.mxu0 %v598
        %1537 = vmatprep.subr.mxu0 0.0
        %1538 = vmatpush1.msra.mxu0 %v599
        %1539 = vmatprep.subr.mxu0 0.0
        %1540 = vmatpush1.msra.mxu0 %v600
        %1541 = vmatprep.subr.mxu0 0.0
        %1542 = vmatpush1.msra.mxu0 %v601
        %1543 = vmatprep.subr.mxu0 0.0
        %1544 = vmatpush1.msra.mxu0 %v602
        %1545 = vmatprep.subr.mxu0 0.0
        %1546 = vmatpush1.msra.mxu0 %v603
        %1547 = vmatprep.subr.mxu0 0.0
        %1548 = vmatpush1.msra.mxu0 %v604
        %1549 = vmatprep.mubr.f32.mxu0 %v296
        %1550 = vmatmul.mubr.f32.gmra.mrb[0].mxu0 %v295
        %v1551 = vpop.f32.mrb[0].mxu0
        %v1552 = vadd.f32 %v1482, %v1551
        %v1553 = vpop.f32.mrb[0].mxu0
        %1554 = vdwg.mxu0
        %1555 = vmatprep.subr.mxu0 0.0
        %1556 = vmatpush1.msra.mxu0 %v605
        %1557 = vmatprep.subr.mxu0 0.0
        %1558 = vmatpush1.msra.mxu0 %v606
        %1559 = vmatprep.subr.mxu0 0.0
        %1560 = vmatpush1.msra.mxu0 %v607
        %1561 = vmatprep.subr.mxu0 0.0
        %1562 = vmatpush1.msra.mxu0 %v608
        %1563 = vmatprep.subr.mxu0 0.0
        %1564 = vmatpush1.msra.mxu0 %v609
        %1565 = vmatprep.subr.mxu0 0.0
        %1566 = vmatpush1.msra.mxu0 %v610
        %1567 = vmatprep.subr.mxu0 0.0
        %1568 = vmatpush1.msra.mxu0 %v611
        %1569 = vmatprep.subr.mxu0 0.0
        %1570 = vmatpush1.msra.mxu0 %v612
        %1571 = vmatprep.subr.mxu0 0.0
        %1572 = vmatpush1.msra.mxu0 %v613
        %1573 = vmatprep.subr.mxu0 0.0
        %1574 = vmatpush1.msra.mxu0 %v614
        %1575 = vmatprep.subr.mxu0 0.0
        %1576 = vmatpush1.msra.mxu0 %v615
        %1577 = vmatprep.subr.mxu0 0.0
        %1578 = vmatpush1.msra.mxu0 %v616
        %1579 = vmatprep.subr.mxu0 0.0
        %1580 = vmatpush1.msra.mxu0 %v617
        %1581 = vmatprep.subr.mxu0 0.0
        %1582 = vmatpush1.msra.mxu0 %v618
        %1583 = vmatprep.subr.mxu0 0.0
        %1584 = vmatpush1.msra.mxu0 %v619
        %1585 = vmatprep.subr.mxu0 0.0
        %1586 = vmatpush1.msra.mxu0 %v620
        %1587 = vmatprep.subr.mxu0 0.0
        %1588 = vmatpush1.msra.mxu0 %v621
        %1589 = vmatprep.subr.mxu0 0.0
        %1590 = vmatpush1.msra.mxu0 %v622
        %1591 = vmatprep.subr.mxu0 0.0
        %1592 = vmatpush1.msra.mxu0 %v623
        %1593 = vmatprep.subr.mxu0 0.0
        %1594 = vmatpush1.msra.mxu0 %v624
        %1595 = vmatprep.subr.mxu0 0.0
        %1596 = vmatpush1.msra.mxu0 %v625
        %1597 = vmatprep.subr.mxu0 0.0
        %1598 = vmatpush1.msra.mxu0 %v626
        %1599 = vmatprep.subr.mxu0 0.0
        %1600 = vmatpush1.msra.mxu0 %v627
        %1601 = vmatprep.subr.mxu0 0.0
        %1602 = vmatpush1.msra.mxu0 %v628
        %1603 = vmatprep.subr.mxu0 0.0
        %1604 = vmatpush1.msra.mxu0 %v629
        %1605 = vmatprep.subr.mxu0 0.0
        %1606 = vmatpush1.msra.mxu0 %v630
        %1607 = vmatprep.subr.mxu0 0.0
        %1608 = vmatpush1.msra.mxu0 %v631
        %1609 = vmatprep.subr.mxu0 0.0
        %1610 = vmatpush1.msra.mxu0 %v632
        %1611 = vmatprep.subr.mxu0 0.0
        %1612 = vmatpush1.msra.mxu0 %v633
        %1613 = vmatprep.subr.mxu0 0.0
        %1614 = vmatpush1.msra.mxu0 %v634
        %1615 = vmatprep.subr.mxu0 0.0
        %1616 = vmatpush1.msra.mxu0 %v635
        %1617 = vmatprep.subr.mxu0 0.0
        %1618 = vmatpush1.msra.mxu0 %v636
        %1619 = vmatprep.mubr.f32.mxu0 %v298
        %1620 = vmatmul.mubr.f32.gmra.mrb[0].mxu0 %v297
        %v1621 = vpop.f32.mrb[0].mxu0
        %v1622 = vadd.f32 %v1552, %v1621
        %v1623 = vpop.f32.mrb[0].mxu0
        %1624 = vdwg.mxu0
        %1625 = vmatprep.subr.mxu0 0.0
        %1626 = vmatpush1.msra.mxu0 %v637
        %1627 = vmatprep.subr.mxu0 0.0
        %1628 = vmatpush1.msra.mxu0 %v638
        %1629 = vmatprep.subr.mxu0 0.0
        %1630 = vmatpush1.msra.mxu0 %v639
        %1631 = vmatprep.subr.mxu0 0.0
        %1632 = vmatpush1.msra.mxu0 %v640
        %1633 = vmatprep.subr.mxu0 0.0
        %1634 = vmatpush1.msra.mxu0 %v641
        %1635 = vmatprep.subr.mxu0 0.0
        %1636 = vmatpush1.msra.mxu0 %v642
        %1637 = vmatprep.subr.mxu0 0.0
        %1638 = vmatpush1.msra.mxu0 %v643
        %1639 = vmatprep.subr.mxu0 0.0
        %1640 = vmatpush1.msra.mxu0 %v644
        %1641 = vmatprep.subr.mxu0 0.0
        %1642 = vmatpush1.msra.mxu0 %v645
        %1643 = vmatprep.subr.mxu0 0.0
        %1644 = vmatpush1.msra.mxu0 %v646
        %1645 = vmatprep.subr.mxu0 0.0
        %1646 = vmatpush1.msra.mxu0 %v647
        %1647 = vmatprep.subr.mxu0 0.0
        %1648 = vmatpush1.msra.mxu0 %v648
        %1649 = vmatprep.subr.mxu0 0.0
        %1650 = vmatpush1.msra.mxu0 %v649
        %1651 = vmatprep.subr.mxu0 0.0
        %1652 = vmatpush1.msra.mxu0 %v650
        %1653 = vmatprep.subr.mxu0 0.0
        %1654 = vmatpush1.msra.mxu0 %v651
        %1655 = vmatprep.subr.mxu0 0.0
        %1656 = vmatpush1.msra.mxu0 %v652
        %1657 = vmatprep.subr.mxu0 0.0
        %1658 = vmatpush1.msra.mxu0 %v653
        %1659 = vmatprep.subr.mxu0 0.0
        %1660 = vmatpush1.msra.mxu0 %v654
        %1661 = vmatprep.subr.mxu0 0.0
        %1662 = vmatpush1.msra.mxu0 %v655
        %1663 = vmatprep.subr.mxu0 0.0
        %1664 = vmatpush1.msra.mxu0 %v656
        %1665 = vmatprep.subr.mxu0 0.0
        %1666 = vmatpush1.msra.mxu0 %v657
        %1667 = vmatprep.subr.mxu0 0.0
        %1668 = vmatpush1.msra.mxu0 %v658
        %1669 = vmatprep.subr.mxu0 0.0
        %1670 = vmatpush1.msra.mxu0 %v659
        %1671 = vmatprep.subr.mxu0 0.0
        %1672 = vmatpush1.msra.mxu0 %v660
        %1673 = vmatprep.subr.mxu0 0.0
        %1674 = vmatpush1.msra.mxu0 %v661
        %1675 = vmatprep.subr.mxu0 0.0
        %1676 = vmatpush1.msra.mxu0 %v662
        %1677 = vmatprep.subr.mxu0 0.0
        %1678 = vmatpush1.msra.mxu0 %v663
        %1679 = vmatprep.subr.mxu0 0.0
        %1680 = vmatpush1.msra.mxu0 %v664
        %1681 = vmatprep.subr.mxu0 0.0
        %1682 = vmatpush1.msra.mxu0 %v665
        %1683 = vmatprep.subr.mxu0 0.0
        %1684 = vmatpush1.msra.mxu0 %v666
        %1685 = vmatprep.subr.mxu0 0.0
        %1686 = vmatpush1.msra.mxu0 %v667
        %1687 = vmatprep.subr.mxu0 0.0
        %1688 = vmatpush1.msra.mxu0 %v668
        %1689 = vmatprep.mubr.f32.mxu0 %v300
        %1690 = vmatmul.mubr.f32.gmra.mrb[0].mxu0 %v299
        %v1691 = vpop.f32.mrb[0].mxu0
        %v1692 = vadd.f32 %v1622, %v1691
        %v1693 = vpop.f32.mrb[0].mxu0
        %1694 = vdwg.mxu0
        %1695 = vmatprep.subr.mxu0 0.0
        %1696 = vmatpush1.msra.mxu0 %v669
        %1697 = vmatprep.subr.mxu0 0.0
        %1698 = vmatpush1.msra.mxu0 %v670
        %1699 = vmatprep.subr.mxu0 0.0
        %1700 = vmatpush1.msra.mxu0 %v671
        %1701 = vmatprep.subr.mxu0 0.0
        %1702 = vmatpush1.msra.mxu0 %v672
        %1703 = vmatprep.subr.mxu0 0.0
        %1704 = vmatpush1.msra.mxu0 %v673
        %1705 = vmatprep.subr.mxu0 0.0
        %1706 = vmatpush1.msra.mxu0 %v674
        %1707 = vmatprep.subr.mxu0 0.0
        %1708 = vmatpush1.msra.mxu0 %v675
        %1709 = vmatprep.subr.mxu0 0.0
        %1710 = vmatpush1.msra.mxu0 %v676
        %1711 = vmatprep.subr.mxu0 0.0
        %1712 = vmatpush1.msra.mxu0 %v677
        %1713 = vmatprep.subr.mxu0 0.0
        %1714 = vmatpush1.msra.mxu0 %v678
        %1715 = vmatprep.subr.mxu0 0.0
        %1716 = vmatpush1.msra.mxu0 %v679
        %1717 = vmatprep.subr.mxu0 0.0
        %1718 = vmatpush1.msra.mxu0 %v680
        %1719 = vmatprep.subr.mxu0 0.0
        %1720 = vmatpush1.msra.mxu0 %v681
        %1721 = vmatprep.subr.mxu0 0.0
        %1722 = vmatpush1.msra.mxu0 %v682
        %1723 = vmatprep.subr.mxu0 0.0
        %1724 = vmatpush1.msra.mxu0 %v683
        %1725 = vmatprep.subr.mxu0 0.0
        %1726 = vmatpush1.msra.mxu0 %v684
        %1727 = vmatprep.subr.mxu0 0.0
        %1728 = vmatpush1.msra.mxu0 %v685
        %1729 = vmatprep.subr.mxu0 0.0
        %1730 = vmatpush1.msra.mxu0 %v686
        %1731 = vmatprep.subr.mxu0 0.0
        %1732 = vmatpush1.msra.mxu0 %v687
        %1733 = vmatprep.subr.mxu0 0.0
        %1734 = vmatpush1.msra.mxu0 %v688
        %1735 = vmatprep.subr.mxu0 0.0
        %1736 = vmatpush1.msra.mxu0 %v689
        %1737 = vmatprep.subr.mxu0 0.0
        %1738 = vmatpush1.msra.mxu0 %v690
        %1739 = vmatprep.subr.mxu0 0.0
        %1740 = vmatpush1.msra.mxu0 %v691
        %1741 = vmatprep.subr.mxu0 0.0
        %1742 = vmatpush1.msra.mxu0 %v692
        %1743 = vmatprep.subr.mxu0 0.0
        %1744 = vmatpush1.msra.mxu0 %v693
        %1745 = vmatprep.subr.mxu0 0.0
        %1746 = vmatpush1.msra.mxu0 %v694
        %1747 = vmatprep.subr.mxu0 0.0
        %1748 = vmatpush1.msra.mxu0 %v695
        %1749 = vmatprep.subr.mxu0 0.0
        %1750 = vmatpush1.msra.mxu0 %v696
        %1751 = vmatprep.subr.mxu0 0.0
        %1752 = vmatpush1.msra.mxu0 %v697
        %1753 = vmatprep.subr.mxu0 0.0
        %1754 = vmatpush1.msra.mxu0 %v698
        %1755 = vmatprep.subr.mxu0 0.0
        %1756 = vmatpush1.msra.mxu0 %v699
        %1757 = vmatprep.subr.mxu0 0.0
        %1758 = vmatpush1.msra.mxu0 %v700
        %1759 = vmatprep.mubr.f32.mxu0 %v302
        %1760 = vmatmul.mubr.f32.gmra.mrb[0].mxu0 %v301
        %v1761 = vpop.f32.mrb[0].mxu0
        %v1762 = vadd.f32 %v1692, %v1761
        %v1763 = vpop.f32.mrb[0].mxu0
        %1764 = vdwg.mxu0
        %1765 = vmatprep.subr.mxu0 0.0
        %1766 = vmatpush1.msra.mxu0 %v701
        %1767 = vmatprep.subr.mxu0 0.0
        %1768 = vmatpush1.msra.mxu0 %v702
        %1769 = vmatprep.subr.mxu0 0.0
        %1770 = vmatpush1.msra.mxu0 %v703
        %1771 = vmatprep.subr.mxu0 0.0
        %1772 = vmatpush1.msra.mxu0 %v704
        %1773 = vmatprep.subr.mxu0 0.0
        %1774 = vmatpush1.msra.mxu0 %v705
        %1775 = vmatprep.subr.mxu0 0.0
        %1776 = vmatpush1.msra.mxu0 %v706
        %1777 = vmatprep.subr.mxu0 0.0
        %1778 = vmatpush1.msra.mxu0 %v707
        %1779 = vmatprep.subr.mxu0 0.0
        %1780 = vmatpush1.msra.mxu0 %v708
        %1781 = vmatprep.subr.mxu0 0.0
        %1782 = vmatpush1.msra.mxu0 %v709
        %1783 = vmatprep.subr.mxu0 0.0
        %1784 = vmatpush1.msra.mxu0 %v710
        %1785 = vmatprep.subr.mxu0 0.0
        %1786 = vmatpush1.msra.mxu0 %v711
        %1787 = vmatprep.subr.mxu0 0.0
        %1788 = vmatpush1.msra.mxu0 %v712
        %1789 = vmatprep.subr.mxu0 0.0
        %1790 = vmatpush1.msra.mxu0 %v713
        %1791 = vmatprep.subr.mxu0 0.0
        %1792 = vmatpush1.msra.mxu0 %v714
        %1793 = vmatprep.subr.mxu0 0.0
        %1794 = vmatpush1.msra.mxu0 %v715
        %1795 = vmatprep.subr.mxu0 0.0
        %1796 = vmatpush1.msra.mxu0 %v716
        %1797 = vmatprep.subr.mxu0 0.0
        %1798 = vmatpush1.msra.mxu0 %v717
        %1799 = vmatprep.subr.mxu0 0.0
        %1800 = vmatpush1.msra.mxu0 %v718
        %1801 = vmatprep.subr.mxu0 0.0
        %1802 = vmatpush1.msra.mxu0 %v719
        %1803 = vmatprep.subr.mxu0 0.0
        %1804 = vmatpush1.msra.mxu0 %v720
        %1805 = vmatprep.subr.mxu0 0.0
        %1806 = vmatpush1.msra.mxu0 %v721
        %1807 = vmatprep.subr.mxu0 0.0
        %1808 = vmatpush1.msra.mxu0 %v722
        %1809 = vmatprep.subr.mxu0 0.0
        %1810 = vmatpush1.msra.mxu0 %v723
        %1811 = vmatprep.subr.mxu0 0.0
        %1812 = vmatpush1.msra.mxu0 %v724
        %1813 = vmatprep.subr.mxu0 0.0
        %1814 = vmatpush1.msra.mxu0 %v725
        %1815 = vmatprep.subr.mxu0 0.0
        %1816 = vmatpush1.msra.mxu0 %v726
        %1817 = vmatprep.subr.mxu0 0.0
        %1818 = vmatpush1.msra.mxu0 %v727
        %1819 = vmatprep.subr.mxu0 0.0
        %1820 = vmatpush1.msra.mxu0 %v728
        %1821 = vmatprep.subr.mxu0 0.0
        %1822 = vmatpush1.msra.mxu0 %v729
        %1823 = vmatprep.subr.mxu0 0.0
        %1824 = vmatpush1.msra.mxu0 %v730
        %1825 = vmatprep.subr.mxu0 0.0
        %1826 = vmatpush1.msra.mxu0 %v731
        %1827 = vmatprep.subr.mxu0 0.0
        %1828 = vmatpush1.msra.mxu0 %v732
        %1829 = vmatprep.mubr.f32.mxu0 %v304
        %1830 = vmatmul.mubr.f32.gmra.mrb[0].mxu0 %v303
        %v1831 = vpop.f32.mrb[0].mxu0
        %v1832 = vadd.f32 %v1762, %v1831
        %v1833 = vpop.f32.mrb[0].mxu0
        %1834 = vdwg.mxu0
        %1835 = vmatprep.subr.mxu0 0.0
        %1836 = vmatpush1.msra.mxu0 %v733
        %1837 = vmatprep.subr.mxu0 0.0
        %1838 = vmatpush1.msra.mxu0 %v734
        %1839 = vmatprep.subr.mxu0 0.0
        %1840 = vmatpush1.msra.mxu0 %v735
        %1841 = vmatprep.subr.mxu0 0.0
        %1842 = vmatpush1.msra.mxu0 %v736
        %1843 = vmatprep.subr.mxu0 0.0
        %1844 = vmatpush1.msra.mxu0 %v737
        %1845 = vmatprep.subr.mxu0 0.0
        %1846 = vmatpush1.msra.mxu0 %v738
        %1847 = vmatprep.subr.mxu0 0.0
        %1848 = vmatpush1.msra.mxu0 %v739
        %1849 = vmatprep.subr.mxu0 0.0
        %1850 = vmatpush1.msra.mxu0 %v740
        %1851 = vmatprep.subr.mxu0 0.0
        %1852 = vmatpush1.msra.mxu0 %v741
        %1853 = vmatprep.subr.mxu0 0.0
        %1854 = vmatpush1.msra.mxu0 %v742
        %1855 = vmatprep.subr.mxu0 0.0
        %1856 = vmatpush1.msra.mxu0 %v743
        %1857 = vmatprep.subr.mxu0 0.0
        %1858 = vmatpush1.msra.mxu0 %v744
        %1859 = vmatprep.subr.mxu0 0.0
        %1860 = vmatpush1.msra.mxu0 %v745
        %1861 = vmatprep.subr.mxu0 0.0
        %1862 = vmatpush1.msra.mxu0 %v746
        %1863 = vmatprep.subr.mxu0 0.0
        %1864 = vmatpush1.msra.mxu0 %v747
        %1865 = vmatprep.subr.mxu0 0.0
        %1866 = vmatpush1.msra.mxu0 %v748
        %1867 = vmatprep.subr.mxu0 0.0
        %1868 = vmatpush1.msra.mxu0 %v749
        %1869 = vmatprep.subr.mxu0 0.0
        %1870 = vmatpush1.msra.mxu0 %v750
        %1871 = vmatprep.subr.mxu0 0.0
        %1872 = vmatpush1.msra.mxu0 %v751
        %1873 = vmatprep.subr.mxu0 0.0
        %1874 = vmatpush1.msra.mxu0 %v752
        %1875 = vmatprep.subr.mxu0 0.0
        %1876 = vmatpush1.msra.mxu0 %v753
        %1877 = vmatprep.subr.mxu0 0.0
        %1878 = vmatpush1.msra.mxu0 %v754
        %1879 = vmatprep.subr.mxu0 0.0
        %1880 = vmatpush1.msra.mxu0 %v755
        %1881 = vmatprep.subr.mxu0 0.0
        %1882 = vmatpush1.msra.mxu0 %v756
        %1883 = vmatprep.subr.mxu0 0.0
        %1884 = vmatpush1.msra.mxu0 %v757
        %1885 = vmatprep.subr.mxu0 0.0
        %1886 = vmatpush1.msra.mxu0 %v758
        %1887 = vmatprep.subr.mxu0 0.0
        %1888 = vmatpush1.msra.mxu0 %v759
        %1889 = vmatprep.subr.mxu0 0.0
        %1890 = vmatpush1.msra.mxu0 %v760
        %1891 = vmatprep.subr.mxu0 0.0
        %1892 = vmatpush1.msra.mxu0 %v761
        %1893 = vmatprep.subr.mxu0 0.0
        %1894 = vmatpush1.msra.mxu0 %v762
        %1895 = vmatprep.subr.mxu0 0.0
        %1896 = vmatpush1.msra.mxu0 %v763
        %1897 = vmatprep.subr.mxu0 0.0
        %1898 = vmatpush1.msra.mxu0 %v764
        %1899 = vmatprep.mubr.f32.mxu0 %v306
        %1900 = vmatmul.mubr.f32.gmra.mrb[0].mxu0 %v305
        %v1901 = vpop.f32.mrb[0].mxu0
        %v1902 = vadd.f32 %v1832, %v1901
        %v1903 = vpop.f32.mrb[0].mxu0
        %1904 = vdwg.mxu0
        %1905 = vmatprep.subr.mxu0 0.0
        %1906 = vmatpush1.msra.mxu0 %v765
        %1907 = vmatprep.subr.mxu0 0.0
        %1908 = vmatpush1.msra.mxu0 %v766
        %1909 = vmatprep.subr.mxu0 0.0
        %1910 = vmatpush1.msra.mxu0 %v767
        %1911 = vmatprep.subr.mxu0 0.0
        %1912 = vmatpush1.msra.mxu0 %v768
        %1913 = vmatprep.subr.mxu0 0.0
        %1914 = vmatpush1.msra.mxu0 %v769
        %1915 = vmatprep.subr.mxu0 0.0
        %1916 = vmatpush1.msra.mxu0 %v770
        %1917 = vmatprep.subr.mxu0 0.0
        %1918 = vmatpush1.msra.mxu0 %v771
        %1919 = vmatprep.subr.mxu0 0.0
        %1920 = vmatpush1.msra.mxu0 %v772
        %1921 = vmatprep.subr.mxu0 0.0
        %1922 = vmatpush1.msra.mxu0 %v773
        %1923 = vmatprep.subr.mxu0 0.0
        %1924 = vmatpush1.msra.mxu0 %v774
        %1925 = vmatprep.subr.mxu0 0.0
        %1926 = vmatpush1.msra.mxu0 %v775
        %1927 = vmatprep.subr.mxu0 0.0
        %1928 = vmatpush1.msra.mxu0 %v776
        %1929 = vmatprep.subr.mxu0 0.0
        %1930 = vmatpush1.msra.mxu0 %v777
        %1931 = vmatprep.subr.mxu0 0.0
        %1932 = vmatpush1.msra.mxu0 %v778
        %1933 = vmatprep.subr.mxu0 0.0
        %1934 = vmatpush1.msra.mxu0 %v779
        %1935 = vmatprep.subr.mxu0 0.0
        %1936 = vmatpush1.msra.mxu0 %v780
        %1937 = vmatprep.subr.mxu0 0.0
        %1938 = vmatpush1.msra.mxu0 %v781
        %1939 = vmatprep.subr.mxu0 0.0
        %1940 = vmatpush1.msra.mxu0 %v782
        %1941 = vmatprep.subr.mxu0 0.0
        %1942 = vmatpush1.msra.mxu0 %v783
        %1943 = vmatprep.subr.mxu0 0.0
        %1944 = vmatpush1.msra.mxu0 %v784
        %1945 = vmatprep.subr.mxu0 0.0
        %1946 = vmatpush1.msra.mxu0 %v785
        %1947 = vmatprep.subr.mxu0 0.0
        %1948 = vmatpush1.msra.mxu0 %v786
        %1949 = vmatprep.subr.mxu0 0.0
        %1950 = vmatpush1.msra.mxu0 %v787
        %1951 = vmatprep.subr.mxu0 0.0
        %1952 = vmatpush1.msra.mxu0 %v788
        %1953 = vmatprep.subr.mxu0 0.0
        %1954 = vmatpush1.msra.mxu0 %v789
        %1955 = vmatprep.subr.mxu0 0.0
        %1956 = vmatpush1.msra.mxu0 %v790
        %1957 = vmatprep.subr.mxu0 0.0
        %1958 = vmatpush1.msra.mxu0 %v791
        %1959 = vmatprep.subr.mxu0 0.0
        %1960 = vmatpush1.msra.mxu0 %v792
        %1961 = vmatprep.subr.mxu0 0.0
        %1962 = vmatpush1.msra.mxu0 %v793
        %1963 = vmatprep.subr.mxu0 0.0
        %1964 = vmatpush1.msra.mxu0 %v794
        %1965 = vmatprep.subr.mxu0 0.0
        %1966 = vmatpush1.msra.mxu0 %v795
        %1967 = vmatprep.subr.mxu0 0.0
        %1968 = vmatpush1.msra.mxu0 %v796
        %1969 = vmatprep.mubr.f32.mxu0 %v308
        %1970 = vmatmul.mubr.f32.gmra.mrb[0].mxu0 %v307
        %v1971 = vpop.f32.mrb[0].mxu0
        %v1972 = vadd.f32 %v1902, %v1971
        %v1973 = vpop.f32.mrb[0].mxu0
        %1974 = vdwg.mxu0
        %1975 = vmatprep.subr.mxu0 0.0
        %1976 = vmatpush1.msra.mxu0 %v797
        %1977 = vmatprep.subr.mxu0 0.0
        %1978 = vmatpush1.msra.mxu0 %v798
        %1979 = vmatprep.subr.mxu0 0.0
        %1980 = vmatpush1.msra.mxu0 %v799
        %1981 = vmatprep.subr.mxu0 0.0
        %1982 = vmatpush1.msra.mxu0 %v800
        %1983 = vmatprep.subr.mxu0 0.0
        %1984 = vmatpush1.msra.mxu0 %v801
        %1985 = vmatprep.subr.mxu0 0.0
        %1986 = vmatpush1.msra.mxu0 %v802
        %1987 = vmatprep.subr.mxu0 0.0
        %1988 = vmatpush1.msra.mxu0 %v803
        %1989 = vmatprep.subr.mxu0 0.0
        %1990 = vmatpush1.msra.mxu0 %v804
        %1991 = vmatprep.subr.mxu0 0.0
        %1992 = vmatpush1.msra.mxu0 %v805
        %1993 = vmatprep.subr.mxu0 0.0
        %1994 = vmatpush1.msra.mxu0 %v806
        %1995 = vmatprep.subr.mxu0 0.0
        %1996 = vmatpush1.msra.mxu0 %v807
        %1997 = vmatprep.subr.mxu0 0.0
        %1998 = vmatpush1.msra.mxu0 %v808
        %1999 = vmatprep.subr.mxu0 0.0
        %2000 = vmatpush1.msra.mxu0 %v809
        %2001 = vmatprep.subr.mxu0 0.0
        %2002 = vmatpush1.msra.mxu0 %v810
        %2003 = vmatprep.subr.mxu0 0.0
        %2004 = vmatpush1.msra.mxu0 %v811
        %2005 = vmatprep.subr.mxu0 0.0
        %2006 = vmatpush1.msra.mxu0 %v812
        %2007 = vmatprep.subr.mxu0 0.0
        %2008 = vmatpush1.msra.mxu0 %v813
        %2009 = vmatprep.subr.mxu0 0.0
        %2010 = vmatpush1.msra.mxu0 %v814
        %2011 = vmatprep.subr.mxu0 0.0
        %2012 = vmatpush1.msra.mxu0 %v815
        %2013 = vmatprep.subr.mxu0 0.0
        %2014 = vmatpush1.msra.mxu0 %v816
        %2015 = vmatprep.subr.mxu0 0.0
        %2016 = vmatpush1.msra.mxu0 %v817
        %2017 = vmatprep.subr.mxu0 0.0
        %2018 = vmatpush1.msra.mxu0 %v818
        %2019 = vmatprep.subr.mxu0 0.0
        %2020 = vmatpush1.msra.mxu0 %v819
        %2021 = vmatprep.subr.mxu0 0.0
        %2022 = vmatpush1.msra.mxu0 %v820
        %2023 = vmatprep.subr.mxu0 0.0
        %2024 = vmatpush1.msra.mxu0 %v821
        %2025 = vmatprep.subr.mxu0 0.0
        %2026 = vmatpush1.msra.mxu0 %v822
        %2027 = vmatprep.subr.mxu0 0.0
        %2028 = vmatpush1.msra.mxu0 %v823
        %2029 = vmatprep.subr.mxu0 0.0
        %2030 = vmatpush1.msra.mxu0 %v824
        %2031 = vmatprep.subr.mxu0 0.0
        %2032 = vmatpush1.msra.mxu0 %v825
        %2033 = vmatprep.subr.mxu0 0.0
        %2034 = vmatpush1.msra.mxu0 %v826
        %2035 = vmatprep.subr.mxu0 0.0
        %2036 = vmatpush1.msra.mxu0 %v827
        %2037 = vmatprep.subr.mxu0 0.0
        %2038 = vmatpush1.msra.mxu0 %v828
        %2039 = vmatprep.mubr.f32.mxu0 %v310
        %2040 = vmatmul.mubr.f32.gmra.mrb[0].mxu0 %v309
        %v2041 = vpop.f32.mrb[0].mxu0
        %v2042 = vadd.f32 %v1972, %v2041
        %v2043 = vpop.f32.mrb[0].mxu0
        %2044 = vdwg.mxu0
        %2045 = vmatprep.subr.mxu0 0.0
        %2046 = vmatpush1.msra.mxu0 %v829
        %2047 = vmatprep.subr.mxu0 0.0
        %2048 = vmatpush1.msra.mxu0 %v830
        %2049 = vmatprep.subr.mxu0 0.0
        %2050 = vmatpush1.msra.mxu0 %v831
        %2051 = vmatprep.subr.mxu0 0.0
        %2052 = vmatpush1.msra.mxu0 %v832
        %2053 = vmatprep.subr.mxu0 0.0
        %2054 = vmatpush1.msra.mxu0 %v833
        %2055 = vmatprep.subr.mxu0 0.0
        %2056 = vmatpush1.msra.mxu0 %v834
        %2057 = vmatprep.subr.mxu0 0.0
        %2058 = vmatpush1.msra.mxu0 %v835
        %2059 = vmatprep.subr.mxu0 0.0
        %2060 = vmatpush1.msra.mxu0 %v836
        %2061 = vmatprep.subr.mxu0 0.0
        %2062 = vmatpush1.msra.mxu0 %v837
        %2063 = vmatprep.subr.mxu0 0.0
        %2064 = vmatpush1.msra.mxu0 %v838
        %2065 = vmatprep.subr.mxu0 0.0
        %2066 = vmatpush1.msra.mxu0 %v839
        %2067 = vmatprep.subr.mxu0 0.0
        %2068 = vmatpush1.msra.mxu0 %v840
        %2069 = vmatprep.subr.mxu0 0.0
        %2070 = vmatpush1.msra.mxu0 %v841
        %2071 = vmatprep.subr.mxu0 0.0
        %2072 = vmatpush1.msra.mxu0 %v842
        %2073 = vmatprep.subr.mxu0 0.0
        %2074 = vmatpush1.msra.mxu0 %v843
        %2075 = vmatprep.subr.mxu0 0.0
        %2076 = vmatpush1.msra.mxu0 %v844
        %2077 = vmatprep.subr.mxu0 0.0
        %2078 = vmatpush1.msra.mxu0 %v845
        %2079 = vmatprep.subr.mxu0 0.0
        %2080 = vmatpush1.msra.mxu0 %v846
        %2081 = vmatprep.subr.mxu0 0.0
        %2082 = vmatpush1.msra.mxu0 %v847
        %2083 = vmatprep.subr.mxu0 0.0
        %2084 = vmatpush1.msra.mxu0 %v848
        %2085 = vmatprep.subr.mxu0 0.0
        %2086 = vmatpush1.msra.mxu0 %v849
        %2087 = vmatprep.subr.mxu0 0.0
        %2088 = vmatpush1.msra.mxu0 %v850
        %2089 = vmatprep.subr.mxu0 0.0
        %2090 = vmatpush1.msra.mxu0 %v851
        %2091 = vmatprep.subr.mxu0 0.0
        %2092 = vmatpush1.msra.mxu0 %v852
        %2093 = vmatprep.subr.mxu0 0.0
        %2094 = vmatpush1.msra.mxu0 %v853
        %2095 = vmatprep.subr.mxu0 0.0
        %2096 = vmatpush1.msra.mxu0 %v854
        %2097 = vmatprep.subr.mxu0 0.0
        %2098 = vmatpush1.msra.mxu0 %v855
        %2099 = vmatprep.subr.mxu0 0.0
        %2100 = vmatpush1.msra.mxu0 %v856
        %2101 = vmatprep.subr.mxu0 0.0
        %2102 = vmatpush1.msra.mxu0 %v857
        %2103 = vmatprep.subr.mxu0 0.0
        %2104 = vmatpush1.msra.mxu0 %v858
        %2105 = vmatprep.subr.mxu0 0.0
        %2106 = vmatpush1.msra.mxu0 %v859
        %2107 = vmatprep.subr.mxu0 0.0
        %2108 = vmatpush1.msra.mxu0 %v860
        %2109 = vmatprep.mubr.f32.mxu0 %v312
        %2110 = vmatmul.mubr.f32.gmra.mrb[0].mxu0 %v311
        %v2111 = vpop.f32.mrb[0].mxu0
        %v2112 = vadd.f32 %v2042, %v2111
        %v2113 = vpop.f32.mrb[0].mxu0
        %2114 = vdwg.mxu0
        %2115 = vmatprep.subr.mxu0 0.0
        %2116 = vmatpush1.msra.mxu0 %v861
        %2117 = vmatprep.subr.mxu0 0.0
        %2118 = vmatpush1.msra.mxu0 %v862
        %2119 = vmatprep.subr.mxu0 0.0
        %2120 = vmatpush1.msra.mxu0 %v863
        %2121 = vmatprep.subr.mxu0 0.0
        %2122 = vmatpush1.msra.mxu0 %v864
        %2123 = vmatprep.subr.mxu0 0.0
        %2124 = vmatpush1.msra.mxu0 %v865
        %2125 = vmatprep.subr.mxu0 0.0
        %2126 = vmatpush1.msra.mxu0 %v866
        %2127 = vmatprep.subr.mxu0 0.0
        %2128 = vmatpush1.msra.mxu0 %v867
        %2129 = vmatprep.subr.mxu0 0.0
        %2130 = vmatpush1.msra.mxu0 %v868
        %2131 = vmatprep.subr.mxu0 0.0
        %2132 = vmatpush1.msra.mxu0 %v869
        %2133 = vmatprep.subr.mxu0 0.0
        %2134 = vmatpush1.msra.mxu0 %v870
        %2135 = vmatprep.subr.mxu0 0.0
        %2136 = vmatpush1.msra.mxu0 %v871
        %2137 = vmatprep.subr.mxu0 0.0
        %2138 = vmatpush1.msra.mxu0 %v872
        %2139 = vmatprep.subr.mxu0 0.0
        %2140 = vmatpush1.msra.mxu0 %v873
        %2141 = vmatprep.subr.mxu0 0.0
        %2142 = vmatpush1.msra.mxu0 %v874
        %2143 = vmatprep.subr.mxu0 0.0
        %2144 = vmatpush1.msra.mxu0 %v875
        %2145 = vmatprep.subr.mxu0 0.0
        %2146 = vmatpush1.msra.mxu0 %v876
        %2147 = vmatprep.subr.mxu0 0.0
        %2148 = vmatpush1.msra.mxu0 %v877
        %2149 = vmatprep.subr.mxu0 0.0
        %2150 = vmatpush1.msra.mxu0 %v878
        %2151 = vmatprep.subr.mxu0 0.0
        %2152 = vmatpush1.msra.mxu0 %v879
        %2153 = vmatprep.subr.mxu0 0.0
        %2154 = vmatpush1.msra.mxu0 %v880
        %2155 = vmatprep.subr.mxu0 0.0
        %2156 = vmatpush1.msra.mxu0 %v881
        %2157 = vmatprep.subr.mxu0 0.0
        %2158 = vmatpush1.msra.mxu0 %v882
        %2159 = vmatprep.subr.mxu0 0.0
        %2160 = vmatpush1.msra.mxu0 %v883
        %2161 = vmatprep.subr.mxu0 0.0
        %2162 = vmatpush1.msra.mxu0 %v884
        %2163 = vmatprep.subr.mxu0 0.0
        %2164 = vmatpush1.msra.mxu0 %v885
        %2165 = vmatprep.subr.mxu0 0.0
        %2166 = vmatpush1.msra.mxu0 %v886
        %2167 = vmatprep.subr.mxu0 0.0
        %2168 = vmatpush1.msra.mxu0 %v887
        %2169 = vmatprep.subr.mxu0 0.0
        %2170 = vmatpush1.msra.mxu0 %v888
        %2171 = vmatprep.subr.mxu0 0.0
        %2172 = vmatpush1.msra.mxu0 %v889
        %2173 = vmatprep.subr.mxu0 0.0
        %2174 = vmatpush1.msra.mxu0 %v890
        %2175 = vmatprep.subr.mxu0 0.0
        %2176 = vmatpush1.msra.mxu0 %v891
        %2177 = vmatprep.subr.mxu0 0.0
        %2178 = vmatpush1.msra.mxu0 %v892
        %2179 = vmatprep.mubr.f32.mxu0 %v314
        %2180 = vmatmul.mubr.f32.gmra.mrb[0].mxu0 %v313
        %v2181 = vpop.f32.mrb[0].mxu0
        %v2182 = vadd.f32 %v2112, %v2181
        %v2183 = vpop.f32.mrb[0].mxu0
        %2184 = vdwg.mxu0
        %2185 = vmatprep.subr.mxu0 0.0
        %2186 = vmatpush1.msra.mxu0 %v893
        %2187 = vmatprep.subr.mxu0 0.0
        %2188 = vmatpush1.msra.mxu0 %v894
        %2189 = vmatprep.subr.mxu0 0.0
        %2190 = vmatpush1.msra.mxu0 %v895
        %2191 = vmatprep.subr.mxu0 0.0
        %2192 = vmatpush1.msra.mxu0 %v896
        %2193 = vmatprep.subr.mxu0 0.0
        %2194 = vmatpush1.msra.mxu0 %v897
        %2195 = vmatprep.subr.mxu0 0.0
        %2196 = vmatpush1.msra.mxu0 %v898
        %2197 = vmatprep.subr.mxu0 0.0
        %2198 = vmatpush1.msra.mxu0 %v899
        %2199 = vmatprep.subr.mxu0 0.0
        %2200 = vmatpush1.msra.mxu0 %v900
        %2201 = vmatprep.subr.mxu0 0.0
        %2202 = vmatpush1.msra.mxu0 %v901
        %2203 = vmatprep.subr.mxu0 0.0
        %2204 = vmatpush1.msra.mxu0 %v902
        %2205 = vmatprep.subr.mxu0 0.0
        %2206 = vmatpush1.msra.mxu0 %v903
        %2207 = vmatprep.subr.mxu0 0.0
        %2208 = vmatpush1.msra.mxu0 %v904
        %2209 = vmatprep.subr.mxu0 0.0
        %2210 = vmatpush1.msra.mxu0 %v905
        %2211 = vmatprep.subr.mxu0 0.0
        %2212 = vmatpush1.msra.mxu0 %v906
        %2213 = vmatprep.subr.mxu0 0.0
        %2214 = vmatpush1.msra.mxu0 %v907
        %2215 = vmatprep.subr.mxu0 0.0
        %2216 = vmatpush1.msra.mxu0 %v908
        %2217 = vmatprep.subr.mxu0 0.0
        %2218 = vmatpush1.msra.mxu0 %v909
        %2219 = vmatprep.subr.mxu0 0.0
        %2220 = vmatpush1.msra.mxu0 %v910
        %2221 = vmatprep.subr.mxu0 0.0
        %2222 = vmatpush1.msra.mxu0 %v911
        %2223 = vmatprep.subr.mxu0 0.0
        %2224 = vmatpush1.msra.mxu0 %v912
        %2225 = vmatprep.subr.mxu0 0.0
        %2226 = vmatpush1.msra.mxu0 %v913
        %2227 = vmatprep.subr.mxu0 0.0
        %2228 = vmatpush1.msra.mxu0 %v914
        %2229 = vmatprep.subr.mxu0 0.0
        %2230 = vmatpush1.msra.mxu0 %v915
        %2231 = vmatprep.subr.mxu0 0.0
        %2232 = vmatpush1.msra.mxu0 %v916
        %2233 = vmatprep.subr.mxu0 0.0
        %2234 = vmatpush1.msra.mxu0 %v917
        %2235 = vmatprep.subr.mxu0 0.0
        %2236 = vmatpush1.msra.mxu0 %v918
        %2237 = vmatprep.subr.mxu0 0.0
        %2238 = vmatpush1.msra.mxu0 %v919
        %2239 = vmatprep.subr.mxu0 0.0
        %2240 = vmatpush1.msra.mxu0 %v920
        %2241 = vmatprep.subr.mxu0 0.0
        %2242 = vmatpush1.msra.mxu0 %v921
        %2243 = vmatprep.subr.mxu0 0.0
        %2244 = vmatpush1.msra.mxu0 %v922
        %2245 = vmatprep.subr.mxu0 0.0
        %2246 = vmatpush1.msra.mxu0 %v923
        %2247 = vmatprep.subr.mxu0 0.0
        %2248 = vmatpush1.msra.mxu0 %v924
        %2249 = vmatprep.mubr.f32.mxu0 %v316
        %2250 = vmatmul.mubr.f32.gmra.mrb[0].mxu0 %v315
        %v2251 = vpop.f32.mrb[0].mxu0
        %v2252 = vadd.f32 %v2182, %v2251
        %v2253 = vpop.f32.mrb[0].mxu0
        %2254 = vdwg.mxu0
        %v2255 = vadd.f32 %v278, %v2252
        %2256 = vst [vmem:[%s272] sm:$0xff] %v2255
        // Predicated region
        $region41: #{mlp_forward.4} parent=31 // pred_check
          %p2257 = pneg %p273
        $region42: #{mlp_forward.4} parent=31 // pred_check_branch
          %2259 = sbr.rel (%p2257) target = $region44
        $region43: #{mlp_forward.4} parent=31 // pred_region
          %v2260 = vld [vmem:[%s272] sm:$0xff]
          %v2261 = vld [vmem:[%s264] sm:$0x1]
          %v2263 = vlaneseq
          %v2264 = vshrl.u32 %v2263, 7
          %v2265 = vsub.s32 0, %v2264
          %v2266 = vrot.slane %v2261, %v2265
          %v2268 = vadd.f32 %v2260, %v2266
          %v2269 = vmax.f32 %v2268, 0.0
          %2270 = vst [vmem:[%s272] sm:$0xff] %v2269
        $region44: #{mlp_forward.4} parent=31 // pred_fallthru
          _
        %p2271 = scmp.lt.s32.totalorder %s22, 0
        %s2272 = scalar_select %p2271, %s22, 0
        %p2273 = scmp.lt.s32.totalorder %s23, 18
        %s2274 = scalar_select %p2273, %s23, 18
        %s2275 = smul.addr %s2272, 19
        %s2276 = sadd.s32 %s2274, %s2275
        %s2277 = smul.addr %s2276, 8
        %s2278 = scalar_lea.vmem %s3, %s2277
        // Predicated region
        $region45: #{mlp_forward.4} parent=31 // pred_check
          %p2279 = pneg %p138
        $region46: #{mlp_forward.4} parent=31 // pred_check_branch
          %2281 = sbr.rel (%p2279) target = $region48
        $region47: #{mlp_forward.4} parent=31 // pred_region
          _
        $region48: #{mlp_forward.4} parent=31 // pred_fallthru
          _
      $region32: #{mlp_forward.4} parent=5 // pred_fallthru
        _
      %p2282 = scmp.le.s32.totalorder 2, %s12
      // Predicated region
      $region49: #{mlp_forward.4} parent=5 // pred_check
        %p2283 = pneg %p2282
      $region50: #{mlp_forward.4} parent=5 // pred_check_branch
        %2285 = sbr.rel (%p2283) target = $region52
      $region51: #{mlp_forward.4} parent=5 // pred_region
        %s2286 = ssub.s32 %s12, 2
        // Predicated region
        $region53: #{mlp_forward.4} parent=51 // pred_check
          %p2287 = pneg %p144
        $region54: #{mlp_forward.4} parent=51 // pred_check_branch
          %2289 = sbr.rel (%p2287) target = $region56
        $region55: #{mlp_forward.4} parent=51 // pred_region
          %p2290 = scmp.lt.s32.totalorder %s25, 0
          %s2291 = scalar_select %p2290, %s25, 0
          %p2292 = scmp.lt.s32.totalorder %s26, 18
          %s2293 = scalar_select %p2292, %s26, 18
          %s2294 = smul.addr %s2291, 19
          %s2295 = sadd.s32 %s2293, %s2294
          %s2296 = smul.addr %s2295, 8
          %s2297 = scalar_lea.vmem %s3, %s2296
        $region56: #{mlp_forward.4} parent=51 // pred_fallthru
          _
      $region52: #{mlp_forward.4} parent=5 // pred_fallthru
        _
    $region6: #{mlp_forward.4} parent=1 // loop_footer
      %s16 = sadd.s32 1, %s12
    $region7: #{mlp_forward.4} parent=1 // loop_footer_branch
      %11 = sbr.rel target = $region3
    $region8: #{mlp_forward.4} parent=1 // loop_exit
      _
    %2298 = vsyncpa [#allocation3], 1
    %s2299 = scalar_lea.sflag [#allocation3], 1
    %2300 = vsyncpa %s2299, 1

// kernel: mlp_forward.3
$region0: #{mlp_forward.3}
  #allocation0 [shape = 'u32[]', space=smem, size = 0x4, offset = 0x4, fixed_abs, tag = 'smem constant byte address 0x4 - core index']
  #allocation1 [shape = 'u32[144,128]{1,0:T(1,128)}', space=vmem, size = 0x12000, scoped, tag = 'internal scratch']
  %s0 = inlined_call_operand.vmem [shape: f32[8,9728], index: 0, kind: input, shape index: {}]
  %s1 = inlined_call_operand.hbm [shape: f32[9728,4864], index: 1, kind: input, shape index: {}]
  %s2 = inlined_call_operand.hbm [shape: f32[1,4864], index: 2, kind: input, shape index: {}]
  %s3 = inlined_call_operand.vmem [shape: f32[8,4864], index: 3, kind: output, shape index: {}]
  %s4 = sld [smem:[#allocation0]]
  $region61: #{mlp_forward.3} parent=0
    _
  %s6 = ssub.s32 1, %s4
  %s7 = scalar_select 0, %s6, %s4
  $region1: #{mlp_forward.3} parent=0
    #allocation2 [shape = 'u8[9961472]{0}', space=vmem, size = 0x980000, scoped, tag = 'input window, operand 1']
    #allocation3 [shape = 's32[2]{0}', space=sflag, size = 0x8, scoped, tag = 'scoped memory for mlp_forward.3']
    #allocation4 [shape = 'u8[19456]{0}', space=vmem, size = 0x4c00, scoped, tag = 'input window, operand 2']
    #allocation5 [shape = 's32[2]{0}', space=sflag, size = 0x8, scoped, tag = 'scoped memory for mlp_forward.3']
    %8 = vsyncpa [#allocation3], 0
    %s9 = scalar_lea.sflag [#allocation3], 1
    %10 = vsyncpa %s9, 0
    %11 = vsyncpa [#allocation5], 0
    %s12 = scalar_lea.sflag [#allocation5], 1
    %13 = vsyncpa %s12, 0
    loop: start=0, step=1, limit=40
    $region2: #{mlp_forward.3} parent=1 // loop_pre_header
      _
    $region3: #{mlp_forward.3} parent=1 // loop_header
      %s15 = sphi 0, %s19
      %p16 = scmp.ge.s32.totalorder %s15, 40
      %s22 = sphi 0, %s41
      %s23 = sphi 0, %s37
      %s24 = sphi 0, %s33
      %s25 = sphi 0, %s22
      %s26 = sphi 0, %s23
      %s27 = sphi 0, %s24
      %s28 = sphi 0, %s25
      %s29 = sphi 0, %s26
      %s30 = sphi 0, %s27
      %s46 = sphi 0, %s48
      %s49 = sphi 0, %s46
      %s50 = sphi 0, %s49
      %s66 = sphi 0, %s50
      %s74 = sphi 0, %s76
      %s77 = sphi 0, %s74
      %s78 = sphi 0, %s77
      %s94 = sphi 0, %s78
      %s100 = sphi 0, %s102
      %s103 = sphi 0, %s100
      %s104 = sphi 0, %s103
      %s120 = sphi 0, %s104
      %s128 = sphi 0, %s130
      %s131 = sphi 0, %s128
      %s132 = sphi 0, %s131
      %s148 = sphi 0, %s132
    $region4: #{mlp_forward.3} parent=1 // loop_header_branch
      %18 = sbr.rel (%p16) target = $region8
    $region5: #{mlp_forward.3} parent=1 // loop_body
      %s20 = ssub.s32 %s15, 1
      %s21 = ssub.s32 %s15, 2
      %s31 = sadd.s32 1, %s24
      %p32 = scmp.ge.s32.totalorder %s31, 19
      %s33 = scalar_select %p32, 0, %s31
      %s34 = sadd.s32 1, %s23
      %s35 = scalar_select %p32, %s34, %s23
      %p36 = scmp.ge.s32.totalorder %s35, 2
      %s37 = scalar_select %p36, 0, %s35
      %s38 = sadd.s32 1, %s22
      %s39 = scalar_select %p36, %s38, %s22
      %p40 = scmp.ge.s32.totalorder %s39, 1
      %s41 = scalar_select %p40, 0, %s39
      %s42 = ssub.s32 %s22, %s41
      %s43 = ssub.s32 %s24, %s33
      %s44 = sor.u32 %s42, %s43
      %p45 = scmp.eq.s32.totalorder %s44, 0
      %s47 = sadd.s32 %s46, 1
      %s48 = scalar_select %p45, %s46, %s47
      %p51 = pneg %p45
      %p52 = scmp.eq.s32.totalorder %s15, 37
      %p53 = por %p51, %p52
      %p54 = scmp.ne.s32.totalorder %s46, %s49
      %p55 = scmp.eq.s32.totalorder %s15, 0
      %p56 = por %p54, %p55
      %p57 = scmp.ne.s32.totalorder %s46, %s49
      %p58 = scmp.eq.s32.totalorder %s20, 37
      %p59 = por %p57, %p58
      %p60 = scmp.ne.s32.totalorder %s49, %s50
      %p61 = scmp.eq.s32.totalorder %s20, 0
      %p62 = por %p60, %p61
      %p63 = scmp.ne.s32.totalorder %s49, %s50
      %p64 = scmp.eq.s32.totalorder %s21, 37
      %p65 = por %p63, %p64
      %p67 = scmp.ne.s32.totalorder %s50, %s66
      %p68 = scmp.eq.s32.totalorder %s21, 0
      %p69 = por %p67, %p68
      %s70 = ssub.s32 %s24, %s33
      %s71 = ssub.s32 %s23, %s37
      %s72 = sor.u32 %s70, %s71
      %p73 = scmp.eq.s32.totalorder %s72, 0
      %s75 = sadd.s32 %s74, 1
      %s76 = scalar_select %p73, %s74, %s75
      %p79 = pneg %p73
      %p80 = scmp.eq.s32.totalorder %s15, 37
      %p81 = por %p79, %p80
      %p82 = scmp.ne.s32.totalorder %s74, %s77
      %p83 = scmp.eq.s32.totalorder %s15, 0
      %p84 = por %p82, %p83
      %p85 = scmp.ne.s32.totalorder %s74, %s77
      %p86 = scmp.eq.s32.totalorder %s20, 37
      %p87 = por %p85, %p86
      %p88 = scmp.ne.s32.totalorder %s77, %s78
      %p89 = scmp.eq.s32.totalorder %s20, 0
      %p90 = por %p88, %p89
      %p91 = scmp.ne.s32.totalorder %s77, %s78
      %p92 = scmp.eq.s32.totalorder %s21, 37
      %p93 = por %p91, %p92
      %p95 = scmp.ne.s32.totalorder %s78, %s94
      %p96 = scmp.eq.s32.totalorder %s21, 0
      %p97 = por %p95, %p96
      %s98 = ssub.s32 %s23, %s37
      %p99 = scmp.eq.s32.totalorder %s98, 0
      %s101 = sadd.s32 %s100, 1
      %s102 = scalar_select %p99, %s100, %s101
      %p105 = pneg %p99
      %p106 = scmp.eq.s32.totalorder %s15, 37
      %p107 = por %p105, %p106
      %p108 = scmp.ne.s32.totalorder %s100, %s103
      %p109 = scmp.eq.s32.totalorder %s15, 0
      %p110 = por %p108, %p109
      %p111 = scmp.ne.s32.totalorder %s100, %s103
      %p112 = scmp.eq.s32.totalorder %s20, 37
      %p113 = por %p111, %p112
      %p114 = scmp.ne.s32.totalorder %s103, %s104
      %p115 = scmp.eq.s32.totalorder %s20, 0
      %p116 = por %p114, %p115
      %p117 = scmp.ne.s32.totalorder %s103, %s104
      %p118 = scmp.eq.s32.totalorder %s21, 37
      %p119 = por %p117, %p118
      %p121 = scmp.ne.s32.totalorder %s104, %s120
      %p122 = scmp.eq.s32.totalorder %s21, 0
      %p123 = por %p121, %p122
      %s124 = ssub.s32 %s22, %s41
      %s125 = ssub.s32 %s23, %s37
      %s126 = sor.u32 %s124, %s125
      %p127 = scmp.eq.s32.totalorder %s126, 0
      %s129 = sadd.s32 %s128, 1
      %s130 = scalar_select %p127, %s128, %s129
      %p133 = pneg %p127
      %p134 = scmp.eq.s32.totalorder %s15, 37
      %p135 = por %p133, %p134
      %p136 = scmp.ne.s32.totalorder %s128, %s131
      %p137 = scmp.eq.s32.totalorder %s15, 0
      %p138 = por %p136, %p137
      %p139 = scmp.ne.s32.totalorder %s128, %s131
      %p140 = scmp.eq.s32.totalorder %s20, 37
      %p141 = por %p139, %p140
      %p142 = scmp.ne.s32.totalorder %s131, %s132
      %p143 = scmp.eq.s32.totalorder %s20, 0
      %p144 = por %p142, %p143
      %p145 = scmp.ne.s32.totalorder %s131, %s132
      %p146 = scmp.eq.s32.totalorder %s21, 37
      %p147 = por %p145, %p146
      %p149 = scmp.ne.s32.totalorder %s132, %s148
      %p150 = scmp.eq.s32.totalorder %s21, 0
      %p151 = por %p149, %p150
      %p152 = scmp.le.s32.totalorder 1, %s15
      %p153 = scmp.lt.s32.totalorder %s15, 39
      %p154 = pnand %p152, %p153
      %p155 = pneg %p154
      // Predicated region
      $region9: #{mlp_forward.3} parent=5 // pred_check
        _
      $region10: #{mlp_forward.3} parent=5 // pred_check_branch
        %157 = sbr.rel (%p154) target = $region12
      $region11: #{mlp_forward.3} parent=5 // pred_region
        %s158 = ssub.s32 %s15, 1
      $region12: #{mlp_forward.3} parent=5 // pred_fallthru
        _
      %p159 = scmp.lt.s32.totalorder %s15, 38
      // Predicated region
      $region13: #{mlp_forward.3} parent=5 // pred_check
        %p160 = pneg %p159
      $region14: #{mlp_forward.3} parent=5 // pred_check_branch
        %162 = sbr.rel (%p160) target = $region16
      $region15: #{mlp_forward.3} parent=5 // pred_region
        // Predicated region
        $region17: #{mlp_forward.3} parent=15 // pred_check
          %p163 = pneg %p56
        $region18: #{mlp_forward.3} parent=15 // pred_check_branch
          %165 = sbr.rel (%p163) target = $region20
        $region19: #{mlp_forward.3} parent=15 // pred_region
          %s166 = smul.u32 4, %s24
          %p167 = scmp.lt.s32.totalorder %s22, 0
          %s168 = scalar_select %p167, %s22, 0
          %p169 = scmp.lt.s32.totalorder %s166, 75
          %s170 = scalar_select %p169, %s166, 75
          %s171 = smul.addr %s168, 76
          %s172 = sadd.s32 %s170, %s171
          %s173 = smul.addr %s172, 8
          %s174 = scalar_lea.vmem %s0, %s173
          %s175 = smul.u32 4, %s24
        $region20: #{mlp_forward.3} parent=15 // pred_fallthru
          _
        // Predicated region
        $region21: #{mlp_forward.3} parent=15 // pred_check
          %p176 = pneg %p84
        $region22: #{mlp_forward.3} parent=15 // pred_check_branch
          %178 = sbr.rel (%p176) target = $region24
        $region23: #{mlp_forward.3} parent=15 // pred_region
          %s179 = sand.u32 %s74, 1
          %s180 = scalar_lea.sflag [#allocation3], %s179
          %s181 = sand.u32 %s74, 1
          %s182 = smul.addr %s181, 9728
          %s183 = scalar_lea.vmem [#allocation2], %s182
          %s184 = smul.u32 64, %s24
          %s185 = smul.u32 19, %s23
          %s187 = ssub.s32 155648, 155648
          %188 = vsyncadd %s180, %s187
          %s189 = smul.addr %s184, 38
          %s190 = sadd.s32 %s185, %s189
          %s191 = smul.addr %s190, 128
          %s192 = scalar_lea.hbm %s1, %s191
          %s193 = sshll.u32 %s183, 4
          %s194 = int_to_ptr.vmem [resolvable:$true] %s193
          %199 = dma.hbm_to_vmem [thread:$0]  %s192, 155648, %s194, %s180, 4864, 2432, 152
        $region24: #{mlp_forward.3} parent=15 // pred_fallthru
          _
        // Predicated region
        $region25: #{mlp_forward.3} parent=15 // pred_check
          %p200 = pneg %p110
        $region26: #{mlp_forward.3} parent=15 // pred_check_branch
          %202 = sbr.rel (%p200) target = $region28
        $region27: #{mlp_forward.3} parent=15 // pred_region
          %s203 = sand.u32 %s100, 1
          %s204 = scalar_lea.sflag [#allocation5], %s203
          %s205 = sand.u32 %s100, 1
          %s206 = smul.addr %s205, 19
          %s207 = scalar_lea.vmem [#allocation4], %s206
          %s208 = smul.u32 19, %s23
          %s210 = ssub.s32 304, 304
          %211 = vsyncadd %s204, %s210
          %s212 = smul.addr %s208, 16
          %s213 = scalar_lea.hbm %s2, %s212
          %s215 = sshll.u32 %s207, 4
          %s216 = int_to_ptr.vmem [resolvable:$true] %s215
          %218 = dma.hbm_to_vmem [thread:$0]  %s213, 304, %s216, %s204
        $region28: #{mlp_forward.3} parent=15 // pred_fallthru
          _
      $region16: #{mlp_forward.3} parent=5 // pred_fallthru
        _
      %p219 = scmp.le.s32.totalorder 1, %s15
      %p220 = scmp.lt.s32.totalorder %s15, 39
      %p221 = pnand %p219, %p220
      %p222 = pneg %p221
      // Predicated region
      $region29: #{mlp_forward.3} parent=5 // pred_check
        _
      $region30: #{mlp_forward.3} parent=5 // pred_check_branch
        %224 = sbr.rel (%p221) target = $region32
      $region31: #{mlp_forward.3} parent=5 // pred_region
        %s225 = ssub.s32 %s15, 1
        %s226 = sand.u32 %s77, 1
        %s227 = scalar_lea.sflag [#allocation3], %s226
        %s228 = sand.u32 %s77, 1
        %s229 = smul.addr %s228, 9728
        %s230 = scalar_lea.vmem [#allocation2], %s229
        // Predicated region
        $region33: #{mlp_forward.3} parent=31 // pred_check
          %p231 = pneg %p90
        $region34: #{mlp_forward.3} parent=31 // pred_check_branch
          %233 = sbr.rel (%p231) target = $region36
        $region35: #{mlp_forward.3} parent=31 // pred_region
          %234 = dma.done %s227, 155648
        $region36: #{mlp_forward.3} parent=31 // pred_fallthru
          _
        %s235 = sand.u32 %s103, 1
        %s236 = scalar_lea.sflag [#allocation5], %s235
        %s237 = sand.u32 %s103, 1
        %s238 = smul.addr %s237, 19
        %s239 = scalar_lea.vmem [#allocation4], %s238
        // Predicated region
        $region37: #{mlp_forward.3} parent=31 // pred_check
          %p240 = pneg %p116
        $region38: #{mlp_forward.3} parent=31 // pred_check_branch
          %242 = sbr.rel (%p240) target = $region40
        $region39: #{mlp_forward.3} parent=31 // pred_region
          %243 = dma.done %s236, 304
        $region40: #{mlp_forward.3} parent=31 // pred_fallthru
          _
        %s244 = smul.u32 4, %s27
        %p245 = scmp.lt.s32.totalorder %s25, 0
        %s246 = scalar_select %p245, %s25, 0
        %p247 = scmp.lt.s32.totalorder %s244, 75
        %s248 = scalar_select %p247, %s244, 75
        %s249 = smul.addr %s246, 76
        %s250 = sadd.s32 %s248, %s249
        %s251 = smul.addr %s250, 8
        %s252 = scalar_lea.vmem %s0, %s251
        %p253 = pneg %p62
        %p254 = pneg %p59
        %s255 = sand.u32 %s77, 1
        %s256 = scalar_lea.sflag [#allocation3], %s255
        %s257 = sand.u32 %s77, 1
        %s258 = smul.addr %s257, 9728
        %s259 = scalar_lea.vmem [#allocation2], %s258
        %p260 = pneg %p90
        %p261 = pneg %p87
        %s262 = sand.u32 %s103, 1
        %s263 = scalar_lea.sflag [#allocation5], %s262
        %s264 = sand.u32 %s103, 1
        %s265 = smul.addr %s264, 19
        %s266 = scalar_lea.vmem [#allocation4], %s265
        %p267 = pneg %p116
        %p268 = pneg %p113
        %p269 = pneg %p144
        %p270 = pneg %p141
        %s271 = smul.u32 19, %s26
        %p272 = scmp.lt.s32.totalorder %s25, 0
        %s273 = scalar_select %p272, %s25, 0
        %p274 = scmp.lt.s32.totalorder %s271, 37
        %s275 = scalar_select %p274, %s271, 37
        %s276 = smul.addr %s273, 38
        %s277 = sadd.s32 %s275, %s276
        %s278 = smul.addr %s277, 8
        %s279 = scalar_lea.vmem %s3, %s278
        %s280 = smul.u32 4, %s27
        %p281 = scmp.lt.s32.totalorder %s25, 0
        %s282 = scalar_select %p281, %s25, 0
        %p283 = scmp.lt.s32.totalorder %s280, 75
        %s284 = scalar_select %p283, %s280, 75
        %s285 = smul.addr %s282, 76
        %s286 = sadd.s32 %s284, %s285
        %s287 = smul.addr %s286, 8
        %s288 = scalar_lea.vmem %s0, %s287
        %s289 = smul.u32 4, %s27
        %s290 = smul.u32 64, %s27
        %s291 = smul.u32 19, %s26
        %s292 = smul.u32 19, %s26
        %s293 = smul.u32 19, %s26
        %p294 = scmp.lt.s32.totalorder %s25, 0
        %s295 = scalar_select %p294, %s25, 0
        %p296 = scmp.lt.s32.totalorder %s293, 37
        %s297 = scalar_select %p296, %s293, 37
        %s298 = smul.addr %s295, 38
        %s299 = sadd.s32 %s297, %s298
        %s300 = smul.addr %s299, 8
        %s301 = scalar_lea.vmem %s3, %s300
        %s302 = smul.u32 19, %s26
        %p303 = scmp.eq.s32.totalorder %s27, 0
        // Predicated region
        $region41: #{mlp_forward.3} parent=31 // pred_check
          %p304 = pneg %p303
        $region42: #{mlp_forward.3} parent=31 // pred_check_branch
          %306 = sbr.rel (%p304) target = $region44
        $region43: #{mlp_forward.3} parent=31 // pred_region
          %307 = vst [vmem:[%s301] sm:$0xff] 0.0
          %308 = vst [vmem:[%s301 + $0x8] sm:$0xff] 0.0
          %309 = vst [vmem:[%s301 + $0x10] sm:$0xff] 0.0
          %310 = vst [vmem:[%s301 + $0x18] sm:$0xff] 0.0
          %311 = vst [vmem:[%s301 + $0x20] sm:$0xff] 0.0
          %312 = vst [vmem:[%s301 + $0x28] sm:$0xff] 0.0
          %313 = vst [vmem:[%s301 + $0x30] sm:$0xff] 0.0
          %314 = vst [vmem:[%s301 + $0x38] sm:$0xff] 0.0
          %315 = vst [vmem:[%s301 + $0x40] sm:$0xff] 0.0
          %316 = vst [vmem:[%s301 + $0x48] sm:$0xff] 0.0
          %317 = vst [vmem:[%s301 + $0x50] sm:$0xff] 0.0
          %318 = vst [vmem:[%s301 + $0x58] sm:$0xff] 0.0
          %319 = vst [vmem:[%s301 + $0x60] sm:$0xff] 0.0
          %320 = vst [vmem:[%s301 + $0x68] sm:$0xff] 0.0
          %321 = vst [vmem:[%s301 + $0x70] sm:$0xff] 0.0
          %322 = vst [vmem:[%s301 + $0x78] sm:$0xff] 0.0
          %323 = vst [vmem:[%s301 + $0x80] sm:$0xff] 0.0
          %324 = vst [vmem:[%s301 + $0x88] sm:$0xff] 0.0
          %325 = vst [vmem:[%s301 + $0x90] sm:$0xff] 0.0
        $region44: #{mlp_forward.3} parent=31 // pred_fallthru
          _
        %v326 = vld [vmem:[%s301] sm:$0xff]
        %v327 = vld [vmem:[%s301 + $0x8] sm:$0xff]
        %v328 = vld [vmem:[%s301 + $0x10] sm:$0xff]
        %v329 = vld [vmem:[%s301 + $0x18] sm:$0xff]
        %v330 = vld [vmem:[%s301 + $0x20] sm:$0xff]
        %v331 = vld [vmem:[%s301 + $0x28] sm:$0xff]
        %v332 = vld [vmem:[%s301 + $0x30] sm:$0xff]
        %v333 = vld [vmem:[%s301 + $0x38] sm:$0xff]
        %v334 = vld [vmem:[%s301 + $0x40] sm:$0xff]
        %v335 = vld [vmem:[%s301 + $0x48] sm:$0xff]
        %v336 = vld [vmem:[%s301 + $0x50] sm:$0xff]
        %v337 = vld [vmem:[%s301 + $0x58] sm:$0xff]
        %v338 = vld [vmem:[%s301 + $0x60] sm:$0xff]
        %v339 = vld [vmem:[%s301 + $0x68] sm:$0xff]
        %v340 = vld [vmem:[%s301 + $0x70] sm:$0xff]
        %v341 = vld [vmem:[%s301 + $0x78] sm:$0xff]
        %v342 = vld [vmem:[%s301 + $0x80] sm:$0xff]
        %v343 = vld [vmem:[%s301 + $0x88] sm:$0xff]
        %v344 = vld [vmem:[%s301 + $0x90] sm:$0xff]
        %v345 = vld [vmem:[%s288] sm:$0xff]
        %v346 = vld [vmem:[%s288 + $0x8] sm:$0xff]
        %v347 = vld [vmem:[%s288 + $0x10] sm:$0xff]
        %v348 = vld [vmem:[%s288 + $0x18] sm:$0xff]
        %v349 = vld [vmem:[%s230] sm:$0xff]
        %v350 = vld [vmem:[%s230 + $0x8] sm:$0xff]
        %v351 = vld [vmem:[%s230 + $0x10] sm:$0xff]
        %v352 = vld [vmem:[%s230 + $0x18] sm:$0xff]
        %v353 = vld [vmem:[%s230 + $0x20] sm:$0xff]
        %v354 = vld [vmem:[%s230 + $0x28] sm:$0xff]
        %v355 = vld [vmem:[%s230 + $0x30] sm:$0xff]
        %v356 = vld [vmem:[%s230 + $0x38] sm:$0xff]
        %v357 = vld [vmem:[%s230 + $0x40] sm:$0xff]
        %v358 = vld [vmem:[%s230 + $0x48] sm:$0xff]
        %v359 = vld [vmem:[%s230 + $0x50] sm:$0xff]
        %v360 = vld [vmem:[%s230 + $0x58] sm:$0xff]
        %v361 = vld [vmem:[%s230 + $0x60] sm:$0xff]
        %v362 = vld [vmem:[%s230 + $0x68] sm:$0xff]
        %v363 = vld [vmem:[%s230 + $0x70] sm:$0xff]
        %v364 = vld [vmem:[%s230 + $0x78] sm:$0xff]
        %v365 = vld [vmem:[%s230 + $0x80] sm:$0xff]
        %v366 = vld [vmem:[%s230 + $0x88] sm:$0xff]
        %v367 = vld [vmem:[%s230 + $0x90] sm:$0xff]
        %v368 = vld [vmem:[%s230 + $0x98] sm:$0xff]
        %v369 = vld [vmem:[%s230 + $0xa0] sm:$0xff]
        %v370 = vld [vmem:[%s230 + $0xa8] sm:$0xff]
        %v371 = vld [vmem:[%s230 + $0xb0] sm:$0xff]
        %v372 = vld [vmem:[%s230 + $0xb8] sm:$0xff]
        %v373 = vld [vmem:[%s230 + $0xc0] sm:$0xff]
        %v374 = vld [vmem:[%s230 + $0xc8] sm:$0xff]
        %v375 = vld [vmem:[%s230 + $0xd0] sm:$0xff]
        %v376 = vld [vmem:[%s230 + $0xd8] sm:$0xff]
        %v377 = vld [vmem:[%s230 + $0xe0] sm:$0xff]
        %v378 = vld [vmem:[%s230 + $0xe8] sm:$0xff]
        %v379 = vld [vmem:[%s230 + $0xf0] sm:$0xff]
        %v380 = vld [vmem:[%s230 + $0xf8] sm:$0xff]
        %v381 = vld [vmem:[%s230 + $0x100] sm:$0xff]
        %v382 = vld [vmem:[%s230 + $0x108] sm:$0xff]
        %v383 = vld [vmem:[%s230 + $0x110] sm:$0xff]
        %v384 = vld [vmem:[%s230 + $0x118] sm:$0xff]
        %v385 = vld [vmem:[%s230 + $0x120] sm:$0xff]
        %v386 = vld [vmem:[%s230 + $0x128] sm:$0xff]
        %v387 = vld [vmem:[%s230 + $0x130] sm:$0xff]
        %v388 = vld [vmem:[%s230 + $0x138] sm:$0xff]
        %v389 = vld [vmem:[%s230 + $0x140] sm:$0xff]
        %v390 = vld [vmem:[%s230 + $0x148] sm:$0xff]
        %v391 = vld [vmem:[%s230 + $0x150] sm:$0xff]
        %v392 = vld [vmem:[%s230 + $0x158] sm:$0xff]
        %v393 = vld [vmem:[%s230 + $0x160] sm:$0xff]
        %v394 = vld [vmem:[%s230 + $0x168] sm:$0xff]
        %v395 = vld [vmem:[%s230 + $0x170] sm:$0xff]
        %v396 = vld [vmem:[%s230 + $0x178] sm:$0xff]
        %v397 = vld [vmem:[%s230 + $0x180] sm:$0xff]
        %v398 = vld [vmem:[%s230 + $0x188] sm:$0xff]
        %v399 = vld [vmem:[%s230 + $0x190] sm:$0xff]
        %v400 = vld [vmem:[%s230 + $0x198] sm:$0xff]
        %v401 = vld [vmem:[%s230 + $0x1a0] sm:$0xff]
        %v402 = vld [vmem:[%s230 + $0x1a8] sm:$0xff]
        %v403 = vld [vmem:[%s230 + $0x1b0] sm:$0xff]
        %v404 = vld [vmem:[%s230 + $0x1b8] sm:$0xff]
        %v405 = vld [vmem:[%s230 + $0x1c0] sm:$0xff]
        %v406 = vld [vmem:[%s230 + $0x1c8] sm:$0xff]
        %v407 = vld [vmem:[%s230 + $0x1d0] sm:$0xff]
        %v408 = vld [vmem:[%s230 + $0x1d8] sm:$0xff]
        %v409 = vld [vmem:[%s230 + $0x1e0] sm:$0xff]
        %v410 = vld [vmem:[%s230 + $0x1e8] sm:$0xff]
        %v411 = vld [vmem:[%s230 + $0x1f0] sm:$0xff]
        %v412 = vld [vmem:[%s230 + $0x1f8] sm:$0xff]
        %v413 = vld [vmem:[%s230 + $0x200] sm:$0xff]
        %v414 = vld [vmem:[%s230 + $0x208] sm:$0xff]
        %v415 = vld [vmem:[%s230 + $0x210] sm:$0xff]
        %v416 = vld [vmem:[%s230 + $0x218] sm:$0xff]
        %v417 = vld [vmem:[%s230 + $0x220] sm:$0xff]
        %v418 = vld [vmem:[%s230 + $0x228] sm:$0xff]
        %v419 = vld [vmem:[%s230 + $0x230] sm:$0xff]
        %v420 = vld [vmem:[%s230 + $0x238] sm:$0xff]
        %v421 = vld [vmem:[%s230 + $0x240] sm:$0xff]
        %v422 = vld [vmem:[%s230 + $0x248] sm:$0xff]
        %v423 = vld [vmem:[%s230 + $0x250] sm:$0xff]
        %v424 = vld [vmem:[%s230 + $0x258] sm:$0xff]
        %v425 = vld [vmem:[%s230 + $0x260] sm:$0xff]
        %v426 = vld [vmem:[%s230 + $0x268] sm:$0xff]
        %v427 = vld [vmem:[%s230 + $0x270] sm:$0xff]
        %v428 = vld [vmem:[%s230 + $0x278] sm:$0xff]
        %v429 = vld [vmem:[%s230 + $0x280] sm:$0xff]
        %v430 = vld [vmem:[%s230 + $0x288] sm:$0xff]
        %v431 = vld [vmem:[%s230 + $0x290] sm:$0xff]
        %v432 = vld [vmem:[%s230 + $0x298] sm:$0xff]
        %v433 = vld [vmem:[%s230 + $0x2a0] sm:$0xff]
        %v434 = vld [vmem:[%s230 + $0x2a8] sm:$0xff]
        %v435 = vld [vmem:[%s230 + $0x2b0] sm:$0xff]
        %v436 = vld [vmem:[%s230 + $0x2b8] sm:$0xff]
        %v437 = vld [vmem:[%s230 + $0x2c0] sm:$0xff]
        %v438 = vld [vmem:[%s230 + $0x2c8] sm:$0xff]
        %v439 = vld [vmem:[%s230 + $0x2d0] sm:$0xff]
        %v440 = vld [vmem:[%s230 + $0x2d8] sm:$0xff]
        %v441 = vld [vmem:[%s230 + $0x2e0] sm:$0xff]
        %v442 = vld [vmem:[%s230 + $0x2e8] sm:$0xff]
        %v443 = vld [vmem:[%s230 + $0x2f0] sm:$0xff]
        %v444 = vld [vmem:[%s230 + $0x2f8] sm:$0xff]
        %v445 = vld [vmem:[%s230 + $0x300] sm:$0xff]
        %v446 = vld [vmem:[%s230 + $0x308] sm:$0xff]
        %v447 = vld [vmem:[%s230 + $0x310] sm:$0xff]
        %v448 = vld [vmem:[%s230 + $0x318] sm:$0xff]
        %v449 = vld [vmem:[%s230 + $0x320] sm:$0xff]
        %v450 = vld [vmem:[%s230 + $0x328] sm:$0xff]
        %v451 = vld [vmem:[%s230 + $0x330] sm:$0xff]
        %v452 = vld [vmem:[%s230 + $0x338] sm:$0xff]
        %v453 = vld [vmem:[%s230 + $0x340] sm:$0xff]
        %v454 = vld [vmem:[%s230 + $0x348] sm:$0xff]
        %v455 = vld [vmem:[%s230 + $0x350] sm:$0xff]
        %v456 = vld [vmem:[%s230 + $0x358] sm:$0xff]
        %v457 = vld [vmem:[%s230 + $0x360] sm:$0xff]
        %v458 = vld [vmem:[%s230 + $0x368] sm:$0xff]
        %v459 = vld [vmem:[%s230 + $0x370] sm:$0xff]
        %v460 = vld [vmem:[%s230 + $0x378] sm:$0xff]
        %v461 = vld [vmem:[%s230 + $0x380] sm:$0xff]
        %v462 = vld [vmem:[%s230 + $0x388] sm:$0xff]
        %v463 = vld [vmem:[%s230 + $0x390] sm:$0xff]
        %v464 = vld [vmem:[%s230 + $0x398] sm:$0xff]
        %v465 = vld [vmem:[%s230 + $0x3a0] sm:$0xff]
        %v466 = vld [vmem:[%s230 + $0x3a8] sm:$0xff]
        %v467 = vld [vmem:[%s230 + $0x3b0] sm:$0xff]
        %v468 = vld [vmem:[%s230 + $0x3b8] sm:$0xff]
        %v469 = vld [vmem:[%s230 + $0x3c0] sm:$0xff]
        %v470 = vld [vmem:[%s230 + $0x3c8] sm:$0xff]
        %v471 = vld [vmem:[%s230 + $0x3d0] sm:$0xff]
        %v472 = vld [vmem:[%s230 + $0x3d8] sm:$0xff]
        %v473 = vld [vmem:[%s230 + $0x3e0] sm:$0xff]
        %v474 = vld [vmem:[%s230 + $0x3e8] sm:$0xff]
        %v475 = vld [vmem:[%s230 + $0x3f0] sm:$0xff]
        %v476 = vld [vmem:[%s230 + $0x3f8] sm:$0xff]
        %v477 = vld [vmem:[%s230 + $0x400] sm:$0xff]
        %v478 = vld [vmem:[%s230 + $0x408] sm:$0xff]
        %v479 = vld [vmem:[%s230 + $0x410] sm:$0xff]
        %v480 = vld [vmem:[%s230 + $0x418] sm:$0xff]
        %v481 = vld [vmem:[%s230 + $0x420] sm:$0xff]
        %v482 = vld [vmem:[%s230 + $0x428] sm:$0xff]
        %v483 = vld [vmem:[%s230 + $0x430] sm:$0xff]
        %v484 = vld [vmem:[%s230 + $0x438] sm:$0xff]
        %v485 = vld [vmem:[%s230 + $0x440] sm:$0xff]
        %v486 = vld [vmem:[%s230 + $0x448] sm:$0xff]
        %v487 = vld [vmem:[%s230 + $0x450] sm:$0xff]
        %v488 = vld [vmem:[%s230 + $0x458] sm:$0xff]
        %v489 = vld [vmem:[%s230 + $0x460] sm:$0xff]
        %v490 = vld [vmem:[%s230 + $0x468] sm:$0xff]
        %v491 = vld [vmem:[%s230 + $0x470] sm:$0xff]
        %v492 = vld [vmem:[%s230 + $0x478] sm:$0xff]
        %v493 = vld [vmem:[%s230 + $0x480] sm:$0xff]
        %v494 = vld [vmem:[%s230 + $0x488] sm:$0xff]
        %v495 = vld [vmem:[%s230 + $0x490] sm:$0xff]
        %v496 = vld [vmem:[%s230 + $0x498] sm:$0xff]
        %v497 = vld [vmem:[%s230 + $0x4a0] sm:$0xff]
        %v498 = vld [vmem:[%s230 + $0x4a8] sm:$0xff]
        %v499 = vld [vmem:[%s230 + $0x4b0] sm:$0xff]
        %v500 = vld [vmem:[%s230 + $0x4b8] sm:$0xff]
        %v501 = vld [vmem:[%s230 + $0x4c0] sm:$0xff]
        %v502 = vld [vmem:[%s230 + $0x4c8] sm:$0xff]
        %v503 = vld [vmem:[%s230 + $0x4d0] sm:$0xff]
        %v504 = vld [vmem:[%s230 + $0x4d8] sm:$0xff]
        %v505 = vld [vmem:[%s230 + $0x4e0] sm:$0xff]
        %v506 = vld [vmem:[%s230 + $0x4e8] sm:$0xff]
        %v507 = vld [vmem:[%s230 + $0x4f0] sm:$0xff]
        %v508 = vld [vmem:[%s230 + $0x4f8] sm:$0xff]
        %v509 = vld [vmem:[%s230 + $0x500] sm:$0xff]
        %v510 = vld [vmem:[%s230 + $0x508] sm:$0xff]
        %v511 = vld [vmem:[%s230 + $0x510] sm:$0xff]
        %v512 = vld [vmem:[%s230 + $0x518] sm:$0xff]
        %v513 = vld [vmem:[%s230 + $0x520] sm:$0xff]
        %v514 = vld [vmem:[%s230 + $0x528] sm:$0xff]
        %v515 = vld [vmem:[%s230 + $0x530] sm:$0xff]
        %v516 = vld [vmem:[%s230 + $0x538] sm:$0xff]
        %v517 = vld [vmem:[%s230 + $0x540] sm:$0xff]
        %v518 = vld [vmem:[%s230 + $0x548] sm:$0xff]
        %v519 = vld [vmem:[%s230 + $0x550] sm:$0xff]
        %v520 = vld [vmem:[%s230 + $0x558] sm:$0xff]
        %v521 = vld [vmem:[%s230 + $0x560] sm:$0xff]
        %v522 = vld [vmem:[%s230 + $0x568] sm:$0xff]
        %v523 = vld [vmem:[%s230 + $0x570] sm:$0xff]
        %v524 = vld [vmem:[%s230 + $0x578] sm:$0xff]
        %v525 = vld [vmem:[%s230 + $0x580] sm:$0xff]
        %v526 = vld [vmem:[%s230 + $0x588] sm:$0xff]
        %v527 = vld [vmem:[%s230 + $0x590] sm:$0xff]
        %v528 = vld [vmem:[%s230 + $0x598] sm:$0xff]
        %v529 = vld [vmem:[%s230 + $0x5a0] sm:$0xff]
        %v530 = vld [vmem:[%s230 + $0x5a8] sm:$0xff]
        %v531 = vld [vmem:[%s230 + $0x5b0] sm:$0xff]
        %v532 = vld [vmem:[%s230 + $0x5b8] sm:$0xff]
        %v533 = vld [vmem:[%s230 + $0x5c0] sm:$0xff]
        %v534 = vld [vmem:[%s230 + $0x5c8] sm:$0xff]
        %v535 = vld [vmem:[%s230 + $0x5d0] sm:$0xff]
        %v536 = vld [vmem:[%s230 + $0x5d8] sm:$0xff]
        %v537 = vld [vmem:[%s230 + $0x5e0] sm:$0xff]
        %v538 = vld [vmem:[%s230 + $0x5e8] sm:$0xff]
        %v539 = vld [vmem:[%s230 + $0x5f0] sm:$0xff]
        %v540 = vld [vmem:[%s230 + $0x5f8] sm:$0xff]
        %v541 = vld [vmem:[%s230 + $0x600] sm:$0xff]
        %v542 = vld [vmem:[%s230 + $0x608] sm:$0xff]
        %v543 = vld [vmem:[%s230 + $0x610] sm:$0xff]
        %v544 = vld [vmem:[%s230 + $0x618] sm:$0xff]
        %v545 = vld [vmem:[%s230 + $0x620] sm:$0xff]
        %v546 = vld [vmem:[%s230 + $0x628] sm:$0xff]
        %v547 = vld [vmem:[%s230 + $0x630] sm:$0xff]
        %v548 = vld [vmem:[%s230 + $0x638] sm:$0xff]
        %v549 = vld [vmem:[%s230 + $0x640] sm:$0xff]
        %v550 = vld [vmem:[%s230 + $0x648] sm:$0xff]
        %v551 = vld [vmem:[%s230 + $0x650] sm:$0xff]
        %v552 = vld [vmem:[%s230 + $0x658] sm:$0xff]
        %v553 = vld [vmem:[%s230 + $0x660] sm:$0xff]
        %v554 = vld [vmem:[%s230 + $0x668] sm:$0xff]
        %v555 = vld [vmem:[%s230 + $0x670] sm:$0xff]
        %v556 = vld [vmem:[%s230 + $0x678] sm:$0xff]
        %v557 = vld [vmem:[%s230 + $0x680] sm:$0xff]
        %v558 = vld [vmem:[%s230 + $0x688] sm:$0xff]
        %v559 = vld [vmem:[%s230 + $0x690] sm:$0xff]
        %v560 = vld [vmem:[%s230 + $0x698] sm:$0xff]
        %v561 = vld [vmem:[%s230 + $0x6a0] sm:$0xff]
        %v562 = vld [vmem:[%s230 + $0x6a8] sm:$0xff]
        %v563 = vld [vmem:[%s230 + $0x6b0] sm:$0xff]
        %v564 = vld [vmem:[%s230 + $0x6b8] sm:$0xff]
        %v565 = vld [vmem:[%s230 + $0x6c0] sm:$0xff]
        %v566 = vld [vmem:[%s230 + $0x6c8] sm:$0xff]
        %v567 = vld [vmem:[%s230 + $0x6d0] sm:$0xff]
        %v568 = vld [vmem:[%s230 + $0x6d8] sm:$0xff]
        %v569 = vld [vmem:[%s230 + $0x6e0] sm:$0xff]
        %v570 = vld [vmem:[%s230 + $0x6e8] sm:$0xff]
        %v571 = vld [vmem:[%s230 + $0x6f0] sm:$0xff]
        %v572 = vld [vmem:[%s230 + $0x6f8] sm:$0xff]
        %v573 = vld [vmem:[%s230 + $0x700] sm:$0xff]
        %v574 = vld [vmem:[%s230 + $0x708] sm:$0xff]
        %v575 = vld [vmem:[%s230 + $0x710] sm:$0xff]
        %v576 = vld [vmem:[%s230 + $0x718] sm:$0xff]
        %v577 = vld [vmem:[%s230 + $0x720] sm:$0xff]
        %v578 = vld [vmem:[%s230 + $0x728] sm:$0xff]
        %v579 = vld [vmem:[%s230 + $0x730] sm:$0xff]
        %v580 = vld [vmem:[%s230 + $0x738] sm:$0xff]
        %v581 = vld [vmem:[%s230 + $0x740] sm:$0xff]
        %v582 = vld [vmem:[%s230 + $0x748] sm:$0xff]
        %v583 = vld [vmem:[%s230 + $0x750] sm:$0xff]
        %v584 = vld [vmem:[%s230 + $0x758] sm:$0xff]
        %v585 = vld [vmem:[%s230 + $0x760] sm:$0xff]
        %v586 = vld [vmem:[%s230 + $0x768] sm:$0xff]
        %v587 = vld [vmem:[%s230 + $0x770] sm:$0xff]
        %v588 = vld [vmem:[%s230 + $0x778] sm:$0xff]
        %v589 = vld [vmem:[%s230 + $0x780] sm:$0xff]
        %v590 = vld [vmem:[%s230 + $0x788] sm:$0xff]
        %v591 = vld [vmem:[%s230 + $0x790] sm:$0xff]
        %v592 = vld [vmem:[%s230 + $0x798] sm:$0xff]
        %v593 = vld [vmem:[%s230 + $0x7a0] sm:$0xff]
        %v594 = vld [vmem:[%s230 + $0x7a8] sm:$0xff]
        %v595 = vld [vmem:[%s230 + $0x7b0] sm:$0xff]
        %v596 = vld [vmem:[%s230 + $0x7b8] sm:$0xff]
        %v597 = vld [vmem:[%s230 + $0x7c0] sm:$0xff]
        %v598 = vld [vmem:[%s230 + $0x7c8] sm:$0xff]
        %v599 = vld [vmem:[%s230 + $0x7d0] sm:$0xff]
        %v600 = vld [vmem:[%s230 + $0x7d8] sm:$0xff]
        %v601 = vld [vmem:[%s230 + $0x7e0] sm:$0xff]
        %v602 = vld [vmem:[%s230 + $0x7e8] sm:$0xff]
        %v603 = vld [vmem:[%s230 + $0x7f0] sm:$0xff]
        %v604 = vld [vmem:[%s230 + $0x7f8] sm:$0xff]
        %v605 = vld [vmem:[%s230 + $0x800] sm:$0xff]
        %v606 = vld [vmem:[%s230 + $0x808] sm:$0xff]
        %v607 = vld [vmem:[%s230 + $0x810] sm:$0xff]
        %v608 = vld [vmem:[%s230 + $0x818] sm:$0xff]
        %v609 = vld [vmem:[%s230 + $0x820] sm:$0xff]
        %v610 = vld [vmem:[%s230 + $0x828] sm:$0xff]
        %v611 = vld [vmem:[%s230 + $0x830] sm:$0xff]
        %v612 = vld [vmem:[%s230 + $0x838] sm:$0xff]
        %v613 = vld [vmem:[%s230 + $0x840] sm:$0xff]
        %v614 = vld [vmem:[%s230 + $0x848] sm:$0xff]
        %v615 = vld [vmem:[%s230 + $0x850] sm:$0xff]
        %v616 = vld [vmem:[%s230 + $0x858] sm:$0xff]
        %v617 = vld [vmem:[%s230 + $0x860] sm:$0xff]
        %v618 = vld [vmem:[%s230 + $0x868] sm:$0xff]
        %v619 = vld [vmem:[%s230 + $0x870] sm:$0xff]
        %v620 = vld [vmem:[%s230 + $0x878] sm:$0xff]
        %v621 = vld [vmem:[%s230 + $0x880] sm:$0xff]
        %v622 = vld [vmem:[%s230 + $0x888] sm:$0xff]
        %v623 = vld [vmem:[%s230 + $0x890] sm:$0xff]
        %v624 = vld [vmem:[%s230 + $0x898] sm:$0xff]
        %v625 = vld [vmem:[%s230 + $0x8a0] sm:$0xff]
        %v626 = vld [vmem:[%s230 + $0x8a8] sm:$0xff]
        %v627 = vld [vmem:[%s230 + $0x8b0] sm:$0xff]
        %v628 = vld [vmem:[%s230 + $0x8b8] sm:$0xff]
        %v629 = vld [vmem:[%s230 + $0x8c0] sm:$0xff]
        %v630 = vld [vmem:[%s230 + $0x8c8] sm:$0xff]
        %v631 = vld [vmem:[%s230 + $0x8d0] sm:$0xff]
        %v632 = vld [vmem:[%s230 + $0x8d8] sm:$0xff]
        %v633 = vld [vmem:[%s230 + $0x8e0] sm:$0xff]
        %v634 = vld [vmem:[%s230 + $0x8e8] sm:$0xff]
        %v635 = vld [vmem:[%s230 + $0x8f0] sm:$0xff]
        %v636 = vld [vmem:[%s230 + $0x8f8] sm:$0xff]
        %v637 = vld [vmem:[%s230 + $0x900] sm:$0xff]
        %v638 = vld [vmem:[%s230 + $0x908] sm:$0xff]
        %v639 = vld [vmem:[%s230 + $0x910] sm:$0xff]
        %v640 = vld [vmem:[%s230 + $0x918] sm:$0xff]
        %v641 = vld [vmem:[%s230 + $0x920] sm:$0xff]
        %v642 = vld [vmem:[%s230 + $0x928] sm:$0xff]
        %v643 = vld [vmem:[%s230 + $0x930] sm:$0xff]
        %v644 = vld [vmem:[%s230 + $0x938] sm:$0xff]
        %v645 = vld [vmem:[%s230 + $0x940] sm:$0xff]
        %v646 = vld [vmem:[%s230 + $0x948] sm:$0xff]
        %v647 = vld [vmem:[%s230 + $0x950] sm:$0xff]
        %v648 = vld [vmem:[%s230 + $0x958] sm:$0xff]
        %v649 = vld [vmem:[%s230 + $0x960] sm:$0xff]
        %v650 = vld [vmem:[%s230 + $0x968] sm:$0xff]
        %v651 = vld [vmem:[%s230 + $0x970] sm:$0xff]
        %v652 = vld [vmem:[%s230 + $0x978] sm:$0xff]
        %v653 = vld [vmem:[%s230 + $0x980] sm:$0xff]
        %v654 = vld [vmem:[%s230 + $0x988] sm:$0xff]
        %v655 = vld [vmem:[%s230 + $0x990] sm:$0xff]
        %v656 = vld [vmem:[%s230 + $0x998] sm:$0xff]
        %v657 = vld [vmem:[%s230 + $0x9a0] sm:$0xff]
        %v658 = vld [vmem:[%s230 + $0x9a8] sm:$0xff]
        %v659 = vld [vmem:[%s230 + $0x9b0] sm:$0xff]
        %v660 = vld [vmem:[%s230 + $0x9b8] sm:$0xff]
        %v661 = vld [vmem:[%s230 + $0x9c0] sm:$0xff]
        %v662 = vld [vmem:[%s230 + $0x9c8] sm:$0xff]
        %v663 = vld [vmem:[%s230 + $0x9d0] sm:$0xff]
        %v664 = vld [vmem:[%s230 + $0x9d8] sm:$0xff]
        %v665 = vld [vmem:[%s230 + $0x9e0] sm:$0xff]
        %v666 = vld [vmem:[%s230 + $0x9e8] sm:$0xff]
        %v667 = vld [vmem:[%s230 + $0x9f0] sm:$0xff]
        %v668 = vld [vmem:[%s230 + $0x9f8] sm:$0xff]
        %v669 = vld [vmem:[%s230 + $0xa00] sm:$0xff]
        %v670 = vld [vmem:[%s230 + $0xa08] sm:$0xff]
        %v671 = vld [vmem:[%s230 + $0xa10] sm:$0xff]
        %v672 = vld [vmem:[%s230 + $0xa18] sm:$0xff]
        %v673 = vld [vmem:[%s230 + $0xa20] sm:$0xff]
        %v674 = vld [vmem:[%s230 + $0xa28] sm:$0xff]
        %v675 = vld [vmem:[%s230 + $0xa30] sm:$0xff]
        %v676 = vld [vmem:[%s230 + $0xa38] sm:$0xff]
        %v677 = vld [vmem:[%s230 + $0xa40] sm:$0xff]
        %v678 = vld [vmem:[%s230 + $0xa48] sm:$0xff]
        %v679 = vld [vmem:[%s230 + $0xa50] sm:$0xff]
        %v680 = vld [vmem:[%s230 + $0xa58] sm:$0xff]
        %v681 = vld [vmem:[%s230 + $0xa60] sm:$0xff]
        %v682 = vld [vmem:[%s230 + $0xa68] sm:$0xff]
        %v683 = vld [vmem:[%s230 + $0xa70] sm:$0xff]
        %v684 = vld [vmem:[%s230 + $0xa78] sm:$0xff]
        %v685 = vld [vmem:[%s230 + $0xa80] sm:$0xff]
        %v686 = vld [vmem:[%s230 + $0xa88] sm:$0xff]
        %v687 = vld [vmem:[%s230 + $0xa90] sm:$0xff]
        %v688 = vld [vmem:[%s230 + $0xa98] sm:$0xff]
        %v689 = vld [vmem:[%s230 + $0xaa0] sm:$0xff]
        %v690 = vld [vmem:[%s230 + $0xaa8] sm:$0xff]
        %v691 = vld [vmem:[%s230 + $0xab0] sm:$0xff]
        %v692 = vld [vmem:[%s230 + $0xab8] sm:$0xff]
        %v693 = vld [vmem:[%s230 + $0xac0] sm:$0xff]
        %v694 = vld [vmem:[%s230 + $0xac8] sm:$0xff]
        %v695 = vld [vmem:[%s230 + $0xad0] sm:$0xff]
        %v696 = vld [vmem:[%s230 + $0xad8] sm:$0xff]
        %v697 = vld [vmem:[%s230 + $0xae0] sm:$0xff]
        %v698 = vld [vmem:[%s230 + $0xae8] sm:$0xff]
        %v699 = vld [vmem:[%s230 + $0xaf0] sm:$0xff]
        %v700 = vld [vmem:[%s230 + $0xaf8] sm:$0xff]
        %v701 = vld [vmem:[%s230 + $0xb00] sm:$0xff]
        %v702 = vld [vmem:[%s230 + $0xb08] sm:$0xff]
        %v703 = vld [vmem:[%s230 + $0xb10] sm:$0xff]
        %v704 = vld [vmem:[%s230 + $0xb18] sm:$0xff]
        %v705 = vld [vmem:[%s230 + $0xb20] sm:$0xff]
        %v706 = vld [vmem:[%s230 + $0xb28] sm:$0xff]
        %v707 = vld [vmem:[%s230 + $0xb30] sm:$0xff]
        %v708 = vld [vmem:[%s230 + $0xb38] sm:$0xff]
        %v709 = vld [vmem:[%s230 + $0xb40] sm:$0xff]
        %v710 = vld [vmem:[%s230 + $0xb48] sm:$0xff]
        %v711 = vld [vmem:[%s230 + $0xb50] sm:$0xff]
        %v712 = vld [vmem:[%s230 + $0xb58] sm:$0xff]
        %v713 = vld [vmem:[%s230 + $0xb60] sm:$0xff]
        %v714 = vld [vmem:[%s230 + $0xb68] sm:$0xff]
        %v715 = vld [vmem:[%s230 + $0xb70] sm:$0xff]
        %v716 = vld [vmem:[%s230 + $0xb78] sm:$0xff]
        %v717 = vld [vmem:[%s230 + $0xb80] sm:$0xff]
        %v718 = vld [vmem:[%s230 + $0xb88] sm:$0xff]
        %v719 = vld [vmem:[%s230 + $0xb90] sm:$0xff]
        %v720 = vld [vmem:[%s230 + $0xb98] sm:$0xff]
        %v721 = vld [vmem:[%s230 + $0xba0] sm:$0xff]
        %v722 = vld [vmem:[%s230 + $0xba8] sm:$0xff]
        %v723 = vld [vmem:[%s230 + $0xbb0] sm:$0xff]
        %v724 = vld [vmem:[%s230 + $0xbb8] sm:$0xff]
        %v725 = vld [vmem:[%s230 + $0xbc0] sm:$0xff]
        %v726 = vld [vmem:[%s230 + $0xbc8] sm:$0xff]
        %v727 = vld [vmem:[%s230 + $0xbd0] sm:$0xff]
        %v728 = vld [vmem:[%s230 + $0xbd8] sm:$0xff]
        %v729 = vld [vmem:[%s230 + $0xbe0] sm:$0xff]
        %v730 = vld [vmem:[%s230 + $0xbe8] sm:$0xff]
        %v731 = vld [vmem:[%s230 + $0xbf0] sm:$0xff]
        %v732 = vld [vmem:[%s230 + $0xbf8] sm:$0xff]
        %v733 = vld [vmem:[%s230 + $0xc00] sm:$0xff]
        %v734 = vld [vmem:[%s230 + $0xc08] sm:$0xff]
        %v735 = vld [vmem:[%s230 + $0xc10] sm:$0xff]
        %v736 = vld [vmem:[%s230 + $0xc18] sm:$0xff]
        %v737 = vld [vmem:[%s230 + $0xc20] sm:$0xff]
        %v738 = vld [vmem:[%s230 + $0xc28] sm:$0xff]
        %v739 = vld [vmem:[%s230 + $0xc30] sm:$0xff]
        %v740 = vld [vmem:[%s230 + $0xc38] sm:$0xff]
        %v741 = vld [vmem:[%s230 + $0xc40] sm:$0xff]
        %v742 = vld [vmem:[%s230 + $0xc48] sm:$0xff]
        %v743 = vld [vmem:[%s230 + $0xc50] sm:$0xff]
        %v744 = vld [vmem:[%s230 + $0xc58] sm:$0xff]
        %v745 = vld [vmem:[%s230 + $0xc60] sm:$0xff]
        %v746 = vld [vmem:[%s230 + $0xc68] sm:$0xff]
        %v747 = vld [vmem:[%s230 + $0xc70] sm:$0xff]
        %v748 = vld [vmem:[%s230 + $0xc78] sm:$0xff]
        %v749 = vld [vmem:[%s230 + $0xc80] sm:$0xff]
        %v750 = vld [vmem:[%s230 + $0xc88] sm:$0xff]
        %v751 = vld [vmem:[%s230 + $0xc90] sm:$0xff]
        %v752 = vld [vmem:[%s230 + $0xc98] sm:$0xff]
        %v753 = vld [vmem:[%s230 + $0xca0] sm:$0xff]
        %v754 = vld [vmem:[%s230 + $0xca8] sm:$0xff]
        %v755 = vld [vmem:[%s230 + $0xcb0] sm:$0xff]
        %v756 = vld [vmem:[%s230 + $0xcb8] sm:$0xff]
        %v757 = vld [vmem:[%s230 + $0xcc0] sm:$0xff]
        %v758 = vld [vmem:[%s230 + $0xcc8] sm:$0xff]
        %v759 = vld [vmem:[%s230 + $0xcd0] sm:$0xff]
        %v760 = vld [vmem:[%s230 + $0xcd8] sm:$0xff]
        %v761 = vld [vmem:[%s230 + $0xce0] sm:$0xff]
        %v762 = vld [vmem:[%s230 + $0xce8] sm:$0xff]
        %v763 = vld [vmem:[%s230 + $0xcf0] sm:$0xff]
        %v764 = vld [vmem:[%s230 + $0xcf8] sm:$0xff]
        %v765 = vld [vmem:[%s230 + $0xd00] sm:$0xff]
        %v766 = vld [vmem:[%s230 + $0xd08] sm:$0xff]
        %v767 = vld [vmem:[%s230 + $0xd10] sm:$0xff]
        %v768 = vld [vmem:[%s230 + $0xd18] sm:$0xff]
        %v769 = vld [vmem:[%s230 + $0xd20] sm:$0xff]
        %v770 = vld [vmem:[%s230 + $0xd28] sm:$0xff]
        %v771 = vld [vmem:[%s230 + $0xd30] sm:$0xff]
        %v772 = vld [vmem:[%s230 + $0xd38] sm:$0xff]
        %v773 = vld [vmem:[%s230 + $0xd40] sm:$0xff]
        %v774 = vld [vmem:[%s230 + $0xd48] sm:$0xff]
        %v775 = vld [vmem:[%s230 + $0xd50] sm:$0xff]
        %v776 = vld [vmem:[%s230 + $0xd58] sm:$0xff]
        %v777 = vld [vmem:[%s230 + $0xd60] sm:$0xff]
        %v778 = vld [vmem:[%s230 + $0xd68] sm:$0xff]
        %v779 = vld [vmem:[%s230 + $0xd70] sm:$0xff]
        %v780 = vld [vmem:[%s230 + $0xd78] sm:$0xff]
        %v781 = vld [vmem:[%s230 + $0xd80] sm:$0xff]
        %v782 = vld [vmem:[%s230 + $0xd88] sm:$0xff]
        %v783 = vld [vmem:[%s230 + $0xd90] sm:$0xff]
        %v784 = vld [vmem:[%s230 + $0xd98] sm:$0xff]
        %v785 = vld [vmem:[%s230 + $0xda0] sm:$0xff]
        %v786 = vld [vmem:[%s230 + $0xda8] sm:$0xff]
        %v787 = vld [vmem:[%s230 + $0xdb0] sm:$0xff]
        %v788 = vld [vmem:[%s230 + $0xdb8] sm:$0xff]
        %v789 = vld [vmem:[%s230 + $0xdc0] sm:$0xff]
        %v790 = vld [vmem:[%s230 + $0xdc8] sm:$0xff]
        %v791 = vld [vmem:[%s230 + $0xdd0] sm:$0xff]
        %v792 = vld [vmem:[%s230 + $0xdd8] sm:$0xff]
        %v793 = vld [vmem:[%s230 + $0xde0] sm:$0xff]
        %v794 = vld [vmem:[%s230 + $0xde8] sm:$0xff]
        %v795 = vld [vmem:[%s230 + $0xdf0] sm:$0xff]
        %v796 = vld [vmem:[%s230 + $0xdf8] sm:$0xff]
        %v797 = vld [vmem:[%s230 + $0xe00] sm:$0xff]
        %v798 = vld [vmem:[%s230 + $0xe08] sm:$0xff]
        %v799 = vld [vmem:[%s230 + $0xe10] sm:$0xff]
        %v800 = vld [vmem:[%s230 + $0xe18] sm:$0xff]
        %v801 = vld [vmem:[%s230 + $0xe20] sm:$0xff]
        %v802 = vld [vmem:[%s230 + $0xe28] sm:$0xff]
        %v803 = vld [vmem:[%s230 + $0xe30] sm:$0xff]
        %v804 = vld [vmem:[%s230 + $0xe38] sm:$0xff]
        %v805 = vld [vmem:[%s230 + $0xe40] sm:$0xff]
        %v806 = vld [vmem:[%s230 + $0xe48] sm:$0xff]
        %v807 = vld [vmem:[%s230 + $0xe50] sm:$0xff]
        %v808 = vld [vmem:[%s230 + $0xe58] sm:$0xff]
        %v809 = vld [vmem:[%s230 + $0xe60] sm:$0xff]
        %v810 = vld [vmem:[%s230 + $0xe68] sm:$0xff]
        %v811 = vld [vmem:[%s230 + $0xe70] sm:$0xff]
        %v812 = vld [vmem:[%s230 + $0xe78] sm:$0xff]
        %v813 = vld [vmem:[%s230 + $0xe80] sm:$0xff]
        %v814 = vld [vmem:[%s230 + $0xe88] sm:$0xff]
        %v815 = vld [vmem:[%s230 + $0xe90] sm:$0xff]
        %v816 = vld [vmem:[%s230 + $0xe98] sm:$0xff]
        %v817 = vld [vmem:[%s230 + $0xea0] sm:$0xff]
        %v818 = vld [vmem:[%s230 + $0xea8] sm:$0xff]
        %v819 = vld [vmem:[%s230 + $0xeb0] sm:$0xff]
        %v820 = vld [vmem:[%s230 + $0xeb8] sm:$0xff]
        %v821 = vld [vmem:[%s230 + $0xec0] sm:$0xff]
        %v822 = vld [vmem:[%s230 + $0xec8] sm:$0xff]
        %v823 = vld [vmem:[%s230 + $0xed0] sm:$0xff]
        %v824 = vld [vmem:[%s230 + $0xed8] sm:$0xff]
        %v825 = vld [vmem:[%s230 + $0xee0] sm:$0xff]
        %v826 = vld [vmem:[%s230 + $0xee8] sm:$0xff]
        %v827 = vld [vmem:[%s230 + $0xef0] sm:$0xff]
        %v828 = vld [vmem:[%s230 + $0xef8] sm:$0xff]
        %v829 = vld [vmem:[%s230 + $0xf00] sm:$0xff]
        %v830 = vld [vmem:[%s230 + $0xf08] sm:$0xff]
        %v831 = vld [vmem:[%s230 + $0xf10] sm:$0xff]
        %v832 = vld [vmem:[%s230 + $0xf18] sm:$0xff]
        %v833 = vld [vmem:[%s230 + $0xf20] sm:$0xff]
        %v834 = vld [vmem:[%s230 + $0xf28] sm:$0xff]
        %v835 = vld [vmem:[%s230 + $0xf30] sm:$0xff]
        %v836 = vld [vmem:[%s230 + $0xf38] sm:$0xff]
        %v837 = vld [vmem:[%s230 + $0xf40] sm:$0xff]
        %v838 = vld [vmem:[%s230 + $0xf48] sm:$0xff]
        %v839 = vld [vmem:[%s230 + $0xf50] sm:$0xff]
        %v840 = vld [vmem:[%s230 + $0xf58] sm:$0xff]
        %v841 = vld [vmem:[%s230 + $0xf60] sm:$0xff]
        %v842 = vld [vmem:[%s230 + $0xf68] sm:$0xff]
        %v843 = vld [vmem:[%s230 + $0xf70] sm:$0xff]
        %v844 = vld [vmem:[%s230 + $0xf78] sm:$0xff]
        %v845 = vld [vmem:[%s230 + $0xf80] sm:$0xff]
        %v846 = vld [vmem:[%s230 + $0xf88] sm:$0xff]
        %v847 = vld [vmem:[%s230 + $0xf90] sm:$0xff]
        %v848 = vld [vmem:[%s230 + $0xf98] sm:$0xff]
        %v849 = vld [vmem:[%s230 + $0xfa0] sm:$0xff]
        %v850 = vld [vmem:[%s230 + $0xfa8] sm:$0xff]
        %v851 = vld [vmem:[%s230 + $0xfb0] sm:$0xff]
        %v852 = vld [vmem:[%s230 + $0xfb8] sm:$0xff]
        %v853 = vld [vmem:[%s230 + $0xfc0] sm:$0xff]
        %v854 = vld [vmem:[%s230 + $0xfc8] sm:$0xff]
        %v855 = vld [vmem:[%s230 + $0xfd0] sm:$0xff]
        %v856 = vld [vmem:[%s230 + $0xfd8] sm:$0xff]
        %v857 = vld [vmem:[%s230 + $0xfe0] sm:$0xff]
        %v858 = vld [vmem:[%s230 + $0xfe8] sm:$0xff]
        %v859 = vld [vmem:[%s230 + $0xff0] sm:$0xff]
        %v860 = vld [vmem:[%s230 + $0xff8] sm:$0xff]
        %v861 = vld [vmem:[%s230 + $0x1000] sm:$0xff]
        %v862 = vld [vmem:[%s230 + $0x1008] sm:$0xff]
        %v863 = vld [vmem:[%s230 + $0x1010] sm:$0xff]
        %v864 = vld [vmem:[%s230 + $0x1018] sm:$0xff]
        %v865 = vld [vmem:[%s230 + $0x1020] sm:$0xff]
        %v866 = vld [vmem:[%s230 + $0x1028] sm:$0xff]
        %v867 = vld [vmem:[%s230 + $0x1030] sm:$0xff]
        %v868 = vld [vmem:[%s230 + $0x1038] sm:$0xff]
        %v869 = vld [vmem:[%s230 + $0x1040] sm:$0xff]
        %v870 = vld [vmem:[%s230 + $0x1048] sm:$0xff]
        %v871 = vld [vmem:[%s230 + $0x1050] sm:$0xff]
        %v872 = vld [vmem:[%s230 + $0x1058] sm:$0xff]
        %v873 = vld [vmem:[%s230 + $0x1060] sm:$0xff]
        %v874 = vld [vmem:[%s230 + $0x1068] sm:$0xff]
        %v875 = vld [vmem:[%s230 + $0x1070] sm:$0xff]
        %v876 = vld [vmem:[%s230 + $0x1078] sm:$0xff]
        %v877 = vld [vmem:[%s230 + $0x1080] sm:$0xff]
        %v878 = vld [vmem:[%s230 + $0x1088] sm:$0xff]
        %v879 = vld [vmem:[%s230 + $0x1090] sm:$0xff]
        %v880 = vld [vmem:[%s230 + $0x1098] sm:$0xff]
        %v881 = vld [vmem:[%s230 + $0x10a0] sm:$0xff]
        %v882 = vld [vmem:[%s230 + $0x10a8] sm:$0xff]
        %v883 = vld [vmem:[%s230 + $0x10b0] sm:$0xff]
        %v884 = vld [vmem:[%s230 + $0x10b8] sm:$0xff]
        %v885 = vld [vmem:[%s230 + $0x10c0] sm:$0xff]
        %v886 = vld [vmem:[%s230 + $0x10c8] sm:$0xff]
        %v887 = vld [vmem:[%s230 + $0x10d0] sm:$0xff]
        %v888 = vld [vmem:[%s230 + $0x10d8] sm:$0xff]
        %v889 = vld [vmem:[%s230 + $0x10e0] sm:$0xff]
        %v890 = vld [vmem:[%s230 + $0x10e8] sm:$0xff]
        %v891 = vld [vmem:[%s230 + $0x10f0] sm:$0xff]
        %v892 = vld [vmem:[%s230 + $0x10f8] sm:$0xff]
        %v893 = vld [vmem:[%s230 + $0x1100] sm:$0xff]
        %v894 = vld [vmem:[%s230 + $0x1108] sm:$0xff]
        %v895 = vld [vmem:[%s230 + $0x1110] sm:$0xff]
        %v896 = vld [vmem:[%s230 + $0x1118] sm:$0xff]
        %v897 = vld [vmem:[%s230 + $0x1120] sm:$0xff]
        %v898 = vld [vmem:[%s230 + $0x1128] sm:$0xff]
        %v899 = vld [vmem:[%s230 + $0x1130] sm:$0xff]
        %v900 = vld [vmem:[%s230 + $0x1138] sm:$0xff]
        %v901 = vld [vmem:[%s230 + $0x1140] sm:$0xff]
        %v902 = vld [vmem:[%s230 + $0x1148] sm:$0xff]
        %v903 = vld [vmem:[%s230 + $0x1150] sm:$0xff]
        %v904 = vld [vmem:[%s230 + $0x1158] sm:$0xff]
        %v905 = vld [vmem:[%s230 + $0x1160] sm:$0xff]
        %v906 = vld [vmem:[%s230 + $0x1168] sm:$0xff]
        %v907 = vld [vmem:[%s230 + $0x1170] sm:$0xff]
        %v908 = vld [vmem:[%s230 + $0x1178] sm:$0xff]
        %v909 = vld [vmem:[%s230 + $0x1180] sm:$0xff]
        %v910 = vld [vmem:[%s230 + $0x1188] sm:$0xff]
        %v911 = vld [vmem:[%s230 + $0x1190] sm:$0xff]
        %v912 = vld [vmem:[%s230 + $0x1198] sm:$0xff]
        %v913 = vld [vmem:[%s230 + $0x11a0] sm:$0xff]
        %v914 = vld [vmem:[%s230 + $0x11a8] sm:$0xff]
        %v915 = vld [vmem:[%s230 + $0x11b0] sm:$0xff]
        %v916 = vld [vmem:[%s230 + $0x11b8] sm:$0xff]
        %v917 = vld [vmem:[%s230 + $0x11c0] sm:$0xff]
        %v918 = vld [vmem:[%s230 + $0x11c8] sm:$0xff]
        %v919 = vld [vmem:[%s230 + $0x11d0] sm:$0xff]
        %v920 = vld [vmem:[%s230 + $0x11d8] sm:$0xff]
        %v921 = vld [vmem:[%s230 + $0x11e0] sm:$0xff]
        %v922 = vld [vmem:[%s230 + $0x11e8] sm:$0xff]
        %v923 = vld [vmem:[%s230 + $0x11f0] sm:$0xff]
        %v924 = vld [vmem:[%s230 + $0x11f8] sm:$0xff]
        %v925 = vld [vmem:[%s230 + $0x1200] sm:$0xff]
        %v926 = vld [vmem:[%s230 + $0x1208] sm:$0xff]
        %v927 = vld [vmem:[%s230 + $0x1210] sm:$0xff]
        %v928 = vld [vmem:[%s230 + $0x1218] sm:$0xff]
        %v929 = vld [vmem:[%s230 + $0x1220] sm:$0xff]
        %v930 = vld [vmem:[%s230 + $0x1228] sm:$0xff]
        %v931 = vld [vmem:[%s230 + $0x1230] sm:$0xff]
        %v932 = vld [vmem:[%s230 + $0x1238] sm:$0xff]
        %v933 = vld [vmem:[%s230 + $0x1240] sm:$0xff]
        %v934 = vld [vmem:[%s230 + $0x1248] sm:$0xff]
        %v935 = vld [vmem:[%s230 + $0x1250] sm:$0xff]
        %v936 = vld [vmem:[%s230 + $0x1258] sm:$0xff]
        %v937 = vld [vmem:[%s230 + $0x1260] sm:$0xff]
        %v938 = vld [vmem:[%s230 + $0x1268] sm:$0xff]
        %v939 = vld [vmem:[%s230 + $0x1270] sm:$0xff]
        %v940 = vld [vmem:[%s230 + $0x1278] sm:$0xff]
        %v941 = vld [vmem:[%s230 + $0x1280] sm:$0xff]
        %v942 = vld [vmem:[%s230 + $0x1288] sm:$0xff]
        %v943 = vld [vmem:[%s230 + $0x1290] sm:$0xff]
        %v944 = vld [vmem:[%s230 + $0x1298] sm:$0xff]
        %v945 = vld [vmem:[%s230 + $0x12a0] sm:$0xff]
        %v946 = vld [vmem:[%s230 + $0x12a8] sm:$0xff]
        %v947 = vld [vmem:[%s230 + $0x12b0] sm:$0xff]
        %v948 = vld [vmem:[%s230 + $0x12b8] sm:$0xff]
        %v949 = vld [vmem:[%s230 + $0x12c0] sm:$0xff]
        %v950 = vld [vmem:[%s230 + $0x12c8] sm:$0xff]
        %v951 = vld [vmem:[%s230 + $0x12d0] sm:$0xff]
        %v952 = vld [vmem:[%s230 + $0x12d8] sm:$0xff]
        %v953 = vld [vmem:[%s230 + $0x12e0] sm:$0xff]
        %v954 = vld [vmem:[%s230 + $0x12e8] sm:$0xff]
        %v955 = vld [vmem:[%s230 + $0x12f0] sm:$0xff]
        %v956 = vld [vmem:[%s230 + $0x12f8] sm:$0xff]
        %v957 = vld [vmem:[%s230 + $0x1300] sm:$0xff]
        %v958 = vld [vmem:[%s230 + $0x1308] sm:$0xff]
        %v959 = vld [vmem:[%s230 + $0x1310] sm:$0xff]
        %v960 = vld [vmem:[%s230 + $0x1318] sm:$0xff]
        %v961 = vld [vmem:[%s230 + $0x1320] sm:$0xff]
        %v962 = vld [vmem:[%s230 + $0x1328] sm:$0xff]
        %v963 = vld [vmem:[%s230 + $0x1330] sm:$0xff]
        %v964 = vld [vmem:[%s230 + $0x1338] sm:$0xff]
        %v965 = vld [vmem:[%s230 + $0x1340] sm:$0xff]
        %v966 = vld [vmem:[%s230 + $0x1348] sm:$0xff]
        %v967 = vld [vmem:[%s230 + $0x1350] sm:$0xff]
        %v968 = vld [vmem:[%s230 + $0x1358] sm:$0xff]
        %v969 = vld [vmem:[%s230 + $0x1360] sm:$0xff]
        %v970 = vld [vmem:[%s230 + $0x1368] sm:$0xff]
        %v971 = vld [vmem:[%s230 + $0x1370] sm:$0xff]
        %v972 = vld [vmem:[%s230 + $0x1378] sm:$0xff]
        %v973 = vld [vmem:[%s230 + $0x1380] sm:$0xff]
        %v974 = vld [vmem:[%s230 + $0x1388] sm:$0xff]
        %v975 = vld [vmem:[%s230 + $0x1390] sm:$0xff]
        %v976 = vld [vmem:[%s230 + $0x1398] sm:$0xff]
        %v977 = vld [vmem:[%s230 + $0x13a0] sm:$0xff]
        %v978 = vld [vmem:[%s230 + $0x13a8] sm:$0xff]
        %v979 = vld [vmem:[%s230 + $0x13b0] sm:$0xff]
        %v980 = vld [vmem:[%s230 + $0x13b8] sm:$0xff]
        %v981 = vld [vmem:[%s230 + $0x13c0] sm:$0xff]
        %v982 = vld [vmem:[%s230 + $0x13c8] sm:$0xff]
        %v983 = vld [vmem:[%s230 + $0x13d0] sm:$0xff]
        %v984 = vld [vmem:[%s230 + $0x13d8] sm:$0xff]
        %v985 = vld [vmem:[%s230 + $0x13e0] sm:$0xff]
        %v986 = vld [vmem:[%s230 + $0x13e8] sm:$0xff]
        %v987 = vld [vmem:[%s230 + $0x13f0] sm:$0xff]
        %v988 = vld [vmem:[%s230 + $0x13f8] sm:$0xff]
        %v989 = vld [vmem:[%s230 + $0x1400] sm:$0xff]
        %v990 = vld [vmem:[%s230 + $0x1408] sm:$0xff]
        %v991 = vld [vmem:[%s230 + $0x1410] sm:$0xff]
        %v992 = vld [vmem:[%s230 + $0x1418] sm:$0xff]
        %v993 = vld [vmem:[%s230 + $0x1420] sm:$0xff]
        %v994 = vld [vmem:[%s230 + $0x1428] sm:$0xff]
        %v995 = vld [vmem:[%s230 + $0x1430] sm:$0xff]
        %v996 = vld [vmem:[%s230 + $0x1438] sm:$0xff]
        %v997 = vld [vmem:[%s230 + $0x1440] sm:$0xff]
        %v998 = vld [vmem:[%s230 + $0x1448] sm:$0xff]
        %v999 = vld [vmem:[%s230 + $0x1450] sm:$0xff]
        %v1000 = vld [vmem:[%s230 + $0x1458] sm:$0xff]
        %v1001 = vld [vmem:[%s230 + $0x1460] sm:$0xff]
        %v1002 = vld [vmem:[%s230 + $0x1468] sm:$0xff]
        %v1003 = vld [vmem:[%s230 + $0x1470] sm:$0xff]
        %v1004 = vld [vmem:[%s230 + $0x1478] sm:$0xff]
        %v1005 = vld [vmem:[%s230 + $0x1480] sm:$0xff]
        %v1006 = vld [vmem:[%s230 + $0x1488] sm:$0xff]
        %v1007 = vld [vmem:[%s230 + $0x1490] sm:$0xff]
        %v1008 = vld [vmem:[%s230 + $0x1498] sm:$0xff]
        %v1009 = vld [vmem:[%s230 + $0x14a0] sm:$0xff]
        %v1010 = vld [vmem:[%s230 + $0x14a8] sm:$0xff]
        %v1011 = vld [vmem:[%s230 + $0x14b0] sm:$0xff]
        %v1012 = vld [vmem:[%s230 + $0x14b8] sm:$0xff]
        %v1013 = vld [vmem:[%s230 + $0x14c0] sm:$0xff]
        %v1014 = vld [vmem:[%s230 + $0x14c8] sm:$0xff]
        %v1015 = vld [vmem:[%s230 + $0x14d0] sm:$0xff]
        %v1016 = vld [vmem:[%s230 + $0x14d8] sm:$0xff]
        %v1017 = vld [vmem:[%s230 + $0x14e0] sm:$0xff]
        %v1018 = vld [vmem:[%s230 + $0x14e8] sm:$0xff]
        %v1019 = vld [vmem:[%s230 + $0x14f0] sm:$0xff]
        %v1020 = vld [vmem:[%s230 + $0x14f8] sm:$0xff]
        %v1021 = vld [vmem:[%s230 + $0x1500] sm:$0xff]
        %v1022 = vld [vmem:[%s230 + $0x1508] sm:$0xff]
        %v1023 = vld [vmem:[%s230 + $0x1510] sm:$0xff]
        %v1024 = vld [vmem:[%s230 + $0x1518] sm:$0xff]
        %v1025 = vld [vmem:[%s230 + $0x1520] sm:$0xff]
        %v1026 = vld [vmem:[%s230 + $0x1528] sm:$0xff]
        %v1027 = vld [vmem:[%s230 + $0x1530] sm:$0xff]
        %v1028 = vld [vmem:[%s230 + $0x1538] sm:$0xff]
        %v1029 = vld [vmem:[%s230 + $0x1540] sm:$0xff]
        %v1030 = vld [vmem:[%s230 + $0x1548] sm:$0xff]
        %v1031 = vld [vmem:[%s230 + $0x1550] sm:$0xff]
        %v1032 = vld [vmem:[%s230 + $0x1558] sm:$0xff]
        %v1033 = vld [vmem:[%s230 + $0x1560] sm:$0xff]
        %v1034 = vld [vmem:[%s230 + $0x1568] sm:$0xff]
        %v1035 = vld [vmem:[%s230 + $0x1570] sm:$0xff]
        %v1036 = vld [vmem:[%s230 + $0x1578] sm:$0xff]
        %v1037 = vld [vmem:[%s230 + $0x1580] sm:$0xff]
        %v1038 = vld [vmem:[%s230 + $0x1588] sm:$0xff]
        %v1039 = vld [vmem:[%s230 + $0x1590] sm:$0xff]
        %v1040 = vld [vmem:[%s230 + $0x1598] sm:$0xff]
        %v1041 = vld [vmem:[%s230 + $0x15a0] sm:$0xff]
        %v1042 = vld [vmem:[%s230 + $0x15a8] sm:$0xff]
        %v1043 = vld [vmem:[%s230 + $0x15b0] sm:$0xff]
        %v1044 = vld [vmem:[%s230 + $0x15b8] sm:$0xff]
        %v1045 = vld [vmem:[%s230 + $0x15c0] sm:$0xff]
        %v1046 = vld [vmem:[%s230 + $0x15c8] sm:$0xff]
        %v1047 = vld [vmem:[%s230 + $0x15d0] sm:$0xff]
        %v1048 = vld [vmem:[%s230 + $0x15d8] sm:$0xff]
        %v1049 = vld [vmem:[%s230 + $0x15e0] sm:$0xff]
        %v1050 = vld [vmem:[%s230 + $0x15e8] sm:$0xff]
        %v1051 = vld [vmem:[%s230 + $0x15f0] sm:$0xff]
        %v1052 = vld [vmem:[%s230 + $0x15f8] sm:$0xff]
        %v1053 = vld [vmem:[%s230 + $0x1600] sm:$0xff]
        %v1054 = vld [vmem:[%s230 + $0x1608] sm:$0xff]
        %v1055 = vld [vmem:[%s230 + $0x1610] sm:$0xff]
        %v1056 = vld [vmem:[%s230 + $0x1618] sm:$0xff]
        %v1057 = vld [vmem:[%s230 + $0x1620] sm:$0xff]
        %v1058 = vld [vmem:[%s230 + $0x1628] sm:$0xff]
        %v1059 = vld [vmem:[%s230 + $0x1630] sm:$0xff]
        %v1060 = vld [vmem:[%s230 + $0x1638] sm:$0xff]
        %v1061 = vld [vmem:[%s230 + $0x1640] sm:$0xff]
        %v1062 = vld [vmem:[%s230 + $0x1648] sm:$0xff]
        %v1063 = vld [vmem:[%s230 + $0x1650] sm:$0xff]
        %v1064 = vld [vmem:[%s230 + $0x1658] sm:$0xff]
        %v1065 = vld [vmem:[%s230 + $0x1660] sm:$0xff]
        %v1066 = vld [vmem:[%s230 + $0x1668] sm:$0xff]
        %v1067 = vld [vmem:[%s230 + $0x1670] sm:$0xff]
        %v1068 = vld [vmem:[%s230 + $0x1678] sm:$0xff]
        %v1069 = vld [vmem:[%s230 + $0x1680] sm:$0xff]
        %v1070 = vld [vmem:[%s230 + $0x1688] sm:$0xff]
        %v1071 = vld [vmem:[%s230 + $0x1690] sm:$0xff]
        %v1072 = vld [vmem:[%s230 + $0x1698] sm:$0xff]
        %v1073 = vld [vmem:[%s230 + $0x16a0] sm:$0xff]
        %v1074 = vld [vmem:[%s230 + $0x16a8] sm:$0xff]
        %v1075 = vld [vmem:[%s230 + $0x16b0] sm:$0xff]
        %v1076 = vld [vmem:[%s230 + $0x16b8] sm:$0xff]
        %v1077 = vld [vmem:[%s230 + $0x16c0] sm:$0xff]
        %v1078 = vld [vmem:[%s230 + $0x16c8] sm:$0xff]
        %v1079 = vld [vmem:[%s230 + $0x16d0] sm:$0xff]
        %v1080 = vld [vmem:[%s230 + $0x16d8] sm:$0xff]
        %v1081 = vld [vmem:[%s230 + $0x16e0] sm:$0xff]
        %v1082 = vld [vmem:[%s230 + $0x16e8] sm:$0xff]
        %v1083 = vld [vmem:[%s230 + $0x16f0] sm:$0xff]
        %v1084 = vld [vmem:[%s230 + $0x16f8] sm:$0xff]
        %v1085 = vld [vmem:[%s230 + $0x1700] sm:$0xff]
        %v1086 = vld [vmem:[%s230 + $0x1708] sm:$0xff]
        %v1087 = vld [vmem:[%s230 + $0x1710] sm:$0xff]
        %v1088 = vld [vmem:[%s230 + $0x1718] sm:$0xff]
        %v1089 = vld [vmem:[%s230 + $0x1720] sm:$0xff]
        %v1090 = vld [vmem:[%s230 + $0x1728] sm:$0xff]
        %v1091 = vld [vmem:[%s230 + $0x1730] sm:$0xff]
        %v1092 = vld [vmem:[%s230 + $0x1738] sm:$0xff]
        %v1093 = vld [vmem:[%s230 + $0x1740] sm:$0xff]
        %v1094 = vld [vmem:[%s230 + $0x1748] sm:$0xff]
        %v1095 = vld [vmem:[%s230 + $0x1750] sm:$0xff]
        %v1096 = vld [vmem:[%s230 + $0x1758] sm:$0xff]
        %v1097 = vld [vmem:[%s230 + $0x1760] sm:$0xff]
        %v1098 = vld [vmem:[%s230 + $0x1768] sm:$0xff]
        %v1099 = vld [vmem:[%s230 + $0x1770] sm:$0xff]
        %v1100 = vld [vmem:[%s230 + $0x1778] sm:$0xff]
        %v1101 = vld [vmem:[%s230 + $0x1780] sm:$0xff]
        %v1102 = vld [vmem:[%s230 + $0x1788] sm:$0xff]
        %v1103 = vld [vmem:[%s230 + $0x1790] sm:$0xff]
        %v1104 = vld [vmem:[%s230 + $0x1798] sm:$0xff]
        %v1105 = vld [vmem:[%s230 + $0x17a0] sm:$0xff]
        %v1106 = vld [vmem:[%s230 + $0x17a8] sm:$0xff]
        %v1107 = vld [vmem:[%s230 + $0x17b0] sm:$0xff]
        %v1108 = vld [vmem:[%s230 + $0x17b8] sm:$0xff]
        %v1109 = vld [vmem:[%s230 + $0x17c0] sm:$0xff]
        %v1110 = vld [vmem:[%s230 + $0x17c8] sm:$0xff]
        %v1111 = vld [vmem:[%s230 + $0x17d0] sm:$0xff]
        %v1112 = vld [vmem:[%s230 + $0x17d8] sm:$0xff]
        %v1113 = vld [vmem:[%s230 + $0x17e0] sm:$0xff]
        %v1114 = vld [vmem:[%s230 + $0x17e8] sm:$0xff]
        %v1115 = vld [vmem:[%s230 + $0x17f0] sm:$0xff]
        %v1116 = vld [vmem:[%s230 + $0x17f8] sm:$0xff]
        %v1117 = vld [vmem:[%s230 + $0x1800] sm:$0xff]
        %v1118 = vld [vmem:[%s230 + $0x1808] sm:$0xff]
        %v1119 = vld [vmem:[%s230 + $0x1810] sm:$0xff]
        %v1120 = vld [vmem:[%s230 + $0x1818] sm:$0xff]
        %v1121 = vld [vmem:[%s230 + $0x1820] sm:$0xff]
        %v1122 = vld [vmem:[%s230 + $0x1828] sm:$0xff]
        %v1123 = vld [vmem:[%s230 + $0x1830] sm:$0xff]
        %v1124 = vld [vmem:[%s230 + $0x1838] sm:$0xff]
        %v1125 = vld [vmem:[%s230 + $0x1840] sm:$0xff]
        %v1126 = vld [vmem:[%s230 + $0x1848] sm:$0xff]
        %v1127 = vld [vmem:[%s230 + $0x1850] sm:$0xff]
        %v1128 = vld [vmem:[%s230 + $0x1858] sm:$0xff]
        %v1129 = vld [vmem:[%s230 + $0x1860] sm:$0xff]
        %v1130 = vld [vmem:[%s230 + $0x1868] sm:$0xff]
        %v1131 = vld [vmem:[%s230 + $0x1870] sm:$0xff]
        %v1132 = vld [vmem:[%s230 + $0x1878] sm:$0xff]
        %v1133 = vld [vmem:[%s230 + $0x1880] sm:$0xff]
        %v1134 = vld [vmem:[%s230 + $0x1888] sm:$0xff]
        %v1135 = vld [vmem:[%s230 + $0x1890] sm:$0xff]
        %v1136 = vld [vmem:[%s230 + $0x1898] sm:$0xff]
        %v1137 = vld [vmem:[%s230 + $0x18a0] sm:$0xff]
        %v1138 = vld [vmem:[%s230 + $0x18a8] sm:$0xff]
        %v1139 = vld [vmem:[%s230 + $0x18b0] sm:$0xff]
        %v1140 = vld [vmem:[%s230 + $0x18b8] sm:$0xff]
        %v1141 = vld [vmem:[%s230 + $0x18c0] sm:$0xff]
        %v1142 = vld [vmem:[%s230 + $0x18c8] sm:$0xff]
        %v1143 = vld [vmem:[%s230 + $0x18d0] sm:$0xff]
        %v1144 = vld [vmem:[%s230 + $0x18d8] sm:$0xff]
        %v1145 = vld [vmem:[%s230 + $0x18e0] sm:$0xff]
        %v1146 = vld [vmem:[%s230 + $0x18e8] sm:$0xff]
        %v1147 = vld [vmem:[%s230 + $0x18f0] sm:$0xff]
        %v1148 = vld [vmem:[%s230 + $0x18f8] sm:$0xff]
        %v1149 = vld [vmem:[%s230 + $0x1900] sm:$0xff]
        %v1150 = vld [vmem:[%s230 + $0x1908] sm:$0xff]
        %v1151 = vld [vmem:[%s230 + $0x1910] sm:$0xff]
        %v1152 = vld [vmem:[%s230 + $0x1918] sm:$0xff]
        %v1153 = vld [vmem:[%s230 + $0x1920] sm:$0xff]
        %v1154 = vld [vmem:[%s230 + $0x1928] sm:$0xff]
        %v1155 = vld [vmem:[%s230 + $0x1930] sm:$0xff]
        %v1156 = vld [vmem:[%s230 + $0x1938] sm:$0xff]
        %v1157 = vld [vmem:[%s230 + $0x1940] sm:$0xff]
        %v1158 = vld [vmem:[%s230 + $0x1948] sm:$0xff]
        %v1159 = vld [vmem:[%s230 + $0x1950] sm:$0xff]
        %v1160 = vld [vmem:[%s230 + $0x1958] sm:$0xff]
        %v1161 = vld [vmem:[%s230 + $0x1960] sm:$0xff]
        %v1162 = vld [vmem:[%s230 + $0x1968] sm:$0xff]
        %v1163 = vld [vmem:[%s230 + $0x1970] sm:$0xff]
        %v1164 = vld [vmem:[%s230 + $0x1978] sm:$0xff]
        %v1165 = vld [vmem:[%s230 + $0x1980] sm:$0xff]
        %v1166 = vld [vmem:[%s230 + $0x1988] sm:$0xff]
        %v1167 = vld [vmem:[%s230 + $0x1990] sm:$0xff]
        %v1168 = vld [vmem:[%s230 + $0x1998] sm:$0xff]
        %v1169 = vld [vmem:[%s230 + $0x19a0] sm:$0xff]
        %v1170 = vld [vmem:[%s230 + $0x19a8] sm:$0xff]
        %v1171 = vld [vmem:[%s230 + $0x19b0] sm:$0xff]
        %v1172 = vld [vmem:[%s230 + $0x19b8] sm:$0xff]
        %v1173 = vld [vmem:[%s230 + $0x19c0] sm:$0xff]
        %v1174 = vld [vmem:[%s230 + $0x19c8] sm:$0xff]
        %v1175 = vld [vmem:[%s230 + $0x19d0] sm:$0xff]
        %v1176 = vld [vmem:[%s230 + $0x19d8] sm:$0xff]
        %v1177 = vld [vmem:[%s230 + $0x19e0] sm:$0xff]
        %v1178 = vld [vmem:[%s230 + $0x19e8] sm:$0xff]
        %v1179 = vld [vmem:[%s230 + $0x19f0] sm:$0xff]
        %v1180 = vld [vmem:[%s230 + $0x19f8] sm:$0xff]
        %v1181 = vld [vmem:[%s230 + $0x1a00] sm:$0xff]
        %v1182 = vld [vmem:[%s230 + $0x1a08] sm:$0xff]
        %v1183 = vld [vmem:[%s230 + $0x1a10] sm:$0xff]
        %v1184 = vld [vmem:[%s230 + $0x1a18] sm:$0xff]
        %v1185 = vld [vmem:[%s230 + $0x1a20] sm:$0xff]
        %v1186 = vld [vmem:[%s230 + $0x1a28] sm:$0xff]
        %v1187 = vld [vmem:[%s230 + $0x1a30] sm:$0xff]
        %v1188 = vld [vmem:[%s230 + $0x1a38] sm:$0xff]
        %v1189 = vld [vmem:[%s230 + $0x1a40] sm:$0xff]
        %v1190 = vld [vmem:[%s230 + $0x1a48] sm:$0xff]
        %v1191 = vld [vmem:[%s230 + $0x1a50] sm:$0xff]
        %v1192 = vld [vmem:[%s230 + $0x1a58] sm:$0xff]
        %v1193 = vld [vmem:[%s230 + $0x1a60] sm:$0xff]
        %v1194 = vld [vmem:[%s230 + $0x1a68] sm:$0xff]
        %v1195 = vld [vmem:[%s230 + $0x1a70] sm:$0xff]
        %v1196 = vld [vmem:[%s230 + $0x1a78] sm:$0xff]
        %v1197 = vld [vmem:[%s230 + $0x1a80] sm:$0xff]
        %v1198 = vld [vmem:[%s230 + $0x1a88] sm:$0xff]
        %v1199 = vld [vmem:[%s230 + $0x1a90] sm:$0xff]
        %v1200 = vld [vmem:[%s230 + $0x1a98] sm:$0xff]
        %v1201 = vld [vmem:[%s230 + $0x1aa0] sm:$0xff]
        %v1202 = vld [vmem:[%s230 + $0x1aa8] sm:$0xff]
        %v1203 = vld [vmem:[%s230 + $0x1ab0] sm:$0xff]
        %v1204 = vld [vmem:[%s230 + $0x1ab8] sm:$0xff]
        %v1205 = vld [vmem:[%s230 + $0x1ac0] sm:$0xff]
        %v1206 = vld [vmem:[%s230 + $0x1ac8] sm:$0xff]
        %v1207 = vld [vmem:[%s230 + $0x1ad0] sm:$0xff]
        %v1208 = vld [vmem:[%s230 + $0x1ad8] sm:$0xff]
        %v1209 = vld [vmem:[%s230 + $0x1ae0] sm:$0xff]
        %v1210 = vld [vmem:[%s230 + $0x1ae8] sm:$0xff]
        %v1211 = vld [vmem:[%s230 + $0x1af0] sm:$0xff]
        %v1212 = vld [vmem:[%s230 + $0x1af8] sm:$0xff]
        %v1213 = vld [vmem:[%s230 + $0x1b00] sm:$0xff]
        %v1214 = vld [vmem:[%s230 + $0x1b08] sm:$0xff]
        %v1215 = vld [vmem:[%s230 + $0x1b10] sm:$0xff]
        %v1216 = vld [vmem:[%s230 + $0x1b18] sm:$0xff]
        %v1217 = vld [vmem:[%s230 + $0x1b20] sm:$0xff]
        %v1218 = vld [vmem:[%s230 + $0x1b28] sm:$0xff]
        %v1219 = vld [vmem:[%s230 + $0x1b30] sm:$0xff]
        %v1220 = vld [vmem:[%s230 + $0x1b38] sm:$0xff]
        %v1221 = vld [vmem:[%s230 + $0x1b40] sm:$0xff]
        %v1222 = vld [vmem:[%s230 + $0x1b48] sm:$0xff]
        %v1223 = vld [vmem:[%s230 + $0x1b50] sm:$0xff]
        %v1224 = vld [vmem:[%s230 + $0x1b58] sm:$0xff]
        %v1225 = vld [vmem:[%s230 + $0x1b60] sm:$0xff]
        %v1226 = vld [vmem:[%s230 + $0x1b68] sm:$0xff]
        %v1227 = vld [vmem:[%s230 + $0x1b70] sm:$0xff]
        %v1228 = vld [vmem:[%s230 + $0x1b78] sm:$0xff]
        %v1229 = vld [vmem:[%s230 + $0x1b80] sm:$0xff]
        %v1230 = vld [vmem:[%s230 + $0x1b88] sm:$0xff]
        %v1231 = vld [vmem:[%s230 + $0x1b90] sm:$0xff]
        %v1232 = vld [vmem:[%s230 + $0x1b98] sm:$0xff]
        %v1233 = vld [vmem:[%s230 + $0x1ba0] sm:$0xff]
        %v1234 = vld [vmem:[%s230 + $0x1ba8] sm:$0xff]
        %v1235 = vld [vmem:[%s230 + $0x1bb0] sm:$0xff]
        %v1236 = vld [vmem:[%s230 + $0x1bb8] sm:$0xff]
        %v1237 = vld [vmem:[%s230 + $0x1bc0] sm:$0xff]
        %v1238 = vld [vmem:[%s230 + $0x1bc8] sm:$0xff]
        %v1239 = vld [vmem:[%s230 + $0x1bd0] sm:$0xff]
        %v1240 = vld [vmem:[%s230 + $0x1bd8] sm:$0xff]
        %v1241 = vld [vmem:[%s230 + $0x1be0] sm:$0xff]
        %v1242 = vld [vmem:[%s230 + $0x1be8] sm:$0xff]
        %v1243 = vld [vmem:[%s230 + $0x1bf0] sm:$0xff]
        %v1244 = vld [vmem:[%s230 + $0x1bf8] sm:$0xff]
        %v1245 = vld [vmem:[%s230 + $0x1c00] sm:$0xff]
        %v1246 = vld [vmem:[%s230 + $0x1c08] sm:$0xff]
        %v1247 = vld [vmem:[%s230 + $0x1c10] sm:$0xff]
        %v1248 = vld [vmem:[%s230 + $0x1c18] sm:$0xff]
        %v1249 = vld [vmem:[%s230 + $0x1c20] sm:$0xff]
        %v1250 = vld [vmem:[%s230 + $0x1c28] sm:$0xff]
        %v1251 = vld [vmem:[%s230 + $0x1c30] sm:$0xff]
        %v1252 = vld [vmem:[%s230 + $0x1c38] sm:$0xff]
        %v1253 = vld [vmem:[%s230 + $0x1c40] sm:$0xff]
        %v1254 = vld [vmem:[%s230 + $0x1c48] sm:$0xff]
        %v1255 = vld [vmem:[%s230 + $0x1c50] sm:$0xff]
        %v1256 = vld [vmem:[%s230 + $0x1c58] sm:$0xff]
        %v1257 = vld [vmem:[%s230 + $0x1c60] sm:$0xff]
        %v1258 = vld [vmem:[%s230 + $0x1c68] sm:$0xff]
        %v1259 = vld [vmem:[%s230 + $0x1c70] sm:$0xff]
        %v1260 = vld [vmem:[%s230 + $0x1c78] sm:$0xff]
        %v1261 = vld [vmem:[%s230 + $0x1c80] sm:$0xff]
        %v1262 = vld [vmem:[%s230 + $0x1c88] sm:$0xff]
        %v1263 = vld [vmem:[%s230 + $0x1c90] sm:$0xff]
        %v1264 = vld [vmem:[%s230 + $0x1c98] sm:$0xff]
        %v1265 = vld [vmem:[%s230 + $0x1ca0] sm:$0xff]
        %v1266 = vld [vmem:[%s230 + $0x1ca8] sm:$0xff]
        %v1267 = vld [vmem:[%s230 + $0x1cb0] sm:$0xff]
        %v1268 = vld [vmem:[%s230 + $0x1cb8] sm:$0xff]
        %v1269 = vld [vmem:[%s230 + $0x1cc0] sm:$0xff]
        %v1270 = vld [vmem:[%s230 + $0x1cc8] sm:$0xff]
        %v1271 = vld [vmem:[%s230 + $0x1cd0] sm:$0xff]
        %v1272 = vld [vmem:[%s230 + $0x1cd8] sm:$0xff]
        %v1273 = vld [vmem:[%s230 + $0x1ce0] sm:$0xff]
        %v1274 = vld [vmem:[%s230 + $0x1ce8] sm:$0xff]
        %v1275 = vld [vmem:[%s230 + $0x1cf0] sm:$0xff]
        %v1276 = vld [vmem:[%s230 + $0x1cf8] sm:$0xff]
        %v1277 = vld [vmem:[%s230 + $0x1d00] sm:$0xff]
        %v1278 = vld [vmem:[%s230 + $0x1d08] sm:$0xff]
        %v1279 = vld [vmem:[%s230 + $0x1d10] sm:$0xff]
        %v1280 = vld [vmem:[%s230 + $0x1d18] sm:$0xff]
        %v1281 = vld [vmem:[%s230 + $0x1d20] sm:$0xff]
        %v1282 = vld [vmem:[%s230 + $0x1d28] sm:$0xff]
        %v1283 = vld [vmem:[%s230 + $0x1d30] sm:$0xff]
        %v1284 = vld [vmem:[%s230 + $0x1d38] sm:$0xff]
        %v1285 = vld [vmem:[%s230 + $0x1d40] sm:$0xff]
        %v1286 = vld [vmem:[%s230 + $0x1d48] sm:$0xff]
        %v1287 = vld [vmem:[%s230 + $0x1d50] sm:$0xff]
        %v1288 = vld [vmem:[%s230 + $0x1d58] sm:$0xff]
        %v1289 = vld [vmem:[%s230 + $0x1d60] sm:$0xff]
        %v1290 = vld [vmem:[%s230 + $0x1d68] sm:$0xff]
        %v1291 = vld [vmem:[%s230 + $0x1d70] sm:$0xff]
        %v1292 = vld [vmem:[%s230 + $0x1d78] sm:$0xff]
        %v1293 = vld [vmem:[%s230 + $0x1d80] sm:$0xff]
        %v1294 = vld [vmem:[%s230 + $0x1d88] sm:$0xff]
        %v1295 = vld [vmem:[%s230 + $0x1d90] sm:$0xff]
        %v1296 = vld [vmem:[%s230 + $0x1d98] sm:$0xff]
        %v1297 = vld [vmem:[%s230 + $0x1da0] sm:$0xff]
        %v1298 = vld [vmem:[%s230 + $0x1da8] sm:$0xff]
        %v1299 = vld [vmem:[%s230 + $0x1db0] sm:$0xff]
        %v1300 = vld [vmem:[%s230 + $0x1db8] sm:$0xff]
        %v1301 = vld [vmem:[%s230 + $0x1dc0] sm:$0xff]
        %v1302 = vld [vmem:[%s230 + $0x1dc8] sm:$0xff]
        %v1303 = vld [vmem:[%s230 + $0x1dd0] sm:$0xff]
        %v1304 = vld [vmem:[%s230 + $0x1dd8] sm:$0xff]
        %v1305 = vld [vmem:[%s230 + $0x1de0] sm:$0xff]
        %v1306 = vld [vmem:[%s230 + $0x1de8] sm:$0xff]
        %v1307 = vld [vmem:[%s230 + $0x1df0] sm:$0xff]
        %v1308 = vld [vmem:[%s230 + $0x1df8] sm:$0xff]
        %v1309 = vld [vmem:[%s230 + $0x1e00] sm:$0xff]
        %v1310 = vld [vmem:[%s230 + $0x1e08] sm:$0xff]
        %v1311 = vld [vmem:[%s230 + $0x1e10] sm:$0xff]
        %v1312 = vld [vmem:[%s230 + $0x1e18] sm:$0xff]
        %v1313 = vld [vmem:[%s230 + $0x1e20] sm:$0xff]
        %v1314 = vld [vmem:[%s230 + $0x1e28] sm:$0xff]
        %v1315 = vld [vmem:[%s230 + $0x1e30] sm:$0xff]
        %v1316 = vld [vmem:[%s230 + $0x1e38] sm:$0xff]
        %v1317 = vld [vmem:[%s230 + $0x1e40] sm:$0xff]
        %v1318 = vld [vmem:[%s230 + $0x1e48] sm:$0xff]
        %v1319 = vld [vmem:[%s230 + $0x1e50] sm:$0xff]
        %v1320 = vld [vmem:[%s230 + $0x1e58] sm:$0xff]
        %v1321 = vld [vmem:[%s230 + $0x1e60] sm:$0xff]
        %v1322 = vld [vmem:[%s230 + $0x1e68] sm:$0xff]
        %v1323 = vld [vmem:[%s230 + $0x1e70] sm:$0xff]
        %v1324 = vld [vmem:[%s230 + $0x1e78] sm:$0xff]
        %v1325 = vld [vmem:[%s230 + $0x1e80] sm:$0xff]
        %v1326 = vld [vmem:[%s230 + $0x1e88] sm:$0xff]
        %v1327 = vld [vmem:[%s230 + $0x1e90] sm:$0xff]
        %v1328 = vld [vmem:[%s230 + $0x1e98] sm:$0xff]
        %v1329 = vld [vmem:[%s230 + $0x1ea0] sm:$0xff]
        %v1330 = vld [vmem:[%s230 + $0x1ea8] sm:$0xff]
        %v1331 = vld [vmem:[%s230 + $0x1eb0] sm:$0xff]
        %v1332 = vld [vmem:[%s230 + $0x1eb8] sm:$0xff]
        %v1333 = vld [vmem:[%s230 + $0x1ec0] sm:$0xff]
        %v1334 = vld [vmem:[%s230 + $0x1ec8] sm:$0xff]
        %v1335 = vld [vmem:[%s230 + $0x1ed0] sm:$0xff]
        %v1336 = vld [vmem:[%s230 + $0x1ed8] sm:$0xff]
        %v1337 = vld [vmem:[%s230 + $0x1ee0] sm:$0xff]
        %v1338 = vld [vmem:[%s230 + $0x1ee8] sm:$0xff]
        %v1339 = vld [vmem:[%s230 + $0x1ef0] sm:$0xff]
        %v1340 = vld [vmem:[%s230 + $0x1ef8] sm:$0xff]
        %v1341 = vld [vmem:[%s230 + $0x1f00] sm:$0xff]
        %v1342 = vld [vmem:[%s230 + $0x1f08] sm:$0xff]
        %v1343 = vld [vmem:[%s230 + $0x1f10] sm:$0xff]
        %v1344 = vld [vmem:[%s230 + $0x1f18] sm:$0xff]
        %v1345 = vld [vmem:[%s230 + $0x1f20] sm:$0xff]
        %v1346 = vld [vmem:[%s230 + $0x1f28] sm:$0xff]
        %v1347 = vld [vmem:[%s230 + $0x1f30] sm:$0xff]
        %v1348 = vld [vmem:[%s230 + $0x1f38] sm:$0xff]
        %v1349 = vld [vmem:[%s230 + $0x1f40] sm:$0xff]
        %v1350 = vld [vmem:[%s230 + $0x1f48] sm:$0xff]
        %v1351 = vld [vmem:[%s230 + $0x1f50] sm:$0xff]
        %v1352 = vld [vmem:[%s230 + $0x1f58] sm:$0xff]
        %v1353 = vld [vmem:[%s230 + $0x1f60] sm:$0xff]
        %v1354 = vld [vmem:[%s230 + $0x1f68] sm:$0xff]
        %v1355 = vld [vmem:[%s230 + $0x1f70] sm:$0xff]
        %v1356 = vld [vmem:[%s230 + $0x1f78] sm:$0xff]
        %v1357 = vld [vmem:[%s230 + $0x1f80] sm:$0xff]
        %v1358 = vld [vmem:[%s230 + $0x1f88] sm:$0xff]
        %v1359 = vld [vmem:[%s230 + $0x1f90] sm:$0xff]
        %v1360 = vld [vmem:[%s230 + $0x1f98] sm:$0xff]
        %v1361 = vld [vmem:[%s230 + $0x1fa0] sm:$0xff]
        %v1362 = vld [vmem:[%s230 + $0x1fa8] sm:$0xff]
        %v1363 = vld [vmem:[%s230 + $0x1fb0] sm:$0xff]
        %v1364 = vld [vmem:[%s230 + $0x1fb8] sm:$0xff]
        %v1365 = vld [vmem:[%s230 + $0x1fc0] sm:$0xff]
        %v1366 = vld [vmem:[%s230 + $0x1fc8] sm:$0xff]
        %v1367 = vld [vmem:[%s230 + $0x1fd0] sm:$0xff]
        %v1368 = vld [vmem:[%s230 + $0x1fd8] sm:$0xff]
        %v1369 = vld [vmem:[%s230 + $0x1fe0] sm:$0xff]
        %v1370 = vld [vmem:[%s230 + $0x1fe8] sm:$0xff]
        %v1371 = vld [vmem:[%s230 + $0x1ff0] sm:$0xff]
        %v1372 = vld [vmem:[%s230 + $0x1ff8] sm:$0xff]
        %v1373 = vld [vmem:[%s230 + $0x2000] sm:$0xff]
        %v1374 = vld [vmem:[%s230 + $0x2008] sm:$0xff]
        %v1375 = vld [vmem:[%s230 + $0x2010] sm:$0xff]
        %v1376 = vld [vmem:[%s230 + $0x2018] sm:$0xff]
        %v1377 = vld [vmem:[%s230 + $0x2020] sm:$0xff]
        %v1378 = vld [vmem:[%s230 + $0x2028] sm:$0xff]
        %v1379 = vld [vmem:[%s230 + $0x2030] sm:$0xff]
        %v1380 = vld [vmem:[%s230 + $0x2038] sm:$0xff]
        %v1381 = vld [vmem:[%s230 + $0x2040] sm:$0xff]
        %v1382 = vld [vmem:[%s230 + $0x2048] sm:$0xff]
        %v1383 = vld [vmem:[%s230 + $0x2050] sm:$0xff]
        %v1384 = vld [vmem:[%s230 + $0x2058] sm:$0xff]
        %v1385 = vld [vmem:[%s230 + $0x2060] sm:$0xff]
        %v1386 = vld [vmem:[%s230 + $0x2068] sm:$0xff]
        %v1387 = vld [vmem:[%s230 + $0x2070] sm:$0xff]
        %v1388 = vld [vmem:[%s230 + $0x2078] sm:$0xff]
        %v1389 = vld [vmem:[%s230 + $0x2080] sm:$0xff]
        %v1390 = vld [vmem:[%s230 + $0x2088] sm:$0xff]
        %v1391 = vld [vmem:[%s230 + $0x2090] sm:$0xff]
        %v1392 = vld [vmem:[%s230 + $0x2098] sm:$0xff]
        %v1393 = vld [vmem:[%s230 + $0x20a0] sm:$0xff]
        %v1394 = vld [vmem:[%s230 + $0x20a8] sm:$0xff]
        %v1395 = vld [vmem:[%s230 + $0x20b0] sm:$0xff]
        %v1396 = vld [vmem:[%s230 + $0x20b8] sm:$0xff]
        %v1397 = vld [vmem:[%s230 + $0x20c0] sm:$0xff]
        %v1398 = vld [vmem:[%s230 + $0x20c8] sm:$0xff]
        %v1399 = vld [vmem:[%s230 + $0x20d0] sm:$0xff]
        %v1400 = vld [vmem:[%s230 + $0x20d8] sm:$0xff]
        %v1401 = vld [vmem:[%s230 + $0x20e0] sm:$0xff]
        %v1402 = vld [vmem:[%s230 + $0x20e8] sm:$0xff]
        %v1403 = vld [vmem:[%s230 + $0x20f0] sm:$0xff]
        %v1404 = vld [vmem:[%s230 + $0x20f8] sm:$0xff]
        %v1405 = vld [vmem:[%s230 + $0x2100] sm:$0xff]
        %v1406 = vld [vmem:[%s230 + $0x2108] sm:$0xff]
        %v1407 = vld [vmem:[%s230 + $0x2110] sm:$0xff]
        %v1408 = vld [vmem:[%s230 + $0x2118] sm:$0xff]
        %v1409 = vld [vmem:[%s230 + $0x2120] sm:$0xff]
        %v1410 = vld [vmem:[%s230 + $0x2128] sm:$0xff]
        %v1411 = vld [vmem:[%s230 + $0x2130] sm:$0xff]
        %v1412 = vld [vmem:[%s230 + $0x2138] sm:$0xff]
        %v1413 = vld [vmem:[%s230 + $0x2140] sm:$0xff]
        %v1414 = vld [vmem:[%s230 + $0x2148] sm:$0xff]
        %v1415 = vld [vmem:[%s230 + $0x2150] sm:$0xff]
        %v1416 = vld [vmem:[%s230 + $0x2158] sm:$0xff]
        %v1417 = vld [vmem:[%s230 + $0x2160] sm:$0xff]
        %v1418 = vld [vmem:[%s230 + $0x2168] sm:$0xff]
        %v1419 = vld [vmem:[%s230 + $0x2170] sm:$0xff]
        %v1420 = vld [vmem:[%s230 + $0x2178] sm:$0xff]
        %v1421 = vld [vmem:[%s230 + $0x2180] sm:$0xff]
        %v1422 = vld [vmem:[%s230 + $0x2188] sm:$0xff]
        %v1423 = vld [vmem:[%s230 + $0x2190] sm:$0xff]
        %v1424 = vld [vmem:[%s230 + $0x2198] sm:$0xff]
        %v1425 = vld [vmem:[%s230 + $0x21a0] sm:$0xff]
        %v1426 = vld [vmem:[%s230 + $0x21a8] sm:$0xff]
        %v1427 = vld [vmem:[%s230 + $0x21b0] sm:$0xff]
        %v1428 = vld [vmem:[%s230 + $0x21b8] sm:$0xff]
        %v1429 = vld [vmem:[%s230 + $0x21c0] sm:$0xff]
        %v1430 = vld [vmem:[%s230 + $0x21c8] sm:$0xff]
        %v1431 = vld [vmem:[%s230 + $0x21d0] sm:$0xff]
        %v1432 = vld [vmem:[%s230 + $0x21d8] sm:$0xff]
        %v1433 = vld [vmem:[%s230 + $0x21e0] sm:$0xff]
        %v1434 = vld [vmem:[%s230 + $0x21e8] sm:$0xff]
        %v1435 = vld [vmem:[%s230 + $0x21f0] sm:$0xff]
        %v1436 = vld [vmem:[%s230 + $0x21f8] sm:$0xff]
        %v1437 = vld [vmem:[%s230 + $0x2200] sm:$0xff]
        %v1438 = vld [vmem:[%s230 + $0x2208] sm:$0xff]
        %v1439 = vld [vmem:[%s230 + $0x2210] sm:$0xff]
        %v1440 = vld [vmem:[%s230 + $0x2218] sm:$0xff]
        %v1441 = vld [vmem:[%s230 + $0x2220] sm:$0xff]
        %v1442 = vld [vmem:[%s230 + $0x2228] sm:$0xff]
        %v1443 = vld [vmem:[%s230 + $0x2230] sm:$0xff]
        %v1444 = vld [vmem:[%s230 + $0x2238] sm:$0xff]
        %v1445 = vld [vmem:[%s230 + $0x2240] sm:$0xff]
        %v1446 = vld [vmem:[%s230 + $0x2248] sm:$0xff]
        %v1447 = vld [vmem:[%s230 + $0x2250] sm:$0xff]
        %v1448 = vld [vmem:[%s230 + $0x2258] sm:$0xff]
        %v1449 = vld [vmem:[%s230 + $0x2260] sm:$0xff]
        %v1450 = vld [vmem:[%s230 + $0x2268] sm:$0xff]
        %v1451 = vld [vmem:[%s230 + $0x2270] sm:$0xff]
        %v1452 = vld [vmem:[%s230 + $0x2278] sm:$0xff]
        %v1453 = vld [vmem:[%s230 + $0x2280] sm:$0xff]
        %v1454 = vld [vmem:[%s230 + $0x2288] sm:$0xff]
        %v1455 = vld [vmem:[%s230 + $0x2290] sm:$0xff]
        %v1456 = vld [vmem:[%s230 + $0x2298] sm:$0xff]
        %v1457 = vld [vmem:[%s230 + $0x22a0] sm:$0xff]
        %v1458 = vld [vmem:[%s230 + $0x22a8] sm:$0xff]
        %v1459 = vld [vmem:[%s230 + $0x22b0] sm:$0xff]
        %v1460 = vld [vmem:[%s230 + $0x22b8] sm:$0xff]
        %v1461 = vld [vmem:[%s230 + $0x22c0] sm:$0xff]
        %v1462 = vld [vmem:[%s230 + $0x22c8] sm:$0xff]
        %v1463 = vld [vmem:[%s230 + $0x22d0] sm:$0xff]
        %v1464 = vld [vmem:[%s230 + $0x22d8] sm:$0xff]
        %v1465 = vld [vmem:[%s230 + $0x22e0] sm:$0xff]
        %v1466 = vld [vmem:[%s230 + $0x22e8] sm:$0xff]
        %v1467 = vld [vmem:[%s230 + $0x22f0] sm:$0xff]
        %v1468 = vld [vmem:[%s230 + $0x22f8] sm:$0xff]
        %v1469 = vld [vmem:[%s230 + $0x2300] sm:$0xff]
        %v1470 = vld [vmem:[%s230 + $0x2308] sm:$0xff]
        %v1471 = vld [vmem:[%s230 + $0x2310] sm:$0xff]
        %v1472 = vld [vmem:[%s230 + $0x2318] sm:$0xff]
        %v1473 = vld [vmem:[%s230 + $0x2320] sm:$0xff]
        %v1474 = vld [vmem:[%s230 + $0x2328] sm:$0xff]
        %v1475 = vld [vmem:[%s230 + $0x2330] sm:$0xff]
        %v1476 = vld [vmem:[%s230 + $0x2338] sm:$0xff]
        %v1477 = vld [vmem:[%s230 + $0x2340] sm:$0xff]
        %v1478 = vld [vmem:[%s230 + $0x2348] sm:$0xff]
        %v1479 = vld [vmem:[%s230 + $0x2350] sm:$0xff]
        %v1480 = vld [vmem:[%s230 + $0x2358] sm:$0xff]
        %v1481 = vld [vmem:[%s230 + $0x2360] sm:$0xff]
        %v1482 = vld [vmem:[%s230 + $0x2368] sm:$0xff]
        %v1483 = vld [vmem:[%s230 + $0x2370] sm:$0xff]
        %v1484 = vld [vmem:[%s230 + $0x2378] sm:$0xff]
        %v1485 = vld [vmem:[%s230 + $0x2380] sm:$0xff]
        %v1486 = vld [vmem:[%s230 + $0x2388] sm:$0xff]
        %v1487 = vld [vmem:[%s230 + $0x2390] sm:$0xff]
        %v1488 = vld [vmem:[%s230 + $0x2398] sm:$0xff]
        %v1489 = vld [vmem:[%s230 + $0x23a0] sm:$0xff]
        %v1490 = vld [vmem:[%s230 + $0x23a8] sm:$0xff]
        %v1491 = vld [vmem:[%s230 + $0x23b0] sm:$0xff]
        %v1492 = vld [vmem:[%s230 + $0x23b8] sm:$0xff]
        %v1493 = vld [vmem:[%s230 + $0x23c0] sm:$0xff]
        %v1494 = vld [vmem:[%s230 + $0x23c8] sm:$0xff]
        %v1495 = vld [vmem:[%s230 + $0x23d0] sm:$0xff]
        %v1496 = vld [vmem:[%s230 + $0x23d8] sm:$0xff]
        %v1497 = vld [vmem:[%s230 + $0x23e0] sm:$0xff]
        %v1498 = vld [vmem:[%s230 + $0x23e8] sm:$0xff]
        %v1499 = vld [vmem:[%s230 + $0x23f0] sm:$0xff]
        %v1500 = vld [vmem:[%s230 + $0x23f8] sm:$0xff]
        %v1501 = vld [vmem:[%s230 + $0x2400] sm:$0xff]
        %v1502 = vld [vmem:[%s230 + $0x2408] sm:$0xff]
        %v1503 = vld [vmem:[%s230 + $0x2410] sm:$0xff]
        %v1504 = vld [vmem:[%s230 + $0x2418] sm:$0xff]
        %v1505 = vld [vmem:[%s230 + $0x2420] sm:$0xff]
        %v1506 = vld [vmem:[%s230 + $0x2428] sm:$0xff]
        %v1507 = vld [vmem:[%s230 + $0x2430] sm:$0xff]
        %v1508 = vld [vmem:[%s230 + $0x2438] sm:$0xff]
        %v1509 = vld [vmem:[%s230 + $0x2440] sm:$0xff]
        %v1510 = vld [vmem:[%s230 + $0x2448] sm:$0xff]
        %v1511 = vld [vmem:[%s230 + $0x2450] sm:$0xff]
        %v1512 = vld [vmem:[%s230 + $0x2458] sm:$0xff]
        %v1513 = vld [vmem:[%s230 + $0x2460] sm:$0xff]
        %v1514 = vld [vmem:[%s230 + $0x2468] sm:$0xff]
        %v1515 = vld [vmem:[%s230 + $0x2470] sm:$0xff]
        %v1516 = vld [vmem:[%s230 + $0x2478] sm:$0xff]
        %v1517 = vld [vmem:[%s230 + $0x2480] sm:$0xff]
        %v1518 = vld [vmem:[%s230 + $0x2488] sm:$0xff]
        %v1519 = vld [vmem:[%s230 + $0x2490] sm:$0xff]
        %v1520 = vld [vmem:[%s230 + $0x2498] sm:$0xff]
        %v1521 = vld [vmem:[%s230 + $0x24a0] sm:$0xff]
        %v1522 = vld [vmem:[%s230 + $0x24a8] sm:$0xff]
        %v1523 = vld [vmem:[%s230 + $0x24b0] sm:$0xff]
        %v1524 = vld [vmem:[%s230 + $0x24b8] sm:$0xff]
        %v1525 = vld [vmem:[%s230 + $0x24c0] sm:$0xff]
        %v1526 = vld [vmem:[%s230 + $0x24c8] sm:$0xff]
        %v1527 = vld [vmem:[%s230 + $0x24d0] sm:$0xff]
        %v1528 = vld [vmem:[%s230 + $0x24d8] sm:$0xff]
        %v1529 = vld [vmem:[%s230 + $0x24e0] sm:$0xff]
        %v1530 = vld [vmem:[%s230 + $0x24e8] sm:$0xff]
        %v1531 = vld [vmem:[%s230 + $0x24f0] sm:$0xff]
        %v1532 = vld [vmem:[%s230 + $0x24f8] sm:$0xff]
        %v1533 = vld [vmem:[%s230 + $0x2500] sm:$0xff]
        %v1534 = vld [vmem:[%s230 + $0x2508] sm:$0xff]
        %v1535 = vld [vmem:[%s230 + $0x2510] sm:$0xff]
        %v1536 = vld [vmem:[%s230 + $0x2518] sm:$0xff]
        %v1537 = vld [vmem:[%s230 + $0x2520] sm:$0xff]
        %v1538 = vld [vmem:[%s230 + $0x2528] sm:$0xff]
        %v1539 = vld [vmem:[%s230 + $0x2530] sm:$0xff]
        %v1540 = vld [vmem:[%s230 + $0x2538] sm:$0xff]
        %v1541 = vld [vmem:[%s230 + $0x2540] sm:$0xff]
        %v1542 = vld [vmem:[%s230 + $0x2548] sm:$0xff]
        %v1543 = vld [vmem:[%s230 + $0x2550] sm:$0xff]
        %v1544 = vld [vmem:[%s230 + $0x2558] sm:$0xff]
        %v1545 = vld [vmem:[%s230 + $0x2560] sm:$0xff]
        %v1546 = vld [vmem:[%s230 + $0x2568] sm:$0xff]
        %v1547 = vld [vmem:[%s230 + $0x2570] sm:$0xff]
        %v1548 = vld [vmem:[%s230 + $0x2578] sm:$0xff]
        %v1549 = vld [vmem:[%s230 + $0x2580] sm:$0xff]
        %v1550 = vld [vmem:[%s230 + $0x2588] sm:$0xff]
        %v1551 = vld [vmem:[%s230 + $0x2590] sm:$0xff]
        %v1552 = vld [vmem:[%s230 + $0x2598] sm:$0xff]
        %v1553 = vld [vmem:[%s230 + $0x25a0] sm:$0xff]
        %v1554 = vld [vmem:[%s230 + $0x25a8] sm:$0xff]
        %v1555 = vld [vmem:[%s230 + $0x25b0] sm:$0xff]
        %v1556 = vld [vmem:[%s230 + $0x25b8] sm:$0xff]
        %v1557 = vld [vmem:[%s230 + $0x25c0] sm:$0xff]
        %v1558 = vld [vmem:[%s230 + $0x25c8] sm:$0xff]
        %v1559 = vld [vmem:[%s230 + $0x25d0] sm:$0xff]
        %v1560 = vld [vmem:[%s230 + $0x25d8] sm:$0xff]
        %v1561 = vld [vmem:[%s230 + $0x25e0] sm:$0xff]
        %v1562 = vld [vmem:[%s230 + $0x25e8] sm:$0xff]
        %v1563 = vld [vmem:[%s230 + $0x25f0] sm:$0xff]
        %v1564 = vld [vmem:[%s230 + $0x25f8] sm:$0xff]
        %1565 = vmatprep.subr.mxu0 %v350
        %1566 = vmatpush1.msra.mxu0 %v349
        %1567 = vmatprep.subr.mxu0 %v369
        %1568 = vmatpush1.msra.mxu0 %v368
        %1569 = vmatprep.subr.mxu0 %v388
        %1570 = vmatpush1.msra.mxu0 %v387
        %1571 = vmatprep.subr.mxu0 %v407
        %1572 = vmatpush1.msra.mxu0 %v406
        %1573 = vmatprep.subr.mxu0 %v426
        %1574 = vmatpush1.msra.mxu0 %v425
        %1575 = vmatprep.subr.mxu0 %v445
        %1576 = vmatpush1.msra.mxu0 %v444
        %1577 = vmatprep.subr.mxu0 %v464
        %1578 = vmatpush1.msra.mxu0 %v463
        %1579 = vmatprep.subr.mxu0 %v483
        %1580 = vmatpush1.msra.mxu0 %v482
        %1581 = vmatprep.subr.mxu0 %v502
        %1582 = vmatpush1.msra.mxu0 %v501
        %1583 = vmatprep.subr.mxu0 %v521
        %1584 = vmatpush1.msra.mxu0 %v520
        %1585 = vmatprep.subr.mxu0 %v540
        %1586 = vmatpush1.msra.mxu0 %v539
        %1587 = vmatprep.subr.mxu0 %v559
        %1588 = vmatpush1.msra.mxu0 %v558
        %1589 = vmatprep.subr.mxu0 %v578
        %1590 = vmatpush1.msra.mxu0 %v577
        %1591 = vmatprep.subr.mxu0 %v597
        %1592 = vmatpush1.msra.mxu0 %v596
        %1593 = vmatprep.subr.mxu0 %v616
        %1594 = vmatpush1.msra.mxu0 %v615
        %1595 = vmatprep.subr.mxu0 %v635
        %1596 = vmatpush1.msra.mxu0 %v634
        %1597 = vmatprep.subr.mxu0 %v654
        %1598 = vmatpush1.msra.mxu0 %v653
        %1599 = vmatprep.subr.mxu0 %v673
        %1600 = vmatpush1.msra.mxu0 %v672
        %1601 = vmatprep.subr.mxu0 %v692
        %1602 = vmatpush1.msra.mxu0 %v691
        %1603 = vmatprep.subr.mxu0 %v711
        %1604 = vmatpush1.msra.mxu0 %v710
        %1605 = vmatprep.subr.mxu0 %v730
        %1606 = vmatpush1.msra.mxu0 %v729
        %1607 = vmatprep.subr.mxu0 %v749
        %1608 = vmatpush1.msra.mxu0 %v748
        %1609 = vmatprep.subr.mxu0 %v768
        %1610 = vmatpush1.msra.mxu0 %v767
        %1611 = vmatprep.subr.mxu0 %v787
        %1612 = vmatpush1.msra.mxu0 %v786
        %1613 = vmatprep.subr.mxu0 %v806
        %1614 = vmatpush1.msra.mxu0 %v805
        %1615 = vmatprep.subr.mxu0 %v825
        %1616 = vmatpush1.msra.mxu0 %v824
        %1617 = vmatprep.subr.mxu0 %v844
        %1618 = vmatpush1.msra.mxu0 %v843
        %1619 = vmatprep.subr.mxu0 %v863
        %1620 = vmatpush1.msra.mxu0 %v862
        %1621 = vmatprep.subr.mxu0 %v882
        %1622 = vmatpush1.msra.mxu0 %v881
        %1623 = vmatprep.subr.mxu0 %v901
        %1624 = vmatpush1.msra.mxu0 %v900
        %1625 = vmatprep.subr.mxu0 %v920
        %1626 = vmatpush1.msra.mxu0 %v919
        %1627 = vmatprep.subr.mxu0 %v939
        %1628 = vmatpush1.msra.mxu0 %v938
        %1629 = vmatprep.mubr.f32.mxu0 %v346
        %1630 = vmatmul.mubr.f32.gmra.mrb[0].mxu0 %v345
        %v1631 = vpop.f32.mrb[0].mxu0
        %v1632 = vadd.f32 0.0, %v1631
        %v1633 = vpop.f32.mrb[0].mxu0
        %v1634 = vadd.f32 0.0, %v1633
        %1635 = vdwg.mxu0
        %1636 = vmatprep.subr.mxu0 %v958
        %1637 = vmatpush1.msra.mxu0 %v957
        %1638 = vmatprep.subr.mxu0 %v977
        %1639 = vmatpush1.msra.mxu0 %v976
        %1640 = vmatprep.subr.mxu0 %v996
        %1641 = vmatpush1.msra.mxu0 %v995
        %1642 = vmatprep.subr.mxu0 %v1015
        %1643 = vmatpush1.msra.mxu0 %v1014
        %1644 = vmatprep.subr.mxu0 %v1034
        %1645 = vmatpush1.msra.mxu0 %v1033
        %1646 = vmatprep.subr.mxu0 %v1053
        %1647 = vmatpush1.msra.mxu0 %v1052
        %1648 = vmatprep.subr.mxu0 %v1072
        %1649 = vmatpush1.msra.mxu0 %v1071
        %1650 = vmatprep.subr.mxu0 %v1091
        %1651 = vmatpush1.msra.mxu0 %v1090
        %1652 = vmatprep.subr.mxu0 %v1110
        %1653 = vmatpush1.msra.mxu0 %v1109
        %1654 = vmatprep.subr.mxu0 %v1129
        %1655 = vmatpush1.msra.mxu0 %v1128
        %1656 = vmatprep.subr.mxu0 %v1148
        %1657 = vmatpush1.msra.mxu0 %v1147
        %1658 = vmatprep.subr.mxu0 %v1167
        %1659 = vmatpush1.msra.mxu0 %v1166
        %1660 = vmatprep.subr.mxu0 %v1186
        %1661 = vmatpush1.msra.mxu0 %v1185
        %1662 = vmatprep.subr.mxu0 %v1205
        %1663 = vmatpush1.msra.mxu0 %v1204
        %1664 = vmatprep.subr.mxu0 %v1224
        %1665 = vmatpush1.msra.mxu0 %v1223
        %1666 = vmatprep.subr.mxu0 %v1243
        %1667 = vmatpush1.msra.mxu0 %v1242
        %1668 = vmatprep.subr.mxu0 %v1262
        %1669 = vmatpush1.msra.mxu0 %v1261
        %1670 = vmatprep.subr.mxu0 %v1281
        %1671 = vmatpush1.msra.mxu0 %v1280
        %1672 = vmatprep.subr.mxu0 %v1300
        %1673 = vmatpush1.msra.mxu0 %v1299
        %1674 = vmatprep.subr.mxu0 %v1319
        %1675 = vmatpush1.msra.mxu0 %v1318
        %1676 = vmatprep.subr.mxu0 %v1338
        %1677 = vmatpush1.msra.mxu0 %v1337
        %1678 = vmatprep.subr.mxu0 %v1357
        %1679 = vmatpush1.msra.mxu0 %v1356
        %1680 = vmatprep.subr.mxu0 %v1376
        %1681 = vmatpush1.msra.mxu0 %v1375
        %1682 = vmatprep.subr.mxu0 %v1395
        %1683 = vmatpush1.msra.mxu0 %v1394
        %1684 = vmatprep.subr.mxu0 %v1414
        %1685 = vmatpush1.msra.mxu0 %v1413
        %1686 = vmatprep.subr.mxu0 %v1433
        %1687 = vmatpush1.msra.mxu0 %v1432
        %1688 = vmatprep.subr.mxu0 %v1452
        %1689 = vmatpush1.msra.mxu0 %v1451
        %1690 = vmatprep.subr.mxu0 %v1471
        %1691 = vmatpush1.msra.mxu0 %v1470
        %1692 = vmatprep.subr.mxu0 %v1490
        %1693 = vmatpush1.msra.mxu0 %v1489
        %1694 = vmatprep.subr.mxu0 %v1509
        %1695 = vmatpush1.msra.mxu0 %v1508
        %1696 = vmatprep.subr.mxu0 %v1528
        %1697 = vmatpush1.msra.mxu0 %v1527
        %1698 = vmatprep.subr.mxu0 %v1547
        %1699 = vmatpush1.msra.mxu0 %v1546
        %1700 = vmatprep.mubr.f32.mxu0 %v348
        %1701 = vmatmul.mubr.f32.gmra.mrb[0].mxu0 %v347
        %v1702 = vpop.f32.mrb[0].mxu0
        %v1703 = vadd.f32 %v1632, %v1702
        %v1704 = vpop.f32.mrb[0].mxu0
        %v1705 = vadd.f32 %v1634, %v1704
        %1706 = vdwg.mxu0
        %1707 = vmatprep.subr.mxu0 %v352
        %1708 = vmatpush1.msra.mxu0 %v351
        %1709 = vmatprep.subr.mxu0 %v371
        %1710 = vmatpush1.msra.mxu0 %v370
        %1711 = vmatprep.subr.mxu0 %v390
        %1712 = vmatpush1.msra.mxu0 %v389
        %1713 = vmatprep.subr.mxu0 %v409
        %1714 = vmatpush1.msra.mxu0 %v408
        %1715 = vmatprep.subr.mxu0 %v428
        %1716 = vmatpush1.msra.mxu0 %v427
        %1717 = vmatprep.subr.mxu0 %v447
        %1718 = vmatpush1.msra.mxu0 %v446
        %1719 = vmatprep.subr.mxu0 %v466
        %1720 = vmatpush1.msra.mxu0 %v465
        %1721 = vmatprep.subr.mxu0 %v485
        %1722 = vmatpush1.msra.mxu0 %v484
        %1723 = vmatprep.subr.mxu0 %v504
        %1724 = vmatpush1.msra.mxu0 %v503
        %1725 = vmatprep.subr.mxu0 %v523
        %1726 = vmatpush1.msra.mxu0 %v522
        %1727 = vmatprep.subr.mxu0 %v542
        %1728 = vmatpush1.msra.mxu0 %v541
        %1729 = vmatprep.subr.mxu0 %v561
        %1730 = vmatpush1.msra.mxu0 %v560
        %1731 = vmatprep.subr.mxu0 %v580
        %1732 = vmatpush1.msra.mxu0 %v579
        %1733 = vmatprep.subr.mxu0 %v599
        %1734 = vmatpush1.msra.mxu0 %v598
        %1735 = vmatprep.subr.mxu0 %v618
        %1736 = vmatpush1.msra.mxu0 %v617
        %1737 = vmatprep.subr.mxu0 %v637
        %1738 = vmatpush1.msra.mxu0 %v636
        %1739 = vmatprep.subr.mxu0 %v656
        %1740 = vmatpush1.msra.mxu0 %v655
        %1741 = vmatprep.subr.mxu0 %v675
        %1742 = vmatpush1.msra.mxu0 %v674
        %1743 = vmatprep.subr.mxu0 %v694
        %1744 = vmatpush1.msra.mxu0 %v693
        %1745 = vmatprep.subr.mxu0 %v713
        %1746 = vmatpush1.msra.mxu0 %v712
        %1747 = vmatprep.subr.mxu0 %v732
        %1748 = vmatpush1.msra.mxu0 %v731
        %1749 = vmatprep.subr.mxu0 %v751
        %1750 = vmatpush1.msra.mxu0 %v750
        %1751 = vmatprep.subr.mxu0 %v770
        %1752 = vmatpush1.msra.mxu0 %v769
        %1753 = vmatprep.subr.mxu0 %v789
        %1754 = vmatpush1.msra.mxu0 %v788
        %1755 = vmatprep.subr.mxu0 %v808
        %1756 = vmatpush1.msra.mxu0 %v807
        %1757 = vmatprep.subr.mxu0 %v827
        %1758 = vmatpush1.msra.mxu0 %v826
        %1759 = vmatprep.subr.mxu0 %v846
        %1760 = vmatpush1.msra.mxu0 %v845
        %1761 = vmatprep.subr.mxu0 %v865
        %1762 = vmatpush1.msra.mxu0 %v864
        %1763 = vmatprep.subr.mxu0 %v884
        %1764 = vmatpush1.msra.mxu0 %v883
        %1765 = vmatprep.subr.mxu0 %v903
        %1766 = vmatpush1.msra.mxu0 %v902
        %1767 = vmatprep.subr.mxu0 %v922
        %1768 = vmatpush1.msra.mxu0 %v921
        %1769 = vmatprep.subr.mxu0 %v941
        %1770 = vmatpush1.msra.mxu0 %v940
        %1771 = vmatprep.mubr.f32.mxu0 %v346
        %1772 = vmatmul.mubr.f32.gmra.mrb[0].mxu0 %v345
        %v1773 = vpop.f32.mrb[0].mxu0
        %v1774 = vadd.f32 0.0, %v1773
        %v1775 = vpop.f32.mrb[0].mxu0
        %v1776 = vadd.f32 0.0, %v1775
        %1777 = vdwg.mxu0
        %1778 = vmatprep.subr.mxu0 %v960
        %1779 = vmatpush1.msra.mxu0 %v959
        %1780 = vmatprep.subr.mxu0 %v979
        %1781 = vmatpush1.msra.mxu0 %v978
        %1782 = vmatprep.subr.mxu0 %v998
        %1783 = vmatpush1.msra.mxu0 %v997
        %1784 = vmatprep.subr.mxu0 %v1017
        %1785 = vmatpush1.msra.mxu0 %v1016
        %1786 = vmatprep.subr.mxu0 %v1036
        %1787 = vmatpush1.msra.mxu0 %v1035
        %1788 = vmatprep.subr.mxu0 %v1055
        %1789 = vmatpush1.msra.mxu0 %v1054
        %1790 = vmatprep.subr.mxu0 %v1074
        %1791 = vmatpush1.msra.mxu0 %v1073
        %1792 = vmatprep.subr.mxu0 %v1093
        %1793 = vmatpush1.msra.mxu0 %v1092
        %1794 = vmatprep.subr.mxu0 %v1112
        %1795 = vmatpush1.msra.mxu0 %v1111
        %1796 = vmatprep.subr.mxu0 %v1131
        %1797 = vmatpush1.msra.mxu0 %v1130
        %1798 = vmatprep.subr.mxu0 %v1150
        %1799 = vmatpush1.msra.mxu0 %v1149
        %1800 = vmatprep.subr.mxu0 %v1169
        %1801 = vmatpush1.msra.mxu0 %v1168
        %1802 = vmatprep.subr.mxu0 %v1188
        %1803 = vmatpush1.msra.mxu0 %v1187
        %1804 = vmatprep.subr.mxu0 %v1207
        %1805 = vmatpush1.msra.mxu0 %v1206
        %1806 = vmatprep.subr.mxu0 %v1226
        %1807 = vmatpush1.msra.mxu0 %v1225
        %1808 = vmatprep.subr.mxu0 %v1245
        %1809 = vmatpush1.msra.mxu0 %v1244
        %1810 = vmatprep.subr.mxu0 %v1264
        %1811 = vmatpush1.msra.mxu0 %v1263
        %1812 = vmatprep.subr.mxu0 %v1283
        %1813 = vmatpush1.msra.mxu0 %v1282
        %1814 = vmatprep.subr.mxu0 %v1302
        %1815 = vmatpush1.msra.mxu0 %v1301
        %1816 = vmatprep.subr.mxu0 %v1321
        %1817 = vmatpush1.msra.mxu0 %v1320
        %1818 = vmatprep.subr.mxu0 %v1340
        %1819 = vmatpush1.msra.mxu0 %v1339
        %1820 = vmatprep.subr.mxu0 %v1359
        %1821 = vmatpush1.msra.mxu0 %v1358
        %1822 = vmatprep.subr.mxu0 %v1378
        %1823 = vmatpush1.msra.mxu0 %v1377
        %1824 = vmatprep.subr.mxu0 %v1397
        %1825 = vmatpush1.msra.mxu0 %v1396
        %1826 = vmatprep.subr.mxu0 %v1416
        %1827 = vmatpush1.msra.mxu0 %v1415
        %1828 = vmatprep.subr.mxu0 %v1435
        %1829 = vmatpush1.msra.mxu0 %v1434
        %1830 = vmatprep.subr.mxu0 %v1454
        %1831 = vmatpush1.msra.mxu0 %v1453
        %1832 = vmatprep.subr.mxu0 %v1473
        %1833 = vmatpush1.msra.mxu0 %v1472
        %1834 = vmatprep.subr.mxu0 %v1492
        %1835 = vmatpush1.msra.mxu0 %v1491
        %1836 = vmatprep.subr.mxu0 %v1511
        %1837 = vmatpush1.msra.mxu0 %v1510
        %1838 = vmatprep.subr.mxu0 %v1530
        %1839 = vmatpush1.msra.mxu0 %v1529
        %1840 = vmatprep.subr.mxu0 %v1549
        %1841 = vmatpush1.msra.mxu0 %v1548
        %1842 = vmatprep.mubr.f32.mxu0 %v348
        %1843 = vmatmul.mubr.f32.gmra.mrb[0].mxu0 %v347
        %v1844 = vpop.f32.mrb[0].mxu0
        %v1845 = vadd.f32 %v1774, %v1844
        %v1846 = vpop.f32.mrb[0].mxu0
        %v1847 = vadd.f32 %v1776, %v1846
        %1848 = vdwg.mxu0
        %1849 = vmatprep.subr.mxu0 %v354
        %1850 = vmatpush1.msra.mxu0 %v353
        %1851 = vmatprep.subr.mxu0 %v373
        %1852 = vmatpush1.msra.mxu0 %v372
        %1853 = vmatprep.subr.mxu0 %v392
        %1854 = vmatpush1.msra.mxu0 %v391
        %1855 = vmatprep.subr.mxu0 %v411
        %1856 = vmatpush1.msra.mxu0 %v410
        %1857 = vmatprep.subr.mxu0 %v430
        %1858 = vmatpush1.msra.mxu0 %v429
        %1859 = vmatprep.subr.mxu0 %v449
        %1860 = vmatpush1.msra.mxu0 %v448
        %1861 = vmatprep.subr.mxu0 %v468
        %1862 = vmatpush1.msra.mxu0 %v467
        %1863 = vmatprep.subr.mxu0 %v487
        %1864 = vmatpush1.msra.mxu0 %v486
        %1865 = vmatprep.subr.mxu0 %v506
        %1866 = vmatpush1.msra.mxu0 %v505
        %1867 = vmatprep.subr.mxu0 %v525
        %1868 = vmatpush1.msra.mxu0 %v524
        %1869 = vmatprep.subr.mxu0 %v544
        %1870 = vmatpush1.msra.mxu0 %v543
        %1871 = vmatprep.subr.mxu0 %v563
        %1872 = vmatpush1.msra.mxu0 %v562
        %1873 = vmatprep.subr.mxu0 %v582
        %1874 = vmatpush1.msra.mxu0 %v581
        %1875 = vmatprep.subr.mxu0 %v601
        %1876 = vmatpush1.msra.mxu0 %v600
        %1877 = vmatprep.subr.mxu0 %v620
        %1878 = vmatpush1.msra.mxu0 %v619
        %1879 = vmatprep.subr.mxu0 %v639
        %1880 = vmatpush1.msra.mxu0 %v638
        %1881 = vmatprep.subr.mxu0 %v658
        %1882 = vmatpush1.msra.mxu0 %v657
        %1883 = vmatprep.subr.mxu0 %v677
        %1884 = vmatpush1.msra.mxu0 %v676
        %1885 = vmatprep.subr.mxu0 %v696
        %1886 = vmatpush1.msra.mxu0 %v695
        %1887 = vmatprep.subr.mxu0 %v715
        %1888 = vmatpush1.msra.mxu0 %v714
        %1889 = vmatprep.subr.mxu0 %v734
        %1890 = vmatpush1.msra.mxu0 %v733
        %1891 = vmatprep.subr.mxu0 %v753
        %1892 = vmatpush1.msra.mxu0 %v752
        %1893 = vmatprep.subr.mxu0 %v772
        %1894 = vmatpush1.msra.mxu0 %v771
        %1895 = vmatprep.subr.mxu0 %v791
        %1896 = vmatpush1.msra.mxu0 %v790
        %1897 = vmatprep.subr.mxu0 %v810
        %1898 = vmatpush1.msra.mxu0 %v809
        %1899 = vmatprep.subr.mxu0 %v829
        %1900 = vmatpush1.msra.mxu0 %v828
        %1901 = vmatprep.subr.mxu0 %v848
        %1902 = vmatpush1.msra.mxu0 %v847
        %1903 = vmatprep.subr.mxu0 %v867
        %1904 = vmatpush1.msra.mxu0 %v866
        %1905 = vmatprep.subr.mxu0 %v886
        %1906 = vmatpush1.msra.mxu0 %v885
        %1907 = vmatprep.subr.mxu0 %v905
        %1908 = vmatpush1.msra.mxu0 %v904
        %1909 = vmatprep.subr.mxu0 %v924
        %1910 = vmatpush1.msra.mxu0 %v923
        %1911 = vmatprep.subr.mxu0 %v943
        %1912 = vmatpush1.msra.mxu0 %v942
        %1913 = vmatprep.mubr.f32.mxu0 %v346
        %1914 = vmatmul.mubr.f32.gmra.mrb[0].mxu0 %v345
        %v1915 = vpop.f32.mrb[0].mxu0
        %v1916 = vadd.f32 0.0, %v1915
        %v1917 = vpop.f32.mrb[0].mxu0
        %v1918 = vadd.f32 0.0, %v1917
        %1919 = vdwg.mxu0
        %1920 = vmatprep.subr.mxu0 %v962
        %1921 = vmatpush1.msra.mxu0 %v961
        %1922 = vmatprep.subr.mxu0 %v981
        %1923 = vmatpush1.msra.mxu0 %v980
        %1924 = vmatprep.subr.mxu0 %v1000
        %1925 = vmatpush1.msra.mxu0 %v999
        %1926 = vmatprep.subr.mxu0 %v1019
        %1927 = vmatpush1.msra.mxu0 %v1018
        %1928 = vmatprep.subr.mxu0 %v1038
        %1929 = vmatpush1.msra.mxu0 %v1037
        %1930 = vmatprep.subr.mxu0 %v1057
        %1931 = vmatpush1.msra.mxu0 %v1056
        %1932 = vmatprep.subr.mxu0 %v1076
        %1933 = vmatpush1.msra.mxu0 %v1075
        %1934 = vmatprep.subr.mxu0 %v1095
        %1935 = vmatpush1.msra.mxu0 %v1094
        %1936 = vmatprep.subr.mxu0 %v1114
        %1937 = vmatpush1.msra.mxu0 %v1113
        %1938 = vmatprep.subr.mxu0 %v1133
        %1939 = vmatpush1.msra.mxu0 %v1132
        %1940 = vmatprep.subr.mxu0 %v1152
        %1941 = vmatpush1.msra.mxu0 %v1151
        %1942 = vmatprep.subr.mxu0 %v1171
        %1943 = vmatpush1.msra.mxu0 %v1170
        %1944 = vmatprep.subr.mxu0 %v1190
        %1945 = vmatpush1.msra.mxu0 %v1189
        %1946 = vmatprep.subr.mxu0 %v1209
        %1947 = vmatpush1.msra.mxu0 %v1208
        %1948 = vmatprep.subr.mxu0 %v1228
        %1949 = vmatpush1.msra.mxu0 %v1227
        %1950 = vmatprep.subr.mxu0 %v1247
        %1951 = vmatpush1.msra.mxu0 %v1246
        %1952 = vmatprep.subr.mxu0 %v1266
        %1953 = vmatpush1.msra.mxu0 %v1265
        %1954 = vmatprep.subr.mxu0 %v1285
        %1955 = vmatpush1.msra.mxu0 %v1284
        %1956 = vmatprep.subr.mxu0 %v1304
        %1957 = vmatpush1.msra.mxu0 %v1303
        %1958 = vmatprep.subr.mxu0 %v1323
        %1959 = vmatpush1.msra.mxu0 %v1322
        %1960 = vmatprep.subr.mxu0 %v1342
        %1961 = vmatpush1.msra.mxu0 %v1341
        %1962 = vmatprep.subr.mxu0 %v1361
        %1963 = vmatpush1.msra.mxu0 %v1360
        %1964 = vmatprep.subr.mxu0 %v1380
        %1965 = vmatpush1.msra.mxu0 %v1379
        %1966 = vmatprep.subr.mxu0 %v1399
        %1967 = vmatpush1.msra.mxu0 %v1398
        %1968 = vmatprep.subr.mxu0 %v1418
        %1969 = vmatpush1.msra.mxu0 %v1417
        %1970 = vmatprep.subr.mxu0 %v1437
        %1971 = vmatpush1.msra.mxu0 %v1436
        %1972 = vmatprep.subr.mxu0 %v1456
        %1973 = vmatpush1.msra.mxu0 %v1455
        %1974 = vmatprep.subr.mxu0 %v1475
        %1975 = vmatpush1.msra.mxu0 %v1474
        %1976 = vmatprep.subr.mxu0 %v1494
        %1977 = vmatpush1.msra.mxu0 %v1493
        %1978 = vmatprep.subr.mxu0 %v1513
        %1979 = vmatpush1.msra.mxu0 %v1512
        %1980 = vmatprep.subr.mxu0 %v1532
        %1981 = vmatpush1.msra.mxu0 %v1531
        %1982 = vmatprep.subr.mxu0 %v1551
        %1983 = vmatpush1.msra.mxu0 %v1550
        %1984 = vmatprep.mubr.f32.mxu0 %v348
        %1985 = vmatmul.mubr.f32.gmra.mrb[0].mxu0 %v347
        %v1986 = vpop.f32.mrb[0].mxu0
        %v1987 = vadd.f32 %v1916, %v1986
        %v1988 = vpop.f32.mrb[0].mxu0
        %v1989 = vadd.f32 %v1918, %v1988
        %1990 = vdwg.mxu0
        %1991 = vmatprep.subr.mxu0 %v356
        %1992 = vmatpush1.msra.mxu0 %v355
        %1993 = vmatprep.subr.mxu0 %v375
        %1994 = vmatpush1.msra.mxu0 %v374
        %1995 = vmatprep.subr.mxu0 %v394
        %1996 = vmatpush1.msra.mxu0 %v393
        %1997 = vmatprep.subr.mxu0 %v413
        %1998 = vmatpush1.msra.mxu0 %v412
        %1999 = vmatprep.subr.mxu0 %v432
        %2000 = vmatpush1.msra.mxu0 %v431
        %2001 = vmatprep.subr.mxu0 %v451
        %2002 = vmatpush1.msra.mxu0 %v450
        %2003 = vmatprep.subr.mxu0 %v470
        %2004 = vmatpush1.msra.mxu0 %v469
        %2005 = vmatprep.subr.mxu0 %v489
        %2006 = vmatpush1.msra.mxu0 %v488
        %2007 = vmatprep.subr.mxu0 %v508
        %2008 = vmatpush1.msra.mxu0 %v507
        %2009 = vmatprep.subr.mxu0 %v527
        %2010 = vmatpush1.msra.mxu0 %v526
        %2011 = vmatprep.subr.mxu0 %v546
        %2012 = vmatpush1.msra.mxu0 %v545
        %2013 = vmatprep.subr.mxu0 %v565
        %2014 = vmatpush1.msra.mxu0 %v564
        %2015 = vmatprep.subr.mxu0 %v584
        %2016 = vmatpush1.msra.mxu0 %v583
        %2017 = vmatprep.subr.mxu0 %v603
        %2018 = vmatpush1.msra.mxu0 %v602
        %2019 = vmatprep.subr.mxu0 %v622
        %2020 = vmatpush1.msra.mxu0 %v621
        %2021 = vmatprep.subr.mxu0 %v641
        %2022 = vmatpush1.msra.mxu0 %v640
        %2023 = vmatprep.subr.mxu0 %v660
        %2024 = vmatpush1.msra.mxu0 %v659
        %2025 = vmatprep.subr.mxu0 %v679
        %2026 = vmatpush1.msra.mxu0 %v678
        %2027 = vmatprep.subr.mxu0 %v698
        %2028 = vmatpush1.msra.mxu0 %v697
        %2029 = vmatprep.subr.mxu0 %v717
        %2030 = vmatpush1.msra.mxu0 %v716
        %2031 = vmatprep.subr.mxu0 %v736
        %2032 = vmatpush1.msra.mxu0 %v735
        %2033 = vmatprep.subr.mxu0 %v755
        %2034 = vmatpush1.msra.mxu0 %v754
        %2035 = vmatprep.subr.mxu0 %v774
        %2036 = vmatpush1.msra.mxu0 %v773
        %2037 = vmatprep.subr.mxu0 %v793
        %2038 = vmatpush1.msra.mxu0 %v792
        %2039 = vmatprep.subr.mxu0 %v812
        %2040 = vmatpush1.msra.mxu0 %v811
        %2041 = vmatprep.subr.mxu0 %v831
        %2042 = vmatpush1.msra.mxu0 %v830
        %2043 = vmatprep.subr.mxu0 %v850
        %2044 = vmatpush1.msra.mxu0 %v849
        %2045 = vmatprep.subr.mxu0 %v869
        %2046 = vmatpush1.msra.mxu0 %v868
        %2047 = vmatprep.subr.mxu0 %v888
        %2048 = vmatpush1.msra.mxu0 %v887
        %2049 = vmatprep.subr.mxu0 %v907
        %2050 = vmatpush1.msra.mxu0 %v906
        %2051 = vmatprep.subr.mxu0 %v926
        %2052 = vmatpush1.msra.mxu0 %v925
        %2053 = vmatprep.subr.mxu0 %v945
        %2054 = vmatpush1.msra.mxu0 %v944
        %2055 = vmatprep.mubr.f32.mxu0 %v346
        %2056 = vmatmul.mubr.f32.gmra.mrb[0].mxu0 %v345
        %v2057 = vpop.f32.mrb[0].mxu0
        %v2058 = vadd.f32 0.0, %v2057
        %v2059 = vpop.f32.mrb[0].mxu0
        %v2060 = vadd.f32 0.0, %v2059
        %2061 = vdwg.mxu0
        %2062 = vmatprep.subr.mxu0 %v964
        %2063 = vmatpush1.msra.mxu0 %v963
        %2064 = vmatprep.subr.mxu0 %v983
        %2065 = vmatpush1.msra.mxu0 %v982
        %2066 = vmatprep.subr.mxu0 %v1002
        %2067 = vmatpush1.msra.mxu0 %v1001
        %2068 = vmatprep.subr.mxu0 %v1021
        %2069 = vmatpush1.msra.mxu0 %v1020
        %2070 = vmatprep.subr.mxu0 %v1040
        %2071 = vmatpush1.msra.mxu0 %v1039
        %2072 = vmatprep.subr.mxu0 %v1059
        %2073 = vmatpush1.msra.mxu0 %v1058
        %2074 = vmatprep.subr.mxu0 %v1078
        %2075 = vmatpush1.msra.mxu0 %v1077
        %2076 = vmatprep.subr.mxu0 %v1097
        %2077 = vmatpush1.msra.mxu0 %v1096
        %2078 = vmatprep.subr.mxu0 %v1116
        %2079 = vmatpush1.msra.mxu0 %v1115
        %2080 = vmatprep.subr.mxu0 %v1135
        %2081 = vmatpush1.msra.mxu0 %v1134
        %2082 = vmatprep.subr.mxu0 %v1154
        %2083 = vmatpush1.msra.mxu0 %v1153
        %2084 = vmatprep.subr.mxu0 %v1173
        %2085 = vmatpush1.msra.mxu0 %v1172
        %2086 = vmatprep.subr.mxu0 %v1192
        %2087 = vmatpush1.msra.mxu0 %v1191
        %2088 = vmatprep.subr.mxu0 %v1211
        %2089 = vmatpush1.msra.mxu0 %v1210
        %2090 = vmatprep.subr.mxu0 %v1230
        %2091 = vmatpush1.msra.mxu0 %v1229
        %2092 = vmatprep.subr.mxu0 %v1249
        %2093 = vmatpush1.msra.mxu0 %v1248
        %2094 = vmatprep.subr.mxu0 %v1268
        %2095 = vmatpush1.msra.mxu0 %v1267
        %2096 = vmatprep.subr.mxu0 %v1287
        %2097 = vmatpush1.msra.mxu0 %v1286
        %2098 = vmatprep.subr.mxu0 %v1306
        %2099 = vmatpush1.msra.mxu0 %v1305
        %2100 = vmatprep.subr.mxu0 %v1325
        %2101 = vmatpush1.msra.mxu0 %v1324
        %2102 = vmatprep.subr.mxu0 %v1344
        %2103 = vmatpush1.msra.mxu0 %v1343
        %2104 = vmatprep.subr.mxu0 %v1363
        %2105 = vmatpush1.msra.mxu0 %v1362
        %2106 = vmatprep.subr.mxu0 %v1382
        %2107 = vmatpush1.msra.mxu0 %v1381
        %2108 = vmatprep.subr.mxu0 %v1401
        %2109 = vmatpush1.msra.mxu0 %v1400
        %2110 = vmatprep.subr.mxu0 %v1420
        %2111 = vmatpush1.msra.mxu0 %v1419
        %2112 = vmatprep.subr.mxu0 %v1439
        %2113 = vmatpush1.msra.mxu0 %v1438
        %2114 = vmatprep.subr.mxu0 %v1458
        %2115 = vmatpush1.msra.mxu0 %v1457
        %2116 = vmatprep.subr.mxu0 %v1477
        %2117 = vmatpush1.msra.mxu0 %v1476
        %2118 = vmatprep.subr.mxu0 %v1496
        %2119 = vmatpush1.msra.mxu0 %v1495
        %2120 = vmatprep.subr.mxu0 %v1515
        %2121 = vmatpush1.msra.mxu0 %v1514
        %2122 = vmatprep.subr.mxu0 %v1534
        %2123 = vmatpush1.msra.mxu0 %v1533
        %2124 = vmatprep.subr.mxu0 %v1553
        %2125 = vmatpush1.msra.mxu0 %v1552
        %2126 = vmatprep.mubr.f32.mxu0 %v348
        %2127 = vmatmul.mubr.f32.gmra.mrb[0].mxu0 %v347
        %v2128 = vpop.f32.mrb[0].mxu0
        %v2129 = vadd.f32 %v2058, %v2128
        %v2130 = vpop.f32.mrb[0].mxu0
        %v2131 = vadd.f32 %v2060, %v2130
        %2132 = vdwg.mxu0
        %2133 = vmatprep.subr.mxu0 %v358
        %2134 = vmatpush1.msra.mxu0 %v357
        %2135 = vmatprep.subr.mxu0 %v377
        %2136 = vmatpush1.msra.mxu0 %v376
        %2137 = vmatprep.subr.mxu0 %v396
        %2138 = vmatpush1.msra.mxu0 %v395
        %2139 = vmatprep.subr.mxu0 %v415
        %2140 = vmatpush1.msra.mxu0 %v414
        %2141 = vmatprep.subr.mxu0 %v434
        %2142 = vmatpush1.msra.mxu0 %v433
        %2143 = vmatprep.subr.mxu0 %v453
        %2144 = vmatpush1.msra.mxu0 %v452
        %2145 = vmatprep.subr.mxu0 %v472
        %2146 = vmatpush1.msra.mxu0 %v471
        %2147 = vmatprep.subr.mxu0 %v491
        %2148 = vmatpush1.msra.mxu0 %v490
        %2149 = vmatprep.subr.mxu0 %v510
        %2150 = vmatpush1.msra.mxu0 %v509
        %2151 = vmatprep.subr.mxu0 %v529
        %2152 = vmatpush1.msra.mxu0 %v528
        %2153 = vmatprep.subr.mxu0 %v548
        %2154 = vmatpush1.msra.mxu0 %v547
        %2155 = vmatprep.subr.mxu0 %v567
        %2156 = vmatpush1.msra.mxu0 %v566
        %2157 = vmatprep.subr.mxu0 %v586
        %2158 = vmatpush1.msra.mxu0 %v585
        %2159 = vmatprep.subr.mxu0 %v605
        %2160 = vmatpush1.msra.mxu0 %v604
        %2161 = vmatprep.subr.mxu0 %v624
        %2162 = vmatpush1.msra.mxu0 %v623
        %2163 = vmatprep.subr.mxu0 %v643
        %2164 = vmatpush1.msra.mxu0 %v642
        %2165 = vmatprep.subr.mxu0 %v662
        %2166 = vmatpush1.msra.mxu0 %v661
        %2167 = vmatprep.subr.mxu0 %v681
        %2168 = vmatpush1.msra.mxu0 %v680
        %2169 = vmatprep.subr.mxu0 %v700
        %2170 = vmatpush1.msra.mxu0 %v699
        %2171 = vmatprep.subr.mxu0 %v719
        %2172 = vmatpush1.msra.mxu0 %v718
        %2173 = vmatprep.subr.mxu0 %v738
        %2174 = vmatpush1.msra.mxu0 %v737
        %2175 = vmatprep.subr.mxu0 %v757
        %2176 = vmatpush1.msra.mxu0 %v756
        %2177 = vmatprep.subr.mxu0 %v776
        %2178 = vmatpush1.msra.mxu0 %v775
        %2179 = vmatprep.subr.mxu0 %v795
        %2180 = vmatpush1.msra.mxu0 %v794
        %2181 = vmatprep.subr.mxu0 %v814
        %2182 = vmatpush1.msra.mxu0 %v813
        %2183 = vmatprep.subr.mxu0 %v833
        %2184 = vmatpush1.msra.mxu0 %v832
        %2185 = vmatprep.subr.mxu0 %v852
        %2186 = vmatpush1.msra.mxu0 %v851
        %2187 = vmatprep.subr.mxu0 %v871
        %2188 = vmatpush1.msra.mxu0 %v870
        %2189 = vmatprep.subr.mxu0 %v890
        %2190 = vmatpush1.msra.mxu0 %v889
        %2191 = vmatprep.subr.mxu0 %v909
        %2192 = vmatpush1.msra.mxu0 %v908
        %2193 = vmatprep.subr.mxu0 %v928
        %2194 = vmatpush1.msra.mxu0 %v927
        %2195 = vmatprep.subr.mxu0 %v947
        %2196 = vmatpush1.msra.mxu0 %v946
        %2197 = vmatprep.mubr.f32.mxu0 %v346
        %2198 = vmatmul.mubr.f32.gmra.mrb[0].mxu0 %v345
        %v2199 = vpop.f32.mrb[0].mxu0
        %v2200 = vadd.f32 0.0, %v2199
        %v2201 = vpop.f32.mrb[0].mxu0
        %v2202 = vadd.f32 0.0, %v2201
        %2203 = vdwg.mxu0
        %2204 = vmatprep.subr.mxu0 %v966
        %2205 = vmatpush1.msra.mxu0 %v965
        %2206 = vmatprep.subr.mxu0 %v985
        %2207 = vmatpush1.msra.mxu0 %v984
        %2208 = vmatprep.subr.mxu0 %v1004
        %2209 = vmatpush1.msra.mxu0 %v1003
        %2210 = vmatprep.subr.mxu0 %v1023
        %2211 = vmatpush1.msra.mxu0 %v1022
        %2212 = vmatprep.subr.mxu0 %v1042
        %2213 = vmatpush1.msra.mxu0 %v1041
        %2214 = vmatprep.subr.mxu0 %v1061
        %2215 = vmatpush1.msra.mxu0 %v1060
        %2216 = vmatprep.subr.mxu0 %v1080
        %2217 = vmatpush1.msra.mxu0 %v1079
        %2218 = vmatprep.subr.mxu0 %v1099
        %2219 = vmatpush1.msra.mxu0 %v1098
        %2220 = vmatprep.subr.mxu0 %v1118
        %2221 = vmatpush1.msra.mxu0 %v1117
        %2222 = vmatprep.subr.mxu0 %v1137
        %2223 = vmatpush1.msra.mxu0 %v1136
        %2224 = vmatprep.subr.mxu0 %v1156
        %2225 = vmatpush1.msra.mxu0 %v1155
        %2226 = vmatprep.subr.mxu0 %v1175
        %2227 = vmatpush1.msra.mxu0 %v1174
        %2228 = vmatprep.subr.mxu0 %v1194
        %2229 = vmatpush1.msra.mxu0 %v1193
        %2230 = vmatprep.subr.mxu0 %v1213
        %2231 = vmatpush1.msra.mxu0 %v1212
        %2232 = vmatprep.subr.mxu0 %v1232
        %2233 = vmatpush1.msra.mxu0 %v1231
        %2234 = vmatprep.subr.mxu0 %v1251
        %2235 = vmatpush1.msra.mxu0 %v1250
        %2236 = vmatprep.subr.mxu0 %v1270
        %2237 = vmatpush1.msra.mxu0 %v1269
        %2238 = vmatprep.subr.mxu0 %v1289
        %2239 = vmatpush1.msra.mxu0 %v1288
        %2240 = vmatprep.subr.mxu0 %v1308
        %2241 = vmatpush1.msra.mxu0 %v1307
        %2242 = vmatprep.subr.mxu0 %v1327
        %2243 = vmatpush1.msra.mxu0 %v1326
        %2244 = vmatprep.subr.mxu0 %v1346
        %2245 = vmatpush1.msra.mxu0 %v1345
        %2246 = vmatprep.subr.mxu0 %v1365
        %2247 = vmatpush1.msra.mxu0 %v1364
        %2248 = vmatprep.subr.mxu0 %v1384
        %2249 = vmatpush1.msra.mxu0 %v1383
        %2250 = vmatprep.subr.mxu0 %v1403
        %2251 = vmatpush1.msra.mxu0 %v1402
        %2252 = vmatprep.subr.mxu0 %v1422
        %2253 = vmatpush1.msra.mxu0 %v1421
        %2254 = vmatprep.subr.mxu0 %v1441
        %2255 = vmatpush1.msra.mxu0 %v1440
        %2256 = vmatprep.subr.mxu0 %v1460
        %2257 = vmatpush1.msra.mxu0 %v1459
        %2258 = vmatprep.subr.mxu0 %v1479
        %2259 = vmatpush1.msra.mxu0 %v1478
        %2260 = vmatprep.subr.mxu0 %v1498
        %2261 = vmatpush1.msra.mxu0 %v1497
        %2262 = vmatprep.subr.mxu0 %v1517
        %2263 = vmatpush1.msra.mxu0 %v1516
        %2264 = vmatprep.subr.mxu0 %v1536
        %2265 = vmatpush1.msra.mxu0 %v1535
        %2266 = vmatprep.subr.mxu0 %v1555
        %2267 = vmatpush1.msra.mxu0 %v1554
        %2268 = vmatprep.mubr.f32.mxu0 %v348
        %2269 = vmatmul.mubr.f32.gmra.mrb[0].mxu0 %v347
        %v2270 = vpop.f32.mrb[0].mxu0
        %v2271 = vadd.f32 %v2200, %v2270
        %v2272 = vpop.f32.mrb[0].mxu0
        %v2273 = vadd.f32 %v2202, %v2272
        %2274 = vdwg.mxu0
        %2275 = vmatprep.subr.mxu0 %v360
        %2276 = vmatpush1.msra.mxu0 %v359
        %2277 = vmatprep.subr.mxu0 %v379
        %2278 = vmatpush1.msra.mxu0 %v378
        %2279 = vmatprep.subr.mxu0 %v398
        %2280 = vmatpush1.msra.mxu0 %v397
        %2281 = vmatprep.subr.mxu0 %v417
        %2282 = vmatpush1.msra.mxu0 %v416
        %2283 = vmatprep.subr.mxu0 %v436
        %2284 = vmatpush1.msra.mxu0 %v435
        %2285 = vmatprep.subr.mxu0 %v455
        %2286 = vmatpush1.msra.mxu0 %v454
        %2287 = vmatprep.subr.mxu0 %v474
        %2288 = vmatpush1.msra.mxu0 %v473
        %2289 = vmatprep.subr.mxu0 %v493
        %2290 = vmatpush1.msra.mxu0 %v492
        %2291 = vmatprep.subr.mxu0 %v512
        %2292 = vmatpush1.msra.mxu0 %v511
        %2293 = vmatprep.subr.mxu0 %v531
        %2294 = vmatpush1.msra.mxu0 %v530
        %2295 = vmatprep.subr.mxu0 %v550
        %2296 = vmatpush1.msra.mxu0 %v549
        %2297 = vmatprep.subr.mxu0 %v569
        %2298 = vmatpush1.msra.mxu0 %v568
        %2299 = vmatprep.subr.mxu0 %v588
        %2300 = vmatpush1.msra.mxu0 %v587
        %2301 = vmatprep.subr.mxu0 %v607
        %2302 = vmatpush1.msra.mxu0 %v606
        %2303 = vmatprep.subr.mxu0 %v626
        %2304 = vmatpush1.msra.mxu0 %v625
        %2305 = vmatprep.subr.mxu0 %v645
        %2306 = vmatpush1.msra.mxu0 %v644
        %2307 = vmatprep.subr.mxu0 %v664
        %2308 = vmatpush1.msra.mxu0 %v663
        %2309 = vmatprep.subr.mxu0 %v683
        %2310 = vmatpush1.msra.mxu0 %v682
        %2311 = vmatprep.subr.mxu0 %v702
        %2312 = vmatpush1.msra.mxu0 %v701
        %2313 = vmatprep.subr.mxu0 %v721
        %2314 = vmatpush1.msra.mxu0 %v720
        %2315 = vmatprep.subr.mxu0 %v740
        %2316 = vmatpush1.msra.mxu0 %v739
        %2317 = vmatprep.subr.mxu0 %v759
        %2318 = vmatpush1.msra.mxu0 %v758
        %2319 = vmatprep.subr.mxu0 %v778
        %2320 = vmatpush1.msra.mxu0 %v777
        %2321 = vmatprep.subr.mxu0 %v797
        %2322 = vmatpush1.msra.mxu0 %v796
        %2323 = vmatprep.subr.mxu0 %v816
        %2324 = vmatpush1.msra.mxu0 %v815
        %2325 = vmatprep.subr.mxu0 %v835
        %2326 = vmatpush1.msra.mxu0 %v834
        %2327 = vmatprep.subr.mxu0 %v854
        %2328 = vmatpush1.msra.mxu0 %v853
        %2329 = vmatprep.subr.mxu0 %v873
        %2330 = vmatpush1.msra.mxu0 %v872
        %2331 = vmatprep.subr.mxu0 %v892
        %2332 = vmatpush1.msra.mxu0 %v891
        %2333 = vmatprep.subr.mxu0 %v911
        %2334 = vmatpush1.msra.mxu0 %v910
        %2335 = vmatprep.subr.mxu0 %v930
        %2336 = vmatpush1.msra.mxu0 %v929
        %2337 = vmatprep.subr.mxu0 %v949
        %2338 = vmatpush1.msra.mxu0 %v948
        %2339 = vmatprep.mubr.f32.mxu0 %v346
        %2340 = vmatmul.mubr.f32.gmra.mrb[0].mxu0 %v345
        %v2341 = vpop.f32.mrb[0].mxu0
        %v2342 = vadd.f32 0.0, %v2341
        %v2343 = vpop.f32.mrb[0].mxu0
        %v2344 = vadd.f32 0.0, %v2343
        %2345 = vdwg.mxu0
        %2346 = vmatprep.subr.mxu0 %v968
        %2347 = vmatpush1.msra.mxu0 %v967
        %2348 = vmatprep.subr.mxu0 %v987
        %2349 = vmatpush1.msra.mxu0 %v986
        %2350 = vmatprep.subr.mxu0 %v1006
        %2351 = vmatpush1.msra.mxu0 %v1005
        %2352 = vmatprep.subr.mxu0 %v1025
        %2353 = vmatpush1.msra.mxu0 %v1024
        %2354 = vmatprep.subr.mxu0 %v1044
        %2355 = vmatpush1.msra.mxu0 %v1043
        %2356 = vmatprep.subr.mxu0 %v1063
        %2357 = vmatpush1.msra.mxu0 %v1062
        %2358 = vmatprep.subr.mxu0 %v1082
        %2359 = vmatpush1.msra.mxu0 %v1081
        %2360 = vmatprep.subr.mxu0 %v1101
        %2361 = vmatpush1.msra.mxu0 %v1100
        %2362 = vmatprep.subr.mxu0 %v1120
        %2363 = vmatpush1.msra.mxu0 %v1119
        %2364 = vmatprep.subr.mxu0 %v1139
        %2365 = vmatpush1.msra.mxu0 %v1138
        %2366 = vmatprep.subr.mxu0 %v1158
        %2367 = vmatpush1.msra.mxu0 %v1157
        %2368 = vmatprep.subr.mxu0 %v1177
        %2369 = vmatpush1.msra.mxu0 %v1176
        %2370 = vmatprep.subr.mxu0 %v1196
        %2371 = vmatpush1.msra.mxu0 %v1195
        %2372 = vmatprep.subr.mxu0 %v1215
        %2373 = vmatpush1.msra.mxu0 %v1214
        %2374 = vmatprep.subr.mxu0 %v1234
        %2375 = vmatpush1.msra.mxu0 %v1233
        %2376 = vmatprep.subr.mxu0 %v1253
        %2377 = vmatpush1.msra.mxu0 %v1252
        %2378 = vmatprep.subr.mxu0 %v1272
        %2379 = vmatpush1.msra.mxu0 %v1271
        %2380 = vmatprep.subr.mxu0 %v1291
        %2381 = vmatpush1.msra.mxu0 %v1290
        %2382 = vmatprep.subr.mxu0 %v1310
        %2383 = vmatpush1.msra.mxu0 %v1309
        %2384 = vmatprep.subr.mxu0 %v1329
        %2385 = vmatpush1.msra.mxu0 %v1328
        %2386 = vmatprep.subr.mxu0 %v1348
        %2387 = vmatpush1.msra.mxu0 %v1347
        %2388 = vmatprep.subr.mxu0 %v1367
        %2389 = vmatpush1.msra.mxu0 %v1366
        %2390 = vmatprep.subr.mxu0 %v1386
        %2391 = vmatpush1.msra.mxu0 %v1385
        %2392 = vmatprep.subr.mxu0 %v1405
        %2393 = vmatpush1.msra.mxu0 %v1404
        %2394 = vmatprep.subr.mxu0 %v1424
        %2395 = vmatpush1.msra.mxu0 %v1423
        %2396 = vmatprep.subr.mxu0 %v1443
        %2397 = vmatpush1.msra.mxu0 %v1442
        %2398 = vmatprep.subr.mxu0 %v1462
        %2399 = vmatpush1.msra.mxu0 %v1461
        %2400 = vmatprep.subr.mxu0 %v1481
        %2401 = vmatpush1.msra.mxu0 %v1480
        %2402 = vmatprep.subr.mxu0 %v1500
        %2403 = vmatpush1.msra.mxu0 %v1499
        %2404 = vmatprep.subr.mxu0 %v1519
        %2405 = vmatpush1.msra.mxu0 %v1518
        %2406 = vmatprep.subr.mxu0 %v1538
        %2407 = vmatpush1.msra.mxu0 %v1537
        %2408 = vmatprep.subr.mxu0 %v1557
        %2409 = vmatpush1.msra.mxu0 %v1556
        %2410 = vmatprep.mubr.f32.mxu0 %v348
        %2411 = vmatmul.mubr.f32.gmra.mrb[0].mxu0 %v347
        %v2412 = vpop.f32.mrb[0].mxu0
        %v2413 = vadd.f32 %v2342, %v2412
        %v2414 = vpop.f32.mrb[0].mxu0
        %v2415 = vadd.f32 %v2344, %v2414
        %2416 = vdwg.mxu0
        %2417 = vmatprep.subr.mxu0 %v362
        %2418 = vmatpush1.msra.mxu0 %v361
        %2419 = vmatprep.subr.mxu0 %v381
        %2420 = vmatpush1.msra.mxu0 %v380
        %2421 = vmatprep.subr.mxu0 %v400
        %2422 = vmatpush1.msra.mxu0 %v399
        %2423 = vmatprep.subr.mxu0 %v419
        %2424 = vmatpush1.msra.mxu0 %v418
        %2425 = vmatprep.subr.mxu0 %v438
        %2426 = vmatpush1.msra.mxu0 %v437
        %2427 = vmatprep.subr.mxu0 %v457
        %2428 = vmatpush1.msra.mxu0 %v456
        %2429 = vmatprep.subr.mxu0 %v476
        %2430 = vmatpush1.msra.mxu0 %v475
        %2431 = vmatprep.subr.mxu0 %v495
        %2432 = vmatpush1.msra.mxu0 %v494
        %2433 = vmatprep.subr.mxu0 %v514
        %2434 = vmatpush1.msra.mxu0 %v513
        %2435 = vmatprep.subr.mxu0 %v533
        %2436 = vmatpush1.msra.mxu0 %v532
        %2437 = vmatprep.subr.mxu0 %v552
        %2438 = vmatpush1.msra.mxu0 %v551
        %2439 = vmatprep.subr.mxu0 %v571
        %2440 = vmatpush1.msra.mxu0 %v570
        %2441 = vmatprep.subr.mxu0 %v590
        %2442 = vmatpush1.msra.mxu0 %v589
        %2443 = vmatprep.subr.mxu0 %v609
        %2444 = vmatpush1.msra.mxu0 %v608
        %2445 = vmatprep.subr.mxu0 %v628
        %2446 = vmatpush1.msra.mxu0 %v627
        %2447 = vmatprep.subr.mxu0 %v647
        %2448 = vmatpush1.msra.mxu0 %v646
        %2449 = vmatprep.subr.mxu0 %v666
        %2450 = vmatpush1.msra.mxu0 %v665
        %2451 = vmatprep.subr.mxu0 %v685
        %2452 = vmatpush1.msra.mxu0 %v684
        %2453 = vmatprep.subr.mxu0 %v704
        %2454 = vmatpush1.msra.mxu0 %v703
        %2455 = vmatprep.subr.mxu0 %v723
        %2456 = vmatpush1.msra.mxu0 %v722
        %2457 = vmatprep.subr.mxu0 %v742
        %2458 = vmatpush1.msra.mxu0 %v741
        %2459 = vmatprep.subr.mxu0 %v761
        %2460 = vmatpush1.msra.mxu0 %v760
        %2461 = vmatprep.subr.mxu0 %v780
        %2462 = vmatpush1.msra.mxu0 %v779
        %2463 = vmatprep.subr.mxu0 %v799
        %2464 = vmatpush1.msra.mxu0 %v798
        %2465 = vmatprep.subr.mxu0 %v818
        %2466 = vmatpush1.msra.mxu0 %v817
        %2467 = vmatprep.subr.mxu0 %v837
        %2468 = vmatpush1.msra.mxu0 %v836
        %2469 = vmatprep.subr.mxu0 %v856
        %2470 = vmatpush1.msra.mxu0 %v855
        %2471 = vmatprep.subr.mxu0 %v875
        %2472 = vmatpush1.msra.mxu0 %v874
        %2473 = vmatprep.subr.mxu0 %v894
        %2474 = vmatpush1.msra.mxu0 %v893
        %2475 = vmatprep.subr.mxu0 %v913
        %2476 = vmatpush1.msra.mxu0 %v912
        %2477 = vmatprep.subr.mxu0 %v932
        %2478 = vmatpush1.msra.mxu0 %v931
        %2479 = vmatprep.subr.mxu0 %v951
        %2480 = vmatpush1.msra.mxu0 %v950
        %2481 = vmatprep.mubr.f32.mxu0 %v346
        %2482 = vmatmul.mubr.f32.gmra.mrb[0].mxu0 %v345
        %v2483 = vpop.f32.mrb[0].mxu0
        %v2484 = vadd.f32 0.0, %v2483
        %v2485 = vpop.f32.mrb[0].mxu0
        %v2486 = vadd.f32 0.0, %v2485
        %2487 = vdwg.mxu0
        %2488 = vmatprep.subr.mxu0 %v970
        %2489 = vmatpush1.msra.mxu0 %v969
        %2490 = vmatprep.subr.mxu0 %v989
        %2491 = vmatpush1.msra.mxu0 %v988
        %2492 = vmatprep.subr.mxu0 %v1008
        %2493 = vmatpush1.msra.mxu0 %v1007
        %2494 = vmatprep.subr.mxu0 %v1027
        %2495 = vmatpush1.msra.mxu0 %v1026
        %2496 = vmatprep.subr.mxu0 %v1046
        %2497 = vmatpush1.msra.mxu0 %v1045
        %2498 = vmatprep.subr.mxu0 %v1065
        %2499 = vmatpush1.msra.mxu0 %v1064
        %2500 = vmatprep.subr.mxu0 %v1084
        %2501 = vmatpush1.msra.mxu0 %v1083
        %2502 = vmatprep.subr.mxu0 %v1103
        %2503 = vmatpush1.msra.mxu0 %v1102
        %2504 = vmatprep.subr.mxu0 %v1122
        %2505 = vmatpush1.msra.mxu0 %v1121
        %2506 = vmatprep.subr.mxu0 %v1141
        %2507 = vmatpush1.msra.mxu0 %v1140
        %2508 = vmatprep.subr.mxu0 %v1160
        %2509 = vmatpush1.msra.mxu0 %v1159
        %2510 = vmatprep.subr.mxu0 %v1179
        %2511 = vmatpush1.msra.mxu0 %v1178
        %2512 = vmatprep.subr.mxu0 %v1198
        %2513 = vmatpush1.msra.mxu0 %v1197
        %2514 = vmatprep.subr.mxu0 %v1217
        %2515 = vmatpush1.msra.mxu0 %v1216
        %2516 = vmatprep.subr.mxu0 %v1236
        %2517 = vmatpush1.msra.mxu0 %v1235
        %2518 = vmatprep.subr.mxu0 %v1255
        %2519 = vmatpush1.msra.mxu0 %v1254
        %2520 = vmatprep.subr.mxu0 %v1274
        %2521 = vmatpush1.msra.mxu0 %v1273
        %2522 = vmatprep.subr.mxu0 %v1293
        %2523 = vmatpush1.msra.mxu0 %v1292
        %2524 = vmatprep.subr.mxu0 %v1312
        %2525 = vmatpush1.msra.mxu0 %v1311
        %2526 = vmatprep.subr.mxu0 %v1331
        %2527 = vmatpush1.msra.mxu0 %v1330
        %2528 = vmatprep.subr.mxu0 %v1350
        %2529 = vmatpush1.msra.mxu0 %v1349
        %2530 = vmatprep.subr.mxu0 %v1369
        %2531 = vmatpush1.msra.mxu0 %v1368
        %2532 = vmatprep.subr.mxu0 %v1388
        %2533 = vmatpush1.msra.mxu0 %v1387
        %2534 = vmatprep.subr.mxu0 %v1407
        %2535 = vmatpush1.msra.mxu0 %v1406
        %2536 = vmatprep.subr.mxu0 %v1426
        %2537 = vmatpush1.msra.mxu0 %v1425
        %2538 = vmatprep.subr.mxu0 %v1445
        %2539 = vmatpush1.msra.mxu0 %v1444
        %2540 = vmatprep.subr.mxu0 %v1464
        %2541 = vmatpush1.msra.mxu0 %v1463
        %2542 = vmatprep.subr.mxu0 %v1483
        %2543 = vmatpush1.msra.mxu0 %v1482
        %2544 = vmatprep.subr.mxu0 %v1502
        %2545 = vmatpush1.msra.mxu0 %v1501
        %2546 = vmatprep.subr.mxu0 %v1521
        %2547 = vmatpush1.msra.mxu0 %v1520
        %2548 = vmatprep.subr.mxu0 %v1540
        %2549 = vmatpush1.msra.mxu0 %v1539
        %2550 = vmatprep.subr.mxu0 %v1559
        %2551 = vmatpush1.msra.mxu0 %v1558
        %2552 = vmatprep.mubr.f32.mxu0 %v348
        %2553 = vmatmul.mubr.f32.gmra.mrb[0].mxu0 %v347
        %v2554 = vpop.f32.mrb[0].mxu0
        %v2555 = vadd.f32 %v2484, %v2554
        %v2556 = vpop.f32.mrb[0].mxu0
        %v2557 = vadd.f32 %v2486, %v2556
        %2558 = vdwg.mxu0
        %2559 = vmatprep.subr.mxu0 %v364
        %2560 = vmatpush1.msra.mxu0 %v363
        %2561 = vmatprep.subr.mxu0 %v383
        %2562 = vmatpush1.msra.mxu0 %v382
        %2563 = vmatprep.subr.mxu0 %v402
        %2564 = vmatpush1.msra.mxu0 %v401
        %2565 = vmatprep.subr.mxu0 %v421
        %2566 = vmatpush1.msra.mxu0 %v420
        %2567 = vmatprep.subr.mxu0 %v440
        %2568 = vmatpush1.msra.mxu0 %v439
        %2569 = vmatprep.subr.mxu0 %v459
        %2570 = vmatpush1.msra.mxu0 %v458
        %2571 = vmatprep.subr.mxu0 %v478
        %2572 = vmatpush1.msra.mxu0 %v477
        %2573 = vmatprep.subr.mxu0 %v497
        %2574 = vmatpush1.msra.mxu0 %v496
        %2575 = vmatprep.subr.mxu0 %v516
        %2576 = vmatpush1.msra.mxu0 %v515
        %2577 = vmatprep.subr.mxu0 %v535
        %2578 = vmatpush1.msra.mxu0 %v534
        %2579 = vmatprep.subr.mxu0 %v554
        %2580 = vmatpush1.msra.mxu0 %v553
        %2581 = vmatprep.subr.mxu0 %v573
        %2582 = vmatpush1.msra.mxu0 %v572
        %2583 = vmatprep.subr.mxu0 %v592
        %2584 = vmatpush1.msra.mxu0 %v591
        %2585 = vmatprep.subr.mxu0 %v611
        %2586 = vmatpush1.msra.mxu0 %v610
        %2587 = vmatprep.subr.mxu0 %v630
        %2588 = vmatpush1.msra.mxu0 %v629
        %2589 = vmatprep.subr.mxu0 %v649
        %2590 = vmatpush1.msra.mxu0 %v648
        %2591 = vmatprep.subr.mxu0 %v668
        %2592 = vmatpush1.msra.mxu0 %v667
        %2593 = vmatprep.subr.mxu0 %v687
        %2594 = vmatpush1.msra.mxu0 %v686
        %2595 = vmatprep.subr.mxu0 %v706
        %2596 = vmatpush1.msra.mxu0 %v705
        %2597 = vmatprep.subr.mxu0 %v725
        %2598 = vmatpush1.msra.mxu0 %v724
        %2599 = vmatprep.subr.mxu0 %v744
        %2600 = vmatpush1.msra.mxu0 %v743
        %2601 = vmatprep.subr.mxu0 %v763
        %2602 = vmatpush1.msra.mxu0 %v762
        %2603 = vmatprep.subr.mxu0 %v782
        %2604 = vmatpush1.msra.mxu0 %v781
        %2605 = vmatprep.subr.mxu0 %v801
        %2606 = vmatpush1.msra.mxu0 %v800
        %2607 = vmatprep.subr.mxu0 %v820
        %2608 = vmatpush1.msra.mxu0 %v819
        %2609 = vmatprep.subr.mxu0 %v839
        %2610 = vmatpush1.msra.mxu0 %v838
        %2611 = vmatprep.subr.mxu0 %v858
        %2612 = vmatpush1.msra.mxu0 %v857
        %2613 = vmatprep.subr.mxu0 %v877
        %2614 = vmatpush1.msra.mxu0 %v876
        %2615 = vmatprep.subr.mxu0 %v896
        %2616 = vmatpush1.msra.mxu0 %v895
        %2617 = vmatprep.subr.mxu0 %v915
        %2618 = vmatpush1.msra.mxu0 %v914
        %2619 = vmatprep.subr.mxu0 %v934
        %2620 = vmatpush1.msra.mxu0 %v933
        %2621 = vmatprep.subr.mxu0 %v953
        %2622 = vmatpush1.msra.mxu0 %v952
        %2623 = vmatprep.mubr.f32.mxu0 %v346
        %2624 = vmatmul.mubr.f32.gmra.mrb[0].mxu0 %v345
        %v2625 = vpop.f32.mrb[0].mxu0
        %v2626 = vadd.f32 0.0, %v2625
        %v2627 = vpop.f32.mrb[0].mxu0
        %v2628 = vadd.f32 0.0, %v2627
        %2629 = vdwg.mxu0
        %2630 = vmatprep.subr.mxu0 %v972
        %2631 = vmatpush1.msra.mxu0 %v971
        %2632 = vmatprep.subr.mxu0 %v991
        %2633 = vmatpush1.msra.mxu0 %v990
        %2634 = vmatprep.subr.mxu0 %v1010
        %2635 = vmatpush1.msra.mxu0 %v1009
        %2636 = vmatprep.subr.mxu0 %v1029
        %2637 = vmatpush1.msra.mxu0 %v1028
        %2638 = vmatprep.subr.mxu0 %v1048
        %2639 = vmatpush1.msra.mxu0 %v1047
        %2640 = vmatprep.subr.mxu0 %v1067
        %2641 = vmatpush1.msra.mxu0 %v1066
        %2642 = vmatprep.subr.mxu0 %v1086
        %2643 = vmatpush1.msra.mxu0 %v1085
        %2644 = vmatprep.subr.mxu0 %v1105
        %2645 = vmatpush1.msra.mxu0 %v1104
        %2646 = vmatprep.subr.mxu0 %v1124
        %2647 = vmatpush1.msra.mxu0 %v1123
        %2648 = vmatprep.subr.mxu0 %v1143
        %2649 = vmatpush1.msra.mxu0 %v1142
        %2650 = vmatprep.subr.mxu0 %v1162
        %2651 = vmatpush1.msra.mxu0 %v1161
        %2652 = vmatprep.subr.mxu0 %v1181
        %2653 = vmatpush1.msra.mxu0 %v1180
        %2654 = vmatprep.subr.mxu0 %v1200
        %2655 = vmatpush1.msra.mxu0 %v1199
        %2656 = vmatprep.subr.mxu0 %v1219
        %2657 = vmatpush1.msra.mxu0 %v1218
        %2658 = vmatprep.subr.mxu0 %v1238
        %2659 = vmatpush1.msra.mxu0 %v1237
        %2660 = vmatprep.subr.mxu0 %v1257
        %2661 = vmatpush1.msra.mxu0 %v1256
        %2662 = vmatprep.subr.mxu0 %v1276
        %2663 = vmatpush1.msra.mxu0 %v1275
        %2664 = vmatprep.subr.mxu0 %v1295
        %2665 = vmatpush1.msra.mxu0 %v1294
        %2666 = vmatprep.subr.mxu0 %v1314
        %2667 = vmatpush1.msra.mxu0 %v1313
        %2668 = vmatprep.subr.mxu0 %v1333
        %2669 = vmatpush1.msra.mxu0 %v1332
        %2670 = vmatprep.subr.mxu0 %v1352
        %2671 = vmatpush1.msra.mxu0 %v1351
        %2672 = vmatprep.subr.mxu0 %v1371
        %2673 = vmatpush1.msra.mxu0 %v1370
        %2674 = vmatprep.subr.mxu0 %v1390
        %2675 = vmatpush1.msra.mxu0 %v1389
        %2676 = vmatprep.subr.mxu0 %v1409
        %2677 = vmatpush1.msra.mxu0 %v1408
        %2678 = vmatprep.subr.mxu0 %v1428
        %2679 = vmatpush1.msra.mxu0 %v1427
        %2680 = vmatprep.subr.mxu0 %v1447
        %2681 = vmatpush1.msra.mxu0 %v1446
        %2682 = vmatprep.subr.mxu0 %v1466
        %2683 = vmatpush1.msra.mxu0 %v1465
        %2684 = vmatprep.subr.mxu0 %v1485
        %2685 = vmatpush1.msra.mxu0 %v1484
        %2686 = vmatprep.subr.mxu0 %v1504
        %2687 = vmatpush1.msra.mxu0 %v1503
        %2688 = vmatprep.subr.mxu0 %v1523
        %2689 = vmatpush1.msra.mxu0 %v1522
        %2690 = vmatprep.subr.mxu0 %v1542
        %2691 = vmatpush1.msra.mxu0 %v1541
        %2692 = vmatprep.subr.mxu0 %v1561
        %2693 = vmatpush1.msra.mxu0 %v1560
        %2694 = vmatprep.mubr.f32.mxu0 %v348
        %2695 = vmatmul.mubr.f32.gmra.mrb[0].mxu0 %v347
        %v2696 = vpop.f32.mrb[0].mxu0
        %v2697 = vadd.f32 %v2626, %v2696
        %v2698 = vpop.f32.mrb[0].mxu0
        %v2699 = vadd.f32 %v2628, %v2698
        %2700 = vdwg.mxu0
        %2701 = vmatprep.subr.mxu0 %v366
        %2702 = vmatpush1.msra.mxu0 %v365
        %2703 = vmatprep.subr.mxu0 %v385
        %2704 = vmatpush1.msra.mxu0 %v384
        %2705 = vmatprep.subr.mxu0 %v404
        %2706 = vmatpush1.msra.mxu0 %v403
        %2707 = vmatprep.subr.mxu0 %v423
        %2708 = vmatpush1.msra.mxu0 %v422
        %2709 = vmatprep.subr.mxu0 %v442
        %2710 = vmatpush1.msra.mxu0 %v441
        %2711 = vmatprep.subr.mxu0 %v461
        %2712 = vmatpush1.msra.mxu0 %v460
        %2713 = vmatprep.subr.mxu0 %v480
        %2714 = vmatpush1.msra.mxu0 %v479
        %2715 = vmatprep.subr.mxu0 %v499
        %2716 = vmatpush1.msra.mxu0 %v498
        %2717 = vmatprep.subr.mxu0 %v518
        %2718 = vmatpush1.msra.mxu0 %v517
        %2719 = vmatprep.subr.mxu0 %v537
        %2720 = vmatpush1.msra.mxu0 %v536
        %2721 = vmatprep.subr.mxu0 %v556
        %2722 = vmatpush1.msra.mxu0 %v555
        %2723 = vmatprep.subr.mxu0 %v575
        %2724 = vmatpush1.msra.mxu0 %v574
        %2725 = vmatprep.subr.mxu0 %v594
        %2726 = vmatpush1.msra.mxu0 %v593
        %2727 = vmatprep.subr.mxu0 %v613
        %2728 = vmatpush1.msra.mxu0 %v612
        %2729 = vmatprep.subr.mxu0 %v632
        %2730 = vmatpush1.msra.mxu0 %v631
        %2731 = vmatprep.subr.mxu0 %v651
        %2732 = vmatpush1.msra.mxu0 %v650
        %2733 = vmatprep.subr.mxu0 %v670
        %2734 = vmatpush1.msra.mxu0 %v669
        %2735 = vmatprep.subr.mxu0 %v689
        %2736 = vmatpush1.msra.mxu0 %v688
        %2737 = vmatprep.subr.mxu0 %v708
        %2738 = vmatpush1.msra.mxu0 %v707
        %2739 = vmatprep.subr.mxu0 %v727
        %2740 = vmatpush1.msra.mxu0 %v726
        %2741 = vmatprep.subr.mxu0 %v746
        %2742 = vmatpush1.msra.mxu0 %v745
        %2743 = vmatprep.subr.mxu0 %v765
        %2744 = vmatpush1.msra.mxu0 %v764
        %2745 = vmatprep.subr.mxu0 %v784
        %2746 = vmatpush1.msra.mxu0 %v783
        %2747 = vmatprep.subr.mxu0 %v803
        %2748 = vmatpush1.msra.mxu0 %v802
        %2749 = vmatprep.subr.mxu0 %v822
        %2750 = vmatpush1.msra.mxu0 %v821
        %2751 = vmatprep.subr.mxu0 %v841
        %2752 = vmatpush1.msra.mxu0 %v840
        %2753 = vmatprep.subr.mxu0 %v860
        %2754 = vmatpush1.msra.mxu0 %v859
        %2755 = vmatprep.subr.mxu0 %v879
        %2756 = vmatpush1.msra.mxu0 %v878
        %2757 = vmatprep.subr.mxu0 %v898
        %2758 = vmatpush1.msra.mxu0 %v897
        %2759 = vmatprep.subr.mxu0 %v917
        %2760 = vmatpush1.msra.mxu0 %v916
        %2761 = vmatprep.subr.mxu0 %v936
        %2762 = vmatpush1.msra.mxu0 %v935
        %2763 = vmatprep.subr.mxu0 %v955
        %2764 = vmatpush1.msra.mxu0 %v954
        %2765 = vmatprep.mubr.f32.mxu0 %v346
        %2766 = vmatmul.mubr.f32.gmra.mrb[0].mxu0 %v345
        %v2767 = vpop.f32.mrb[0].mxu0
        %v2768 = vadd.f32 0.0, %v2767
        %v2769 = vpop.f32.mrb[0].mxu0
        %v2770 = vadd.f32 0.0, %v2769
        %2771 = vdwg.mxu0
        %2772 = vmatprep.subr.mxu0 %v974
        %2773 = vmatpush1.msra.mxu0 %v973
        %2774 = vmatprep.subr.mxu0 %v993
        %2775 = vmatpush1.msra.mxu0 %v992
        %2776 = vmatprep.subr.mxu0 %v1012
        %2777 = vmatpush1.msra.mxu0 %v1011
        %2778 = vmatprep.subr.mxu0 %v1031
        %2779 = vmatpush1.msra.mxu0 %v1030
        %2780 = vmatprep.subr.mxu0 %v1050
        %2781 = vmatpush1.msra.mxu0 %v1049
        %2782 = vmatprep.subr.mxu0 %v1069
        %2783 = vmatpush1.msra.mxu0 %v1068
        %2784 = vmatprep.subr.mxu0 %v1088
        %2785 = vmatpush1.msra.mxu0 %v1087
        %2786 = vmatprep.subr.mxu0 %v1107
        %2787 = vmatpush1.msra.mxu0 %v1106
        %2788 = vmatprep.subr.mxu0 %v1126
        %2789 = vmatpush1.msra.mxu0 %v1125
        %2790 = vmatprep.subr.mxu0 %v1145
        %2791 = vmatpush1.msra.mxu0 %v1144
        %2792 = vmatprep.subr.mxu0 %v1164
        %2793 = vmatpush1.msra.mxu0 %v1163
        %2794 = vmatprep.subr.mxu0 %v1183
        %2795 = vmatpush1.msra.mxu0 %v1182
        %2796 = vmatprep.subr.mxu0 %v1202
        %2797 = vmatpush1.msra.mxu0 %v1201
        %2798 = vmatprep.subr.mxu0 %v1221
        %2799 = vmatpush1.msra.mxu0 %v1220
        %2800 = vmatprep.subr.mxu0 %v1240
        %2801 = vmatpush1.msra.mxu0 %v1239
        %2802 = vmatprep.subr.mxu0 %v1259
        %2803 = vmatpush1.msra.mxu0 %v1258
        %2804 = vmatprep.subr.mxu0 %v1278
        %2805 = vmatpush1.msra.mxu0 %v1277
        %2806 = vmatprep.subr.mxu0 %v1297
        %2807 = vmatpush1.msra.mxu0 %v1296
        %2808 = vmatprep.subr.mxu0 %v1316
        %2809 = vmatpush1.msra.mxu0 %v1315
        %2810 = vmatprep.subr.mxu0 %v1335
        %2811 = vmatpush1.msra.mxu0 %v1334
        %2812 = vmatprep.subr.mxu0 %v1354
        %2813 = vmatpush1.msra.mxu0 %v1353
        %2814 = vmatprep.subr.mxu0 %v1373
        %2815 = vmatpush1.msra.mxu0 %v1372
        %2816 = vmatprep.subr.mxu0 %v1392
        %2817 = vmatpush1.msra.mxu0 %v1391
        %2818 = vmatprep.subr.mxu0 %v1411
        %2819 = vmatpush1.msra.mxu0 %v1410
        %2820 = vmatprep.subr.mxu0 %v1430
        %2821 = vmatpush1.msra.mxu0 %v1429
        %2822 = vmatprep.subr.mxu0 %v1449
        %2823 = vmatpush1.msra.mxu0 %v1448
        %2824 = vmatprep.subr.mxu0 %v1468
        %2825 = vmatpush1.msra.mxu0 %v1467
        %2826 = vmatprep.subr.mxu0 %v1487
        %2827 = vmatpush1.msra.mxu0 %v1486
        %2828 = vmatprep.subr.mxu0 %v1506
        %2829 = vmatpush1.msra.mxu0 %v1505
        %2830 = vmatprep.subr.mxu0 %v1525
        %2831 = vmatpush1.msra.mxu0 %v1524
        %2832 = vmatprep.subr.mxu0 %v1544
        %2833 = vmatpush1.msra.mxu0 %v1543
        %2834 = vmatprep.subr.mxu0 %v1563
        %2835 = vmatpush1.msra.mxu0 %v1562
        %2836 = vmatprep.mubr.f32.mxu0 %v348
        %2837 = vmatmul.mubr.f32.gmra.mrb[0].mxu0 %v347
        %v2838 = vpop.f32.mrb[0].mxu0
        %v2839 = vadd.f32 %v2768, %v2838
        %v2840 = vpop.f32.mrb[0].mxu0
        %v2841 = vadd.f32 %v2770, %v2840
        %2842 = vdwg.mxu0
        %2843 = vmatprep.subr.mxu0 0.0
        %2844 = vmatpush1.msra.mxu0 %v367
        %2845 = vmatprep.subr.mxu0 0.0
        %2846 = vmatpush1.msra.mxu0 %v386
        %2847 = vmatprep.subr.mxu0 0.0
        %2848 = vmatpush1.msra.mxu0 %v405
        %2849 = vmatprep.subr.mxu0 0.0
        %2850 = vmatpush1.msra.mxu0 %v424
        %2851 = vmatprep.subr.mxu0 0.0
        %2852 = vmatpush1.msra.mxu0 %v443
        %2853 = vmatprep.subr.mxu0 0.0
        %2854 = vmatpush1.msra.mxu0 %v462
        %2855 = vmatprep.subr.mxu0 0.0
        %2856 = vmatpush1.msra.mxu0 %v481
        %2857 = vmatprep.subr.mxu0 0.0
        %2858 = vmatpush1.msra.mxu0 %v500
        %2859 = vmatprep.subr.mxu0 0.0
        %2860 = vmatpush1.msra.mxu0 %v519
        %2861 = vmatprep.subr.mxu0 0.0
        %2862 = vmatpush1.msra.mxu0 %v538
        %2863 = vmatprep.subr.mxu0 0.0
        %2864 = vmatpush1.msra.mxu0 %v557
        %2865 = vmatprep.subr.mxu0 0.0
        %2866 = vmatpush1.msra.mxu0 %v576
        %2867 = vmatprep.subr.mxu0 0.0
        %2868 = vmatpush1.msra.mxu0 %v595
        %2869 = vmatprep.subr.mxu0 0.0
        %2870 = vmatpush1.msra.mxu0 %v614
        %2871 = vmatprep.subr.mxu0 0.0
        %2872 = vmatpush1.msra.mxu0 %v633
        %2873 = vmatprep.subr.mxu0 0.0
        %2874 = vmatpush1.msra.mxu0 %v652
        %2875 = vmatprep.subr.mxu0 0.0
        %2876 = vmatpush1.msra.mxu0 %v671
        %2877 = vmatprep.subr.mxu0 0.0
        %2878 = vmatpush1.msra.mxu0 %v690
        %2879 = vmatprep.subr.mxu0 0.0
        %2880 = vmatpush1.msra.mxu0 %v709
        %2881 = vmatprep.subr.mxu0 0.0
        %2882 = vmatpush1.msra.mxu0 %v728
        %2883 = vmatprep.subr.mxu0 0.0
        %2884 = vmatpush1.msra.mxu0 %v747
        %2885 = vmatprep.subr.mxu0 0.0
        %2886 = vmatpush1.msra.mxu0 %v766
        %2887 = vmatprep.subr.mxu0 0.0
        %2888 = vmatpush1.msra.mxu0 %v785
        %2889 = vmatprep.subr.mxu0 0.0
        %2890 = vmatpush1.msra.mxu0 %v804
        %2891 = vmatprep.subr.mxu0 0.0
        %2892 = vmatpush1.msra.mxu0 %v823
        %2893 = vmatprep.subr.mxu0 0.0
        %2894 = vmatpush1.msra.mxu0 %v842
        %2895 = vmatprep.subr.mxu0 0.0
        %2896 = vmatpush1.msra.mxu0 %v861
        %2897 = vmatprep.subr.mxu0 0.0
        %2898 = vmatpush1.msra.mxu0 %v880
        %2899 = vmatprep.subr.mxu0 0.0
        %2900 = vmatpush1.msra.mxu0 %v899
        %2901 = vmatprep.subr.mxu0 0.0
        %2902 = vmatpush1.msra.mxu0 %v918
        %2903 = vmatprep.subr.mxu0 0.0
        %2904 = vmatpush1.msra.mxu0 %v937
        %2905 = vmatprep.subr.mxu0 0.0
        %2906 = vmatpush1.msra.mxu0 %v956
        %2907 = vmatprep.mubr.f32.mxu0 %v346
        %2908 = vmatmul.mubr.f32.gmra.mrb[0].mxu0 %v345
        %v2909 = vpop.f32.mrb[0].mxu0
        %v2910 = vadd.f32 0.0, %v2909
        %v2911 = vpop.f32.mrb[0].mxu0
        %2912 = vdwg.mxu0
        %2913 = vmatprep.subr.mxu0 0.0
        %2914 = vmatpush1.msra.mxu0 %v975
        %2915 = vmatprep.subr.mxu0 0.0
        %2916 = vmatpush1.msra.mxu0 %v994
        %2917 = vmatprep.subr.mxu0 0.0
        %2918 = vmatpush1.msra.mxu0 %v1013
        %2919 = vmatprep.subr.mxu0 0.0
        %2920 = vmatpush1.msra.mxu0 %v1032
        %2921 = vmatprep.subr.mxu0 0.0
        %2922 = vmatpush1.msra.mxu0 %v1051
        %2923 = vmatprep.subr.mxu0 0.0
        %2924 = vmatpush1.msra.mxu0 %v1070
        %2925 = vmatprep.subr.mxu0 0.0
        %2926 = vmatpush1.msra.mxu0 %v1089
        %2927 = vmatprep.subr.mxu0 0.0
        %2928 = vmatpush1.msra.mxu0 %v1108
        %2929 = vmatprep.subr.mxu0 0.0
        %2930 = vmatpush1.msra.mxu0 %v1127
        %2931 = vmatprep.subr.mxu0 0.0
        %2932 = vmatpush1.msra.mxu0 %v1146
        %2933 = vmatprep.subr.mxu0 0.0
        %2934 = vmatpush1.msra.mxu0 %v1165
        %2935 = vmatprep.subr.mxu0 0.0
        %2936 = vmatpush1.msra.mxu0 %v1184
        %2937 = vmatprep.subr.mxu0 0.0
        %2938 = vmatpush1.msra.mxu0 %v1203
        %2939 = vmatprep.subr.mxu0 0.0
        %2940 = vmatpush1.msra.mxu0 %v1222
        %2941 = vmatprep.subr.mxu0 0.0
        %2942 = vmatpush1.msra.mxu0 %v1241
        %2943 = vmatprep.subr.mxu0 0.0
        %2944 = vmatpush1.msra.mxu0 %v1260
        %2945 = vmatprep.subr.mxu0 0.0
        %2946 = vmatpush1.msra.mxu0 %v1279
        %2947 = vmatprep.subr.mxu0 0.0
        %2948 = vmatpush1.msra.mxu0 %v1298
        %2949 = vmatprep.subr.mxu0 0.0
        %2950 = vmatpush1.msra.mxu0 %v1317
        %2951 = vmatprep.subr.mxu0 0.0
        %2952 = vmatpush1.msra.mxu0 %v1336
        %2953 = vmatprep.subr.mxu0 0.0
        %2954 = vmatpush1.msra.mxu0 %v1355
        %2955 = vmatprep.subr.mxu0 0.0
        %2956 = vmatpush1.msra.mxu0 %v1374
        %2957 = vmatprep.subr.mxu0 0.0
        %2958 = vmatpush1.msra.mxu0 %v1393
        %2959 = vmatprep.subr.mxu0 0.0
        %2960 = vmatpush1.msra.mxu0 %v1412
        %2961 = vmatprep.subr.mxu0 0.0
        %2962 = vmatpush1.msra.mxu0 %v1431
        %2963 = vmatprep.subr.mxu0 0.0
        %2964 = vmatpush1.msra.mxu0 %v1450
        %2965 = vmatprep.subr.mxu0 0.0
        %2966 = vmatpush1.msra.mxu0 %v1469
        %2967 = vmatprep.subr.mxu0 0.0
        %2968 = vmatpush1.msra.mxu0 %v1488
        %2969 = vmatprep.subr.mxu0 0.0
        %2970 = vmatpush1.msra.mxu0 %v1507
        %2971 = vmatprep.subr.mxu0 0.0
        %2972 = vmatpush1.msra.mxu0 %v1526
        %2973 = vmatprep.subr.mxu0 0.0
        %2974 = vmatpush1.msra.mxu0 %v1545
        %2975 = vmatprep.subr.mxu0 0.0
        %2976 = vmatpush1.msra.mxu0 %v1564
        %2977 = vmatprep.mubr.f32.mxu0 %v348
        %2978 = vmatmul.mubr.f32.gmra.mrb[0].mxu0 %v347
        %v2979 = vpop.f32.mrb[0].mxu0
        %v2980 = vadd.f32 %v2910, %v2979
        %v2981 = vpop.f32.mrb[0].mxu0
        %2982 = vdwg.mxu0
        %v2983 = vadd.f32 %v326, %v1703
        %v2984 = vadd.f32 %v327, %v1705
        %v2985 = vadd.f32 %v328, %v1845
        %v2986 = vadd.f32 %v329, %v1847
        %v2987 = vadd.f32 %v330, %v1987
        %v2988 = vadd.f32 %v331, %v1989
        %v2989 = vadd.f32 %v332, %v2129
        %v2990 = vadd.f32 %v333, %v2131
        %v2991 = vadd.f32 %v334, %v2271
        %v2992 = vadd.f32 %v335, %v2273
        %v2993 = vadd.f32 %v336, %v2413
        %v2994 = vadd.f32 %v337, %v2415
        %v2995 = vadd.f32 %v338, %v2555
        %v2996 = vadd.f32 %v339, %v2557
        %v2997 = vadd.f32 %v340, %v2697
        %v2998 = vadd.f32 %v341, %v2699
        %v2999 = vadd.f32 %v342, %v2839
        %v3000 = vadd.f32 %v343, %v2841
        %v3001 = vadd.f32 %v344, %v2980
        %3002 = vst [vmem:[%s301] sm:$0xff] %v2983
        %3003 = vst [vmem:[%s301 + $0x8] sm:$0xff] %v2984
        %3004 = vst [vmem:[%s301 + $0x10] sm:$0xff] %v2985
        %3005 = vst [vmem:[%s301 + $0x18] sm:$0xff] %v2986
        %3006 = vst [vmem:[%s301 + $0x20] sm:$0xff] %v2987
        %3007 = vst [vmem:[%s301 + $0x28] sm:$0xff] %v2988
        %3008 = vst [vmem:[%s301 + $0x30] sm:$0xff] %v2989
        %3009 = vst [vmem:[%s301 + $0x38] sm:$0xff] %v2990
        %3010 = vst [vmem:[%s301 + $0x40] sm:$0xff] %v2991
        %3011 = vst [vmem:[%s301 + $0x48] sm:$0xff] %v2992
        %3012 = vst [vmem:[%s301 + $0x50] sm:$0xff] %v2993
        %3013 = vst [vmem:[%s301 + $0x58] sm:$0xff] %v2994
        %3014 = vst [vmem:[%s301 + $0x60] sm:$0xff] %v2995
        %3015 = vst [vmem:[%s301 + $0x68] sm:$0xff] %v2996
        %3016 = vst [vmem:[%s301 + $0x70] sm:$0xff] %v2997
        %3017 = vst [vmem:[%s301 + $0x78] sm:$0xff] %v2998
        %3018 = vst [vmem:[%s301 + $0x80] sm:$0xff] %v2999
        %3019 = vst [vmem:[%s301 + $0x88] sm:$0xff] %v3000
        %3020 = vst [vmem:[%s301 + $0x90] sm:$0xff] %v3001
        %p3021 = scmp.eq.s32.totalorder %s27, 18
        // Predicated region
        $region45: #{mlp_forward.3} parent=31 // pred_check
          %p3022 = pneg %p3021
        $region46: #{mlp_forward.3} parent=31 // pred_check_branch
          %3024 = sbr.rel (%p3022) target = $region48
        $region47: #{mlp_forward.3} parent=31 // pred_region
          %v3025 = vld [vmem:[%s301] sm:$0xff]
          %v3026 = vld [vmem:[%s301 + $0x8] sm:$0xff]
          %v3027 = vld [vmem:[%s301 + $0x10] sm:$0xff]
          %v3028 = vld [vmem:[%s301 + $0x18] sm:$0xff]
          %v3029 = vld [vmem:[%s301 + $0x20] sm:$0xff]
          %v3030 = vld [vmem:[%s301 + $0x28] sm:$0xff]
          %v3031 = vld [vmem:[%s301 + $0x30] sm:$0xff]
          %v3032 = vld [vmem:[%s301 + $0x38] sm:$0xff]
          %v3033 = vld [vmem:[%s301 + $0x40] sm:$0xff]
          %v3034 = vld [vmem:[%s301 + $0x48] sm:$0xff]
          %v3035 = vld [vmem:[%s301 + $0x50] sm:$0xff]
          %v3036 = vld [vmem:[%s301 + $0x58] sm:$0xff]
          %v3037 = vld [vmem:[%s301 + $0x60] sm:$0xff]
          %v3038 = vld [vmem:[%s301 + $0x68] sm:$0xff]
          %v3039 = vld [vmem:[%s301 + $0x70] sm:$0xff]
          %v3040 = vld [vmem:[%s301 + $0x78] sm:$0xff]
          %v3041 = vld [vmem:[%s301 + $0x80] sm:$0xff]
          %v3042 = vld [vmem:[%s301 + $0x88] sm:$0xff]
          %v3043 = vld [vmem:[%s301 + $0x90] sm:$0xff]
          %v3044 = vld [vmem:[%s239] sm:$0xff]
          %v3045 = vld [vmem:[%s239 + $0x8] sm:$0xff]
          %v3046 = vld [vmem:[%s239 + $0x10] sm:$0x7]
          %v3050 = vlaneseq
          %v3051 = vshrl.u32 %v3050, 7
          %v3052 = vsub.s32 0, %v3051
          %v3053 = vrot.slane %v3044, %v3052
          %v3054 = vlaneseq
          %v3055 = vshrl.u32 %v3054, 7
          %v3056 = vsub.s32 1, %v3055
          %v3057 = vrot.slane %v3044, %v3056
          %v3058 = vlaneseq
          %v3059 = vshrl.u32 %v3058, 7
          %v3060 = vsub.s32 2, %v3059
          %v3061 = vrot.slane %v3044, %v3060
          %v3062 = vlaneseq
          %v3063 = vshrl.u32 %v3062, 7
          %v3064 = vsub.s32 3, %v3063
          %v3065 = vrot.slane %v3044, %v3064
          %v3066 = vlaneseq
          %v3067 = vshrl.u32 %v3066, 7
          %v3068 = vsub.s32 4, %v3067
          %v3069 = vrot.slane %v3044, %v3068
          %v3070 = vlaneseq
          %v3071 = vshrl.u32 %v3070, 7
          %v3072 = vsub.s32 5, %v3071
          %v3073 = vrot.slane %v3044, %v3072
          %v3074 = vlaneseq
          %v3075 = vshrl.u32 %v3074, 7
          %v3076 = vsub.s32 6, %v3075
          %v3077 = vrot.slane %v3044, %v3076
          %v3078 = vlaneseq
          %v3079 = vshrl.u32 %v3078, 7
          %v3080 = vsub.s32 7, %v3079
          %v3081 = vrot.slane %v3044, %v3080
          %v3082 = vlaneseq
          %v3083 = vshrl.u32 %v3082, 7
          %v3084 = vsub.s32 0, %v3083
          %v3085 = vrot.slane %v3045, %v3084
          %v3086 = vlaneseq
          %v3087 = vshrl.u32 %v3086, 7
          %v3088 = vsub.s32 1, %v3087
          %v3089 = vrot.slane %v3045, %v3088
          %v3090 = vlaneseq
          %v3091 = vshrl.u32 %v3090, 7
          %v3092 = vsub.s32 2, %v3091
          %v3093 = vrot.slane %v3045, %v3092
          %v3094 = vlaneseq
          %v3095 = vshrl.u32 %v3094, 7
          %v3096 = vsub.s32 3, %v3095
          %v3097 = vrot.slane %v3045, %v3096
          %v3098 = vlaneseq
          %v3099 = vshrl.u32 %v3098, 7
          %v3100 = vsub.s32 4, %v3099
          %v3101 = vrot.slane %v3045, %v3100
          %v3102 = vlaneseq
          %v3103 = vshrl.u32 %v3102, 7
          %v3104 = vsub.s32 5, %v3103
          %v3105 = vrot.slane %v3045, %v3104
          %v3106 = vlaneseq
          %v3107 = vshrl.u32 %v3106, 7
          %v3108 = vsub.s32 6, %v3107
          %v3109 = vrot.slane %v3045, %v3108
          %v3110 = vlaneseq
          %v3111 = vshrl.u32 %v3110, 7
          %v3112 = vsub.s32 7, %v3111
          %v3113 = vrot.slane %v3045, %v3112
          %v3114 = vlaneseq
          %v3115 = vshrl.u32 %v3114, 7
          %v3116 = vsub.s32 0, %v3115
          %v3117 = vrot.slane %v3046, %v3116
          %v3118 = vlaneseq
          %v3119 = vshrl.u32 %v3118, 7
          %v3120 = vsub.s32 1, %v3119
          %v3121 = vrot.slane %v3046, %v3120
          %v3122 = vlaneseq
          %v3123 = vshrl.u32 %v3122, 7
          %v3124 = vsub.s32 2, %v3123
          %v3125 = vrot.slane %v3046, %v3124
          %v3145 = vadd.f32 %v3025, %v3053
          %v3146 = vadd.f32 %v3026, %v3057
          %v3147 = vadd.f32 %v3027, %v3061
          %v3148 = vadd.f32 %v3028, %v3065
          %v3149 = vadd.f32 %v3029, %v3069
          %v3150 = vadd.f32 %v3030, %v3073
          %v3151 = vadd.f32 %v3031, %v3077
          %v3152 = vadd.f32 %v3032, %v3081
          %v3153 = vadd.f32 %v3033, %v3085
          %v3154 = vadd.f32 %v3034, %v3089
          %v3155 = vadd.f32 %v3035, %v3093
          %v3156 = vadd.f32 %v3036, %v3097
          %v3157 = vadd.f32 %v3037, %v3101
          %v3158 = vadd.f32 %v3038, %v3105
          %v3159 = vadd.f32 %v3039, %v3109
          %v3160 = vadd.f32 %v3040, %v3113
          %v3161 = vadd.f32 %v3041, %v3117
          %v3162 = vadd.f32 %v3042, %v3121
          %v3163 = vadd.f32 %v3043, %v3125
          %v3164 = vmax.f32 %v3145, 0.0
          %v3165 = vmax.f32 %v3146, 0.0
          %v3166 = vmax.f32 %v3147, 0.0
          %v3167 = vmax.f32 %v3148, 0.0
          %v3168 = vmax.f32 %v3149, 0.0
          %v3169 = vmax.f32 %v3150, 0.0
          %v3170 = vmax.f32 %v3151, 0.0
          %v3171 = vmax.f32 %v3152, 0.0
          %v3172 = vmax.f32 %v3153, 0.0
          %v3173 = vmax.f32 %v3154, 0.0
          %v3174 = vmax.f32 %v3155, 0.0
          %v3175 = vmax.f32 %v3156, 0.0
          %v3176 = vmax.f32 %v3157, 0.0
          %v3177 = vmax.f32 %v3158, 0.0
          %v3178 = vmax.f32 %v3159, 0.0
          %v3179 = vmax.f32 %v3160, 0.0
          %v3180 = vmax.f32 %v3161, 0.0
          %v3181 = vmax.f32 %v3162, 0.0
          %v3182 = vmax.f32 %v3163, 0.0
          %3183 = vst [vmem:[%s301] sm:$0xff] %v3164
          %3184 = vst [vmem:[%s301 + $0x8] sm:$0xff] %v3165
          %3185 = vst [vmem:[%s301 + $0x10] sm:$0xff] %v3166
          %3186 = vst [vmem:[%s301 + $0x18] sm:$0xff] %v3167
          %3187 = vst [vmem:[%s301 + $0x20] sm:$0xff] %v3168
          %3188 = vst [vmem:[%s301 + $0x28] sm:$0xff] %v3169
          %3189 = vst [vmem:[%s301 + $0x30] sm:$0xff] %v3170
          %3190 = vst [vmem:[%s301 + $0x38] sm:$0xff] %v3171
          %3191 = vst [vmem:[%s301 + $0x40] sm:$0xff] %v3172
          %3192 = vst [vmem:[%s301 + $0x48] sm:$0xff] %v3173
          %3193 = vst [vmem:[%s301 + $0x50] sm:$0xff] %v3174
          %3194 = vst [vmem:[%s301 + $0x58] sm:$0xff] %v3175
          %3195 = vst [vmem:[%s301 + $0x60] sm:$0xff] %v3176
          %3196 = vst [vmem:[%s301 + $0x68] sm:$0xff] %v3177
          %3197 = vst [vmem:[%s301 + $0x70] sm:$0xff] %v3178
          %3198 = vst [vmem:[%s301 + $0x78] sm:$0xff] %v3179
          %3199 = vst [vmem:[%s301 + $0x80] sm:$0xff] %v3180
          %3200 = vst [vmem:[%s301 + $0x88] sm:$0xff] %v3181
          %3201 = vst [vmem:[%s301 + $0x90] sm:$0xff] %v3182
        $region48: #{mlp_forward.3} parent=31 // pred_fallthru
          _
        %s3202 = smul.u32 19, %s26
        %p3203 = scmp.lt.s32.totalorder %s25, 0
        %s3204 = scalar_select %p3203, %s25, 0
        %p3205 = scmp.lt.s32.totalorder %s3202, 37
        %s3206 = scalar_select %p3205, %s3202, 37
        %s3207 = smul.addr %s3204, 38
        %s3208 = sadd.s32 %s3206, %s3207
        %s3209 = smul.addr %s3208, 8
        %s3210 = scalar_lea.vmem %s3, %s3209
        // Predicated region
        $region49: #{mlp_forward.3} parent=31 // pred_check
          %p3211 = pneg %p141
        $region50: #{mlp_forward.3} parent=31 // pred_check_branch
          %3213 = sbr.rel (%p3211) target = $region52
        $region51: #{mlp_forward.3} parent=31 // pred_region
          %s3214 = smul.u32 19, %s26
        $region52: #{mlp_forward.3} parent=31 // pred_fallthru
          _
      $region32: #{mlp_forward.3} parent=5 // pred_fallthru
        _
      %p3215 = scmp.le.s32.totalorder 2, %s15
      // Predicated region
      $region53: #{mlp_forward.3} parent=5 // pred_check
        %p3216 = pneg %p3215
      $region54: #{mlp_forward.3} parent=5 // pred_check_branch
        %3218 = sbr.rel (%p3216) target = $region56
      $region55: #{mlp_forward.3} parent=5 // pred_region
        %s3219 = ssub.s32 %s15, 2
        // Predicated region
        $region57: #{mlp_forward.3} parent=55 // pred_check
          %p3220 = pneg %p147
        $region58: #{mlp_forward.3} parent=55 // pred_check_branch
          %3222 = sbr.rel (%p3220) target = $region60
        $region59: #{mlp_forward.3} parent=55 // pred_region
          %s3223 = smul.u32 19, %s29
          %p3224 = scmp.lt.s32.totalorder %s28, 0
          %s3225 = scalar_select %p3224, %s28, 0
          %p3226 = scmp.lt.s32.totalorder %s3223, 37
          %s3227 = scalar_select %p3226, %s3223, 37
          %s3228 = smul.addr %s3225, 38
          %s3229 = sadd.s32 %s3227, %s3228
          %s3230 = smul.addr %s3229, 8
          %s3231 = scalar_lea.vmem %s3, %s3230
        $region60: #{mlp_forward.3} parent=55 // pred_fallthru
          _
      $region56: #{mlp_forward.3} parent=5 // pred_fallthru
        _
    $region6: #{mlp_forward.3} parent=1 // loop_footer
      %s19 = sadd.s32 1, %s15
    $region7: #{mlp_forward.3} parent=1 // loop_footer_branch
      %14 = sbr.rel target = $region3
    $region8: #{mlp_forward.3} parent=1 // loop_exit
      _
    %3232 = vsyncpa [#allocation3], 1
    %s3233 = scalar_lea.sflag [#allocation3], 1
    %3234 = vsyncpa %s3233, 1
    %3235 = vsyncpa [#allocation5], 1
    %s3236 = scalar_lea.sflag [#allocation5], 1
    %3237 = vsyncpa %s3236, 1

</llo_original>
